<compile_context>
chip_gen: v7x
topology: tpu7x:2x2x1
jax: 0.10.0
libtpu: 0.0.40
codegen_flags: <defaults>
</compile_context>

<pallas_src>
import jax
import jax.numpy as jnp
from jax import lax
from jax.experimental import pallas as pl
from jax.experimental.pallas import tpu as pltpu

EPS = 1e-6


def _pick_vmem_limit():
    # v5e/v6e have 128 MiB physical VMEM (use up to ~64 MiB scoped); v7x has
    # only 64 MiB per TC (stay around 32 MiB).  Conservative fallback if the
    # query is unavailable.
    try:
        cap = pltpu.get_tpu_info().vmem_capacity_bytes
        return int(min(cap // 2, 96 * 1024 * 1024))
    except Exception:
        return 32 * 1024 * 1024


def _make_mlka_kernel(H, W, C, Ch, offsets, fuse_pf):
    """Build the kernel with static spatial/channel dims closed over."""

    def kernel(*refs):
        if fuse_pf:
            (x_ref, row_ref, col_ref, vec_ref, w_pf,
             w7a, w7b, w7p, wx7, w5a, w5b, w5p, wx5,
             wpl7, wpl5, o_ref) = refs
        else:
            (x_ref, row_ref, col_ref, vec_ref, w_a1, w_a2, w_xh, w_xl,
             w7a, w7b, w7p, wx7, w5a, w5b, w5p, wx5,
             wpl7, wpl5, o_ref) = refs

        Sp = x_ref.shape[2]                 # lane-padded H*W
        x0 = x_ref[0]                       # (C, Sp) shortcut
        row = row_ref[...]                  # (1, Sp) int32  y coordinate
        col = col_ref[...]                  # (1, Sp) int32  x coordinate
        vecs = vec_ref[...]                 # (Nv, 1) packed bias/ln/scale blob

        def vec(name):                      # sublane-aligned static slice
            o, n = offsets[name]
            return vecs[o:o + n]            # (n, 1)

        def mm(w_ref_, v):                  # 1x1 conv == matmul on the MXU
            return jnp.dot(w_ref_[...], v, preferred_element_type=jnp.float32)

        # ---- boundary masks, built ONCE per (K, dilation) geometry ----
        def build_masks(K, dil):
            pad = (K // 2) * dil
            cm = {}
            for kx in range(K):
                dx = kx * dil - pad
                if -W < dx < W:             # taps fully in padding are skipped
                    cm[kx] = jnp.where((col + dx >= 0) & (col + dx < W),
                                       1.0, 0.0)
            rm = {}
            for ky in range(K):
                dy = ky * dil - pad
                if -H < dy < H:
                    rm[ky] = jnp.where((row + dy >= 0) & (row + dy < H),
                                       1.0, 0.0)
            return cm, rm

        cm71, rm71 = build_masks(7, 1)      # LKA7 first conv + X7 gate
        cm94, rm94 = build_masks(9, 4)      # LKA7 dilated conv
        cm51, rm51 = build_masks(5, 1)      # LKA5 first conv + X5 gate
        cm73, rm73 = build_masks(7, 3)      # LKA5 dilated conv

        # ---- factored depthwise conv: K column rolls + K row rolls ----
        def col_rolled(v, K, dil, cm):
            # cmask is applied BEFORE the row roll; valid because rmask zeroes
            # every lane whose column coordinate changes under the row shift
            # or the Sp wrap.
            pad = (K // 2) * dil
            out = {}
            for kx, m in cm.items():
                dx = kx * dil - pad
                s = v if dx == 0 else pltpu.roll(v, shift=(-dx) % Sp, axis=1)
                out[kx] = m * s
            return out

        def dw_apply(colr, w_ref_, K, dil, rm):
            # colr: dict kx -> column-rolled+masked (Ch, Sp) copies of the input
            pad = (K // 2) * dil
            acc = None
            for ky, rmask in rm.items():
                dy = ky * dil - pad
                inner = None
                for kx, cv in colr.items():
                    term = cv * w_ref_[ky * K + kx]          # (Ch,Sp)*(Ch,1)
                    inner = term if inner is None else inner + term
                rolled = inner if dy == 0 else pltpu.roll(
                    inner, shift=(-dy * W) % Sp, axis=1)
                contrib = rmask * rolled
                acc = contrib if acc is None else acc + contrib
            return acc

        # --- LayerNorm over channels (channels_first semantics) ---
        u = jnp.mean(x0, axis=0, keepdims=True)
        xc = x0 - u
        var = jnp.mean(xc * xc, axis=0, keepdims=True)
        xn = xc * lax.rsqrt(var + EPS)                       # rsqrt -> EUP
        xn = xn * vec('ln_w') + vec('ln_b')

        # --- proj_first (1x1, C -> 2C) ---
        if fuse_pf:
            y = mm(w_pf, xn) + vec('pf_b')                   # one MXU pass
            a1, a2 = y[0:Ch], y[Ch:2 * Ch]
            xh, xl = y[2 * Ch:3 * Ch], y[3 * Ch:4 * Ch]
        else:
            a1 = mm(w_a1, xn) + vec('b_a1')                  # LKA7 input
            a2 = mm(w_a2, xn) + vec('b_a2')                  # LKA5 input
            xh = mm(w_xh, xn) + vec('b_xh')                  # gate, LKA7 half
            xl = mm(w_xl, xn) + vec('b_xl')                  # gate, LKA5 half

        # --- LKA7 branch: dw7 -> dw9(dil=4) -> 1x1 ; gated by X7 (dw7) ---
        colr_a1 = col_rolled(a1, 7, 1, cm71)     # shared by lka7_0 and X7
        t7 = dw_apply(colr_a1, w7a, 7, 1, rm71) + vec('b7a')
        gate7 = dw_apply(colr_a1, wx7, 7, 1, rm71) + vec('bx7')
        colr_t7 = col_rolled(t7, 9, 4, cm94)
        t7 = dw_apply(colr_t7, w7b, 9, 4, rm94) + vec('b7b')
        lka7 = mm(w7p, t7) + vec('b7p')
        g7 = lka7 * gate7

        # --- LKA5 branch: dw5 -> dw7(dil=3) -> 1x1 ; gated by X5 (dw5) ---
        colr_a2 = col_rolled(a2, 5, 1, cm51)     # shared by lka5_0 and X5
        t5 = dw_apply(colr_a2, w5a, 5, 1, rm51) + vec('b5a')
        gate5 = dw_apply(colr_a2, wx5, 5, 1, rm51) + vec('bx5')
        colr_t5 = col_rolled(t5, 7, 3, cm73)
        t5 = dw_apply(colr_t5, w5b, 7, 3, rm73) + vec('b5b')
        lka5 = mm(w5p, t5) + vec('b5p')
        g5 = lka5 * gate5

        # --- proj_last as two half-matmul accumulations, scale, residual ---
        out = mm(wpl7, xh * g7)
        out = out + mm(wpl5, xl * g5)            # MXU accumulate (MRB on v7x)
        out = out + vec('pl_b')
        o_ref[0] = (out * vec('scale') + x0).astype(o_ref.dtype)

    return kernel


def mlka_ablation(x_nchw, params):
    """x_nchw: (B, C, H, W) float32.  Returns (B, C, H, W)."""
    B, C, H, W = x_nchw.shape
    Ch = C // 2
    S = H * W
    Sp = ((S + 127) // 128) * 128            # lane-pad the spatial axis

    x = x_nchw.astype(jnp.float32).reshape(B, C, S)
    if Sp != S:
        x = jnp.pad(x, ((0, 0), (0, 0), (0, Sp - S)))

    lin = jnp.arange(Sp, dtype=jnp.int32)
    rowmap = (lin // W).reshape(1, Sp)
    colmap = (lin % W).reshape(1, Sp)

    # ---- convert PyTorch-layout params to kernel-friendly layouts ----
    def dwk(w):   # depthwise (Ch, 1, K, K) -> tap-major (K*K, Ch, 1)
        K = w.shape[-1]
        return (w[:, 0].reshape(Ch, K * K).T.reshape(K * K, Ch, 1)
                .astype(jnp.float32))

    def pwk(w):   # pointwise (Co, Ci, 1, 1) -> (Co, Ci)
        return w[:, :, 0, 0].astype(jnp.float32)

    wpf = pwk(params['pf_w'])
    bpf = params['pf_b'].astype(jnp.float32)
    wpl = pwk(params['pl_w'])

    fuse_pf = (Ch % 8 == 0)   # fused proj_first needs sublane-aligned slices

    # ---- pack all tiny bias / ln / scale column vectors into one blob ----
    vec_entries = [('ln_w', params['ln_w']), ('ln_b', params['ln_b'])]
    if fuse_pf:
        vec_entries.append(('pf_b', bpf))
    else:
        vec_entries += [('b_a1', bpf[0:Ch]), ('b_a2', bpf[Ch:C]),
                        ('b_xh', bpf[C:C + Ch]), ('b_xl', bpf[C + Ch:])]
    vec_entries += [
        ('b7a', params['lka7_0_b']), ('b7b', params['lka7_1_b']),
        ('b7p', params['lka7_2_b']), ('bx7', params['x7_b']),
        ('b5a', params['lka5_0_b']), ('b5b', params['lka5_1_b']),
        ('b5p', params['lka5_2_b']), ('bx5', params['x5_b']),
        ('pl_b', params['pl_b']), ('scale', params['scale']),
    ]
    offsets = {}
    chunks = []
    off = 0
    for name, v in vec_entries:
        v = jnp.asarray(v, jnp.float32).reshape(-1)
        n = v.shape[0]
        npad = ((n + 7) // 8) * 8            # keep every slice sublane-aligned
        offsets[name] = (off, n)
        chunks.append(jnp.pad(v, (0, npad - n)))
        off += npad
    vec_blob = jnp.concatenate(chunks).reshape(off, 1)

    mats = []
    if fuse_pf:
        mats.append(wpf)                                       # (2C, C)
    else:   # pre-split: a1 | a2 | x_hi (pairs with LKA7) | x_lo (LKA5)
        mats += [wpf[0:Ch], wpf[Ch:C], wpf[C:C + Ch], wpf[C + Ch:]]
    mats += [
        dwk(params['lka7_0_w']), dwk(params['lka7_1_w']),
        pwk(params['lka7_2_w']), dwk(params['x7_w']),
        dwk(params['lka5_0_w']), dwk(params['lka5_1_w']),
        pwk(params['lka5_2_w']), dwk(params['x5_w']),
        wpl[:, :Ch], wpl[:, Ch:],   # proj_last split by input half (no concat)
    ]

    kparams = [rowmap, colmap, vec_blob] + mats

    def _const_spec(p):
        zeros = (0,) * p.ndim
        return pl.BlockSpec(p.shape, lambda b: zeros)

    x_spec = pl.BlockSpec((1, C, Sp), lambda b: (b, 0, 0))
    small_specs = [_const_spec(p) for p in kparams]

    # TODO(synk): for large feature maps on v7x (64 MiB VMEM) add an H-row-block
    # grid axis with a +/-19-row halo (pl.Element offsets or manual DMA) instead
    # of the whole image per grid step; it also feeds v7x's 2 TCs when B is small.
    # TODO(synk): on v6e/v7x, run the tap math in bf16 with an f32 accumulator
    # (not on v5e: no bf16 VPU).
    out = pl.pallas_call(
        _make_mlka_kernel(H, W, C, Ch, offsets, fuse_pf),
        out_shape=jax.ShapeDtypeStruct((B, C, Sp), jnp.float32),
        grid=(B,),
        in_specs=[x_spec] + small_specs,
        out_specs=pl.BlockSpec((1, C, Sp), lambda b: (b, 0, 0)),
        compiler_params=pltpu.CompilerParams(
            dimension_semantics=("parallel",),
            vmem_limit_bytes=_pick_vmem_limit()),
    )(x, *kparams)

    return out[:, :, :S].reshape(B, C, H, W)


def init_params(key, n_feats):
    """Deterministic parameter init with the shapes from MLKA_Ablation.__init__."""
    C = n_feats
    Ch = C // 2
    iC = 2 * C
    shapes = {
        'ln_w': (C,), 'ln_b': (C,),
        'pf_w': (iC, C, 1, 1), 'pf_b': (iC,),
        'lka7_0_w': (Ch, 1, 7, 7), 'lka7_0_b': (Ch,),
        'lka7_1_w': (Ch, 1, 9, 9), 'lka7_1_b': (Ch,),
        'lka7_2_w': (Ch, Ch, 1, 1), 'lka7_2_b': (Ch,),
        'lka5_0_w': (Ch, 1, 5, 5), 'lka5_0_b': (Ch,),
        'lka5_1_w': (Ch, 1, 7, 7), 'lka5_1_b': (Ch,),
        'lka5_2_w': (Ch, Ch, 1, 1), 'lka5_2_b': (Ch,),
        'x5_w': (Ch, 1, 5, 5), 'x5_b': (Ch,),
        'x7_w': (Ch, 1, 7, 7), 'x7_b': (Ch,),
        'pl_w': (C, C, 1, 1), 'pl_b': (C,),
        'scale': (C,),
    }
    keys = jax.random.split(key, len(shapes))
    params = {name: 0.1 * jax.random.normal(k, shp, jnp.float32)
              for k, (name, shp) in zip(keys, shapes.items())}
    # LayerNorm params initialize to ones/zeros as in the module.
    params['ln_w'] = jnp.ones((C,), jnp.float32)
    params['ln_b'] = jnp.zeros((C,), jnp.float32)
    # NOTE: the PyTorch module initializes `scale` to zeros (output == shortcut);
    # a nonzero deterministic value is used here so the full path is exercised.
    return params


def ref_forward(x, p):
    """Pure-JAX NCHW reference that mirrors the PyTorch forward exactly."""
    HI = lax.Precision.HIGHEST

    def conv1x1(x, w, b):
        y = lax.conv_general_dilated(
            x, w, (1, 1), [(0, 0), (0, 0)],
            dimension_numbers=('NCHW', 'OIHW', 'NCHW'), precision=HI)
        return y + b[None, :, None, None]

    def dwconv(x, w, b, pad, dil):
        y = lax.conv_general_dilated(
            x, w, (1, 1), [(pad, pad), (pad, pad)],
            rhs_dilation=(dil, dil),
            dimension_numbers=('NCHW', 'OIHW', 'NCHW'),
            feature_group_count=x.shape[1], precision=HI)
        return y + b[None, :, None, None]

    shortcut = x
    u = x.mean(1, keepdims=True)
    s = ((x - u) ** 2).mean(1, keepdims=True)
    xn = (x - u) / jnp.sqrt(s + EPS)
    xn = p['ln_w'][None, :, None, None] * xn + p['ln_b'][None, :, None, None]

    y = conv1x1(xn, p['pf_w'], p['pf_b'])
    a, xx = jnp.split(y, 2, axis=1)
    a1, a2 = jnp.split(a, 2, axis=1)

    lka7 = conv1x1(dwconv(dwconv(a1, p['lka7_0_w'], p['lka7_0_b'], 3, 1),
                          p['lka7_1_w'], p['lka7_1_b'], 16, 4),
                   p['lka7_2_w'], p['lka7_2_b'])
    x7 = dwconv(a1, p['x7_w'], p['x7_b'], 3, 1)
    lka5 = conv1x1(dwconv(dwconv(a2, p['lka5_0_w'], p['lka5_0_b'], 2, 1),
                          p['lka5_1_w'], p['lka5_1_b'], 9, 3),
                   p['lka5_2_w'], p['lka5_2_b'])
    x5 = dwconv(a2, p['x5_w'], p['x5_b'], 2, 1)
    a = jnp.concatenate([lka7 * x7, lka5 * x5], axis=1)

    out = conv1x1(xx * a, p['pl_w'], p['pl_b'])
    return out * p['scale'][None, :, None, None] + shortcut


if __name__ == "__main__":
    key = jax.random.PRNGKey(0)
    configs = [
        (2, 4, 16, 16),   # n_feats=4 (Ch=2): split proj_first path
        (1, 4, 10, 12),   # lane-padded Sp (128) is NOT a multiple of W=12
        (1, 16, 8, 8),    # Ch=8: fused proj_first path, aligned slices
    ]
    for (B, C, H, W) in configs:
        kx, kp, key = jax.random.split(key, 3)
        x = jax.random.normal(kx, (B, C, H, W), jnp.float32)
        params = init_params(kp, C)

        out = jax.block_until_ready(mlka_ablation(x, params))
        ref = ref_forward(x, params)
        assert out.shape == ref.shape == (B, C, H, W)
        err = float(jnp.max(jnp.abs(out - ref)))
        # Tolerance allows for MXU input rounding on the 1x1-conv matmuls vs
        # the HIGHEST-precision XLA reference.
        if err > 5e-3:
            raise AssertionError(
                f"Pallas kernel mismatch vs reference for {(B, C, H, W)}: "
                f"max abs err={err}")

    print("KERNEL_OK")
</pallas_src>

<mosaic_0001>
module attributes {stable_mosaic.version = 11 : i64} {
  func.func @kernel(%arg0: i32, %arg1: memref<1x4x256xf32, #tpu.memory_space<vmem>>, %arg2: memref<1x256xi32, #tpu.memory_space<vmem>>, %arg3: memref<1x256xi32, #tpu.memory_space<vmem>>, %arg4: memref<128x1xf32, #tpu.memory_space<vmem>>, %arg5: memref<2x4xf32, #tpu.memory_space<vmem>>, %arg6: memref<2x4xf32, #tpu.memory_space<vmem>>, %arg7: memref<2x4xf32, #tpu.memory_space<vmem>>, %arg8: memref<2x4xf32, #tpu.memory_space<vmem>>, %arg9: memref<49x2x1xf32, #tpu.memory_space<vmem>>, %arg10: memref<81x2x1xf32, #tpu.memory_space<vmem>>, %arg11: memref<2x2xf32, #tpu.memory_space<vmem>>, %arg12: memref<49x2x1xf32, #tpu.memory_space<vmem>>, %arg13: memref<25x2x1xf32, #tpu.memory_space<vmem>>, %arg14: memref<49x2x1xf32, #tpu.memory_space<vmem>>, %arg15: memref<2x2xf32, #tpu.memory_space<vmem>>, %arg16: memref<25x2x1xf32, #tpu.memory_space<vmem>>, %arg17: memref<4x2xf32, #tpu.memory_space<vmem>>, %arg18: memref<4x2xf32, #tpu.memory_space<vmem>>, %arg19: memref<1x4x256xf32, #tpu.memory_space<vmem>>) attributes {dimension_semantics = [#tpu.dimension_semantics<parallel>], iteration_bounds = array<i64: 2>, scalar_prefetch = 0 : i64, scratch_operands = 0 : i64, tpu.core_type = #tpu.core_type<tc>, window_params = [{transform_indices = @transform_0, window_bounds = array<i64: 1, 4, 256>}, {pipeline_mode = #tpu.pipeline_mode<synchronous>, transform_indices = @transform_1, window_bounds = array<i64: 1, 256>}, {pipeline_mode = #tpu.pipeline_mode<synchronous>, transform_indices = @transform_2, window_bounds = array<i64: 1, 256>}, {pipeline_mode = #tpu.pipeline_mode<synchronous>, transform_indices = @transform_3, window_bounds = array<i64: 128, 1>}, {pipeline_mode = #tpu.pipeline_mode<synchronous>, transform_indices = @transform_4, window_bounds = array<i64: 2, 4>}, {pipeline_mode = #tpu.pipeline_mode<synchronous>, transform_indices = @transform_5, window_bounds = array<i64: 2, 4>}, {pipeline_mode = #tpu.pipeline_mode<synchronous>, transform_indices = @transform_6, window_bounds = array<i64: 2, 4>}, {pipeline_mode = #tpu.pipeline_mode<synchronous>, transform_indices = @transform_7, window_bounds = array<i64: 2, 4>}, {pipeline_mode = #tpu.pipeline_mode<synchronous>, transform_indices = @transform_8, window_bounds = array<i64: 49, 2, 1>}, {pipeline_mode = #tpu.pipeline_mode<synchronous>, transform_indices = @transform_9, window_bounds = array<i64: 81, 2, 1>}, {pipeline_mode = #tpu.pipeline_mode<synchronous>, transform_indices = @transform_10, window_bounds = array<i64: 2, 2>}, {pipeline_mode = #tpu.pipeline_mode<synchronous>, transform_indices = @transform_11, window_bounds = array<i64: 49, 2, 1>}, {pipeline_mode = #tpu.pipeline_mode<synchronous>, transform_indices = @transform_12, window_bounds = array<i64: 25, 2, 1>}, {pipeline_mode = #tpu.pipeline_mode<synchronous>, transform_indices = @transform_13, window_bounds = array<i64: 49, 2, 1>}, {pipeline_mode = #tpu.pipeline_mode<synchronous>, transform_indices = @transform_14, window_bounds = array<i64: 2, 2>}, {pipeline_mode = #tpu.pipeline_mode<synchronous>, transform_indices = @transform_15, window_bounds = array<i64: 25, 2, 1>}, {pipeline_mode = #tpu.pipeline_mode<synchronous>, transform_indices = @transform_16, window_bounds = array<i64: 4, 2>}, {pipeline_mode = #tpu.pipeline_mode<synchronous>, transform_indices = @transform_17, window_bounds = array<i64: 4, 2>}, {transform_indices = @transform_18, window_bounds = array<i64: 1, 4, 256>}]} {
    %c0 = arith.constant 0 : index
    %c0_0 = arith.constant 0 : index
    %c0_1 = arith.constant 0 : index
    %0 = vector.load %arg1[%c0, %c0_0, %c0_1] : memref<1x4x256xf32, #tpu.memory_space<vmem>>, vector<1x4x256xf32>
    %1 = vector.shape_cast %0 : vector<1x4x256xf32> to vector<4x256xf32>
    %c0_2 = arith.constant 0 : index
    %c0_3 = arith.constant 0 : index
    %2 = vector.load %arg2[%c0_2, %c0_3] : memref<1x256xi32, #tpu.memory_space<vmem>>, vector<1x256xi32>
    %c0_4 = arith.constant 0 : index
    %c0_5 = arith.constant 0 : index
    %3 = vector.load %arg3[%c0_4, %c0_5] : memref<1x256xi32, #tpu.memory_space<vmem>>, vector<1x256xi32>
    %c0_6 = arith.constant 0 : index
    %c0_7 = arith.constant 0 : index
    %4 = vector.load %arg4[%c0_6, %c0_7] : memref<128x1xf32, #tpu.memory_space<vmem>>, vector<128x1xf32>
    %c-3_i32 = arith.constant -3 : i32
    %5 = vector.broadcast %c-3_i32 : i32 to vector<1x256xi32>
    %6 = arith.addi %3, %5 : vector<1x256xi32>
    %c0_i32 = arith.constant 0 : i32
    %7 = vector.broadcast %c0_i32 : i32 to vector<1x256xi32>
    %8 = arith.cmpi sge, %6, %7 : vector<1x256xi32>
    %c-3_i32_8 = arith.constant -3 : i32
    %9 = vector.broadcast %c-3_i32_8 : i32 to vector<1x256xi32>
    %10 = arith.addi %3, %9 : vector<1x256xi32>
    %c16_i32 = arith.constant 16 : i32
    %11 = vector.broadcast %c16_i32 : i32 to vector<1x256xi32>
    %12 = arith.cmpi slt, %10, %11 : vector<1x256xi32>
    %13 = arith.andi %8, %12 : vector<1x256xi1>
    %cst = arith.constant 1.000000e+00 : f32
    %cst_9 = arith.constant 0.000000e+00 : f32
    %14 = vector.broadcast %cst : f32 to vector<1x256xf32>
    %15 = vector.broadcast %cst_9 : f32 to vector<1x256xf32>
    %16 = arith.select %13, %14, %15 : vector<1x256xi1>, vector<1x256xf32>
    %c-2_i32 = arith.constant -2 : i32
    %17 = vector.broadcast %c-2_i32 : i32 to vector<1x256xi32>
    %18 = arith.addi %3, %17 : vector<1x256xi32>
    %c0_i32_10 = arith.constant 0 : i32
    %19 = vector.broadcast %c0_i32_10 : i32 to vector<1x256xi32>
    %20 = arith.cmpi sge, %18, %19 : vector<1x256xi32>
    %c-2_i32_11 = arith.constant -2 : i32
    %21 = vector.broadcast %c-2_i32_11 : i32 to vector<1x256xi32>
    %22 = arith.addi %3, %21 : vector<1x256xi32>
    %c16_i32_12 = arith.constant 16 : i32
    %23 = vector.broadcast %c16_i32_12 : i32 to vector<1x256xi32>
    %24 = arith.cmpi slt, %22, %23 : vector<1x256xi32>
    %25 = arith.andi %20, %24 : vector<1x256xi1>
    %cst_13 = arith.constant 1.000000e+00 : f32
    %cst_14 = arith.constant 0.000000e+00 : f32
    %26 = vector.broadcast %cst_13 : f32 to vector<1x256xf32>
    %27 = vector.broadcast %cst_14 : f32 to vector<1x256xf32>
    %28 = arith.select %25, %26, %27 : vector<1x256xi1>, vector<1x256xf32>
    %c-1_i32 = arith.constant -1 : i32
    %29 = vector.broadcast %c-1_i32 : i32 to vector<1x256xi32>
    %30 = arith.addi %3, %29 : vector<1x256xi32>
    %c0_i32_15 = arith.constant 0 : i32
    %31 = vector.broadcast %c0_i32_15 : i32 to vector<1x256xi32>
    %32 = arith.cmpi sge, %30, %31 : vector<1x256xi32>
    %c-1_i32_16 = arith.constant -1 : i32
    %33 = vector.broadcast %c-1_i32_16 : i32 to vector<1x256xi32>
    %34 = arith.addi %3, %33 : vector<1x256xi32>
    %c16_i32_17 = arith.constant 16 : i32
    %35 = vector.broadcast %c16_i32_17 : i32 to vector<1x256xi32>
    %36 = arith.cmpi slt, %34, %35 : vector<1x256xi32>
    %37 = arith.andi %32, %36 : vector<1x256xi1>
    %cst_18 = arith.constant 1.000000e+00 : f32
    %cst_19 = arith.constant 0.000000e+00 : f32
    %38 = vector.broadcast %cst_18 : f32 to vector<1x256xf32>
    %39 = vector.broadcast %cst_19 : f32 to vector<1x256xf32>
    %40 = arith.select %37, %38, %39 : vector<1x256xi1>, vector<1x256xf32>
    %c0_i32_20 = arith.constant 0 : i32
    %41 = vector.broadcast %c0_i32_20 : i32 to vector<1x256xi32>
    %42 = arith.addi %3, %41 : vector<1x256xi32>
    %c0_i32_21 = arith.constant 0 : i32
    %43 = vector.broadcast %c0_i32_21 : i32 to vector<1x256xi32>
    %44 = arith.cmpi sge, %42, %43 : vector<1x256xi32>
    %c0_i32_22 = arith.constant 0 : i32
    %45 = vector.broadcast %c0_i32_22 : i32 to vector<1x256xi32>
    %46 = arith.addi %3, %45 : vector<1x256xi32>
    %c16_i32_23 = arith.constant 16 : i32
    %47 = vector.broadcast %c16_i32_23 : i32 to vector<1x256xi32>
    %48 = arith.cmpi slt, %46, %47 : vector<1x256xi32>
    %49 = arith.andi %44, %48 : vector<1x256xi1>
    %cst_24 = arith.constant 1.000000e+00 : f32
    %cst_25 = arith.constant 0.000000e+00 : f32
    %50 = vector.broadcast %cst_24 : f32 to vector<1x256xf32>
    %51 = vector.broadcast %cst_25 : f32 to vector<1x256xf32>
    %52 = arith.select %49, %50, %51 : vector<1x256xi1>, vector<1x256xf32>
    %c1_i32 = arith.constant 1 : i32
    %53 = vector.broadcast %c1_i32 : i32 to vector<1x256xi32>
    %54 = arith.addi %3, %53 : vector<1x256xi32>
    %c0_i32_26 = arith.constant 0 : i32
    %55 = vector.broadcast %c0_i32_26 : i32 to vector<1x256xi32>
    %56 = arith.cmpi sge, %54, %55 : vector<1x256xi32>
    %c1_i32_27 = arith.constant 1 : i32
    %57 = vector.broadcast %c1_i32_27 : i32 to vector<1x256xi32>
    %58 = arith.addi %3, %57 : vector<1x256xi32>
    %c16_i32_28 = arith.constant 16 : i32
    %59 = vector.broadcast %c16_i32_28 : i32 to vector<1x256xi32>
    %60 = arith.cmpi slt, %58, %59 : vector<1x256xi32>
    %61 = arith.andi %56, %60 : vector<1x256xi1>
    %cst_29 = arith.constant 1.000000e+00 : f32
    %cst_30 = arith.constant 0.000000e+00 : f32
    %62 = vector.broadcast %cst_29 : f32 to vector<1x256xf32>
    %63 = vector.broadcast %cst_30 : f32 to vector<1x256xf32>
    %64 = arith.select %61, %62, %63 : vector<1x256xi1>, vector<1x256xf32>
    %c2_i32 = arith.constant 2 : i32
    %65 = vector.broadcast %c2_i32 : i32 to vector<1x256xi32>
    %66 = arith.addi %3, %65 : vector<1x256xi32>
    %c0_i32_31 = arith.constant 0 : i32
    %67 = vector.broadcast %c0_i32_31 : i32 to vector<1x256xi32>
    %68 = arith.cmpi sge, %66, %67 : vector<1x256xi32>
    %c2_i32_32 = arith.constant 2 : i32
    %69 = vector.broadcast %c2_i32_32 : i32 to vector<1x256xi32>
    %70 = arith.addi %3, %69 : vector<1x256xi32>
    %c16_i32_33 = arith.constant 16 : i32
    %71 = vector.broadcast %c16_i32_33 : i32 to vector<1x256xi32>
    %72 = arith.cmpi slt, %70, %71 : vector<1x256xi32>
    %73 = arith.andi %68, %72 : vector<1x256xi1>
    %cst_34 = arith.constant 1.000000e+00 : f32
    %cst_35 = arith.constant 0.000000e+00 : f32
    %74 = vector.broadcast %cst_34 : f32 to vector<1x256xf32>
    %75 = vector.broadcast %cst_35 : f32 to vector<1x256xf32>
    %76 = arith.select %73, %74, %75 : vector<1x256xi1>, vector<1x256xf32>
    %c3_i32 = arith.constant 3 : i32
    %77 = vector.broadcast %c3_i32 : i32 to vector<1x256xi32>
    %78 = arith.addi %3, %77 : vector<1x256xi32>
    %c0_i32_36 = arith.constant 0 : i32
    %79 = vector.broadcast %c0_i32_36 : i32 to vector<1x256xi32>
    %80 = arith.cmpi sge, %78, %79 : vector<1x256xi32>
    %c3_i32_37 = arith.constant 3 : i32
    %81 = vector.broadcast %c3_i32_37 : i32 to vector<1x256xi32>
    %82 = arith.addi %3, %81 : vector<1x256xi32>
    %c16_i32_38 = arith.constant 16 : i32
    %83 = vector.broadcast %c16_i32_38 : i32 to vector<1x256xi32>
    %84 = arith.cmpi slt, %82, %83 : vector<1x256xi32>
    %85 = arith.andi %80, %84 : vector<1x256xi1>
    %cst_39 = arith.constant 1.000000e+00 : f32
    %cst_40 = arith.constant 0.000000e+00 : f32
    %86 = vector.broadcast %cst_39 : f32 to vector<1x256xf32>
    %87 = vector.broadcast %cst_40 : f32 to vector<1x256xf32>
    %88 = arith.select %85, %86, %87 : vector<1x256xi1>, vector<1x256xf32>
    %c-3_i32_41 = arith.constant -3 : i32
    %89 = vector.broadcast %c-3_i32_41 : i32 to vector<1x256xi32>
    %90 = arith.addi %2, %89 : vector<1x256xi32>
    %c0_i32_42 = arith.constant 0 : i32
    %91 = vector.broadcast %c0_i32_42 : i32 to vector<1x256xi32>
    %92 = arith.cmpi sge, %90, %91 : vector<1x256xi32>
    %c-3_i32_43 = arith.constant -3 : i32
    %93 = vector.broadcast %c-3_i32_43 : i32 to vector<1x256xi32>
    %94 = arith.addi %2, %93 : vector<1x256xi32>
    %c16_i32_44 = arith.constant 16 : i32
    %95 = vector.broadcast %c16_i32_44 : i32 to vector<1x256xi32>
    %96 = arith.cmpi slt, %94, %95 : vector<1x256xi32>
    %97 = arith.andi %92, %96 : vector<1x256xi1>
    %cst_45 = arith.constant 1.000000e+00 : f32
    %cst_46 = arith.constant 0.000000e+00 : f32
    %98 = vector.broadcast %cst_45 : f32 to vector<1x256xf32>
    %99 = vector.broadcast %cst_46 : f32 to vector<1x256xf32>
    %100 = arith.select %97, %98, %99 : vector<1x256xi1>, vector<1x256xf32>
    %c-2_i32_47 = arith.constant -2 : i32
    %101 = vector.broadcast %c-2_i32_47 : i32 to vector<1x256xi32>
    %102 = arith.addi %2, %101 : vector<1x256xi32>
    %c0_i32_48 = arith.constant 0 : i32
    %103 = vector.broadcast %c0_i32_48 : i32 to vector<1x256xi32>
    %104 = arith.cmpi sge, %102, %103 : vector<1x256xi32>
    %c-2_i32_49 = arith.constant -2 : i32
    %105 = vector.broadcast %c-2_i32_49 : i32 to vector<1x256xi32>
    %106 = arith.addi %2, %105 : vector<1x256xi32>
    %c16_i32_50 = arith.constant 16 : i32
    %107 = vector.broadcast %c16_i32_50 : i32 to vector<1x256xi32>
    %108 = arith.cmpi slt, %106, %107 : vector<1x256xi32>
    %109 = arith.andi %104, %108 : vector<1x256xi1>
    %cst_51 = arith.constant 1.000000e+00 : f32
    %cst_52 = arith.constant 0.000000e+00 : f32
    %110 = vector.broadcast %cst_51 : f32 to vector<1x256xf32>
    %111 = vector.broadcast %cst_52 : f32 to vector<1x256xf32>
    %112 = arith.select %109, %110, %111 : vector<1x256xi1>, vector<1x256xf32>
    %c-1_i32_53 = arith.constant -1 : i32
    %113 = vector.broadcast %c-1_i32_53 : i32 to vector<1x256xi32>
    %114 = arith.addi %2, %113 : vector<1x256xi32>
    %c0_i32_54 = arith.constant 0 : i32
    %115 = vector.broadcast %c0_i32_54 : i32 to vector<1x256xi32>
    %116 = arith.cmpi sge, %114, %115 : vector<1x256xi32>
    %c-1_i32_55 = arith.constant -1 : i32
    %117 = vector.broadcast %c-1_i32_55 : i32 to vector<1x256xi32>
    %118 = arith.addi %2, %117 : vector<1x256xi32>
    %c16_i32_56 = arith.constant 16 : i32
    %119 = vector.broadcast %c16_i32_56 : i32 to vector<1x256xi32>
    %120 = arith.cmpi slt, %118, %119 : vector<1x256xi32>
    %121 = arith.andi %116, %120 : vector<1x256xi1>
    %cst_57 = arith.constant 1.000000e+00 : f32
    %cst_58 = arith.constant 0.000000e+00 : f32
    %122 = vector.broadcast %cst_57 : f32 to vector<1x256xf32>
    %123 = vector.broadcast %cst_58 : f32 to vector<1x256xf32>
    %124 = arith.select %121, %122, %123 : vector<1x256xi1>, vector<1x256xf32>
    %c0_i32_59 = arith.constant 0 : i32
    %125 = vector.broadcast %c0_i32_59 : i32 to vector<1x256xi32>
    %126 = arith.addi %2, %125 : vector<1x256xi32>
    %c0_i32_60 = arith.constant 0 : i32
    %127 = vector.broadcast %c0_i32_60 : i32 to vector<1x256xi32>
    %128 = arith.cmpi sge, %126, %127 : vector<1x256xi32>
    %c0_i32_61 = arith.constant 0 : i32
    %129 = vector.broadcast %c0_i32_61 : i32 to vector<1x256xi32>
    %130 = arith.addi %2, %129 : vector<1x256xi32>
    %c16_i32_62 = arith.constant 16 : i32
    %131 = vector.broadcast %c16_i32_62 : i32 to vector<1x256xi32>
    %132 = arith.cmpi slt, %130, %131 : vector<1x256xi32>
    %133 = arith.andi %128, %132 : vector<1x256xi1>
    %cst_63 = arith.constant 1.000000e+00 : f32
    %cst_64 = arith.constant 0.000000e+00 : f32
    %134 = vector.broadcast %cst_63 : f32 to vector<1x256xf32>
    %135 = vector.broadcast %cst_64 : f32 to vector<1x256xf32>
    %136 = arith.select %133, %134, %135 : vector<1x256xi1>, vector<1x256xf32>
    %c1_i32_65 = arith.constant 1 : i32
    %137 = vector.broadcast %c1_i32_65 : i32 to vector<1x256xi32>
    %138 = arith.addi %2, %137 : vector<1x256xi32>
    %c0_i32_66 = arith.constant 0 : i32
    %139 = vector.broadcast %c0_i32_66 : i32 to vector<1x256xi32>
    %140 = arith.cmpi sge, %138, %139 : vector<1x256xi32>
    %c1_i32_67 = arith.constant 1 : i32
    %141 = vector.broadcast %c1_i32_67 : i32 to vector<1x256xi32>
    %142 = arith.addi %2, %141 : vector<1x256xi32>
    %c16_i32_68 = arith.constant 16 : i32
    %143 = vector.broadcast %c16_i32_68 : i32 to vector<1x256xi32>
    %144 = arith.cmpi slt, %142, %143 : vector<1x256xi32>
    %145 = arith.andi %140, %144 : vector<1x256xi1>
    %cst_69 = arith.constant 1.000000e+00 : f32
    %cst_70 = arith.constant 0.000000e+00 : f32
    %146 = vector.broadcast %cst_69 : f32 to vector<1x256xf32>
    %147 = vector.broadcast %cst_70 : f32 to vector<1x256xf32>
    %148 = arith.select %145, %146, %147 : vector<1x256xi1>, vector<1x256xf32>
    %c2_i32_71 = arith.constant 2 : i32
    %149 = vector.broadcast %c2_i32_71 : i32 to vector<1x256xi32>
    %150 = arith.addi %2, %149 : vector<1x256xi32>
    %c0_i32_72 = arith.constant 0 : i32
    %151 = vector.broadcast %c0_i32_72 : i32 to vector<1x256xi32>
    %152 = arith.cmpi sge, %150, %151 : vector<1x256xi32>
    %c2_i32_73 = arith.constant 2 : i32
    %153 = vector.broadcast %c2_i32_73 : i32 to vector<1x256xi32>
    %154 = arith.addi %2, %153 : vector<1x256xi32>
    %c16_i32_74 = arith.constant 16 : i32
    %155 = vector.broadcast %c16_i32_74 : i32 to vector<1x256xi32>
    %156 = arith.cmpi slt, %154, %155 : vector<1x256xi32>
    %157 = arith.andi %152, %156 : vector<1x256xi1>
    %cst_75 = arith.constant 1.000000e+00 : f32
    %cst_76 = arith.constant 0.000000e+00 : f32
    %158 = vector.broadcast %cst_75 : f32 to vector<1x256xf32>
    %159 = vector.broadcast %cst_76 : f32 to vector<1x256xf32>
    %160 = arith.select %157, %158, %159 : vector<1x256xi1>, vector<1x256xf32>
    %c3_i32_77 = arith.constant 3 : i32
    %161 = vector.broadcast %c3_i32_77 : i32 to vector<1x256xi32>
    %162 = arith.addi %2, %161 : vector<1x256xi32>
    %c0_i32_78 = arith.constant 0 : i32
    %163 = vector.broadcast %c0_i32_78 : i32 to vector<1x256xi32>
    %164 = arith.cmpi sge, %162, %163 : vector<1x256xi32>
    %c3_i32_79 = arith.constant 3 : i32
    %165 = vector.broadcast %c3_i32_79 : i32 to vector<1x256xi32>
    %166 = arith.addi %2, %165 : vector<1x256xi32>
    %c16_i32_80 = arith.constant 16 : i32
    %167 = vector.broadcast %c16_i32_80 : i32 to vector<1x256xi32>
    %168 = arith.cmpi slt, %166, %167 : vector<1x256xi32>
    %169 = arith.andi %164, %168 : vector<1x256xi1>
    %cst_81 = arith.constant 1.000000e+00 : f32
    %cst_82 = arith.constant 0.000000e+00 : f32
    %170 = vector.broadcast %cst_81 : f32 to vector<1x256xf32>
    %171 = vector.broadcast %cst_82 : f32 to vector<1x256xf32>
    %172 = arith.select %169, %170, %171 : vector<1x256xi1>, vector<1x256xf32>
    %c-12_i32 = arith.constant -12 : i32
    %173 = vector.broadcast %c-12_i32 : i32 to vector<1x256xi32>
    %174 = arith.addi %3, %173 : vector<1x256xi32>
    %c0_i32_83 = arith.constant 0 : i32
    %175 = vector.broadcast %c0_i32_83 : i32 to vector<1x256xi32>
    %176 = arith.cmpi sge, %174, %175 : vector<1x256xi32>
    %c-12_i32_84 = arith.constant -12 : i32
    %177 = vector.broadcast %c-12_i32_84 : i32 to vector<1x256xi32>
    %178 = arith.addi %3, %177 : vector<1x256xi32>
    %c16_i32_85 = arith.constant 16 : i32
    %179 = vector.broadcast %c16_i32_85 : i32 to vector<1x256xi32>
    %180 = arith.cmpi slt, %178, %179 : vector<1x256xi32>
    %181 = arith.andi %176, %180 : vector<1x256xi1>
    %cst_86 = arith.constant 1.000000e+00 : f32
    %cst_87 = arith.constant 0.000000e+00 : f32
    %182 = vector.broadcast %cst_86 : f32 to vector<1x256xf32>
    %183 = vector.broadcast %cst_87 : f32 to vector<1x256xf32>
    %184 = arith.select %181, %182, %183 : vector<1x256xi1>, vector<1x256xf32>
    %c-8_i32 = arith.constant -8 : i32
    %185 = vector.broadcast %c-8_i32 : i32 to vector<1x256xi32>
    %186 = arith.addi %3, %185 : vector<1x256xi32>
    %c0_i32_88 = arith.constant 0 : i32
    %187 = vector.broadcast %c0_i32_88 : i32 to vector<1x256xi32>
    %188 = arith.cmpi sge, %186, %187 : vector<1x256xi32>
    %c-8_i32_89 = arith.constant -8 : i32
    %189 = vector.broadcast %c-8_i32_89 : i32 to vector<1x256xi32>
    %190 = arith.addi %3, %189 : vector<1x256xi32>
    %c16_i32_90 = arith.constant 16 : i32
    %191 = vector.broadcast %c16_i32_90 : i32 to vector<1x256xi32>
    %192 = arith.cmpi slt, %190, %191 : vector<1x256xi32>
    %193 = arith.andi %188, %192 : vector<1x256xi1>
    %cst_91 = arith.constant 1.000000e+00 : f32
    %cst_92 = arith.constant 0.000000e+00 : f32
    %194 = vector.broadcast %cst_91 : f32 to vector<1x256xf32>
    %195 = vector.broadcast %cst_92 : f32 to vector<1x256xf32>
    %196 = arith.select %193, %194, %195 : vector<1x256xi1>, vector<1x256xf32>
    %c-4_i32 = arith.constant -4 : i32
    %197 = vector.broadcast %c-4_i32 : i32 to vector<1x256xi32>
    %198 = arith.addi %3, %197 : vector<1x256xi32>
    %c0_i32_93 = arith.constant 0 : i32
    %199 = vector.broadcast %c0_i32_93 : i32 to vector<1x256xi32>
    %200 = arith.cmpi sge, %198, %199 : vector<1x256xi32>
    %c-4_i32_94 = arith.constant -4 : i32
    %201 = vector.broadcast %c-4_i32_94 : i32 to vector<1x256xi32>
    %202 = arith.addi %3, %201 : vector<1x256xi32>
    %c16_i32_95 = arith.constant 16 : i32
    %203 = vector.broadcast %c16_i32_95 : i32 to vector<1x256xi32>
    %204 = arith.cmpi slt, %202, %203 : vector<1x256xi32>
    %205 = arith.andi %200, %204 : vector<1x256xi1>
    %cst_96 = arith.constant 1.000000e+00 : f32
    %cst_97 = arith.constant 0.000000e+00 : f32
    %206 = vector.broadcast %cst_96 : f32 to vector<1x256xf32>
    %207 = vector.broadcast %cst_97 : f32 to vector<1x256xf32>
    %208 = arith.select %205, %206, %207 : vector<1x256xi1>, vector<1x256xf32>
    %c0_i32_98 = arith.constant 0 : i32
    %209 = vector.broadcast %c0_i32_98 : i32 to vector<1x256xi32>
    %210 = arith.addi %3, %209 : vector<1x256xi32>
    %c0_i32_99 = arith.constant 0 : i32
    %211 = vector.broadcast %c0_i32_99 : i32 to vector<1x256xi32>
    %212 = arith.cmpi sge, %210, %211 : vector<1x256xi32>
    %c0_i32_100 = arith.constant 0 : i32
    %213 = vector.broadcast %c0_i32_100 : i32 to vector<1x256xi32>
    %214 = arith.addi %3, %213 : vector<1x256xi32>
    %c16_i32_101 = arith.constant 16 : i32
    %215 = vector.broadcast %c16_i32_101 : i32 to vector<1x256xi32>
    %216 = arith.cmpi slt, %214, %215 : vector<1x256xi32>
    %217 = arith.andi %212, %216 : vector<1x256xi1>
    %cst_102 = arith.constant 1.000000e+00 : f32
    %cst_103 = arith.constant 0.000000e+00 : f32
    %218 = vector.broadcast %cst_102 : f32 to vector<1x256xf32>
    %219 = vector.broadcast %cst_103 : f32 to vector<1x256xf32>
    %220 = arith.select %217, %218, %219 : vector<1x256xi1>, vector<1x256xf32>
    %c4_i32 = arith.constant 4 : i32
    %221 = vector.broadcast %c4_i32 : i32 to vector<1x256xi32>
    %222 = arith.addi %3, %221 : vector<1x256xi32>
    %c0_i32_104 = arith.constant 0 : i32
    %223 = vector.broadcast %c0_i32_104 : i32 to vector<1x256xi32>
    %224 = arith.cmpi sge, %222, %223 : vector<1x256xi32>
    %c4_i32_105 = arith.constant 4 : i32
    %225 = vector.broadcast %c4_i32_105 : i32 to vector<1x256xi32>
    %226 = arith.addi %3, %225 : vector<1x256xi32>
    %c16_i32_106 = arith.constant 16 : i32
    %227 = vector.broadcast %c16_i32_106 : i32 to vector<1x256xi32>
    %228 = arith.cmpi slt, %226, %227 : vector<1x256xi32>
    %229 = arith.andi %224, %228 : vector<1x256xi1>
    %cst_107 = arith.constant 1.000000e+00 : f32
    %cst_108 = arith.constant 0.000000e+00 : f32
    %230 = vector.broadcast %cst_107 : f32 to vector<1x256xf32>
    %231 = vector.broadcast %cst_108 : f32 to vector<1x256xf32>
    %232 = arith.select %229, %230, %231 : vector<1x256xi1>, vector<1x256xf32>
    %c8_i32 = arith.constant 8 : i32
    %233 = vector.broadcast %c8_i32 : i32 to vector<1x256xi32>
    %234 = arith.addi %3, %233 : vector<1x256xi32>
    %c0_i32_109 = arith.constant 0 : i32
    %235 = vector.broadcast %c0_i32_109 : i32 to vector<1x256xi32>
    %236 = arith.cmpi sge, %234, %235 : vector<1x256xi32>
    %c8_i32_110 = arith.constant 8 : i32
    %237 = vector.broadcast %c8_i32_110 : i32 to vector<1x256xi32>
    %238 = arith.addi %3, %237 : vector<1x256xi32>
    %c16_i32_111 = arith.constant 16 : i32
    %239 = vector.broadcast %c16_i32_111 : i32 to vector<1x256xi32>
    %240 = arith.cmpi slt, %238, %239 : vector<1x256xi32>
    %241 = arith.andi %236, %240 : vector<1x256xi1>
    %cst_112 = arith.constant 1.000000e+00 : f32
    %cst_113 = arith.constant 0.000000e+00 : f32
    %242 = vector.broadcast %cst_112 : f32 to vector<1x256xf32>
    %243 = vector.broadcast %cst_113 : f32 to vector<1x256xf32>
    %244 = arith.select %241, %242, %243 : vector<1x256xi1>, vector<1x256xf32>
    %c12_i32 = arith.constant 12 : i32
    %245 = vector.broadcast %c12_i32 : i32 to vector<1x256xi32>
    %246 = arith.addi %3, %245 : vector<1x256xi32>
    %c0_i32_114 = arith.constant 0 : i32
    %247 = vector.broadcast %c0_i32_114 : i32 to vector<1x256xi32>
    %248 = arith.cmpi sge, %246, %247 : vector<1x256xi32>
    %c12_i32_115 = arith.constant 12 : i32
    %249 = vector.broadcast %c12_i32_115 : i32 to vector<1x256xi32>
    %250 = arith.addi %3, %249 : vector<1x256xi32>
    %c16_i32_116 = arith.constant 16 : i32
    %251 = vector.broadcast %c16_i32_116 : i32 to vector<1x256xi32>
    %252 = arith.cmpi slt, %250, %251 : vector<1x256xi32>
    %253 = arith.andi %248, %252 : vector<1x256xi1>
    %cst_117 = arith.constant 1.000000e+00 : f32
    %cst_118 = arith.constant 0.000000e+00 : f32
    %254 = vector.broadcast %cst_117 : f32 to vector<1x256xf32>
    %255 = vector.broadcast %cst_118 : f32 to vector<1x256xf32>
    %256 = arith.select %253, %254, %255 : vector<1x256xi1>, vector<1x256xf32>
    %c-12_i32_119 = arith.constant -12 : i32
    %257 = vector.broadcast %c-12_i32_119 : i32 to vector<1x256xi32>
    %258 = arith.addi %2, %257 : vector<1x256xi32>
    %c0_i32_120 = arith.constant 0 : i32
    %259 = vector.broadcast %c0_i32_120 : i32 to vector<1x256xi32>
    %260 = arith.cmpi sge, %258, %259 : vector<1x256xi32>
    %c-12_i32_121 = arith.constant -12 : i32
    %261 = vector.broadcast %c-12_i32_121 : i32 to vector<1x256xi32>
    %262 = arith.addi %2, %261 : vector<1x256xi32>
    %c16_i32_122 = arith.constant 16 : i32
    %263 = vector.broadcast %c16_i32_122 : i32 to vector<1x256xi32>
    %264 = arith.cmpi slt, %262, %263 : vector<1x256xi32>
    %265 = arith.andi %260, %264 : vector<1x256xi1>
    %cst_123 = arith.constant 1.000000e+00 : f32
    %cst_124 = arith.constant 0.000000e+00 : f32
    %266 = vector.broadcast %cst_123 : f32 to vector<1x256xf32>
    %267 = vector.broadcast %cst_124 : f32 to vector<1x256xf32>
    %268 = arith.select %265, %266, %267 : vector<1x256xi1>, vector<1x256xf32>
    %c-8_i32_125 = arith.constant -8 : i32
    %269 = vector.broadcast %c-8_i32_125 : i32 to vector<1x256xi32>
    %270 = arith.addi %2, %269 : vector<1x256xi32>
    %c0_i32_126 = arith.constant 0 : i32
    %271 = vector.broadcast %c0_i32_126 : i32 to vector<1x256xi32>
    %272 = arith.cmpi sge, %270, %271 : vector<1x256xi32>
    %c-8_i32_127 = arith.constant -8 : i32
    %273 = vector.broadcast %c-8_i32_127 : i32 to vector<1x256xi32>
    %274 = arith.addi %2, %273 : vector<1x256xi32>
    %c16_i32_128 = arith.constant 16 : i32
    %275 = vector.broadcast %c16_i32_128 : i32 to vector<1x256xi32>
    %276 = arith.cmpi slt, %274, %275 : vector<1x256xi32>
    %277 = arith.andi %272, %276 : vector<1x256xi1>
    %cst_129 = arith.constant 1.000000e+00 : f32
    %cst_130 = arith.constant 0.000000e+00 : f32
    %278 = vector.broadcast %cst_129 : f32 to vector<1x256xf32>
    %279 = vector.broadcast %cst_130 : f32 to vector<1x256xf32>
    %280 = arith.select %277, %278, %279 : vector<1x256xi1>, vector<1x256xf32>
    %c-4_i32_131 = arith.constant -4 : i32
    %281 = vector.broadcast %c-4_i32_131 : i32 to vector<1x256xi32>
    %282 = arith.addi %2, %281 : vector<1x256xi32>
    %c0_i32_132 = arith.constant 0 : i32
    %283 = vector.broadcast %c0_i32_132 : i32 to vector<1x256xi32>
    %284 = arith.cmpi sge, %282, %283 : vector<1x256xi32>
    %c-4_i32_133 = arith.constant -4 : i32
    %285 = vector.broadcast %c-4_i32_133 : i32 to vector<1x256xi32>
    %286 = arith.addi %2, %285 : vector<1x256xi32>
    %c16_i32_134 = arith.constant 16 : i32
    %287 = vector.broadcast %c16_i32_134 : i32 to vector<1x256xi32>
    %288 = arith.cmpi slt, %286, %287 : vector<1x256xi32>
    %289 = arith.andi %284, %288 : vector<1x256xi1>
    %cst_135 = arith.constant 1.000000e+00 : f32
    %cst_136 = arith.constant 0.000000e+00 : f32
    %290 = vector.broadcast %cst_135 : f32 to vector<1x256xf32>
    %291 = vector.broadcast %cst_136 : f32 to vector<1x256xf32>
    %292 = arith.select %289, %290, %291 : vector<1x256xi1>, vector<1x256xf32>
    %c0_i32_137 = arith.constant 0 : i32
    %293 = vector.broadcast %c0_i32_137 : i32 to vector<1x256xi32>
    %294 = arith.addi %2, %293 : vector<1x256xi32>
    %c0_i32_138 = arith.constant 0 : i32
    %295 = vector.broadcast %c0_i32_138 : i32 to vector<1x256xi32>
    %296 = arith.cmpi sge, %294, %295 : vector<1x256xi32>
    %c0_i32_139 = arith.constant 0 : i32
    %297 = vector.broadcast %c0_i32_139 : i32 to vector<1x256xi32>
    %298 = arith.addi %2, %297 : vector<1x256xi32>
    %c16_i32_140 = arith.constant 16 : i32
    %299 = vector.broadcast %c16_i32_140 : i32 to vector<1x256xi32>
    %300 = arith.cmpi slt, %298, %299 : vector<1x256xi32>
    %301 = arith.andi %296, %300 : vector<1x256xi1>
    %cst_141 = arith.constant 1.000000e+00 : f32
    %cst_142 = arith.constant 0.000000e+00 : f32
    %302 = vector.broadcast %cst_141 : f32 to vector<1x256xf32>
    %303 = vector.broadcast %cst_142 : f32 to vector<1x256xf32>
    %304 = arith.select %301, %302, %303 : vector<1x256xi1>, vector<1x256xf32>
    %c4_i32_143 = arith.constant 4 : i32
    %305 = vector.broadcast %c4_i32_143 : i32 to vector<1x256xi32>
    %306 = arith.addi %2, %305 : vector<1x256xi32>
    %c0_i32_144 = arith.constant 0 : i32
    %307 = vector.broadcast %c0_i32_144 : i32 to vector<1x256xi32>
    %308 = arith.cmpi sge, %306, %307 : vector<1x256xi32>
    %c4_i32_145 = arith.constant 4 : i32
    %309 = vector.broadcast %c4_i32_145 : i32 to vector<1x256xi32>
    %310 = arith.addi %2, %309 : vector<1x256xi32>
    %c16_i32_146 = arith.constant 16 : i32
    %311 = vector.broadcast %c16_i32_146 : i32 to vector<1x256xi32>
    %312 = arith.cmpi slt, %310, %311 : vector<1x256xi32>
    %313 = arith.andi %308, %312 : vector<1x256xi1>
    %cst_147 = arith.constant 1.000000e+00 : f32
    %cst_148 = arith.constant 0.000000e+00 : f32
    %314 = vector.broadcast %cst_147 : f32 to vector<1x256xf32>
    %315 = vector.broadcast %cst_148 : f32 to vector<1x256xf32>
    %316 = arith.select %313, %314, %315 : vector<1x256xi1>, vector<1x256xf32>
    %c8_i32_149 = arith.constant 8 : i32
    %317 = vector.broadcast %c8_i32_149 : i32 to vector<1x256xi32>
    %318 = arith.addi %2, %317 : vector<1x256xi32>
    %c0_i32_150 = arith.constant 0 : i32
    %319 = vector.broadcast %c0_i32_150 : i32 to vector<1x256xi32>
    %320 = arith.cmpi sge, %318, %319 : vector<1x256xi32>
    %c8_i32_151 = arith.constant 8 : i32
    %321 = vector.broadcast %c8_i32_151 : i32 to vector<1x256xi32>
    %322 = arith.addi %2, %321 : vector<1x256xi32>
    %c16_i32_152 = arith.constant 16 : i32
    %323 = vector.broadcast %c16_i32_152 : i32 to vector<1x256xi32>
    %324 = arith.cmpi slt, %322, %323 : vector<1x256xi32>
    %325 = arith.andi %320, %324 : vector<1x256xi1>
    %cst_153 = arith.constant 1.000000e+00 : f32
    %cst_154 = arith.constant 0.000000e+00 : f32
    %326 = vector.broadcast %cst_153 : f32 to vector<1x256xf32>
    %327 = vector.broadcast %cst_154 : f32 to vector<1x256xf32>
    %328 = arith.select %325, %326, %327 : vector<1x256xi1>, vector<1x256xf32>
    %c12_i32_155 = arith.constant 12 : i32
    %329 = vector.broadcast %c12_i32_155 : i32 to vector<1x256xi32>
    %330 = arith.addi %2, %329 : vector<1x256xi32>
    %c0_i32_156 = arith.constant 0 : i32
    %331 = vector.broadcast %c0_i32_156 : i32 to vector<1x256xi32>
    %332 = arith.cmpi sge, %330, %331 : vector<1x256xi32>
    %c12_i32_157 = arith.constant 12 : i32
    %333 = vector.broadcast %c12_i32_157 : i32 to vector<1x256xi32>
    %334 = arith.addi %2, %333 : vector<1x256xi32>
    %c16_i32_158 = arith.constant 16 : i32
    %335 = vector.broadcast %c16_i32_158 : i32 to vector<1x256xi32>
    %336 = arith.cmpi slt, %334, %335 : vector<1x256xi32>
    %337 = arith.andi %332, %336 : vector<1x256xi1>
    %cst_159 = arith.constant 1.000000e+00 : f32
    %cst_160 = arith.constant 0.000000e+00 : f32
    %338 = vector.broadcast %cst_159 : f32 to vector<1x256xf32>
    %339 = vector.broadcast %cst_160 : f32 to vector<1x256xf32>
    %340 = arith.select %337, %338, %339 : vector<1x256xi1>, vector<1x256xf32>
    %c-2_i32_161 = arith.constant -2 : i32
    %341 = vector.broadcast %c-2_i32_161 : i32 to vector<1x256xi32>
    %342 = arith.addi %3, %341 : vector<1x256xi32>
    %c0_i32_162 = arith.constant 0 : i32
    %343 = vector.broadcast %c0_i32_162 : i32 to vector<1x256xi32>
    %344 = arith.cmpi sge, %342, %343 : vector<1x256xi32>
    %c-2_i32_163 = arith.constant -2 : i32
    %345 = vector.broadcast %c-2_i32_163 : i32 to vector<1x256xi32>
    %346 = arith.addi %3, %345 : vector<1x256xi32>
    %c16_i32_164 = arith.constant 16 : i32
    %347 = vector.broadcast %c16_i32_164 : i32 to vector<1x256xi32>
    %348 = arith.cmpi slt, %346, %347 : vector<1x256xi32>
    %349 = arith.andi %344, %348 : vector<1x256xi1>
    %cst_165 = arith.constant 1.000000e+00 : f32
    %cst_166 = arith.constant 0.000000e+00 : f32
    %350 = vector.broadcast %cst_165 : f32 to vector<1x256xf32>
    %351 = vector.broadcast %cst_166 : f32 to vector<1x256xf32>
    %352 = arith.select %349, %350, %351 : vector<1x256xi1>, vector<1x256xf32>
    %c-1_i32_167 = arith.constant -1 : i32
    %353 = vector.broadcast %c-1_i32_167 : i32 to vector<1x256xi32>
    %354 = arith.addi %3, %353 : vector<1x256xi32>
    %c0_i32_168 = arith.constant 0 : i32
    %355 = vector.broadcast %c0_i32_168 : i32 to vector<1x256xi32>
    %356 = arith.cmpi sge, %354, %355 : vector<1x256xi32>
    %c-1_i32_169 = arith.constant -1 : i32
    %357 = vector.broadcast %c-1_i32_169 : i32 to vector<1x256xi32>
    %358 = arith.addi %3, %357 : vector<1x256xi32>
    %c16_i32_170 = arith.constant 16 : i32
    %359 = vector.broadcast %c16_i32_170 : i32 to vector<1x256xi32>
    %360 = arith.cmpi slt, %358, %359 : vector<1x256xi32>
    %361 = arith.andi %356, %360 : vector<1x256xi1>
    %cst_171 = arith.constant 1.000000e+00 : f32
    %cst_172 = arith.constant 0.000000e+00 : f32
    %362 = vector.broadcast %cst_171 : f32 to vector<1x256xf32>
    %363 = vector.broadcast %cst_172 : f32 to vector<1x256xf32>
    %364 = arith.select %361, %362, %363 : vector<1x256xi1>, vector<1x256xf32>
    %c0_i32_173 = arith.constant 0 : i32
    %365 = vector.broadcast %c0_i32_173 : i32 to vector<1x256xi32>
    %366 = arith.addi %3, %365 : vector<1x256xi32>
    %c0_i32_174 = arith.constant 0 : i32
    %367 = vector.broadcast %c0_i32_174 : i32 to vector<1x256xi32>
    %368 = arith.cmpi sge, %366, %367 : vector<1x256xi32>
    %c0_i32_175 = arith.constant 0 : i32
    %369 = vector.broadcast %c0_i32_175 : i32 to vector<1x256xi32>
    %370 = arith.addi %3, %369 : vector<1x256xi32>
    %c16_i32_176 = arith.constant 16 : i32
    %371 = vector.broadcast %c16_i32_176 : i32 to vector<1x256xi32>
    %372 = arith.cmpi slt, %370, %371 : vector<1x256xi32>
    %373 = arith.andi %368, %372 : vector<1x256xi1>
    %cst_177 = arith.constant 1.000000e+00 : f32
    %cst_178 = arith.constant 0.000000e+00 : f32
    %374 = vector.broadcast %cst_177 : f32 to vector<1x256xf32>
    %375 = vector.broadcast %cst_178 : f32 to vector<1x256xf32>
    %376 = arith.select %373, %374, %375 : vector<1x256xi1>, vector<1x256xf32>
    %c1_i32_179 = arith.constant 1 : i32
    %377 = vector.broadcast %c1_i32_179 : i32 to vector<1x256xi32>
    %378 = arith.addi %3, %377 : vector<1x256xi32>
    %c0_i32_180 = arith.constant 0 : i32
    %379 = vector.broadcast %c0_i32_180 : i32 to vector<1x256xi32>
    %380 = arith.cmpi sge, %378, %379 : vector<1x256xi32>
    %c1_i32_181 = arith.constant 1 : i32
    %381 = vector.broadcast %c1_i32_181 : i32 to vector<1x256xi32>
    %382 = arith.addi %3, %381 : vector<1x256xi32>
    %c16_i32_182 = arith.constant 16 : i32
    %383 = vector.broadcast %c16_i32_182 : i32 to vector<1x256xi32>
    %384 = arith.cmpi slt, %382, %383 : vector<1x256xi32>
    %385 = arith.andi %380, %384 : vector<1x256xi1>
    %cst_183 = arith.constant 1.000000e+00 : f32
    %cst_184 = arith.constant 0.000000e+00 : f32
    %386 = vector.broadcast %cst_183 : f32 to vector<1x256xf32>
    %387 = vector.broadcast %cst_184 : f32 to vector<1x256xf32>
    %388 = arith.select %385, %386, %387 : vector<1x256xi1>, vector<1x256xf32>
    %c2_i32_185 = arith.constant 2 : i32
    %389 = vector.broadcast %c2_i32_185 : i32 to vector<1x256xi32>
    %390 = arith.addi %3, %389 : vector<1x256xi32>
    %c0_i32_186 = arith.constant 0 : i32
    %391 = vector.broadcast %c0_i32_186 : i32 to vector<1x256xi32>
    %392 = arith.cmpi sge, %390, %391 : vector<1x256xi32>
    %c2_i32_187 = arith.constant 2 : i32
    %393 = vector.broadcast %c2_i32_187 : i32 to vector<1x256xi32>
    %394 = arith.addi %3, %393 : vector<1x256xi32>
    %c16_i32_188 = arith.constant 16 : i32
    %395 = vector.broadcast %c16_i32_188 : i32 to vector<1x256xi32>
    %396 = arith.cmpi slt, %394, %395 : vector<1x256xi32>
    %397 = arith.andi %392, %396 : vector<1x256xi1>
    %cst_189 = arith.constant 1.000000e+00 : f32
    %cst_190 = arith.constant 0.000000e+00 : f32
    %398 = vector.broadcast %cst_189 : f32 to vector<1x256xf32>
    %399 = vector.broadcast %cst_190 : f32 to vector<1x256xf32>
    %400 = arith.select %397, %398, %399 : vector<1x256xi1>, vector<1x256xf32>
    %c-2_i32_191 = arith.constant -2 : i32
    %401 = vector.broadcast %c-2_i32_191 : i32 to vector<1x256xi32>
    %402 = arith.addi %2, %401 : vector<1x256xi32>
    %c0_i32_192 = arith.constant 0 : i32
    %403 = vector.broadcast %c0_i32_192 : i32 to vector<1x256xi32>
    %404 = arith.cmpi sge, %402, %403 : vector<1x256xi32>
    %c-2_i32_193 = arith.constant -2 : i32
    %405 = vector.broadcast %c-2_i32_193 : i32 to vector<1x256xi32>
    %406 = arith.addi %2, %405 : vector<1x256xi32>
    %c16_i32_194 = arith.constant 16 : i32
    %407 = vector.broadcast %c16_i32_194 : i32 to vector<1x256xi32>
    %408 = arith.cmpi slt, %406, %407 : vector<1x256xi32>
    %409 = arith.andi %404, %408 : vector<1x256xi1>
    %cst_195 = arith.constant 1.000000e+00 : f32
    %cst_196 = arith.constant 0.000000e+00 : f32
    %410 = vector.broadcast %cst_195 : f32 to vector<1x256xf32>
    %411 = vector.broadcast %cst_196 : f32 to vector<1x256xf32>
    %412 = arith.select %409, %410, %411 : vector<1x256xi1>, vector<1x256xf32>
    %c-1_i32_197 = arith.constant -1 : i32
    %413 = vector.broadcast %c-1_i32_197 : i32 to vector<1x256xi32>
    %414 = arith.addi %2, %413 : vector<1x256xi32>
    %c0_i32_198 = arith.constant 0 : i32
    %415 = vector.broadcast %c0_i32_198 : i32 to vector<1x256xi32>
    %416 = arith.cmpi sge, %414, %415 : vector<1x256xi32>
    %c-1_i32_199 = arith.constant -1 : i32
    %417 = vector.broadcast %c-1_i32_199 : i32 to vector<1x256xi32>
    %418 = arith.addi %2, %417 : vector<1x256xi32>
    %c16_i32_200 = arith.constant 16 : i32
    %419 = vector.broadcast %c16_i32_200 : i32 to vector<1x256xi32>
    %420 = arith.cmpi slt, %418, %419 : vector<1x256xi32>
    %421 = arith.andi %416, %420 : vector<1x256xi1>
    %cst_201 = arith.constant 1.000000e+00 : f32
    %cst_202 = arith.constant 0.000000e+00 : f32
    %422 = vector.broadcast %cst_201 : f32 to vector<1x256xf32>
    %423 = vector.broadcast %cst_202 : f32 to vector<1x256xf32>
    %424 = arith.select %421, %422, %423 : vector<1x256xi1>, vector<1x256xf32>
    %c0_i32_203 = arith.constant 0 : i32
    %425 = vector.broadcast %c0_i32_203 : i32 to vector<1x256xi32>
    %426 = arith.addi %2, %425 : vector<1x256xi32>
    %c0_i32_204 = arith.constant 0 : i32
    %427 = vector.broadcast %c0_i32_204 : i32 to vector<1x256xi32>
    %428 = arith.cmpi sge, %426, %427 : vector<1x256xi32>
    %c0_i32_205 = arith.constant 0 : i32
    %429 = vector.broadcast %c0_i32_205 : i32 to vector<1x256xi32>
    %430 = arith.addi %2, %429 : vector<1x256xi32>
    %c16_i32_206 = arith.constant 16 : i32
    %431 = vector.broadcast %c16_i32_206 : i32 to vector<1x256xi32>
    %432 = arith.cmpi slt, %430, %431 : vector<1x256xi32>
    %433 = arith.andi %428, %432 : vector<1x256xi1>
    %cst_207 = arith.constant 1.000000e+00 : f32
    %cst_208 = arith.constant 0.000000e+00 : f32
    %434 = vector.broadcast %cst_207 : f32 to vector<1x256xf32>
    %435 = vector.broadcast %cst_208 : f32 to vector<1x256xf32>
    %436 = arith.select %433, %434, %435 : vector<1x256xi1>, vector<1x256xf32>
    %c1_i32_209 = arith.constant 1 : i32
    %437 = vector.broadcast %c1_i32_209 : i32 to vector<1x256xi32>
    %438 = arith.addi %2, %437 : vector<1x256xi32>
    %c0_i32_210 = arith.constant 0 : i32
    %439 = vector.broadcast %c0_i32_210 : i32 to vector<1x256xi32>
    %440 = arith.cmpi sge, %438, %439 : vector<1x256xi32>
    %c1_i32_211 = arith.constant 1 : i32
    %441 = vector.broadcast %c1_i32_211 : i32 to vector<1x256xi32>
    %442 = arith.addi %2, %441 : vector<1x256xi32>
    %c16_i32_212 = arith.constant 16 : i32
    %443 = vector.broadcast %c16_i32_212 : i32 to vector<1x256xi32>
    %444 = arith.cmpi slt, %442, %443 : vector<1x256xi32>
    %445 = arith.andi %440, %444 : vector<1x256xi1>
    %cst_213 = arith.constant 1.000000e+00 : f32
    %cst_214 = arith.constant 0.000000e+00 : f32
    %446 = vector.broadcast %cst_213 : f32 to vector<1x256xf32>
    %447 = vector.broadcast %cst_214 : f32 to vector<1x256xf32>
    %448 = arith.select %445, %446, %447 : vector<1x256xi1>, vector<1x256xf32>
    %c2_i32_215 = arith.constant 2 : i32
    %449 = vector.broadcast %c2_i32_215 : i32 to vector<1x256xi32>
    %450 = arith.addi %2, %449 : vector<1x256xi32>
    %c0_i32_216 = arith.constant 0 : i32
    %451 = vector.broadcast %c0_i32_216 : i32 to vector<1x256xi32>
    %452 = arith.cmpi sge, %450, %451 : vector<1x256xi32>
    %c2_i32_217 = arith.constant 2 : i32
    %453 = vector.broadcast %c2_i32_217 : i32 to vector<1x256xi32>
    %454 = arith.addi %2, %453 : vector<1x256xi32>
    %c16_i32_218 = arith.constant 16 : i32
    %455 = vector.broadcast %c16_i32_218 : i32 to vector<1x256xi32>
    %456 = arith.cmpi slt, %454, %455 : vector<1x256xi32>
    %457 = arith.andi %452, %456 : vector<1x256xi1>
    %cst_219 = arith.constant 1.000000e+00 : f32
    %cst_220 = arith.constant 0.000000e+00 : f32
    %458 = vector.broadcast %cst_219 : f32 to vector<1x256xf32>
    %459 = vector.broadcast %cst_220 : f32 to vector<1x256xf32>
    %460 = arith.select %457, %458, %459 : vector<1x256xi1>, vector<1x256xf32>
    %c-9_i32 = arith.constant -9 : i32
    %461 = vector.broadcast %c-9_i32 : i32 to vector<1x256xi32>
    %462 = arith.addi %3, %461 : vector<1x256xi32>
    %c0_i32_221 = arith.constant 0 : i32
    %463 = vector.broadcast %c0_i32_221 : i32 to vector<1x256xi32>
    %464 = arith.cmpi sge, %462, %463 : vector<1x256xi32>
    %c-9_i32_222 = arith.constant -9 : i32
    %465 = vector.broadcast %c-9_i32_222 : i32 to vector<1x256xi32>
    %466 = arith.addi %3, %465 : vector<1x256xi32>
    %c16_i32_223 = arith.constant 16 : i32
    %467 = vector.broadcast %c16_i32_223 : i32 to vector<1x256xi32>
    %468 = arith.cmpi slt, %466, %467 : vector<1x256xi32>
    %469 = arith.andi %464, %468 : vector<1x256xi1>
    %cst_224 = arith.constant 1.000000e+00 : f32
    %cst_225 = arith.constant 0.000000e+00 : f32
    %470 = vector.broadcast %cst_224 : f32 to vector<1x256xf32>
    %471 = vector.broadcast %cst_225 : f32 to vector<1x256xf32>
    %472 = arith.select %469, %470, %471 : vector<1x256xi1>, vector<1x256xf32>
    %c-6_i32 = arith.constant -6 : i32
    %473 = vector.broadcast %c-6_i32 : i32 to vector<1x256xi32>
    %474 = arith.addi %3, %473 : vector<1x256xi32>
    %c0_i32_226 = arith.constant 0 : i32
    %475 = vector.broadcast %c0_i32_226 : i32 to vector<1x256xi32>
    %476 = arith.cmpi sge, %474, %475 : vector<1x256xi32>
    %c-6_i32_227 = arith.constant -6 : i32
    %477 = vector.broadcast %c-6_i32_227 : i32 to vector<1x256xi32>
    %478 = arith.addi %3, %477 : vector<1x256xi32>
    %c16_i32_228 = arith.constant 16 : i32
    %479 = vector.broadcast %c16_i32_228 : i32 to vector<1x256xi32>
    %480 = arith.cmpi slt, %478, %479 : vector<1x256xi32>
    %481 = arith.andi %476, %480 : vector<1x256xi1>
    %cst_229 = arith.constant 1.000000e+00 : f32
    %cst_230 = arith.constant 0.000000e+00 : f32
    %482 = vector.broadcast %cst_229 : f32 to vector<1x256xf32>
    %483 = vector.broadcast %cst_230 : f32 to vector<1x256xf32>
    %484 = arith.select %481, %482, %483 : vector<1x256xi1>, vector<1x256xf32>
    %c-3_i32_231 = arith.constant -3 : i32
    %485 = vector.broadcast %c-3_i32_231 : i32 to vector<1x256xi32>
    %486 = arith.addi %3, %485 : vector<1x256xi32>
    %c0_i32_232 = arith.constant 0 : i32
    %487 = vector.broadcast %c0_i32_232 : i32 to vector<1x256xi32>
    %488 = arith.cmpi sge, %486, %487 : vector<1x256xi32>
    %c-3_i32_233 = arith.constant -3 : i32
    %489 = vector.broadcast %c-3_i32_233 : i32 to vector<1x256xi32>
    %490 = arith.addi %3, %489 : vector<1x256xi32>
    %c16_i32_234 = arith.constant 16 : i32
    %491 = vector.broadcast %c16_i32_234 : i32 to vector<1x256xi32>
    %492 = arith.cmpi slt, %490, %491 : vector<1x256xi32>
    %493 = arith.andi %488, %492 : vector<1x256xi1>
    %cst_235 = arith.constant 1.000000e+00 : f32
    %cst_236 = arith.constant 0.000000e+00 : f32
    %494 = vector.broadcast %cst_235 : f32 to vector<1x256xf32>
    %495 = vector.broadcast %cst_236 : f32 to vector<1x256xf32>
    %496 = arith.select %493, %494, %495 : vector<1x256xi1>, vector<1x256xf32>
    %c0_i32_237 = arith.constant 0 : i32
    %497 = vector.broadcast %c0_i32_237 : i32 to vector<1x256xi32>
    %498 = arith.addi %3, %497 : vector<1x256xi32>
    %c0_i32_238 = arith.constant 0 : i32
    %499 = vector.broadcast %c0_i32_238 : i32 to vector<1x256xi32>
    %500 = arith.cmpi sge, %498, %499 : vector<1x256xi32>
    %c0_i32_239 = arith.constant 0 : i32
    %501 = vector.broadcast %c0_i32_239 : i32 to vector<1x256xi32>
    %502 = arith.addi %3, %501 : vector<1x256xi32>
    %c16_i32_240 = arith.constant 16 : i32
    %503 = vector.broadcast %c16_i32_240 : i32 to vector<1x256xi32>
    %504 = arith.cmpi slt, %502, %503 : vector<1x256xi32>
    %505 = arith.andi %500, %504 : vector<1x256xi1>
    %cst_241 = arith.constant 1.000000e+00 : f32
    %cst_242 = arith.constant 0.000000e+00 : f32
    %506 = vector.broadcast %cst_241 : f32 to vector<1x256xf32>
    %507 = vector.broadcast %cst_242 : f32 to vector<1x256xf32>
    %508 = arith.select %505, %506, %507 : vector<1x256xi1>, vector<1x256xf32>
    %c3_i32_243 = arith.constant 3 : i32
    %509 = vector.broadcast %c3_i32_243 : i32 to vector<1x256xi32>
    %510 = arith.addi %3, %509 : vector<1x256xi32>
    %c0_i32_244 = arith.constant 0 : i32
    %511 = vector.broadcast %c0_i32_244 : i32 to vector<1x256xi32>
    %512 = arith.cmpi sge, %510, %511 : vector<1x256xi32>
    %c3_i32_245 = arith.constant 3 : i32
    %513 = vector.broadcast %c3_i32_245 : i32 to vector<1x256xi32>
    %514 = arith.addi %3, %513 : vector<1x256xi32>
    %c16_i32_246 = arith.constant 16 : i32
    %515 = vector.broadcast %c16_i32_246 : i32 to vector<1x256xi32>
    %516 = arith.cmpi slt, %514, %515 : vector<1x256xi32>
    %517 = arith.andi %512, %516 : vector<1x256xi1>
    %cst_247 = arith.constant 1.000000e+00 : f32
    %cst_248 = arith.constant 0.000000e+00 : f32
    %518 = vector.broadcast %cst_247 : f32 to vector<1x256xf32>
    %519 = vector.broadcast %cst_248 : f32 to vector<1x256xf32>
    %520 = arith.select %517, %518, %519 : vector<1x256xi1>, vector<1x256xf32>
    %c6_i32 = arith.constant 6 : i32
    %521 = vector.broadcast %c6_i32 : i32 to vector<1x256xi32>
    %522 = arith.addi %3, %521 : vector<1x256xi32>
    %c0_i32_249 = arith.constant 0 : i32
    %523 = vector.broadcast %c0_i32_249 : i32 to vector<1x256xi32>
    %524 = arith.cmpi sge, %522, %523 : vector<1x256xi32>
    %c6_i32_250 = arith.constant 6 : i32
    %525 = vector.broadcast %c6_i32_250 : i32 to vector<1x256xi32>
    %526 = arith.addi %3, %525 : vector<1x256xi32>
    %c16_i32_251 = arith.constant 16 : i32
    %527 = vector.broadcast %c16_i32_251 : i32 to vector<1x256xi32>
    %528 = arith.cmpi slt, %526, %527 : vector<1x256xi32>
    %529 = arith.andi %524, %528 : vector<1x256xi1>
    %cst_252 = arith.constant 1.000000e+00 : f32
    %cst_253 = arith.constant 0.000000e+00 : f32
    %530 = vector.broadcast %cst_252 : f32 to vector<1x256xf32>
    %531 = vector.broadcast %cst_253 : f32 to vector<1x256xf32>
    %532 = arith.select %529, %530, %531 : vector<1x256xi1>, vector<1x256xf32>
    %c9_i32 = arith.constant 9 : i32
    %533 = vector.broadcast %c9_i32 : i32 to vector<1x256xi32>
    %534 = arith.addi %3, %533 : vector<1x256xi32>
    %c0_i32_254 = arith.constant 0 : i32
    %535 = vector.broadcast %c0_i32_254 : i32 to vector<1x256xi32>
    %536 = arith.cmpi sge, %534, %535 : vector<1x256xi32>
    %c9_i32_255 = arith.constant 9 : i32
    %537 = vector.broadcast %c9_i32_255 : i32 to vector<1x256xi32>
    %538 = arith.addi %3, %537 : vector<1x256xi32>
    %c16_i32_256 = arith.constant 16 : i32
    %539 = vector.broadcast %c16_i32_256 : i32 to vector<1x256xi32>
    %540 = arith.cmpi slt, %538, %539 : vector<1x256xi32>
    %541 = arith.andi %536, %540 : vector<1x256xi1>
    %cst_257 = arith.constant 1.000000e+00 : f32
    %cst_258 = arith.constant 0.000000e+00 : f32
    %542 = vector.broadcast %cst_257 : f32 to vector<1x256xf32>
    %543 = vector.broadcast %cst_258 : f32 to vector<1x256xf32>
    %544 = arith.select %541, %542, %543 : vector<1x256xi1>, vector<1x256xf32>
    %c-9_i32_259 = arith.constant -9 : i32
    %545 = vector.broadcast %c-9_i32_259 : i32 to vector<1x256xi32>
    %546 = arith.addi %2, %545 : vector<1x256xi32>
    %c0_i32_260 = arith.constant 0 : i32
    %547 = vector.broadcast %c0_i32_260 : i32 to vector<1x256xi32>
    %548 = arith.cmpi sge, %546, %547 : vector<1x256xi32>
    %c-9_i32_261 = arith.constant -9 : i32
    %549 = vector.broadcast %c-9_i32_261 : i32 to vector<1x256xi32>
    %550 = arith.addi %2, %549 : vector<1x256xi32>
    %c16_i32_262 = arith.constant 16 : i32
    %551 = vector.broadcast %c16_i32_262 : i32 to vector<1x256xi32>
    %552 = arith.cmpi slt, %550, %551 : vector<1x256xi32>
    %553 = arith.andi %548, %552 : vector<1x256xi1>
    %cst_263 = arith.constant 1.000000e+00 : f32
    %cst_264 = arith.constant 0.000000e+00 : f32
    %554 = vector.broadcast %cst_263 : f32 to vector<1x256xf32>
    %555 = vector.broadcast %cst_264 : f32 to vector<1x256xf32>
    %556 = arith.select %553, %554, %555 : vector<1x256xi1>, vector<1x256xf32>
    %c-6_i32_265 = arith.constant -6 : i32
    %557 = vector.broadcast %c-6_i32_265 : i32 to vector<1x256xi32>
    %558 = arith.addi %2, %557 : vector<1x256xi32>
    %c0_i32_266 = arith.constant 0 : i32
    %559 = vector.broadcast %c0_i32_266 : i32 to vector<1x256xi32>
    %560 = arith.cmpi sge, %558, %559 : vector<1x256xi32>
    %c-6_i32_267 = arith.constant -6 : i32
    %561 = vector.broadcast %c-6_i32_267 : i32 to vector<1x256xi32>
    %562 = arith.addi %2, %561 : vector<1x256xi32>
    %c16_i32_268 = arith.constant 16 : i32
    %563 = vector.broadcast %c16_i32_268 : i32 to vector<1x256xi32>
    %564 = arith.cmpi slt, %562, %563 : vector<1x256xi32>
    %565 = arith.andi %560, %564 : vector<1x256xi1>
    %cst_269 = arith.constant 1.000000e+00 : f32
    %cst_270 = arith.constant 0.000000e+00 : f32
    %566 = vector.broadcast %cst_269 : f32 to vector<1x256xf32>
    %567 = vector.broadcast %cst_270 : f32 to vector<1x256xf32>
    %568 = arith.select %565, %566, %567 : vector<1x256xi1>, vector<1x256xf32>
    %c-3_i32_271 = arith.constant -3 : i32
    %569 = vector.broadcast %c-3_i32_271 : i32 to vector<1x256xi32>
    %570 = arith.addi %2, %569 : vector<1x256xi32>
    %c0_i32_272 = arith.constant 0 : i32
    %571 = vector.broadcast %c0_i32_272 : i32 to vector<1x256xi32>
    %572 = arith.cmpi sge, %570, %571 : vector<1x256xi32>
    %c-3_i32_273 = arith.constant -3 : i32
    %573 = vector.broadcast %c-3_i32_273 : i32 to vector<1x256xi32>
    %574 = arith.addi %2, %573 : vector<1x256xi32>
    %c16_i32_274 = arith.constant 16 : i32
    %575 = vector.broadcast %c16_i32_274 : i32 to vector<1x256xi32>
    %576 = arith.cmpi slt, %574, %575 : vector<1x256xi32>
    %577 = arith.andi %572, %576 : vector<1x256xi1>
    %cst_275 = arith.constant 1.000000e+00 : f32
    %cst_276 = arith.constant 0.000000e+00 : f32
    %578 = vector.broadcast %cst_275 : f32 to vector<1x256xf32>
    %579 = vector.broadcast %cst_276 : f32 to vector<1x256xf32>
    %580 = arith.select %577, %578, %579 : vector<1x256xi1>, vector<1x256xf32>
    %c0_i32_277 = arith.constant 0 : i32
    %581 = vector.broadcast %c0_i32_277 : i32 to vector<1x256xi32>
    %582 = arith.addi %2, %581 : vector<1x256xi32>
    %c0_i32_278 = arith.constant 0 : i32
    %583 = vector.broadcast %c0_i32_278 : i32 to vector<1x256xi32>
    %584 = arith.cmpi sge, %582, %583 : vector<1x256xi32>
    %c0_i32_279 = arith.constant 0 : i32
    %585 = vector.broadcast %c0_i32_279 : i32 to vector<1x256xi32>
    %586 = arith.addi %2, %585 : vector<1x256xi32>
    %c16_i32_280 = arith.constant 16 : i32
    %587 = vector.broadcast %c16_i32_280 : i32 to vector<1x256xi32>
    %588 = arith.cmpi slt, %586, %587 : vector<1x256xi32>
    %589 = arith.andi %584, %588 : vector<1x256xi1>
    %cst_281 = arith.constant 1.000000e+00 : f32
    %cst_282 = arith.constant 0.000000e+00 : f32
    %590 = vector.broadcast %cst_281 : f32 to vector<1x256xf32>
    %591 = vector.broadcast %cst_282 : f32 to vector<1x256xf32>
    %592 = arith.select %589, %590, %591 : vector<1x256xi1>, vector<1x256xf32>
    %c3_i32_283 = arith.constant 3 : i32
    %593 = vector.broadcast %c3_i32_283 : i32 to vector<1x256xi32>
    %594 = arith.addi %2, %593 : vector<1x256xi32>
    %c0_i32_284 = arith.constant 0 : i32
    %595 = vector.broadcast %c0_i32_284 : i32 to vector<1x256xi32>
    %596 = arith.cmpi sge, %594, %595 : vector<1x256xi32>
    %c3_i32_285 = arith.constant 3 : i32
    %597 = vector.broadcast %c3_i32_285 : i32 to vector<1x256xi32>
    %598 = arith.addi %2, %597 : vector<1x256xi32>
    %c16_i32_286 = arith.constant 16 : i32
    %599 = vector.broadcast %c16_i32_286 : i32 to vector<1x256xi32>
    %600 = arith.cmpi slt, %598, %599 : vector<1x256xi32>
    %601 = arith.andi %596, %600 : vector<1x256xi1>
    %cst_287 = arith.constant 1.000000e+00 : f32
    %cst_288 = arith.constant 0.000000e+00 : f32
    %602 = vector.broadcast %cst_287 : f32 to vector<1x256xf32>
    %603 = vector.broadcast %cst_288 : f32 to vector<1x256xf32>
    %604 = arith.select %601, %602, %603 : vector<1x256xi1>, vector<1x256xf32>
    %c6_i32_289 = arith.constant 6 : i32
    %605 = vector.broadcast %c6_i32_289 : i32 to vector<1x256xi32>
    %606 = arith.addi %2, %605 : vector<1x256xi32>
    %c0_i32_290 = arith.constant 0 : i32
    %607 = vector.broadcast %c0_i32_290 : i32 to vector<1x256xi32>
    %608 = arith.cmpi sge, %606, %607 : vector<1x256xi32>
    %c6_i32_291 = arith.constant 6 : i32
    %609 = vector.broadcast %c6_i32_291 : i32 to vector<1x256xi32>
    %610 = arith.addi %2, %609 : vector<1x256xi32>
    %c16_i32_292 = arith.constant 16 : i32
    %611 = vector.broadcast %c16_i32_292 : i32 to vector<1x256xi32>
    %612 = arith.cmpi slt, %610, %611 : vector<1x256xi32>
    %613 = arith.andi %608, %612 : vector<1x256xi1>
    %cst_293 = arith.constant 1.000000e+00 : f32
    %cst_294 = arith.constant 0.000000e+00 : f32
    %614 = vector.broadcast %cst_293 : f32 to vector<1x256xf32>
    %615 = vector.broadcast %cst_294 : f32 to vector<1x256xf32>
    %616 = arith.select %613, %614, %615 : vector<1x256xi1>, vector<1x256xf32>
    %c9_i32_295 = arith.constant 9 : i32
    %617 = vector.broadcast %c9_i32_295 : i32 to vector<1x256xi32>
    %618 = arith.addi %2, %617 : vector<1x256xi32>
    %c0_i32_296 = arith.constant 0 : i32
    %619 = vector.broadcast %c0_i32_296 : i32 to vector<1x256xi32>
    %620 = arith.cmpi sge, %618, %619 : vector<1x256xi32>
    %c9_i32_297 = arith.constant 9 : i32
    %621 = vector.broadcast %c9_i32_297 : i32 to vector<1x256xi32>
    %622 = arith.addi %2, %621 : vector<1x256xi32>
    %c16_i32_298 = arith.constant 16 : i32
    %623 = vector.broadcast %c16_i32_298 : i32 to vector<1x256xi32>
    %624 = arith.cmpi slt, %622, %623 : vector<1x256xi32>
    %625 = arith.andi %620, %624 : vector<1x256xi1>
    %cst_299 = arith.constant 1.000000e+00 : f32
    %cst_300 = arith.constant 0.000000e+00 : f32
    %626 = vector.broadcast %cst_299 : f32 to vector<1x256xf32>
    %627 = vector.broadcast %cst_300 : f32 to vector<1x256xf32>
    %628 = arith.select %625, %626, %627 : vector<1x256xi1>, vector<1x256xf32>
    %cst_301 = arith.constant dense<0.000000e+00> : vector<256xf32>
    %629 = vector.multi_reduction <add>, %1, %cst_301 [0] : vector<4x256xf32> to vector<256xf32>
    %630 = vector.shape_cast %629 : vector<256xf32> to vector<1x256xf32>
    %cst_302 = arith.constant 4.000000e+00 : f32
    %631 = vector.broadcast %cst_302 : f32 to vector<1x256xf32>
    %632 = arith.divf %630, %631 : vector<1x256xf32>
    %633 = vector.broadcast %632 : vector<1x256xf32> to vector<4x256xf32>
    %634 = arith.subf %1, %633 : vector<4x256xf32>
    %635 = arith.mulf %634, %634 : vector<4x256xf32>
    %cst_303 = arith.constant dense<0.000000e+00> : vector<256xf32>
    %636 = vector.multi_reduction <add>, %635, %cst_303 [0] : vector<4x256xf32> to vector<256xf32>
    %637 = vector.shape_cast %636 : vector<256xf32> to vector<1x256xf32>
    %cst_304 = arith.constant 4.000000e+00 : f32
    %638 = vector.broadcast %cst_304 : f32 to vector<1x256xf32>
    %639 = arith.divf %637, %638 : vector<1x256xf32>
    %cst_305 = arith.constant 9.99999997E-7 : f32
    %640 = vector.broadcast %cst_305 : f32 to vector<1x256xf32>
    %641 = arith.addf %639, %640 : vector<1x256xf32>
    %642 = math.rsqrt %641 : vector<1x256xf32>
    %643 = vector.broadcast %642 : vector<1x256xf32> to vector<4x256xf32>
    %644 = arith.mulf %634, %643 : vector<4x256xf32>
    %645 = vector.extract_strided_slice %4 {offsets = [0, 0], sizes = [4, 1], strides = [1, 1]} : vector<128x1xf32> to vector<4x1xf32>
    %646 = vector.broadcast %645 : vector<4x1xf32> to vector<4x256xf32>
    %647 = arith.mulf %644, %646 : vector<4x256xf32>
    %648 = vector.extract_strided_slice %4 {offsets = [8, 0], sizes = [4, 1], strides = [1, 1]} : vector<128x1xf32> to vector<4x1xf32>
    %649 = vector.broadcast %648 : vector<4x1xf32> to vector<4x256xf32>
    %650 = arith.addf %647, %649 : vector<4x256xf32>
    %c0_306 = arith.constant 0 : index
    %c0_307 = arith.constant 0 : index
    %651 = vector.load %arg5[%c0_306, %c0_307] : memref<2x4xf32, #tpu.memory_space<vmem>>, vector<2x4xf32>
    %cst_308 = arith.constant dense<0.000000e+00> : vector<2x256xf32>
    %652 = tpu.matmul %651, %650, %cst_308 {dimension_numbers = #tpu.dot_dimension_numbers<[1], [0], [0], [1], [0, 0, 1, 1], [], []>} : vector<2x4xf32>, vector<4x256xf32>, vector<2x256xf32> -> vector<2x256xf32>
    %653 = vector.extract_strided_slice %4 {offsets = [16, 0], sizes = [2, 1], strides = [1, 1]} : vector<128x1xf32> to vector<2x1xf32>
    %654 = vector.broadcast %653 : vector<2x1xf32> to vector<2x256xf32>
    %655 = arith.addf %652, %654 : vector<2x256xf32>
    %c0_309 = arith.constant 0 : index
    %c0_310 = arith.constant 0 : index
    %656 = vector.load %arg6[%c0_309, %c0_310] : memref<2x4xf32, #tpu.memory_space<vmem>>, vector<2x4xf32>
    %cst_311 = arith.constant dense<0.000000e+00> : vector<2x256xf32>
    %657 = tpu.matmul %656, %650, %cst_311 {dimension_numbers = #tpu.dot_dimension_numbers<[1], [0], [0], [1], [0, 0, 1, 1], [], []>} : vector<2x4xf32>, vector<4x256xf32>, vector<2x256xf32> -> vector<2x256xf32>
    %658 = vector.extract_strided_slice %4 {offsets = [24, 0], sizes = [2, 1], strides = [1, 1]} : vector<128x1xf32> to vector<2x1xf32>
    %659 = vector.broadcast %658 : vector<2x1xf32> to vector<2x256xf32>
    %660 = arith.addf %657, %659 : vector<2x256xf32>
    %c0_312 = arith.constant 0 : index
    %c0_313 = arith.constant 0 : index
    %661 = vector.load %arg7[%c0_312, %c0_313] : memref<2x4xf32, #tpu.memory_space<vmem>>, vector<2x4xf32>
    %cst_314 = arith.constant dense<0.000000e+00> : vector<2x256xf32>
    %662 = tpu.matmul %661, %650, %cst_314 {dimension_numbers = #tpu.dot_dimension_numbers<[1], [0], [0], [1], [0, 0, 1, 1], [], []>} : vector<2x4xf32>, vector<4x256xf32>, vector<2x256xf32> -> vector<2x256xf32>
    %663 = vector.extract_strided_slice %4 {offsets = [32, 0], sizes = [2, 1], strides = [1, 1]} : vector<128x1xf32> to vector<2x1xf32>
    %664 = vector.broadcast %663 : vector<2x1xf32> to vector<2x256xf32>
    %665 = arith.addf %662, %664 : vector<2x256xf32>
    %c0_315 = arith.constant 0 : index
    %c0_316 = arith.constant 0 : index
    %666 = vector.load %arg8[%c0_315, %c0_316] : memref<2x4xf32, #tpu.memory_space<vmem>>, vector<2x4xf32>
    %cst_317 = arith.constant dense<0.000000e+00> : vector<2x256xf32>
    %667 = tpu.matmul %666, %650, %cst_317 {dimension_numbers = #tpu.dot_dimension_numbers<[1], [0], [0], [1], [0, 0, 1, 1], [], []>} : vector<2x4xf32>, vector<4x256xf32>, vector<2x256xf32> -> vector<2x256xf32>
    %668 = vector.extract_strided_slice %4 {offsets = [40, 0], sizes = [2, 1], strides = [1, 1]} : vector<128x1xf32> to vector<2x1xf32>
    %669 = vector.broadcast %668 : vector<2x1xf32> to vector<2x256xf32>
    %670 = arith.addf %667, %669 : vector<2x256xf32>
    %c3_i32_318 = arith.constant 3 : i32
    %671 = tpu.dynamic_rotate %655 by %c3_i32_318 dim 1 : vector<2x256xf32>, i32 -> vector<2x256xf32>
    %672 = vector.broadcast %16 : vector<1x256xf32> to vector<2x256xf32>
    %673 = arith.mulf %672, %671 : vector<2x256xf32>
    %c2_i32_319 = arith.constant 2 : i32
    %674 = tpu.dynamic_rotate %655 by %c2_i32_319 dim 1 : vector<2x256xf32>, i32 -> vector<2x256xf32>
    %675 = vector.broadcast %28 : vector<1x256xf32> to vector<2x256xf32>
    %676 = arith.mulf %675, %674 : vector<2x256xf32>
    %c1_i32_320 = arith.constant 1 : i32
    %677 = tpu.dynamic_rotate %655 by %c1_i32_320 dim 1 : vector<2x256xf32>, i32 -> vector<2x256xf32>
    %678 = vector.broadcast %40 : vector<1x256xf32> to vector<2x256xf32>
    %679 = arith.mulf %678, %677 : vector<2x256xf32>
    %680 = vector.broadcast %52 : vector<1x256xf32> to vector<2x256xf32>
    %681 = arith.mulf %680, %655 : vector<2x256xf32>
    %c255_i32 = arith.constant 255 : i32
    %682 = tpu.dynamic_rotate %655 by %c255_i32 dim 1 : vector<2x256xf32>, i32 -> vector<2x256xf32>
    %683 = vector.broadcast %64 : vector<1x256xf32> to vector<2x256xf32>
    %684 = arith.mulf %683, %682 : vector<2x256xf32>
    %c254_i32 = arith.constant 254 : i32
    %685 = tpu.dynamic_rotate %655 by %c254_i32 dim 1 : vector<2x256xf32>, i32 -> vector<2x256xf32>
    %686 = vector.broadcast %76 : vector<1x256xf32> to vector<2x256xf32>
    %687 = arith.mulf %686, %685 : vector<2x256xf32>
    %c253_i32 = arith.constant 253 : i32
    %688 = tpu.dynamic_rotate %655 by %c253_i32 dim 1 : vector<2x256xf32>, i32 -> vector<2x256xf32>
    %689 = vector.broadcast %88 : vector<1x256xf32> to vector<2x256xf32>
    %690 = arith.mulf %689, %688 : vector<2x256xf32>
    %c0_321 = arith.constant 0 : index
    %c0_322 = arith.constant 0 : index
    %c0_323 = arith.constant 0 : index
    %691 = vector.load %arg9[%c0_321, %c0_322, %c0_323] : memref<49x2x1xf32, #tpu.memory_space<vmem>>, vector<1x2x1xf32>
    %692 = vector.shape_cast %691 : vector<1x2x1xf32> to vector<2x1xf32>
    %693 = vector.broadcast %692 : vector<2x1xf32> to vector<2x256xf32>
    %694 = arith.mulf %673, %693 : vector<2x256xf32>
    %c1 = arith.constant 1 : index
    %c0_324 = arith.constant 0 : index
    %c0_325 = arith.constant 0 : index
    %695 = vector.load %arg9[%c1, %c0_324, %c0_325] : memref<49x2x1xf32, #tpu.memory_space<vmem>>, vector<1x2x1xf32>
    %696 = vector.shape_cast %695 : vector<1x2x1xf32> to vector<2x1xf32>
    %697 = vector.broadcast %696 : vector<2x1xf32> to vector<2x256xf32>
    %698 = arith.mulf %676, %697 : vector<2x256xf32>
    %699 = arith.addf %694, %698 : vector<2x256xf32>
    %c2 = arith.constant 2 : index
    %c0_326 = arith.constant 0 : index
    %c0_327 = arith.constant 0 : index
    %700 = vector.load %arg9[%c2, %c0_326, %c0_327] : memref<49x2x1xf32, #tpu.memory_space<vmem>>, vector<1x2x1xf32>
    %701 = vector.shape_cast %700 : vector<1x2x1xf32> to vector<2x1xf32>
    %702 = vector.broadcast %701 : vector<2x1xf32> to vector<2x256xf32>
    %703 = arith.mulf %679, %702 : vector<2x256xf32>
    %704 = arith.addf %699, %703 : vector<2x256xf32>
    %c3 = arith.constant 3 : index
    %c0_328 = arith.constant 0 : index
    %c0_329 = arith.constant 0 : index
    %705 = vector.load %arg9[%c3, %c0_328, %c0_329] : memref<49x2x1xf32, #tpu.memory_space<vmem>>, vector<1x2x1xf32>
    %706 = vector.shape_cast %705 : vector<1x2x1xf32> to vector<2x1xf32>
    %707 = vector.broadcast %706 : vector<2x1xf32> to vector<2x256xf32>
    %708 = arith.mulf %681, %707 : vector<2x256xf32>
    %709 = arith.addf %704, %708 : vector<2x256xf32>
    %c4 = arith.constant 4 : index
    %c0_330 = arith.constant 0 : index
    %c0_331 = arith.constant 0 : index
    %710 = vector.load %arg9[%c4, %c0_330, %c0_331] : memref<49x2x1xf32, #tpu.memory_space<vmem>>, vector<1x2x1xf32>
    %711 = vector.shape_cast %710 : vector<1x2x1xf32> to vector<2x1xf32>
    %712 = vector.broadcast %711 : vector<2x1xf32> to vector<2x256xf32>
    %713 = arith.mulf %684, %712 : vector<2x256xf32>
    %714 = arith.addf %709, %713 : vector<2x256xf32>
    %c5 = arith.constant 5 : index
    %c0_332 = arith.constant 0 : index
    %c0_333 = arith.constant 0 : index
    %715 = vector.load %arg9[%c5, %c0_332, %c0_333] : memref<49x2x1xf32, #tpu.memory_space<vmem>>, vector<1x2x1xf32>
    %716 = vector.shape_cast %715 : vector<1x2x1xf32> to vector<2x1xf32>
    %717 = vector.broadcast %716 : vector<2x1xf32> to vector<2x256xf32>
    %718 = arith.mulf %687, %717 : vector<2x256xf32>
    %719 = arith.addf %714, %718 : vector<2x256xf32>
    %c6 = arith.constant 6 : index
    %c0_334 = arith.constant 0 : index
    %c0_335 = arith.constant 0 : index
    %720 = vector.load %arg9[%c6, %c0_334, %c0_335] : memref<49x2x1xf32, #tpu.memory_space<vmem>>, vector<1x2x1xf32>
    %721 = vector.shape_cast %720 : vector<1x2x1xf32> to vector<2x1xf32>
    %722 = vector.broadcast %721 : vector<2x1xf32> to vector<2x256xf32>
    %723 = arith.mulf %690, %722 : vector<2x256xf32>
    %724 = arith.addf %719, %723 : vector<2x256xf32>
    %c48_i32 = arith.constant 48 : i32
    %725 = tpu.dynamic_rotate %724 by %c48_i32 dim 1 : vector<2x256xf32>, i32 -> vector<2x256xf32>
    %726 = vector.broadcast %100 : vector<1x256xf32> to vector<2x256xf32>
    %727 = arith.mulf %726, %725 : vector<2x256xf32>
    %c7 = arith.constant 7 : index
    %c0_336 = arith.constant 0 : index
    %c0_337 = arith.constant 0 : index
    %728 = vector.load %arg9[%c7, %c0_336, %c0_337] : memref<49x2x1xf32, #tpu.memory_space<vmem>>, vector<1x2x1xf32>
    %729 = vector.shape_cast %728 : vector<1x2x1xf32> to vector<2x1xf32>
    %730 = vector.broadcast %729 : vector<2x1xf32> to vector<2x256xf32>
    %731 = arith.mulf %673, %730 : vector<2x256xf32>
    %c8 = arith.constant 8 : index
    %c0_338 = arith.constant 0 : index
    %c0_339 = arith.constant 0 : index
    %732 = vector.load %arg9[%c8, %c0_338, %c0_339] : memref<49x2x1xf32, #tpu.memory_space<vmem>>, vector<1x2x1xf32>
    %733 = vector.shape_cast %732 : vector<1x2x1xf32> to vector<2x1xf32>
    %734 = vector.broadcast %733 : vector<2x1xf32> to vector<2x256xf32>
    %735 = arith.mulf %676, %734 : vector<2x256xf32>
    %736 = arith.addf %731, %735 : vector<2x256xf32>
    %c9 = arith.constant 9 : index
    %c0_340 = arith.constant 0 : index
    %c0_341 = arith.constant 0 : index
    %737 = vector.load %arg9[%c9, %c0_340, %c0_341] : memref<49x2x1xf32, #tpu.memory_space<vmem>>, vector<1x2x1xf32>
    %738 = vector.shape_cast %737 : vector<1x2x1xf32> to vector<2x1xf32>
    %739 = vector.broadcast %738 : vector<2x1xf32> to vector<2x256xf32>
    %740 = arith.mulf %679, %739 : vector<2x256xf32>
    %741 = arith.addf %736, %740 : vector<2x256xf32>
    %c10 = arith.constant 10 : index
    %c0_342 = arith.constant 0 : index
    %c0_343 = arith.constant 0 : index
    %742 = vector.load %arg9[%c10, %c0_342, %c0_343] : memref<49x2x1xf32, #tpu.memory_space<vmem>>, vector<1x2x1xf32>
    %743 = vector.shape_cast %742 : vector<1x2x1xf32> to vector<2x1xf32>
    %744 = vector.broadcast %743 : vector<2x1xf32> to vector<2x256xf32>
    %745 = arith.mulf %681, %744 : vector<2x256xf32>
    %746 = arith.addf %741, %745 : vector<2x256xf32>
    %c11 = arith.constant 11 : index
    %c0_344 = arith.constant 0 : index
    %c0_345 = arith.constant 0 : index
    %747 = vector.load %arg9[%c11, %c0_344, %c0_345] : memref<49x2x1xf32, #tpu.memory_space<vmem>>, vector<1x2x1xf32>
    %748 = vector.shape_cast %747 : vector<1x2x1xf32> to vector<2x1xf32>
    %749 = vector.broadcast %748 : vector<2x1xf32> to vector<2x256xf32>
    %750 = arith.mulf %684, %749 : vector<2x256xf32>
    %751 = arith.addf %746, %750 : vector<2x256xf32>
    %c12 = arith.constant 12 : index
    %c0_346 = arith.constant 0 : index
    %c0_347 = arith.constant 0 : index
    %752 = vector.load %arg9[%c12, %c0_346, %c0_347] : memref<49x2x1xf32, #tpu.memory_space<vmem>>, vector<1x2x1xf32>
    %753 = vector.shape_cast %752 : vector<1x2x1xf32> to vector<2x1xf32>
    %754 = vector.broadcast %753 : vector<2x1xf32> to vector<2x256xf32>
    %755 = arith.mulf %687, %754 : vector<2x256xf32>
    %756 = arith.addf %751, %755 : vector<2x256xf32>
    %c13 = arith.constant 13 : index
    %c0_348 = arith.constant 0 : index
    %c0_349 = arith.constant 0 : index
    %757 = vector.load %arg9[%c13, %c0_348, %c0_349] : memref<49x2x1xf32, #tpu.memory_space<vmem>>, vector<1x2x1xf32>
    %758 = vector.shape_cast %757 : vector<1x2x1xf32> to vector<2x1xf32>
    %759 = vector.broadcast %758 : vector<2x1xf32> to vector<2x256xf32>
    %760 = arith.mulf %690, %759 : vector<2x256xf32>
    %761 = arith.addf %756, %760 : vector<2x256xf32>
    %c32_i32 = arith.constant 32 : i32
    %762 = tpu.dynamic_rotate %761 by %c32_i32 dim 1 : vector<2x256xf32>, i32 -> vector<2x256xf32>
    %763 = vector.broadcast %112 : vector<1x256xf32> to vector<2x256xf32>
    %764 = arith.mulf %763, %762 : vector<2x256xf32>
    %765 = arith.addf %727, %764 : vector<2x256xf32>
    %c14 = arith.constant 14 : index
    %c0_350 = arith.constant 0 : index
    %c0_351 = arith.constant 0 : index
    %766 = vector.load %arg9[%c14, %c0_350, %c0_351] : memref<49x2x1xf32, #tpu.memory_space<vmem>>, vector<1x2x1xf32>
    %767 = vector.shape_cast %766 : vector<1x2x1xf32> to vector<2x1xf32>
    %768 = vector.broadcast %767 : vector<2x1xf32> to vector<2x256xf32>
    %769 = arith.mulf %673, %768 : vector<2x256xf32>
    %c15 = arith.constant 15 : index
    %c0_352 = arith.constant 0 : index
    %c0_353 = arith.constant 0 : index
    %770 = vector.load %arg9[%c15, %c0_352, %c0_353] : memref<49x2x1xf32, #tpu.memory_space<vmem>>, vector<1x2x1xf32>
    %771 = vector.shape_cast %770 : vector<1x2x1xf32> to vector<2x1xf32>
    %772 = vector.broadcast %771 : vector<2x1xf32> to vector<2x256xf32>
    %773 = arith.mulf %676, %772 : vector<2x256xf32>
    %774 = arith.addf %769, %773 : vector<2x256xf32>
    %c16 = arith.constant 16 : index
    %c0_354 = arith.constant 0 : index
    %c0_355 = arith.constant 0 : index
    %775 = vector.load %arg9[%c16, %c0_354, %c0_355] : memref<49x2x1xf32, #tpu.memory_space<vmem>>, vector<1x2x1xf32>
    %776 = vector.shape_cast %775 : vector<1x2x1xf32> to vector<2x1xf32>
    %777 = vector.broadcast %776 : vector<2x1xf32> to vector<2x256xf32>
    %778 = arith.mulf %679, %777 : vector<2x256xf32>
    %779 = arith.addf %774, %778 : vector<2x256xf32>
    %c17 = arith.constant 17 : index
    %c0_356 = arith.constant 0 : index
    %c0_357 = arith.constant 0 : index
    %780 = vector.load %arg9[%c17, %c0_356, %c0_357] : memref<49x2x1xf32, #tpu.memory_space<vmem>>, vector<1x2x1xf32>
    %781 = vector.shape_cast %780 : vector<1x2x1xf32> to vector<2x1xf32>
    %782 = vector.broadcast %781 : vector<2x1xf32> to vector<2x256xf32>
    %783 = arith.mulf %681, %782 : vector<2x256xf32>
    %784 = arith.addf %779, %783 : vector<2x256xf32>
    %c18 = arith.constant 18 : index
    %c0_358 = arith.constant 0 : index
    %c0_359 = arith.constant 0 : index
    %785 = vector.load %arg9[%c18, %c0_358, %c0_359] : memref<49x2x1xf32, #tpu.memory_space<vmem>>, vector<1x2x1xf32>
    %786 = vector.shape_cast %785 : vector<1x2x1xf32> to vector<2x1xf32>
    %787 = vector.broadcast %786 : vector<2x1xf32> to vector<2x256xf32>
    %788 = arith.mulf %684, %787 : vector<2x256xf32>
    %789 = arith.addf %784, %788 : vector<2x256xf32>
    %c19 = arith.constant 19 : index
    %c0_360 = arith.constant 0 : index
    %c0_361 = arith.constant 0 : index
    %790 = vector.load %arg9[%c19, %c0_360, %c0_361] : memref<49x2x1xf32, #tpu.memory_space<vmem>>, vector<1x2x1xf32>
    %791 = vector.shape_cast %790 : vector<1x2x1xf32> to vector<2x1xf32>
    %792 = vector.broadcast %791 : vector<2x1xf32> to vector<2x256xf32>
    %793 = arith.mulf %687, %792 : vector<2x256xf32>
    %794 = arith.addf %789, %793 : vector<2x256xf32>
    %c20 = arith.constant 20 : index
    %c0_362 = arith.constant 0 : index
    %c0_363 = arith.constant 0 : index
    %795 = vector.load %arg9[%c20, %c0_362, %c0_363] : memref<49x2x1xf32, #tpu.memory_space<vmem>>, vector<1x2x1xf32>
    %796 = vector.shape_cast %795 : vector<1x2x1xf32> to vector<2x1xf32>
    %797 = vector.broadcast %796 : vector<2x1xf32> to vector<2x256xf32>
    %798 = arith.mulf %690, %797 : vector<2x256xf32>
    %799 = arith.addf %794, %798 : vector<2x256xf32>
    %c16_i32_364 = arith.constant 16 : i32
    %800 = tpu.dynamic_rotate %799 by %c16_i32_364 dim 1 : vector<2x256xf32>, i32 -> vector<2x256xf32>
    %801 = vector.broadcast %124 : vector<1x256xf32> to vector<2x256xf32>
    %802 = arith.mulf %801, %800 : vector<2x256xf32>
    %803 = arith.addf %765, %802 : vector<2x256xf32>
    %c21 = arith.constant 21 : index
    %c0_365 = arith.constant 0 : index
    %c0_366 = arith.constant 0 : index
    %804 = vector.load %arg9[%c21, %c0_365, %c0_366] : memref<49x2x1xf32, #tpu.memory_space<vmem>>, vector<1x2x1xf32>
    %805 = vector.shape_cast %804 : vector<1x2x1xf32> to vector<2x1xf32>
    %806 = vector.broadcast %805 : vector<2x1xf32> to vector<2x256xf32>
    %807 = arith.mulf %673, %806 : vector<2x256xf32>
    %c22 = arith.constant 22 : index
    %c0_367 = arith.constant 0 : index
    %c0_368 = arith.constant 0 : index
    %808 = vector.load %arg9[%c22, %c0_367, %c0_368] : memref<49x2x1xf32, #tpu.memory_space<vmem>>, vector<1x2x1xf32>
    %809 = vector.shape_cast %808 : vector<1x2x1xf32> to vector<2x1xf32>
    %810 = vector.broadcast %809 : vector<2x1xf32> to vector<2x256xf32>
    %811 = arith.mulf %676, %810 : vector<2x256xf32>
    %812 = arith.addf %807, %811 : vector<2x256xf32>
    %c23 = arith.constant 23 : index
    %c0_369 = arith.constant 0 : index
    %c0_370 = arith.constant 0 : index
    %813 = vector.load %arg9[%c23, %c0_369, %c0_370] : memref<49x2x1xf32, #tpu.memory_space<vmem>>, vector<1x2x1xf32>
    %814 = vector.shape_cast %813 : vector<1x2x1xf32> to vector<2x1xf32>
    %815 = vector.broadcast %814 : vector<2x1xf32> to vector<2x256xf32>
    %816 = arith.mulf %679, %815 : vector<2x256xf32>
    %817 = arith.addf %812, %816 : vector<2x256xf32>
    %c24 = arith.constant 24 : index
    %c0_371 = arith.constant 0 : index
    %c0_372 = arith.constant 0 : index
    %818 = vector.load %arg9[%c24, %c0_371, %c0_372] : memref<49x2x1xf32, #tpu.memory_space<vmem>>, vector<1x2x1xf32>
    %819 = vector.shape_cast %818 : vector<1x2x1xf32> to vector<2x1xf32>
    %820 = vector.broadcast %819 : vector<2x1xf32> to vector<2x256xf32>
    %821 = arith.mulf %681, %820 : vector<2x256xf32>
    %822 = arith.addf %817, %821 : vector<2x256xf32>
    %c25 = arith.constant 25 : index
    %c0_373 = arith.constant 0 : index
    %c0_374 = arith.constant 0 : index
    %823 = vector.load %arg9[%c25, %c0_373, %c0_374] : memref<49x2x1xf32, #tpu.memory_space<vmem>>, vector<1x2x1xf32>
    %824 = vector.shape_cast %823 : vector<1x2x1xf32> to vector<2x1xf32>
    %825 = vector.broadcast %824 : vector<2x1xf32> to vector<2x256xf32>
    %826 = arith.mulf %684, %825 : vector<2x256xf32>
    %827 = arith.addf %822, %826 : vector<2x256xf32>
    %c26 = arith.constant 26 : index
    %c0_375 = arith.constant 0 : index
    %c0_376 = arith.constant 0 : index
    %828 = vector.load %arg9[%c26, %c0_375, %c0_376] : memref<49x2x1xf32, #tpu.memory_space<vmem>>, vector<1x2x1xf32>
    %829 = vector.shape_cast %828 : vector<1x2x1xf32> to vector<2x1xf32>
    %830 = vector.broadcast %829 : vector<2x1xf32> to vector<2x256xf32>
    %831 = arith.mulf %687, %830 : vector<2x256xf32>
    %832 = arith.addf %827, %831 : vector<2x256xf32>
    %c27 = arith.constant 27 : index
    %c0_377 = arith.constant 0 : index
    %c0_378 = arith.constant 0 : index
    %833 = vector.load %arg9[%c27, %c0_377, %c0_378] : memref<49x2x1xf32, #tpu.memory_space<vmem>>, vector<1x2x1xf32>
    %834 = vector.shape_cast %833 : vector<1x2x1xf32> to vector<2x1xf32>
    %835 = vector.broadcast %834 : vector<2x1xf32> to vector<2x256xf32>
    %836 = arith.mulf %690, %835 : vector<2x256xf32>
    %837 = arith.addf %832, %836 : vector<2x256xf32>
    %838 = vector.broadcast %136 : vector<1x256xf32> to vector<2x256xf32>
    %839 = arith.mulf %838, %837 : vector<2x256xf32>
    %840 = arith.addf %803, %839 : vector<2x256xf32>
    %c28 = arith.constant 28 : index
    %c0_379 = arith.constant 0 : index
    %c0_380 = arith.constant 0 : index
    %841 = vector.load %arg9[%c28, %c0_379, %c0_380] : memref<49x2x1xf32, #tpu.memory_space<vmem>>, vector<1x2x1xf32>
    %842 = vector.shape_cast %841 : vector<1x2x1xf32> to vector<2x1xf32>
    %843 = vector.broadcast %842 : vector<2x1xf32> to vector<2x256xf32>
    %844 = arith.mulf %673, %843 : vector<2x256xf32>
    %c29 = arith.constant 29 : index
    %c0_381 = arith.constant 0 : index
    %c0_382 = arith.constant 0 : index
    %845 = vector.load %arg9[%c29, %c0_381, %c0_382] : memref<49x2x1xf32, #tpu.memory_space<vmem>>, vector<1x2x1xf32>
    %846 = vector.shape_cast %845 : vector<1x2x1xf32> to vector<2x1xf32>
    %847 = vector.broadcast %846 : vector<2x1xf32> to vector<2x256xf32>
    %848 = arith.mulf %676, %847 : vector<2x256xf32>
    %849 = arith.addf %844, %848 : vector<2x256xf32>
    %c30 = arith.constant 30 : index
    %c0_383 = arith.constant 0 : index
    %c0_384 = arith.constant 0 : index
    %850 = vector.load %arg9[%c30, %c0_383, %c0_384] : memref<49x2x1xf32, #tpu.memory_space<vmem>>, vector<1x2x1xf32>
    %851 = vector.shape_cast %850 : vector<1x2x1xf32> to vector<2x1xf32>
    %852 = vector.broadcast %851 : vector<2x1xf32> to vector<2x256xf32>
    %853 = arith.mulf %679, %852 : vector<2x256xf32>
    %854 = arith.addf %849, %853 : vector<2x256xf32>
    %c31 = arith.constant 31 : index
    %c0_385 = arith.constant 0 : index
    %c0_386 = arith.constant 0 : index
    %855 = vector.load %arg9[%c31, %c0_385, %c0_386] : memref<49x2x1xf32, #tpu.memory_space<vmem>>, vector<1x2x1xf32>
    %856 = vector.shape_cast %855 : vector<1x2x1xf32> to vector<2x1xf32>
    %857 = vector.broadcast %856 : vector<2x1xf32> to vector<2x256xf32>
    %858 = arith.mulf %681, %857 : vector<2x256xf32>
    %859 = arith.addf %854, %858 : vector<2x256xf32>
    %c32 = arith.constant 32 : index
    %c0_387 = arith.constant 0 : index
    %c0_388 = arith.constant 0 : index
    %860 = vector.load %arg9[%c32, %c0_387, %c0_388] : memref<49x2x1xf32, #tpu.memory_space<vmem>>, vector<1x2x1xf32>
    %861 = vector.shape_cast %860 : vector<1x2x1xf32> to vector<2x1xf32>
    %862 = vector.broadcast %861 : vector<2x1xf32> to vector<2x256xf32>
    %863 = arith.mulf %684, %862 : vector<2x256xf32>
    %864 = arith.addf %859, %863 : vector<2x256xf32>
    %c33 = arith.constant 33 : index
    %c0_389 = arith.constant 0 : index
    %c0_390 = arith.constant 0 : index
    %865 = vector.load %arg9[%c33, %c0_389, %c0_390] : memref<49x2x1xf32, #tpu.memory_space<vmem>>, vector<1x2x1xf32>
    %866 = vector.shape_cast %865 : vector<1x2x1xf32> to vector<2x1xf32>
    %867 = vector.broadcast %866 : vector<2x1xf32> to vector<2x256xf32>
    %868 = arith.mulf %687, %867 : vector<2x256xf32>
    %869 = arith.addf %864, %868 : vector<2x256xf32>
    %c34 = arith.constant 34 : index
    %c0_391 = arith.constant 0 : index
    %c0_392 = arith.constant 0 : index
    %870 = vector.load %arg9[%c34, %c0_391, %c0_392] : memref<49x2x1xf32, #tpu.memory_space<vmem>>, vector<1x2x1xf32>
    %871 = vector.shape_cast %870 : vector<1x2x1xf32> to vector<2x1xf32>
    %872 = vector.broadcast %871 : vector<2x1xf32> to vector<2x256xf32>
    %873 = arith.mulf %690, %872 : vector<2x256xf32>
    %874 = arith.addf %869, %873 : vector<2x256xf32>
    %c240_i32 = arith.constant 240 : i32
    %875 = tpu.dynamic_rotate %874 by %c240_i32 dim 1 : vector<2x256xf32>, i32 -> vector<2x256xf32>
    %876 = vector.broadcast %148 : vector<1x256xf32> to vector<2x256xf32>
    %877 = arith.mulf %876, %875 : vector<2x256xf32>
    %878 = arith.addf %840, %877 : vector<2x256xf32>
    %c35 = arith.constant 35 : index
    %c0_393 = arith.constant 0 : index
    %c0_394 = arith.constant 0 : index
    %879 = vector.load %arg9[%c35, %c0_393, %c0_394] : memref<49x2x1xf32, #tpu.memory_space<vmem>>, vector<1x2x1xf32>
    %880 = vector.shape_cast %879 : vector<1x2x1xf32> to vector<2x1xf32>
    %881 = vector.broadcast %880 : vector<2x1xf32> to vector<2x256xf32>
    %882 = arith.mulf %673, %881 : vector<2x256xf32>
    %c36 = arith.constant 36 : index
    %c0_395 = arith.constant 0 : index
    %c0_396 = arith.constant 0 : index
    %883 = vector.load %arg9[%c36, %c0_395, %c0_396] : memref<49x2x1xf32, #tpu.memory_space<vmem>>, vector<1x2x1xf32>
    %884 = vector.shape_cast %883 : vector<1x2x1xf32> to vector<2x1xf32>
    %885 = vector.broadcast %884 : vector<2x1xf32> to vector<2x256xf32>
    %886 = arith.mulf %676, %885 : vector<2x256xf32>
    %887 = arith.addf %882, %886 : vector<2x256xf32>
    %c37 = arith.constant 37 : index
    %c0_397 = arith.constant 0 : index
    %c0_398 = arith.constant 0 : index
    %888 = vector.load %arg9[%c37, %c0_397, %c0_398] : memref<49x2x1xf32, #tpu.memory_space<vmem>>, vector<1x2x1xf32>
    %889 = vector.shape_cast %888 : vector<1x2x1xf32> to vector<2x1xf32>
    %890 = vector.broadcast %889 : vector<2x1xf32> to vector<2x256xf32>
    %891 = arith.mulf %679, %890 : vector<2x256xf32>
    %892 = arith.addf %887, %891 : vector<2x256xf32>
    %c38 = arith.constant 38 : index
    %c0_399 = arith.constant 0 : index
    %c0_400 = arith.constant 0 : index
    %893 = vector.load %arg9[%c38, %c0_399, %c0_400] : memref<49x2x1xf32, #tpu.memory_space<vmem>>, vector<1x2x1xf32>
    %894 = vector.shape_cast %893 : vector<1x2x1xf32> to vector<2x1xf32>
    %895 = vector.broadcast %894 : vector<2x1xf32> to vector<2x256xf32>
    %896 = arith.mulf %681, %895 : vector<2x256xf32>
    %897 = arith.addf %892, %896 : vector<2x256xf32>
    %c39 = arith.constant 39 : index
    %c0_401 = arith.constant 0 : index
    %c0_402 = arith.constant 0 : index
    %898 = vector.load %arg9[%c39, %c0_401, %c0_402] : memref<49x2x1xf32, #tpu.memory_space<vmem>>, vector<1x2x1xf32>
    %899 = vector.shape_cast %898 : vector<1x2x1xf32> to vector<2x1xf32>
    %900 = vector.broadcast %899 : vector<2x1xf32> to vector<2x256xf32>
    %901 = arith.mulf %684, %900 : vector<2x256xf32>
    %902 = arith.addf %897, %901 : vector<2x256xf32>
    %c40 = arith.constant 40 : index
    %c0_403 = arith.constant 0 : index
    %c0_404 = arith.constant 0 : index
    %903 = vector.load %arg9[%c40, %c0_403, %c0_404] : memref<49x2x1xf32, #tpu.memory_space<vmem>>, vector<1x2x1xf32>
    %904 = vector.shape_cast %903 : vector<1x2x1xf32> to vector<2x1xf32>
    %905 = vector.broadcast %904 : vector<2x1xf32> to vector<2x256xf32>
    %906 = arith.mulf %687, %905 : vector<2x256xf32>
    %907 = arith.addf %902, %906 : vector<2x256xf32>
    %c41 = arith.constant 41 : index
    %c0_405 = arith.constant 0 : index
    %c0_406 = arith.constant 0 : index
    %908 = vector.load %arg9[%c41, %c0_405, %c0_406] : memref<49x2x1xf32, #tpu.memory_space<vmem>>, vector<1x2x1xf32>
    %909 = vector.shape_cast %908 : vector<1x2x1xf32> to vector<2x1xf32>
    %910 = vector.broadcast %909 : vector<2x1xf32> to vector<2x256xf32>
    %911 = arith.mulf %690, %910 : vector<2x256xf32>
    %912 = arith.addf %907, %911 : vector<2x256xf32>
    %c224_i32 = arith.constant 224 : i32
    %913 = tpu.dynamic_rotate %912 by %c224_i32 dim 1 : vector<2x256xf32>, i32 -> vector<2x256xf32>
    %914 = vector.broadcast %160 : vector<1x256xf32> to vector<2x256xf32>
    %915 = arith.mulf %914, %913 : vector<2x256xf32>
    %916 = arith.addf %878, %915 : vector<2x256xf32>
    %c42 = arith.constant 42 : index
    %c0_407 = arith.constant 0 : index
    %c0_408 = arith.constant 0 : index
    %917 = vector.load %arg9[%c42, %c0_407, %c0_408] : memref<49x2x1xf32, #tpu.memory_space<vmem>>, vector<1x2x1xf32>
    %918 = vector.shape_cast %917 : vector<1x2x1xf32> to vector<2x1xf32>
    %919 = vector.broadcast %918 : vector<2x1xf32> to vector<2x256xf32>
    %920 = arith.mulf %673, %919 : vector<2x256xf32>
    %c43 = arith.constant 43 : index
    %c0_409 = arith.constant 0 : index
    %c0_410 = arith.constant 0 : index
    %921 = vector.load %arg9[%c43, %c0_409, %c0_410] : memref<49x2x1xf32, #tpu.memory_space<vmem>>, vector<1x2x1xf32>
    %922 = vector.shape_cast %921 : vector<1x2x1xf32> to vector<2x1xf32>
    %923 = vector.broadcast %922 : vector<2x1xf32> to vector<2x256xf32>
    %924 = arith.mulf %676, %923 : vector<2x256xf32>
    %925 = arith.addf %920, %924 : vector<2x256xf32>
    %c44 = arith.constant 44 : index
    %c0_411 = arith.constant 0 : index
    %c0_412 = arith.constant 0 : index
    %926 = vector.load %arg9[%c44, %c0_411, %c0_412] : memref<49x2x1xf32, #tpu.memory_space<vmem>>, vector<1x2x1xf32>
    %927 = vector.shape_cast %926 : vector<1x2x1xf32> to vector<2x1xf32>
    %928 = vector.broadcast %927 : vector<2x1xf32> to vector<2x256xf32>
    %929 = arith.mulf %679, %928 : vector<2x256xf32>
    %930 = arith.addf %925, %929 : vector<2x256xf32>
    %c45 = arith.constant 45 : index
    %c0_413 = arith.constant 0 : index
    %c0_414 = arith.constant 0 : index
    %931 = vector.load %arg9[%c45, %c0_413, %c0_414] : memref<49x2x1xf32, #tpu.memory_space<vmem>>, vector<1x2x1xf32>
    %932 = vector.shape_cast %931 : vector<1x2x1xf32> to vector<2x1xf32>
    %933 = vector.broadcast %932 : vector<2x1xf32> to vector<2x256xf32>
    %934 = arith.mulf %681, %933 : vector<2x256xf32>
    %935 = arith.addf %930, %934 : vector<2x256xf32>
    %c46 = arith.constant 46 : index
    %c0_415 = arith.constant 0 : index
    %c0_416 = arith.constant 0 : index
    %936 = vector.load %arg9[%c46, %c0_415, %c0_416] : memref<49x2x1xf32, #tpu.memory_space<vmem>>, vector<1x2x1xf32>
    %937 = vector.shape_cast %936 : vector<1x2x1xf32> to vector<2x1xf32>
    %938 = vector.broadcast %937 : vector<2x1xf32> to vector<2x256xf32>
    %939 = arith.mulf %684, %938 : vector<2x256xf32>
    %940 = arith.addf %935, %939 : vector<2x256xf32>
    %c47 = arith.constant 47 : index
    %c0_417 = arith.constant 0 : index
    %c0_418 = arith.constant 0 : index
    %941 = vector.load %arg9[%c47, %c0_417, %c0_418] : memref<49x2x1xf32, #tpu.memory_space<vmem>>, vector<1x2x1xf32>
    %942 = vector.shape_cast %941 : vector<1x2x1xf32> to vector<2x1xf32>
    %943 = vector.broadcast %942 : vector<2x1xf32> to vector<2x256xf32>
    %944 = arith.mulf %687, %943 : vector<2x256xf32>
    %945 = arith.addf %940, %944 : vector<2x256xf32>
    %c48 = arith.constant 48 : index
    %c0_419 = arith.constant 0 : index
    %c0_420 = arith.constant 0 : index
    %946 = vector.load %arg9[%c48, %c0_419, %c0_420] : memref<49x2x1xf32, #tpu.memory_space<vmem>>, vector<1x2x1xf32>
    %947 = vector.shape_cast %946 : vector<1x2x1xf32> to vector<2x1xf32>
    %948 = vector.broadcast %947 : vector<2x1xf32> to vector<2x256xf32>
    %949 = arith.mulf %690, %948 : vector<2x256xf32>
    %950 = arith.addf %945, %949 : vector<2x256xf32>
    %c208_i32 = arith.constant 208 : i32
    %951 = tpu.dynamic_rotate %950 by %c208_i32 dim 1 : vector<2x256xf32>, i32 -> vector<2x256xf32>
    %952 = vector.broadcast %172 : vector<1x256xf32> to vector<2x256xf32>
    %953 = arith.mulf %952, %951 : vector<2x256xf32>
    %954 = arith.addf %916, %953 : vector<2x256xf32>
    %955 = vector.extract_strided_slice %4 {offsets = [48, 0], sizes = [2, 1], strides = [1, 1]} : vector<128x1xf32> to vector<2x1xf32>
    %956 = vector.broadcast %955 : vector<2x1xf32> to vector<2x256xf32>
    %957 = arith.addf %954, %956 : vector<2x256xf32>
    %c0_421 = arith.constant 0 : index
    %c0_422 = arith.constant 0 : index
    %c0_423 = arith.constant 0 : index
    %958 = vector.load %arg12[%c0_421, %c0_422, %c0_423] : memref<49x2x1xf32, #tpu.memory_space<vmem>>, vector<1x2x1xf32>
    %959 = vector.shape_cast %958 : vector<1x2x1xf32> to vector<2x1xf32>
    %960 = vector.broadcast %959 : vector<2x1xf32> to vector<2x256xf32>
    %961 = arith.mulf %673, %960 : vector<2x256xf32>
    %c1_424 = arith.constant 1 : index
    %c0_425 = arith.constant 0 : index
    %c0_426 = arith.constant 0 : index
    %962 = vector.load %arg12[%c1_424, %c0_425, %c0_426] : memref<49x2x1xf32, #tpu.memory_space<vmem>>, vector<1x2x1xf32>
    %963 = vector.shape_cast %962 : vector<1x2x1xf32> to vector<2x1xf32>
    %964 = vector.broadcast %963 : vector<2x1xf32> to vector<2x256xf32>
    %965 = arith.mulf %676, %964 : vector<2x256xf32>
    %966 = arith.addf %961, %965 : vector<2x256xf32>
    %c2_427 = arith.constant 2 : index
    %c0_428 = arith.constant 0 : index
    %c0_429 = arith.constant 0 : index
    %967 = vector.load %arg12[%c2_427, %c0_428, %c0_429] : memref<49x2x1xf32, #tpu.memory_space<vmem>>, vector<1x2x1xf32>
    %968 = vector.shape_cast %967 : vector<1x2x1xf32> to vector<2x1xf32>
    %969 = vector.broadcast %968 : vector<2x1xf32> to vector<2x256xf32>
    %970 = arith.mulf %679, %969 : vector<2x256xf32>
    %971 = arith.addf %966, %970 : vector<2x256xf32>
    %c3_430 = arith.constant 3 : index
    %c0_431 = arith.constant 0 : index
    %c0_432 = arith.constant 0 : index
    %972 = vector.load %arg12[%c3_430, %c0_431, %c0_432] : memref<49x2x1xf32, #tpu.memory_space<vmem>>, vector<1x2x1xf32>
    %973 = vector.shape_cast %972 : vector<1x2x1xf32> to vector<2x1xf32>
    %974 = vector.broadcast %973 : vector<2x1xf32> to vector<2x256xf32>
    %975 = arith.mulf %681, %974 : vector<2x256xf32>
    %976 = arith.addf %971, %975 : vector<2x256xf32>
    %c4_433 = arith.constant 4 : index
    %c0_434 = arith.constant 0 : index
    %c0_435 = arith.constant 0 : index
    %977 = vector.load %arg12[%c4_433, %c0_434, %c0_435] : memref<49x2x1xf32, #tpu.memory_space<vmem>>, vector<1x2x1xf32>
    %978 = vector.shape_cast %977 : vector<1x2x1xf32> to vector<2x1xf32>
    %979 = vector.broadcast %978 : vector<2x1xf32> to vector<2x256xf32>
    %980 = arith.mulf %684, %979 : vector<2x256xf32>
    %981 = arith.addf %976, %980 : vector<2x256xf32>
    %c5_436 = arith.constant 5 : index
    %c0_437 = arith.constant 0 : index
    %c0_438 = arith.constant 0 : index
    %982 = vector.load %arg12[%c5_436, %c0_437, %c0_438] : memref<49x2x1xf32, #tpu.memory_space<vmem>>, vector<1x2x1xf32>
    %983 = vector.shape_cast %982 : vector<1x2x1xf32> to vector<2x1xf32>
    %984 = vector.broadcast %983 : vector<2x1xf32> to vector<2x256xf32>
    %985 = arith.mulf %687, %984 : vector<2x256xf32>
    %986 = arith.addf %981, %985 : vector<2x256xf32>
    %c6_439 = arith.constant 6 : index
    %c0_440 = arith.constant 0 : index
    %c0_441 = arith.constant 0 : index
    %987 = vector.load %arg12[%c6_439, %c0_440, %c0_441] : memref<49x2x1xf32, #tpu.memory_space<vmem>>, vector<1x2x1xf32>
    %988 = vector.shape_cast %987 : vector<1x2x1xf32> to vector<2x1xf32>
    %989 = vector.broadcast %988 : vector<2x1xf32> to vector<2x256xf32>
    %990 = arith.mulf %690, %989 : vector<2x256xf32>
    %991 = arith.addf %986, %990 : vector<2x256xf32>
    %c48_i32_442 = arith.constant 48 : i32
    %992 = tpu.dynamic_rotate %991 by %c48_i32_442 dim 1 : vector<2x256xf32>, i32 -> vector<2x256xf32>
    %993 = vector.broadcast %100 : vector<1x256xf32> to vector<2x256xf32>
    %994 = arith.mulf %993, %992 : vector<2x256xf32>
    %c7_443 = arith.constant 7 : index
    %c0_444 = arith.constant 0 : index
    %c0_445 = arith.constant 0 : index
    %995 = vector.load %arg12[%c7_443, %c0_444, %c0_445] : memref<49x2x1xf32, #tpu.memory_space<vmem>>, vector<1x2x1xf32>
    %996 = vector.shape_cast %995 : vector<1x2x1xf32> to vector<2x1xf32>
    %997 = vector.broadcast %996 : vector<2x1xf32> to vector<2x256xf32>
    %998 = arith.mulf %673, %997 : vector<2x256xf32>
    %c8_446 = arith.constant 8 : index
    %c0_447 = arith.constant 0 : index
    %c0_448 = arith.constant 0 : index
    %999 = vector.load %arg12[%c8_446, %c0_447, %c0_448] : memref<49x2x1xf32, #tpu.memory_space<vmem>>, vector<1x2x1xf32>
    %1000 = vector.shape_cast %999 : vector<1x2x1xf32> to vector<2x1xf32>
    %1001 = vector.broadcast %1000 : vector<2x1xf32> to vector<2x256xf32>
    %1002 = arith.mulf %676, %1001 : vector<2x256xf32>
    %1003 = arith.addf %998, %1002 : vector<2x256xf32>
    %c9_449 = arith.constant 9 : index
    %c0_450 = arith.constant 0 : index
    %c0_451 = arith.constant 0 : index
    %1004 = vector.load %arg12[%c9_449, %c0_450, %c0_451] : memref<49x2x1xf32, #tpu.memory_space<vmem>>, vector<1x2x1xf32>
    %1005 = vector.shape_cast %1004 : vector<1x2x1xf32> to vector<2x1xf32>
    %1006 = vector.broadcast %1005 : vector<2x1xf32> to vector<2x256xf32>
    %1007 = arith.mulf %679, %1006 : vector<2x256xf32>
    %1008 = arith.addf %1003, %1007 : vector<2x256xf32>
    %c10_452 = arith.constant 10 : index
    %c0_453 = arith.constant 0 : index
    %c0_454 = arith.constant 0 : index
    %1009 = vector.load %arg12[%c10_452, %c0_453, %c0_454] : memref<49x2x1xf32, #tpu.memory_space<vmem>>, vector<1x2x1xf32>
    %1010 = vector.shape_cast %1009 : vector<1x2x1xf32> to vector<2x1xf32>
    %1011 = vector.broadcast %1010 : vector<2x1xf32> to vector<2x256xf32>
    %1012 = arith.mulf %681, %1011 : vector<2x256xf32>
    %1013 = arith.addf %1008, %1012 : vector<2x256xf32>
    %c11_455 = arith.constant 11 : index
    %c0_456 = arith.constant 0 : index
    %c0_457 = arith.constant 0 : index
    %1014 = vector.load %arg12[%c11_455, %c0_456, %c0_457] : memref<49x2x1xf32, #tpu.memory_space<vmem>>, vector<1x2x1xf32>
    %1015 = vector.shape_cast %1014 : vector<1x2x1xf32> to vector<2x1xf32>
    %1016 = vector.broadcast %1015 : vector<2x1xf32> to vector<2x256xf32>
    %1017 = arith.mulf %684, %1016 : vector<2x256xf32>
    %1018 = arith.addf %1013, %1017 : vector<2x256xf32>
    %c12_458 = arith.constant 12 : index
    %c0_459 = arith.constant 0 : index
    %c0_460 = arith.constant 0 : index
    %1019 = vector.load %arg12[%c12_458, %c0_459, %c0_460] : memref<49x2x1xf32, #tpu.memory_space<vmem>>, vector<1x2x1xf32>
    %1020 = vector.shape_cast %1019 : vector<1x2x1xf32> to vector<2x1xf32>
    %1021 = vector.broadcast %1020 : vector<2x1xf32> to vector<2x256xf32>
    %1022 = arith.mulf %687, %1021 : vector<2x256xf32>
    %1023 = arith.addf %1018, %1022 : vector<2x256xf32>
    %c13_461 = arith.constant 13 : index
    %c0_462 = arith.constant 0 : index
    %c0_463 = arith.constant 0 : index
    %1024 = vector.load %arg12[%c13_461, %c0_462, %c0_463] : memref<49x2x1xf32, #tpu.memory_space<vmem>>, vector<1x2x1xf32>
    %1025 = vector.shape_cast %1024 : vector<1x2x1xf32> to vector<2x1xf32>
    %1026 = vector.broadcast %1025 : vector<2x1xf32> to vector<2x256xf32>
    %1027 = arith.mulf %690, %1026 : vector<2x256xf32>
    %1028 = arith.addf %1023, %1027 : vector<2x256xf32>
    %c32_i32_464 = arith.constant 32 : i32
    %1029 = tpu.dynamic_rotate %1028 by %c32_i32_464 dim 1 : vector<2x256xf32>, i32 -> vector<2x256xf32>
    %1030 = vector.broadcast %112 : vector<1x256xf32> to vector<2x256xf32>
    %1031 = arith.mulf %1030, %1029 : vector<2x256xf32>
    %1032 = arith.addf %994, %1031 : vector<2x256xf32>
    %c14_465 = arith.constant 14 : index
    %c0_466 = arith.constant 0 : index
    %c0_467 = arith.constant 0 : index
    %1033 = vector.load %arg12[%c14_465, %c0_466, %c0_467] : memref<49x2x1xf32, #tpu.memory_space<vmem>>, vector<1x2x1xf32>
    %1034 = vector.shape_cast %1033 : vector<1x2x1xf32> to vector<2x1xf32>
    %1035 = vector.broadcast %1034 : vector<2x1xf32> to vector<2x256xf32>
    %1036 = arith.mulf %673, %1035 : vector<2x256xf32>
    %c15_468 = arith.constant 15 : index
    %c0_469 = arith.constant 0 : index
    %c0_470 = arith.constant 0 : index
    %1037 = vector.load %arg12[%c15_468, %c0_469, %c0_470] : memref<49x2x1xf32, #tpu.memory_space<vmem>>, vector<1x2x1xf32>
    %1038 = vector.shape_cast %1037 : vector<1x2x1xf32> to vector<2x1xf32>
    %1039 = vector.broadcast %1038 : vector<2x1xf32> to vector<2x256xf32>
    %1040 = arith.mulf %676, %1039 : vector<2x256xf32>
    %1041 = arith.addf %1036, %1040 : vector<2x256xf32>
    %c16_471 = arith.constant 16 : index
    %c0_472 = arith.constant 0 : index
    %c0_473 = arith.constant 0 : index
    %1042 = vector.load %arg12[%c16_471, %c0_472, %c0_473] : memref<49x2x1xf32, #tpu.memory_space<vmem>>, vector<1x2x1xf32>
    %1043 = vector.shape_cast %1042 : vector<1x2x1xf32> to vector<2x1xf32>
    %1044 = vector.broadcast %1043 : vector<2x1xf32> to vector<2x256xf32>
    %1045 = arith.mulf %679, %1044 : vector<2x256xf32>
    %1046 = arith.addf %1041, %1045 : vector<2x256xf32>
    %c17_474 = arith.constant 17 : index
    %c0_475 = arith.constant 0 : index
    %c0_476 = arith.constant 0 : index
    %1047 = vector.load %arg12[%c17_474, %c0_475, %c0_476] : memref<49x2x1xf32, #tpu.memory_space<vmem>>, vector<1x2x1xf32>
    %1048 = vector.shape_cast %1047 : vector<1x2x1xf32> to vector<2x1xf32>
    %1049 = vector.broadcast %1048 : vector<2x1xf32> to vector<2x256xf32>
    %1050 = arith.mulf %681, %1049 : vector<2x256xf32>
    %1051 = arith.addf %1046, %1050 : vector<2x256xf32>
    %c18_477 = arith.constant 18 : index
    %c0_478 = arith.constant 0 : index
    %c0_479 = arith.constant 0 : index
    %1052 = vector.load %arg12[%c18_477, %c0_478, %c0_479] : memref<49x2x1xf32, #tpu.memory_space<vmem>>, vector<1x2x1xf32>
    %1053 = vector.shape_cast %1052 : vector<1x2x1xf32> to vector<2x1xf32>
    %1054 = vector.broadcast %1053 : vector<2x1xf32> to vector<2x256xf32>
    %1055 = arith.mulf %684, %1054 : vector<2x256xf32>
    %1056 = arith.addf %1051, %1055 : vector<2x256xf32>
    %c19_480 = arith.constant 19 : index
    %c0_481 = arith.constant 0 : index
    %c0_482 = arith.constant 0 : index
    %1057 = vector.load %arg12[%c19_480, %c0_481, %c0_482] : memref<49x2x1xf32, #tpu.memory_space<vmem>>, vector<1x2x1xf32>
    %1058 = vector.shape_cast %1057 : vector<1x2x1xf32> to vector<2x1xf32>
    %1059 = vector.broadcast %1058 : vector<2x1xf32> to vector<2x256xf32>
    %1060 = arith.mulf %687, %1059 : vector<2x256xf32>
    %1061 = arith.addf %1056, %1060 : vector<2x256xf32>
    %c20_483 = arith.constant 20 : index
    %c0_484 = arith.constant 0 : index
    %c0_485 = arith.constant 0 : index
    %1062 = vector.load %arg12[%c20_483, %c0_484, %c0_485] : memref<49x2x1xf32, #tpu.memory_space<vmem>>, vector<1x2x1xf32>
    %1063 = vector.shape_cast %1062 : vector<1x2x1xf32> to vector<2x1xf32>
    %1064 = vector.broadcast %1063 : vector<2x1xf32> to vector<2x256xf32>
    %1065 = arith.mulf %690, %1064 : vector<2x256xf32>
    %1066 = arith.addf %1061, %1065 : vector<2x256xf32>
    %c16_i32_486 = arith.constant 16 : i32
    %1067 = tpu.dynamic_rotate %1066 by %c16_i32_486 dim 1 : vector<2x256xf32>, i32 -> vector<2x256xf32>
    %1068 = vector.broadcast %124 : vector<1x256xf32> to vector<2x256xf32>
    %1069 = arith.mulf %1068, %1067 : vector<2x256xf32>
    %1070 = arith.addf %1032, %1069 : vector<2x256xf32>
    %c21_487 = arith.constant 21 : index
    %c0_488 = arith.constant 0 : index
    %c0_489 = arith.constant 0 : index
    %1071 = vector.load %arg12[%c21_487, %c0_488, %c0_489] : memref<49x2x1xf32, #tpu.memory_space<vmem>>, vector<1x2x1xf32>
    %1072 = vector.shape_cast %1071 : vector<1x2x1xf32> to vector<2x1xf32>
    %1073 = vector.broadcast %1072 : vector<2x1xf32> to vector<2x256xf32>
    %1074 = arith.mulf %673, %1073 : vector<2x256xf32>
    %c22_490 = arith.constant 22 : index
    %c0_491 = arith.constant 0 : index
    %c0_492 = arith.constant 0 : index
    %1075 = vector.load %arg12[%c22_490, %c0_491, %c0_492] : memref<49x2x1xf32, #tpu.memory_space<vmem>>, vector<1x2x1xf32>
    %1076 = vector.shape_cast %1075 : vector<1x2x1xf32> to vector<2x1xf32>
    %1077 = vector.broadcast %1076 : vector<2x1xf32> to vector<2x256xf32>
    %1078 = arith.mulf %676, %1077 : vector<2x256xf32>
    %1079 = arith.addf %1074, %1078 : vector<2x256xf32>
    %c23_493 = arith.constant 23 : index
    %c0_494 = arith.constant 0 : index
    %c0_495 = arith.constant 0 : index
    %1080 = vector.load %arg12[%c23_493, %c0_494, %c0_495] : memref<49x2x1xf32, #tpu.memory_space<vmem>>, vector<1x2x1xf32>
    %1081 = vector.shape_cast %1080 : vector<1x2x1xf32> to vector<2x1xf32>
    %1082 = vector.broadcast %1081 : vector<2x1xf32> to vector<2x256xf32>
    %1083 = arith.mulf %679, %1082 : vector<2x256xf32>
    %1084 = arith.addf %1079, %1083 : vector<2x256xf32>
    %c24_496 = arith.constant 24 : index
    %c0_497 = arith.constant 0 : index
    %c0_498 = arith.constant 0 : index
    %1085 = vector.load %arg12[%c24_496, %c0_497, %c0_498] : memref<49x2x1xf32, #tpu.memory_space<vmem>>, vector<1x2x1xf32>
    %1086 = vector.shape_cast %1085 : vector<1x2x1xf32> to vector<2x1xf32>
    %1087 = vector.broadcast %1086 : vector<2x1xf32> to vector<2x256xf32>
    %1088 = arith.mulf %681, %1087 : vector<2x256xf32>
    %1089 = arith.addf %1084, %1088 : vector<2x256xf32>
    %c25_499 = arith.constant 25 : index
    %c0_500 = arith.constant 0 : index
    %c0_501 = arith.constant 0 : index
    %1090 = vector.load %arg12[%c25_499, %c0_500, %c0_501] : memref<49x2x1xf32, #tpu.memory_space<vmem>>, vector<1x2x1xf32>
    %1091 = vector.shape_cast %1090 : vector<1x2x1xf32> to vector<2x1xf32>
    %1092 = vector.broadcast %1091 : vector<2x1xf32> to vector<2x256xf32>
    %1093 = arith.mulf %684, %1092 : vector<2x256xf32>
    %1094 = arith.addf %1089, %1093 : vector<2x256xf32>
    %c26_502 = arith.constant 26 : index
    %c0_503 = arith.constant 0 : index
    %c0_504 = arith.constant 0 : index
    %1095 = vector.load %arg12[%c26_502, %c0_503, %c0_504] : memref<49x2x1xf32, #tpu.memory_space<vmem>>, vector<1x2x1xf32>
    %1096 = vector.shape_cast %1095 : vector<1x2x1xf32> to vector<2x1xf32>
    %1097 = vector.broadcast %1096 : vector<2x1xf32> to vector<2x256xf32>
    %1098 = arith.mulf %687, %1097 : vector<2x256xf32>
    %1099 = arith.addf %1094, %1098 : vector<2x256xf32>
    %c27_505 = arith.constant 27 : index
    %c0_506 = arith.constant 0 : index
    %c0_507 = arith.constant 0 : index
    %1100 = vector.load %arg12[%c27_505, %c0_506, %c0_507] : memref<49x2x1xf32, #tpu.memory_space<vmem>>, vector<1x2x1xf32>
    %1101 = vector.shape_cast %1100 : vector<1x2x1xf32> to vector<2x1xf32>
    %1102 = vector.broadcast %1101 : vector<2x1xf32> to vector<2x256xf32>
    %1103 = arith.mulf %690, %1102 : vector<2x256xf32>
    %1104 = arith.addf %1099, %1103 : vector<2x256xf32>
    %1105 = vector.broadcast %136 : vector<1x256xf32> to vector<2x256xf32>
    %1106 = arith.mulf %1105, %1104 : vector<2x256xf32>
    %1107 = arith.addf %1070, %1106 : vector<2x256xf32>
    %c28_508 = arith.constant 28 : index
    %c0_509 = arith.constant 0 : index
    %c0_510 = arith.constant 0 : index
    %1108 = vector.load %arg12[%c28_508, %c0_509, %c0_510] : memref<49x2x1xf32, #tpu.memory_space<vmem>>, vector<1x2x1xf32>
    %1109 = vector.shape_cast %1108 : vector<1x2x1xf32> to vector<2x1xf32>
    %1110 = vector.broadcast %1109 : vector<2x1xf32> to vector<2x256xf32>
    %1111 = arith.mulf %673, %1110 : vector<2x256xf32>
    %c29_511 = arith.constant 29 : index
    %c0_512 = arith.constant 0 : index
    %c0_513 = arith.constant 0 : index
    %1112 = vector.load %arg12[%c29_511, %c0_512, %c0_513] : memref<49x2x1xf32, #tpu.memory_space<vmem>>, vector<1x2x1xf32>
    %1113 = vector.shape_cast %1112 : vector<1x2x1xf32> to vector<2x1xf32>
    %1114 = vector.broadcast %1113 : vector<2x1xf32> to vector<2x256xf32>
    %1115 = arith.mulf %676, %1114 : vector<2x256xf32>
    %1116 = arith.addf %1111, %1115 : vector<2x256xf32>
    %c30_514 = arith.constant 30 : index
    %c0_515 = arith.constant 0 : index
    %c0_516 = arith.constant 0 : index
    %1117 = vector.load %arg12[%c30_514, %c0_515, %c0_516] : memref<49x2x1xf32, #tpu.memory_space<vmem>>, vector<1x2x1xf32>
    %1118 = vector.shape_cast %1117 : vector<1x2x1xf32> to vector<2x1xf32>
    %1119 = vector.broadcast %1118 : vector<2x1xf32> to vector<2x256xf32>
    %1120 = arith.mulf %679, %1119 : vector<2x256xf32>
    %1121 = arith.addf %1116, %1120 : vector<2x256xf32>
    %c31_517 = arith.constant 31 : index
    %c0_518 = arith.constant 0 : index
    %c0_519 = arith.constant 0 : index
    %1122 = vector.load %arg12[%c31_517, %c0_518, %c0_519] : memref<49x2x1xf32, #tpu.memory_space<vmem>>, vector<1x2x1xf32>
    %1123 = vector.shape_cast %1122 : vector<1x2x1xf32> to vector<2x1xf32>
    %1124 = vector.broadcast %1123 : vector<2x1xf32> to vector<2x256xf32>
    %1125 = arith.mulf %681, %1124 : vector<2x256xf32>
    %1126 = arith.addf %1121, %1125 : vector<2x256xf32>
    %c32_520 = arith.constant 32 : index
    %c0_521 = arith.constant 0 : index
    %c0_522 = arith.constant 0 : index
    %1127 = vector.load %arg12[%c32_520, %c0_521, %c0_522] : memref<49x2x1xf32, #tpu.memory_space<vmem>>, vector<1x2x1xf32>
    %1128 = vector.shape_cast %1127 : vector<1x2x1xf32> to vector<2x1xf32>
    %1129 = vector.broadcast %1128 : vector<2x1xf32> to vector<2x256xf32>
    %1130 = arith.mulf %684, %1129 : vector<2x256xf32>
    %1131 = arith.addf %1126, %1130 : vector<2x256xf32>
    %c33_523 = arith.constant 33 : index
    %c0_524 = arith.constant 0 : index
    %c0_525 = arith.constant 0 : index
    %1132 = vector.load %arg12[%c33_523, %c0_524, %c0_525] : memref<49x2x1xf32, #tpu.memory_space<vmem>>, vector<1x2x1xf32>
    %1133 = vector.shape_cast %1132 : vector<1x2x1xf32> to vector<2x1xf32>
    %1134 = vector.broadcast %1133 : vector<2x1xf32> to vector<2x256xf32>
    %1135 = arith.mulf %687, %1134 : vector<2x256xf32>
    %1136 = arith.addf %1131, %1135 : vector<2x256xf32>
    %c34_526 = arith.constant 34 : index
    %c0_527 = arith.constant 0 : index
    %c0_528 = arith.constant 0 : index
    %1137 = vector.load %arg12[%c34_526, %c0_527, %c0_528] : memref<49x2x1xf32, #tpu.memory_space<vmem>>, vector<1x2x1xf32>
    %1138 = vector.shape_cast %1137 : vector<1x2x1xf32> to vector<2x1xf32>
    %1139 = vector.broadcast %1138 : vector<2x1xf32> to vector<2x256xf32>
    %1140 = arith.mulf %690, %1139 : vector<2x256xf32>
    %1141 = arith.addf %1136, %1140 : vector<2x256xf32>
    %c240_i32_529 = arith.constant 240 : i32
    %1142 = tpu.dynamic_rotate %1141 by %c240_i32_529 dim 1 : vector<2x256xf32>, i32 -> vector<2x256xf32>
    %1143 = vector.broadcast %148 : vector<1x256xf32> to vector<2x256xf32>
    %1144 = arith.mulf %1143, %1142 : vector<2x256xf32>
    %1145 = arith.addf %1107, %1144 : vector<2x256xf32>
    %c35_530 = arith.constant 35 : index
    %c0_531 = arith.constant 0 : index
    %c0_532 = arith.constant 0 : index
    %1146 = vector.load %arg12[%c35_530, %c0_531, %c0_532] : memref<49x2x1xf32, #tpu.memory_space<vmem>>, vector<1x2x1xf32>
    %1147 = vector.shape_cast %1146 : vector<1x2x1xf32> to vector<2x1xf32>
    %1148 = vector.broadcast %1147 : vector<2x1xf32> to vector<2x256xf32>
    %1149 = arith.mulf %673, %1148 : vector<2x256xf32>
    %c36_533 = arith.constant 36 : index
    %c0_534 = arith.constant 0 : index
    %c0_535 = arith.constant 0 : index
    %1150 = vector.load %arg12[%c36_533, %c0_534, %c0_535] : memref<49x2x1xf32, #tpu.memory_space<vmem>>, vector<1x2x1xf32>
    %1151 = vector.shape_cast %1150 : vector<1x2x1xf32> to vector<2x1xf32>
    %1152 = vector.broadcast %1151 : vector<2x1xf32> to vector<2x256xf32>
    %1153 = arith.mulf %676, %1152 : vector<2x256xf32>
    %1154 = arith.addf %1149, %1153 : vector<2x256xf32>
    %c37_536 = arith.constant 37 : index
    %c0_537 = arith.constant 0 : index
    %c0_538 = arith.constant 0 : index
    %1155 = vector.load %arg12[%c37_536, %c0_537, %c0_538] : memref<49x2x1xf32, #tpu.memory_space<vmem>>, vector<1x2x1xf32>
    %1156 = vector.shape_cast %1155 : vector<1x2x1xf32> to vector<2x1xf32>
    %1157 = vector.broadcast %1156 : vector<2x1xf32> to vector<2x256xf32>
    %1158 = arith.mulf %679, %1157 : vector<2x256xf32>
    %1159 = arith.addf %1154, %1158 : vector<2x256xf32>
    %c38_539 = arith.constant 38 : index
    %c0_540 = arith.constant 0 : index
    %c0_541 = arith.constant 0 : index
    %1160 = vector.load %arg12[%c38_539, %c0_540, %c0_541] : memref<49x2x1xf32, #tpu.memory_space<vmem>>, vector<1x2x1xf32>
    %1161 = vector.shape_cast %1160 : vector<1x2x1xf32> to vector<2x1xf32>
    %1162 = vector.broadcast %1161 : vector<2x1xf32> to vector<2x256xf32>
    %1163 = arith.mulf %681, %1162 : vector<2x256xf32>
    %1164 = arith.addf %1159, %1163 : vector<2x256xf32>
    %c39_542 = arith.constant 39 : index
    %c0_543 = arith.constant 0 : index
    %c0_544 = arith.constant 0 : index
    %1165 = vector.load %arg12[%c39_542, %c0_543, %c0_544] : memref<49x2x1xf32, #tpu.memory_space<vmem>>, vector<1x2x1xf32>
    %1166 = vector.shape_cast %1165 : vector<1x2x1xf32> to vector<2x1xf32>
    %1167 = vector.broadcast %1166 : vector<2x1xf32> to vector<2x256xf32>
    %1168 = arith.mulf %684, %1167 : vector<2x256xf32>
    %1169 = arith.addf %1164, %1168 : vector<2x256xf32>
    %c40_545 = arith.constant 40 : index
    %c0_546 = arith.constant 0 : index
    %c0_547 = arith.constant 0 : index
    %1170 = vector.load %arg12[%c40_545, %c0_546, %c0_547] : memref<49x2x1xf32, #tpu.memory_space<vmem>>, vector<1x2x1xf32>
    %1171 = vector.shape_cast %1170 : vector<1x2x1xf32> to vector<2x1xf32>
    %1172 = vector.broadcast %1171 : vector<2x1xf32> to vector<2x256xf32>
    %1173 = arith.mulf %687, %1172 : vector<2x256xf32>
    %1174 = arith.addf %1169, %1173 : vector<2x256xf32>
    %c41_548 = arith.constant 41 : index
    %c0_549 = arith.constant 0 : index
    %c0_550 = arith.constant 0 : index
    %1175 = vector.load %arg12[%c41_548, %c0_549, %c0_550] : memref<49x2x1xf32, #tpu.memory_space<vmem>>, vector<1x2x1xf32>
    %1176 = vector.shape_cast %1175 : vector<1x2x1xf32> to vector<2x1xf32>
    %1177 = vector.broadcast %1176 : vector<2x1xf32> to vector<2x256xf32>
    %1178 = arith.mulf %690, %1177 : vector<2x256xf32>
    %1179 = arith.addf %1174, %1178 : vector<2x256xf32>
    %c224_i32_551 = arith.constant 224 : i32
    %1180 = tpu.dynamic_rotate %1179 by %c224_i32_551 dim 1 : vector<2x256xf32>, i32 -> vector<2x256xf32>
    %1181 = vector.broadcast %160 : vector<1x256xf32> to vector<2x256xf32>
    %1182 = arith.mulf %1181, %1180 : vector<2x256xf32>
    %1183 = arith.addf %1145, %1182 : vector<2x256xf32>
    %c42_552 = arith.constant 42 : index
    %c0_553 = arith.constant 0 : index
    %c0_554 = arith.constant 0 : index
    %1184 = vector.load %arg12[%c42_552, %c0_553, %c0_554] : memref<49x2x1xf32, #tpu.memory_space<vmem>>, vector<1x2x1xf32>
    %1185 = vector.shape_cast %1184 : vector<1x2x1xf32> to vector<2x1xf32>
    %1186 = vector.broadcast %1185 : vector<2x1xf32> to vector<2x256xf32>
    %1187 = arith.mulf %673, %1186 : vector<2x256xf32>
    %c43_555 = arith.constant 43 : index
    %c0_556 = arith.constant 0 : index
    %c0_557 = arith.constant 0 : index
    %1188 = vector.load %arg12[%c43_555, %c0_556, %c0_557] : memref<49x2x1xf32, #tpu.memory_space<vmem>>, vector<1x2x1xf32>
    %1189 = vector.shape_cast %1188 : vector<1x2x1xf32> to vector<2x1xf32>
    %1190 = vector.broadcast %1189 : vector<2x1xf32> to vector<2x256xf32>
    %1191 = arith.mulf %676, %1190 : vector<2x256xf32>
    %1192 = arith.addf %1187, %1191 : vector<2x256xf32>
    %c44_558 = arith.constant 44 : index
    %c0_559 = arith.constant 0 : index
    %c0_560 = arith.constant 0 : index
    %1193 = vector.load %arg12[%c44_558, %c0_559, %c0_560] : memref<49x2x1xf32, #tpu.memory_space<vmem>>, vector<1x2x1xf32>
    %1194 = vector.shape_cast %1193 : vector<1x2x1xf32> to vector<2x1xf32>
    %1195 = vector.broadcast %1194 : vector<2x1xf32> to vector<2x256xf32>
    %1196 = arith.mulf %679, %1195 : vector<2x256xf32>
    %1197 = arith.addf %1192, %1196 : vector<2x256xf32>
    %c45_561 = arith.constant 45 : index
    %c0_562 = arith.constant 0 : index
    %c0_563 = arith.constant 0 : index
    %1198 = vector.load %arg12[%c45_561, %c0_562, %c0_563] : memref<49x2x1xf32, #tpu.memory_space<vmem>>, vector<1x2x1xf32>
    %1199 = vector.shape_cast %1198 : vector<1x2x1xf32> to vector<2x1xf32>
    %1200 = vector.broadcast %1199 : vector<2x1xf32> to vector<2x256xf32>
    %1201 = arith.mulf %681, %1200 : vector<2x256xf32>
    %1202 = arith.addf %1197, %1201 : vector<2x256xf32>
    %c46_564 = arith.constant 46 : index
    %c0_565 = arith.constant 0 : index
    %c0_566 = arith.constant 0 : index
    %1203 = vector.load %arg12[%c46_564, %c0_565, %c0_566] : memref<49x2x1xf32, #tpu.memory_space<vmem>>, vector<1x2x1xf32>
    %1204 = vector.shape_cast %1203 : vector<1x2x1xf32> to vector<2x1xf32>
    %1205 = vector.broadcast %1204 : vector<2x1xf32> to vector<2x256xf32>
    %1206 = arith.mulf %684, %1205 : vector<2x256xf32>
    %1207 = arith.addf %1202, %1206 : vector<2x256xf32>
    %c47_567 = arith.constant 47 : index
    %c0_568 = arith.constant 0 : index
    %c0_569 = arith.constant 0 : index
    %1208 = vector.load %arg12[%c47_567, %c0_568, %c0_569] : memref<49x2x1xf32, #tpu.memory_space<vmem>>, vector<1x2x1xf32>
    %1209 = vector.shape_cast %1208 : vector<1x2x1xf32> to vector<2x1xf32>
    %1210 = vector.broadcast %1209 : vector<2x1xf32> to vector<2x256xf32>
    %1211 = arith.mulf %687, %1210 : vector<2x256xf32>
    %1212 = arith.addf %1207, %1211 : vector<2x256xf32>
    %c48_570 = arith.constant 48 : index
    %c0_571 = arith.constant 0 : index
    %c0_572 = arith.constant 0 : index
    %1213 = vector.load %arg12[%c48_570, %c0_571, %c0_572] : memref<49x2x1xf32, #tpu.memory_space<vmem>>, vector<1x2x1xf32>
    %1214 = vector.shape_cast %1213 : vector<1x2x1xf32> to vector<2x1xf32>
    %1215 = vector.broadcast %1214 : vector<2x1xf32> to vector<2x256xf32>
    %1216 = arith.mulf %690, %1215 : vector<2x256xf32>
    %1217 = arith.addf %1212, %1216 : vector<2x256xf32>
    %c208_i32_573 = arith.constant 208 : i32
    %1218 = tpu.dynamic_rotate %1217 by %c208_i32_573 dim 1 : vector<2x256xf32>, i32 -> vector<2x256xf32>
    %1219 = vector.broadcast %172 : vector<1x256xf32> to vector<2x256xf32>
    %1220 = arith.mulf %1219, %1218 : vector<2x256xf32>
    %1221 = arith.addf %1183, %1220 : vector<2x256xf32>
    %1222 = vector.extract_strided_slice %4 {offsets = [72, 0], sizes = [2, 1], strides = [1, 1]} : vector<128x1xf32> to vector<2x1xf32>
    %1223 = vector.broadcast %1222 : vector<2x1xf32> to vector<2x256xf32>
    %1224 = arith.addf %1221, %1223 : vector<2x256xf32>
    %c12_i32_574 = arith.constant 12 : i32
    %1225 = tpu.dynamic_rotate %957 by %c12_i32_574 dim 1 : vector<2x256xf32>, i32 -> vector<2x256xf32>
    %1226 = vector.broadcast %184 : vector<1x256xf32> to vector<2x256xf32>
    %1227 = arith.mulf %1226, %1225 : vector<2x256xf32>
    %c8_i32_575 = arith.constant 8 : i32
    %1228 = tpu.dynamic_rotate %957 by %c8_i32_575 dim 1 : vector<2x256xf32>, i32 -> vector<2x256xf32>
    %1229 = vector.broadcast %196 : vector<1x256xf32> to vector<2x256xf32>
    %1230 = arith.mulf %1229, %1228 : vector<2x256xf32>
    %c4_i32_576 = arith.constant 4 : i32
    %1231 = tpu.dynamic_rotate %957 by %c4_i32_576 dim 1 : vector<2x256xf32>, i32 -> vector<2x256xf32>
    %1232 = vector.broadcast %208 : vector<1x256xf32> to vector<2x256xf32>
    %1233 = arith.mulf %1232, %1231 : vector<2x256xf32>
    %1234 = vector.broadcast %220 : vector<1x256xf32> to vector<2x256xf32>
    %1235 = arith.mulf %1234, %957 : vector<2x256xf32>
    %c252_i32 = arith.constant 252 : i32
    %1236 = tpu.dynamic_rotate %957 by %c252_i32 dim 1 : vector<2x256xf32>, i32 -> vector<2x256xf32>
    %1237 = vector.broadcast %232 : vector<1x256xf32> to vector<2x256xf32>
    %1238 = arith.mulf %1237, %1236 : vector<2x256xf32>
    %c248_i32 = arith.constant 248 : i32
    %1239 = tpu.dynamic_rotate %957 by %c248_i32 dim 1 : vector<2x256xf32>, i32 -> vector<2x256xf32>
    %1240 = vector.broadcast %244 : vector<1x256xf32> to vector<2x256xf32>
    %1241 = arith.mulf %1240, %1239 : vector<2x256xf32>
    %c244_i32 = arith.constant 244 : i32
    %1242 = tpu.dynamic_rotate %957 by %c244_i32 dim 1 : vector<2x256xf32>, i32 -> vector<2x256xf32>
    %1243 = vector.broadcast %256 : vector<1x256xf32> to vector<2x256xf32>
    %1244 = arith.mulf %1243, %1242 : vector<2x256xf32>
    %c10_577 = arith.constant 10 : index
    %c0_578 = arith.constant 0 : index
    %c0_579 = arith.constant 0 : index
    %1245 = vector.load %arg10[%c10_577, %c0_578, %c0_579] : memref<81x2x1xf32, #tpu.memory_space<vmem>>, vector<1x2x1xf32>
    %1246 = vector.shape_cast %1245 : vector<1x2x1xf32> to vector<2x1xf32>
    %1247 = vector.broadcast %1246 : vector<2x1xf32> to vector<2x256xf32>
    %1248 = arith.mulf %1227, %1247 : vector<2x256xf32>
    %c11_580 = arith.constant 11 : index
    %c0_581 = arith.constant 0 : index
    %c0_582 = arith.constant 0 : index
    %1249 = vector.load %arg10[%c11_580, %c0_581, %c0_582] : memref<81x2x1xf32, #tpu.memory_space<vmem>>, vector<1x2x1xf32>
    %1250 = vector.shape_cast %1249 : vector<1x2x1xf32> to vector<2x1xf32>
    %1251 = vector.broadcast %1250 : vector<2x1xf32> to vector<2x256xf32>
    %1252 = arith.mulf %1230, %1251 : vector<2x256xf32>
    %1253 = arith.addf %1248, %1252 : vector<2x256xf32>
    %c12_583 = arith.constant 12 : index
    %c0_584 = arith.constant 0 : index
    %c0_585 = arith.constant 0 : index
    %1254 = vector.load %arg10[%c12_583, %c0_584, %c0_585] : memref<81x2x1xf32, #tpu.memory_space<vmem>>, vector<1x2x1xf32>
    %1255 = vector.shape_cast %1254 : vector<1x2x1xf32> to vector<2x1xf32>
    %1256 = vector.broadcast %1255 : vector<2x1xf32> to vector<2x256xf32>
    %1257 = arith.mulf %1233, %1256 : vector<2x256xf32>
    %1258 = arith.addf %1253, %1257 : vector<2x256xf32>
    %c13_586 = arith.constant 13 : index
    %c0_587 = arith.constant 0 : index
    %c0_588 = arith.constant 0 : index
    %1259 = vector.load %arg10[%c13_586, %c0_587, %c0_588] : memref<81x2x1xf32, #tpu.memory_space<vmem>>, vector<1x2x1xf32>
    %1260 = vector.shape_cast %1259 : vector<1x2x1xf32> to vector<2x1xf32>
    %1261 = vector.broadcast %1260 : vector<2x1xf32> to vector<2x256xf32>
    %1262 = arith.mulf %1235, %1261 : vector<2x256xf32>
    %1263 = arith.addf %1258, %1262 : vector<2x256xf32>
    %c14_589 = arith.constant 14 : index
    %c0_590 = arith.constant 0 : index
    %c0_591 = arith.constant 0 : index
    %1264 = vector.load %arg10[%c14_589, %c0_590, %c0_591] : memref<81x2x1xf32, #tpu.memory_space<vmem>>, vector<1x2x1xf32>
    %1265 = vector.shape_cast %1264 : vector<1x2x1xf32> to vector<2x1xf32>
    %1266 = vector.broadcast %1265 : vector<2x1xf32> to vector<2x256xf32>
    %1267 = arith.mulf %1238, %1266 : vector<2x256xf32>
    %1268 = arith.addf %1263, %1267 : vector<2x256xf32>
    %c15_592 = arith.constant 15 : index
    %c0_593 = arith.constant 0 : index
    %c0_594 = arith.constant 0 : index
    %1269 = vector.load %arg10[%c15_592, %c0_593, %c0_594] : memref<81x2x1xf32, #tpu.memory_space<vmem>>, vector<1x2x1xf32>
    %1270 = vector.shape_cast %1269 : vector<1x2x1xf32> to vector<2x1xf32>
    %1271 = vector.broadcast %1270 : vector<2x1xf32> to vector<2x256xf32>
    %1272 = arith.mulf %1241, %1271 : vector<2x256xf32>
    %1273 = arith.addf %1268, %1272 : vector<2x256xf32>
    %c16_595 = arith.constant 16 : index
    %c0_596 = arith.constant 0 : index
    %c0_597 = arith.constant 0 : index
    %1274 = vector.load %arg10[%c16_595, %c0_596, %c0_597] : memref<81x2x1xf32, #tpu.memory_space<vmem>>, vector<1x2x1xf32>
    %1275 = vector.shape_cast %1274 : vector<1x2x1xf32> to vector<2x1xf32>
    %1276 = vector.broadcast %1275 : vector<2x1xf32> to vector<2x256xf32>
    %1277 = arith.mulf %1244, %1276 : vector<2x256xf32>
    %1278 = arith.addf %1273, %1277 : vector<2x256xf32>
    %c192_i32 = arith.constant 192 : i32
    %1279 = tpu.dynamic_rotate %1278 by %c192_i32 dim 1 : vector<2x256xf32>, i32 -> vector<2x256xf32>
    %1280 = vector.broadcast %268 : vector<1x256xf32> to vector<2x256xf32>
    %1281 = arith.mulf %1280, %1279 : vector<2x256xf32>
    %c19_598 = arith.constant 19 : index
    %c0_599 = arith.constant 0 : index
    %c0_600 = arith.constant 0 : index
    %1282 = vector.load %arg10[%c19_598, %c0_599, %c0_600] : memref<81x2x1xf32, #tpu.memory_space<vmem>>, vector<1x2x1xf32>
    %1283 = vector.shape_cast %1282 : vector<1x2x1xf32> to vector<2x1xf32>
    %1284 = vector.broadcast %1283 : vector<2x1xf32> to vector<2x256xf32>
    %1285 = arith.mulf %1227, %1284 : vector<2x256xf32>
    %c20_601 = arith.constant 20 : index
    %c0_602 = arith.constant 0 : index
    %c0_603 = arith.constant 0 : index
    %1286 = vector.load %arg10[%c20_601, %c0_602, %c0_603] : memref<81x2x1xf32, #tpu.memory_space<vmem>>, vector<1x2x1xf32>
    %1287 = vector.shape_cast %1286 : vector<1x2x1xf32> to vector<2x1xf32>
    %1288 = vector.broadcast %1287 : vector<2x1xf32> to vector<2x256xf32>
    %1289 = arith.mulf %1230, %1288 : vector<2x256xf32>
    %1290 = arith.addf %1285, %1289 : vector<2x256xf32>
    %c21_604 = arith.constant 21 : index
    %c0_605 = arith.constant 0 : index
    %c0_606 = arith.constant 0 : index
    %1291 = vector.load %arg10[%c21_604, %c0_605, %c0_606] : memref<81x2x1xf32, #tpu.memory_space<vmem>>, vector<1x2x1xf32>
    %1292 = vector.shape_cast %1291 : vector<1x2x1xf32> to vector<2x1xf32>
    %1293 = vector.broadcast %1292 : vector<2x1xf32> to vector<2x256xf32>
    %1294 = arith.mulf %1233, %1293 : vector<2x256xf32>
    %1295 = arith.addf %1290, %1294 : vector<2x256xf32>
    %c22_607 = arith.constant 22 : index
    %c0_608 = arith.constant 0 : index
    %c0_609 = arith.constant 0 : index
    %1296 = vector.load %arg10[%c22_607, %c0_608, %c0_609] : memref<81x2x1xf32, #tpu.memory_space<vmem>>, vector<1x2x1xf32>
    %1297 = vector.shape_cast %1296 : vector<1x2x1xf32> to vector<2x1xf32>
    %1298 = vector.broadcast %1297 : vector<2x1xf32> to vector<2x256xf32>
    %1299 = arith.mulf %1235, %1298 : vector<2x256xf32>
    %1300 = arith.addf %1295, %1299 : vector<2x256xf32>
    %c23_610 = arith.constant 23 : index
    %c0_611 = arith.constant 0 : index
    %c0_612 = arith.constant 0 : index
    %1301 = vector.load %arg10[%c23_610, %c0_611, %c0_612] : memref<81x2x1xf32, #tpu.memory_space<vmem>>, vector<1x2x1xf32>
    %1302 = vector.shape_cast %1301 : vector<1x2x1xf32> to vector<2x1xf32>
    %1303 = vector.broadcast %1302 : vector<2x1xf32> to vector<2x256xf32>
    %1304 = arith.mulf %1238, %1303 : vector<2x256xf32>
    %1305 = arith.addf %1300, %1304 : vector<2x256xf32>
    %c24_613 = arith.constant 24 : index
    %c0_614 = arith.constant 0 : index
    %c0_615 = arith.constant 0 : index
    %1306 = vector.load %arg10[%c24_613, %c0_614, %c0_615] : memref<81x2x1xf32, #tpu.memory_space<vmem>>, vector<1x2x1xf32>
    %1307 = vector.shape_cast %1306 : vector<1x2x1xf32> to vector<2x1xf32>
    %1308 = vector.broadcast %1307 : vector<2x1xf32> to vector<2x256xf32>
    %1309 = arith.mulf %1241, %1308 : vector<2x256xf32>
    %1310 = arith.addf %1305, %1309 : vector<2x256xf32>
    %c25_616 = arith.constant 25 : index
    %c0_617 = arith.constant 0 : index
    %c0_618 = arith.constant 0 : index
    %1311 = vector.load %arg10[%c25_616, %c0_617, %c0_618] : memref<81x2x1xf32, #tpu.memory_space<vmem>>, vector<1x2x1xf32>
    %1312 = vector.shape_cast %1311 : vector<1x2x1xf32> to vector<2x1xf32>
    %1313 = vector.broadcast %1312 : vector<2x1xf32> to vector<2x256xf32>
    %1314 = arith.mulf %1244, %1313 : vector<2x256xf32>
    %1315 = arith.addf %1310, %1314 : vector<2x256xf32>
    %c128_i32 = arith.constant 128 : i32
    %1316 = tpu.dynamic_rotate %1315 by %c128_i32 dim 1 : vector<2x256xf32>, i32 -> vector<2x256xf32>
    %1317 = vector.broadcast %280 : vector<1x256xf32> to vector<2x256xf32>
    %1318 = arith.mulf %1317, %1316 : vector<2x256xf32>
    %1319 = arith.addf %1281, %1318 : vector<2x256xf32>
    %c28_619 = arith.constant 28 : index
    %c0_620 = arith.constant 0 : index
    %c0_621 = arith.constant 0 : index
    %1320 = vector.load %arg10[%c28_619, %c0_620, %c0_621] : memref<81x2x1xf32, #tpu.memory_space<vmem>>, vector<1x2x1xf32>
    %1321 = vector.shape_cast %1320 : vector<1x2x1xf32> to vector<2x1xf32>
    %1322 = vector.broadcast %1321 : vector<2x1xf32> to vector<2x256xf32>
    %1323 = arith.mulf %1227, %1322 : vector<2x256xf32>
    %c29_622 = arith.constant 29 : index
    %c0_623 = arith.constant 0 : index
    %c0_624 = arith.constant 0 : index
    %1324 = vector.load %arg10[%c29_622, %c0_623, %c0_624] : memref<81x2x1xf32, #tpu.memory_space<vmem>>, vector<1x2x1xf32>
    %1325 = vector.shape_cast %1324 : vector<1x2x1xf32> to vector<2x1xf32>
    %1326 = vector.broadcast %1325 : vector<2x1xf32> to vector<2x256xf32>
    %1327 = arith.mulf %1230, %1326 : vector<2x256xf32>
    %1328 = arith.addf %1323, %1327 : vector<2x256xf32>
    %c30_625 = arith.constant 30 : index
    %c0_626 = arith.constant 0 : index
    %c0_627 = arith.constant 0 : index
    %1329 = vector.load %arg10[%c30_625, %c0_626, %c0_627] : memref<81x2x1xf32, #tpu.memory_space<vmem>>, vector<1x2x1xf32>
    %1330 = vector.shape_cast %1329 : vector<1x2x1xf32> to vector<2x1xf32>
    %1331 = vector.broadcast %1330 : vector<2x1xf32> to vector<2x256xf32>
    %1332 = arith.mulf %1233, %1331 : vector<2x256xf32>
    %1333 = arith.addf %1328, %1332 : vector<2x256xf32>
    %c31_628 = arith.constant 31 : index
    %c0_629 = arith.constant 0 : index
    %c0_630 = arith.constant 0 : index
    %1334 = vector.load %arg10[%c31_628, %c0_629, %c0_630] : memref<81x2x1xf32, #tpu.memory_space<vmem>>, vector<1x2x1xf32>
    %1335 = vector.shape_cast %1334 : vector<1x2x1xf32> to vector<2x1xf32>
    %1336 = vector.broadcast %1335 : vector<2x1xf32> to vector<2x256xf32>
    %1337 = arith.mulf %1235, %1336 : vector<2x256xf32>
    %1338 = arith.addf %1333, %1337 : vector<2x256xf32>
    %c32_631 = arith.constant 32 : index
    %c0_632 = arith.constant 0 : index
    %c0_633 = arith.constant 0 : index
    %1339 = vector.load %arg10[%c32_631, %c0_632, %c0_633] : memref<81x2x1xf32, #tpu.memory_space<vmem>>, vector<1x2x1xf32>
    %1340 = vector.shape_cast %1339 : vector<1x2x1xf32> to vector<2x1xf32>
    %1341 = vector.broadcast %1340 : vector<2x1xf32> to vector<2x256xf32>
    %1342 = arith.mulf %1238, %1341 : vector<2x256xf32>
    %1343 = arith.addf %1338, %1342 : vector<2x256xf32>
    %c33_634 = arith.constant 33 : index
    %c0_635 = arith.constant 0 : index
    %c0_636 = arith.constant 0 : index
    %1344 = vector.load %arg10[%c33_634, %c0_635, %c0_636] : memref<81x2x1xf32, #tpu.memory_space<vmem>>, vector<1x2x1xf32>
    %1345 = vector.shape_cast %1344 : vector<1x2x1xf32> to vector<2x1xf32>
    %1346 = vector.broadcast %1345 : vector<2x1xf32> to vector<2x256xf32>
    %1347 = arith.mulf %1241, %1346 : vector<2x256xf32>
    %1348 = arith.addf %1343, %1347 : vector<2x256xf32>
    %c34_637 = arith.constant 34 : index
    %c0_638 = arith.constant 0 : index
    %c0_639 = arith.constant 0 : index
    %1349 = vector.load %arg10[%c34_637, %c0_638, %c0_639] : memref<81x2x1xf32, #tpu.memory_space<vmem>>, vector<1x2x1xf32>
    %1350 = vector.shape_cast %1349 : vector<1x2x1xf32> to vector<2x1xf32>
    %1351 = vector.broadcast %1350 : vector<2x1xf32> to vector<2x256xf32>
    %1352 = arith.mulf %1244, %1351 : vector<2x256xf32>
    %1353 = arith.addf %1348, %1352 : vector<2x256xf32>
    %c64_i32 = arith.constant 64 : i32
    %1354 = tpu.dynamic_rotate %1353 by %c64_i32 dim 1 : vector<2x256xf32>, i32 -> vector<2x256xf32>
    %1355 = vector.broadcast %292 : vector<1x256xf32> to vector<2x256xf32>
    %1356 = arith.mulf %1355, %1354 : vector<2x256xf32>
    %1357 = arith.addf %1319, %1356 : vector<2x256xf32>
    %c37_640 = arith.constant 37 : index
    %c0_641 = arith.constant 0 : index
    %c0_642 = arith.constant 0 : index
    %1358 = vector.load %arg10[%c37_640, %c0_641, %c0_642] : memref<81x2x1xf32, #tpu.memory_space<vmem>>, vector<1x2x1xf32>
    %1359 = vector.shape_cast %1358 : vector<1x2x1xf32> to vector<2x1xf32>
    %1360 = vector.broadcast %1359 : vector<2x1xf32> to vector<2x256xf32>
    %1361 = arith.mulf %1227, %1360 : vector<2x256xf32>
    %c38_643 = arith.constant 38 : index
    %c0_644 = arith.constant 0 : index
    %c0_645 = arith.constant 0 : index
    %1362 = vector.load %arg10[%c38_643, %c0_644, %c0_645] : memref<81x2x1xf32, #tpu.memory_space<vmem>>, vector<1x2x1xf32>
    %1363 = vector.shape_cast %1362 : vector<1x2x1xf32> to vector<2x1xf32>
    %1364 = vector.broadcast %1363 : vector<2x1xf32> to vector<2x256xf32>
    %1365 = arith.mulf %1230, %1364 : vector<2x256xf32>
    %1366 = arith.addf %1361, %1365 : vector<2x256xf32>
    %c39_646 = arith.constant 39 : index
    %c0_647 = arith.constant 0 : index
    %c0_648 = arith.constant 0 : index
    %1367 = vector.load %arg10[%c39_646, %c0_647, %c0_648] : memref<81x2x1xf32, #tpu.memory_space<vmem>>, vector<1x2x1xf32>
    %1368 = vector.shape_cast %1367 : vector<1x2x1xf32> to vector<2x1xf32>
    %1369 = vector.broadcast %1368 : vector<2x1xf32> to vector<2x256xf32>
    %1370 = arith.mulf %1233, %1369 : vector<2x256xf32>
    %1371 = arith.addf %1366, %1370 : vector<2x256xf32>
    %c40_649 = arith.constant 40 : index
    %c0_650 = arith.constant 0 : index
    %c0_651 = arith.constant 0 : index
    %1372 = vector.load %arg10[%c40_649, %c0_650, %c0_651] : memref<81x2x1xf32, #tpu.memory_space<vmem>>, vector<1x2x1xf32>
    %1373 = vector.shape_cast %1372 : vector<1x2x1xf32> to vector<2x1xf32>
    %1374 = vector.broadcast %1373 : vector<2x1xf32> to vector<2x256xf32>
    %1375 = arith.mulf %1235, %1374 : vector<2x256xf32>
    %1376 = arith.addf %1371, %1375 : vector<2x256xf32>
    %c41_652 = arith.constant 41 : index
    %c0_653 = arith.constant 0 : index
    %c0_654 = arith.constant 0 : index
    %1377 = vector.load %arg10[%c41_652, %c0_653, %c0_654] : memref<81x2x1xf32, #tpu.memory_space<vmem>>, vector<1x2x1xf32>
    %1378 = vector.shape_cast %1377 : vector<1x2x1xf32> to vector<2x1xf32>
    %1379 = vector.broadcast %1378 : vector<2x1xf32> to vector<2x256xf32>
    %1380 = arith.mulf %1238, %1379 : vector<2x256xf32>
    %1381 = arith.addf %1376, %1380 : vector<2x256xf32>
    %c42_655 = arith.constant 42 : index
    %c0_656 = arith.constant 0 : index
    %c0_657 = arith.constant 0 : index
    %1382 = vector.load %arg10[%c42_655, %c0_656, %c0_657] : memref<81x2x1xf32, #tpu.memory_space<vmem>>, vector<1x2x1xf32>
    %1383 = vector.shape_cast %1382 : vector<1x2x1xf32> to vector<2x1xf32>
    %1384 = vector.broadcast %1383 : vector<2x1xf32> to vector<2x256xf32>
    %1385 = arith.mulf %1241, %1384 : vector<2x256xf32>
    %1386 = arith.addf %1381, %1385 : vector<2x256xf32>
    %c43_658 = arith.constant 43 : index
    %c0_659 = arith.constant 0 : index
    %c0_660 = arith.constant 0 : index
    %1387 = vector.load %arg10[%c43_658, %c0_659, %c0_660] : memref<81x2x1xf32, #tpu.memory_space<vmem>>, vector<1x2x1xf32>
    %1388 = vector.shape_cast %1387 : vector<1x2x1xf32> to vector<2x1xf32>
    %1389 = vector.broadcast %1388 : vector<2x1xf32> to vector<2x256xf32>
    %1390 = arith.mulf %1244, %1389 : vector<2x256xf32>
    %1391 = arith.addf %1386, %1390 : vector<2x256xf32>
    %1392 = vector.broadcast %304 : vector<1x256xf32> to vector<2x256xf32>
    %1393 = arith.mulf %1392, %1391 : vector<2x256xf32>
    %1394 = arith.addf %1357, %1393 : vector<2x256xf32>
    %c46_661 = arith.constant 46 : index
    %c0_662 = arith.constant 0 : index
    %c0_663 = arith.constant 0 : index
    %1395 = vector.load %arg10[%c46_661, %c0_662, %c0_663] : memref<81x2x1xf32, #tpu.memory_space<vmem>>, vector<1x2x1xf32>
    %1396 = vector.shape_cast %1395 : vector<1x2x1xf32> to vector<2x1xf32>
    %1397 = vector.broadcast %1396 : vector<2x1xf32> to vector<2x256xf32>
    %1398 = arith.mulf %1227, %1397 : vector<2x256xf32>
    %c47_664 = arith.constant 47 : index
    %c0_665 = arith.constant 0 : index
    %c0_666 = arith.constant 0 : index
    %1399 = vector.load %arg10[%c47_664, %c0_665, %c0_666] : memref<81x2x1xf32, #tpu.memory_space<vmem>>, vector<1x2x1xf32>
    %1400 = vector.shape_cast %1399 : vector<1x2x1xf32> to vector<2x1xf32>
    %1401 = vector.broadcast %1400 : vector<2x1xf32> to vector<2x256xf32>
    %1402 = arith.mulf %1230, %1401 : vector<2x256xf32>
    %1403 = arith.addf %1398, %1402 : vector<2x256xf32>
    %c48_667 = arith.constant 48 : index
    %c0_668 = arith.constant 0 : index
    %c0_669 = arith.constant 0 : index
    %1404 = vector.load %arg10[%c48_667, %c0_668, %c0_669] : memref<81x2x1xf32, #tpu.memory_space<vmem>>, vector<1x2x1xf32>
    %1405 = vector.shape_cast %1404 : vector<1x2x1xf32> to vector<2x1xf32>
    %1406 = vector.broadcast %1405 : vector<2x1xf32> to vector<2x256xf32>
    %1407 = arith.mulf %1233, %1406 : vector<2x256xf32>
    %1408 = arith.addf %1403, %1407 : vector<2x256xf32>
    %c49 = arith.constant 49 : index
    %c0_670 = arith.constant 0 : index
    %c0_671 = arith.constant 0 : index
    %1409 = vector.load %arg10[%c49, %c0_670, %c0_671] : memref<81x2x1xf32, #tpu.memory_space<vmem>>, vector<1x2x1xf32>
    %1410 = vector.shape_cast %1409 : vector<1x2x1xf32> to vector<2x1xf32>
    %1411 = vector.broadcast %1410 : vector<2x1xf32> to vector<2x256xf32>
    %1412 = arith.mulf %1235, %1411 : vector<2x256xf32>
    %1413 = arith.addf %1408, %1412 : vector<2x256xf32>
    %c50 = arith.constant 50 : index
    %c0_672 = arith.constant 0 : index
    %c0_673 = arith.constant 0 : index
    %1414 = vector.load %arg10[%c50, %c0_672, %c0_673] : memref<81x2x1xf32, #tpu.memory_space<vmem>>, vector<1x2x1xf32>
    %1415 = vector.shape_cast %1414 : vector<1x2x1xf32> to vector<2x1xf32>
    %1416 = vector.broadcast %1415 : vector<2x1xf32> to vector<2x256xf32>
    %1417 = arith.mulf %1238, %1416 : vector<2x256xf32>
    %1418 = arith.addf %1413, %1417 : vector<2x256xf32>
    %c51 = arith.constant 51 : index
    %c0_674 = arith.constant 0 : index
    %c0_675 = arith.constant 0 : index
    %1419 = vector.load %arg10[%c51, %c0_674, %c0_675] : memref<81x2x1xf32, #tpu.memory_space<vmem>>, vector<1x2x1xf32>
    %1420 = vector.shape_cast %1419 : vector<1x2x1xf32> to vector<2x1xf32>
    %1421 = vector.broadcast %1420 : vector<2x1xf32> to vector<2x256xf32>
    %1422 = arith.mulf %1241, %1421 : vector<2x256xf32>
    %1423 = arith.addf %1418, %1422 : vector<2x256xf32>
    %c52 = arith.constant 52 : index
    %c0_676 = arith.constant 0 : index
    %c0_677 = arith.constant 0 : index
    %1424 = vector.load %arg10[%c52, %c0_676, %c0_677] : memref<81x2x1xf32, #tpu.memory_space<vmem>>, vector<1x2x1xf32>
    %1425 = vector.shape_cast %1424 : vector<1x2x1xf32> to vector<2x1xf32>
    %1426 = vector.broadcast %1425 : vector<2x1xf32> to vector<2x256xf32>
    %1427 = arith.mulf %1244, %1426 : vector<2x256xf32>
    %1428 = arith.addf %1423, %1427 : vector<2x256xf32>
    %c192_i32_678 = arith.constant 192 : i32
    %1429 = tpu.dynamic_rotate %1428 by %c192_i32_678 dim 1 : vector<2x256xf32>, i32 -> vector<2x256xf32>
    %1430 = vector.broadcast %316 : vector<1x256xf32> to vector<2x256xf32>
    %1431 = arith.mulf %1430, %1429 : vector<2x256xf32>
    %1432 = arith.addf %1394, %1431 : vector<2x256xf32>
    %c55 = arith.constant 55 : index
    %c0_679 = arith.constant 0 : index
    %c0_680 = arith.constant 0 : index
    %1433 = vector.load %arg10[%c55, %c0_679, %c0_680] : memref<81x2x1xf32, #tpu.memory_space<vmem>>, vector<1x2x1xf32>
    %1434 = vector.shape_cast %1433 : vector<1x2x1xf32> to vector<2x1xf32>
    %1435 = vector.broadcast %1434 : vector<2x1xf32> to vector<2x256xf32>
    %1436 = arith.mulf %1227, %1435 : vector<2x256xf32>
    %c56 = arith.constant 56 : index
    %c0_681 = arith.constant 0 : index
    %c0_682 = arith.constant 0 : index
    %1437 = vector.load %arg10[%c56, %c0_681, %c0_682] : memref<81x2x1xf32, #tpu.memory_space<vmem>>, vector<1x2x1xf32>
    %1438 = vector.shape_cast %1437 : vector<1x2x1xf32> to vector<2x1xf32>
    %1439 = vector.broadcast %1438 : vector<2x1xf32> to vector<2x256xf32>
    %1440 = arith.mulf %1230, %1439 : vector<2x256xf32>
    %1441 = arith.addf %1436, %1440 : vector<2x256xf32>
    %c57 = arith.constant 57 : index
    %c0_683 = arith.constant 0 : index
    %c0_684 = arith.constant 0 : index
    %1442 = vector.load %arg10[%c57, %c0_683, %c0_684] : memref<81x2x1xf32, #tpu.memory_space<vmem>>, vector<1x2x1xf32>
    %1443 = vector.shape_cast %1442 : vector<1x2x1xf32> to vector<2x1xf32>
    %1444 = vector.broadcast %1443 : vector<2x1xf32> to vector<2x256xf32>
    %1445 = arith.mulf %1233, %1444 : vector<2x256xf32>
    %1446 = arith.addf %1441, %1445 : vector<2x256xf32>
    %c58 = arith.constant 58 : index
    %c0_685 = arith.constant 0 : index
    %c0_686 = arith.constant 0 : index
    %1447 = vector.load %arg10[%c58, %c0_685, %c0_686] : memref<81x2x1xf32, #tpu.memory_space<vmem>>, vector<1x2x1xf32>
    %1448 = vector.shape_cast %1447 : vector<1x2x1xf32> to vector<2x1xf32>
    %1449 = vector.broadcast %1448 : vector<2x1xf32> to vector<2x256xf32>
    %1450 = arith.mulf %1235, %1449 : vector<2x256xf32>
    %1451 = arith.addf %1446, %1450 : vector<2x256xf32>
    %c59 = arith.constant 59 : index
    %c0_687 = arith.constant 0 : index
    %c0_688 = arith.constant 0 : index
    %1452 = vector.load %arg10[%c59, %c0_687, %c0_688] : memref<81x2x1xf32, #tpu.memory_space<vmem>>, vector<1x2x1xf32>
    %1453 = vector.shape_cast %1452 : vector<1x2x1xf32> to vector<2x1xf32>
    %1454 = vector.broadcast %1453 : vector<2x1xf32> to vector<2x256xf32>
    %1455 = arith.mulf %1238, %1454 : vector<2x256xf32>
    %1456 = arith.addf %1451, %1455 : vector<2x256xf32>
    %c60 = arith.constant 60 : index
    %c0_689 = arith.constant 0 : index
    %c0_690 = arith.constant 0 : index
    %1457 = vector.load %arg10[%c60, %c0_689, %c0_690] : memref<81x2x1xf32, #tpu.memory_space<vmem>>, vector<1x2x1xf32>
    %1458 = vector.shape_cast %1457 : vector<1x2x1xf32> to vector<2x1xf32>
    %1459 = vector.broadcast %1458 : vector<2x1xf32> to vector<2x256xf32>
    %1460 = arith.mulf %1241, %1459 : vector<2x256xf32>
    %1461 = arith.addf %1456, %1460 : vector<2x256xf32>
    %c61 = arith.constant 61 : index
    %c0_691 = arith.constant 0 : index
    %c0_692 = arith.constant 0 : index
    %1462 = vector.load %arg10[%c61, %c0_691, %c0_692] : memref<81x2x1xf32, #tpu.memory_space<vmem>>, vector<1x2x1xf32>
    %1463 = vector.shape_cast %1462 : vector<1x2x1xf32> to vector<2x1xf32>
    %1464 = vector.broadcast %1463 : vector<2x1xf32> to vector<2x256xf32>
    %1465 = arith.mulf %1244, %1464 : vector<2x256xf32>
    %1466 = arith.addf %1461, %1465 : vector<2x256xf32>
    %c128_i32_693 = arith.constant 128 : i32
    %1467 = tpu.dynamic_rotate %1466 by %c128_i32_693 dim 1 : vector<2x256xf32>, i32 -> vector<2x256xf32>
    %1468 = vector.broadcast %328 : vector<1x256xf32> to vector<2x256xf32>
    %1469 = arith.mulf %1468, %1467 : vector<2x256xf32>
    %1470 = arith.addf %1432, %1469 : vector<2x256xf32>
    %c64 = arith.constant 64 : index
    %c0_694 = arith.constant 0 : index
    %c0_695 = arith.constant 0 : index
    %1471 = vector.load %arg10[%c64, %c0_694, %c0_695] : memref<81x2x1xf32, #tpu.memory_space<vmem>>, vector<1x2x1xf32>
    %1472 = vector.shape_cast %1471 : vector<1x2x1xf32> to vector<2x1xf32>
    %1473 = vector.broadcast %1472 : vector<2x1xf32> to vector<2x256xf32>
    %1474 = arith.mulf %1227, %1473 : vector<2x256xf32>
    %c65 = arith.constant 65 : index
    %c0_696 = arith.constant 0 : index
    %c0_697 = arith.constant 0 : index
    %1475 = vector.load %arg10[%c65, %c0_696, %c0_697] : memref<81x2x1xf32, #tpu.memory_space<vmem>>, vector<1x2x1xf32>
    %1476 = vector.shape_cast %1475 : vector<1x2x1xf32> to vector<2x1xf32>
    %1477 = vector.broadcast %1476 : vector<2x1xf32> to vector<2x256xf32>
    %1478 = arith.mulf %1230, %1477 : vector<2x256xf32>
    %1479 = arith.addf %1474, %1478 : vector<2x256xf32>
    %c66 = arith.constant 66 : index
    %c0_698 = arith.constant 0 : index
    %c0_699 = arith.constant 0 : index
    %1480 = vector.load %arg10[%c66, %c0_698, %c0_699] : memref<81x2x1xf32, #tpu.memory_space<vmem>>, vector<1x2x1xf32>
    %1481 = vector.shape_cast %1480 : vector<1x2x1xf32> to vector<2x1xf32>
    %1482 = vector.broadcast %1481 : vector<2x1xf32> to vector<2x256xf32>
    %1483 = arith.mulf %1233, %1482 : vector<2x256xf32>
    %1484 = arith.addf %1479, %1483 : vector<2x256xf32>
    %c67 = arith.constant 67 : index
    %c0_700 = arith.constant 0 : index
    %c0_701 = arith.constant 0 : index
    %1485 = vector.load %arg10[%c67, %c0_700, %c0_701] : memref<81x2x1xf32, #tpu.memory_space<vmem>>, vector<1x2x1xf32>
    %1486 = vector.shape_cast %1485 : vector<1x2x1xf32> to vector<2x1xf32>
    %1487 = vector.broadcast %1486 : vector<2x1xf32> to vector<2x256xf32>
    %1488 = arith.mulf %1235, %1487 : vector<2x256xf32>
    %1489 = arith.addf %1484, %1488 : vector<2x256xf32>
    %c68 = arith.constant 68 : index
    %c0_702 = arith.constant 0 : index
    %c0_703 = arith.constant 0 : index
    %1490 = vector.load %arg10[%c68, %c0_702, %c0_703] : memref<81x2x1xf32, #tpu.memory_space<vmem>>, vector<1x2x1xf32>
    %1491 = vector.shape_cast %1490 : vector<1x2x1xf32> to vector<2x1xf32>
    %1492 = vector.broadcast %1491 : vector<2x1xf32> to vector<2x256xf32>
    %1493 = arith.mulf %1238, %1492 : vector<2x256xf32>
    %1494 = arith.addf %1489, %1493 : vector<2x256xf32>
    %c69 = arith.constant 69 : index
    %c0_704 = arith.constant 0 : index
    %c0_705 = arith.constant 0 : index
    %1495 = vector.load %arg10[%c69, %c0_704, %c0_705] : memref<81x2x1xf32, #tpu.memory_space<vmem>>, vector<1x2x1xf32>
    %1496 = vector.shape_cast %1495 : vector<1x2x1xf32> to vector<2x1xf32>
    %1497 = vector.broadcast %1496 : vector<2x1xf32> to vector<2x256xf32>
    %1498 = arith.mulf %1241, %1497 : vector<2x256xf32>
    %1499 = arith.addf %1494, %1498 : vector<2x256xf32>
    %c70 = arith.constant 70 : index
    %c0_706 = arith.constant 0 : index
    %c0_707 = arith.constant 0 : index
    %1500 = vector.load %arg10[%c70, %c0_706, %c0_707] : memref<81x2x1xf32, #tpu.memory_space<vmem>>, vector<1x2x1xf32>
    %1501 = vector.shape_cast %1500 : vector<1x2x1xf32> to vector<2x1xf32>
    %1502 = vector.broadcast %1501 : vector<2x1xf32> to vector<2x256xf32>
    %1503 = arith.mulf %1244, %1502 : vector<2x256xf32>
    %1504 = arith.addf %1499, %1503 : vector<2x256xf32>
    %c64_i32_708 = arith.constant 64 : i32
    %1505 = tpu.dynamic_rotate %1504 by %c64_i32_708 dim 1 : vector<2x256xf32>, i32 -> vector<2x256xf32>
    %1506 = vector.broadcast %340 : vector<1x256xf32> to vector<2x256xf32>
    %1507 = arith.mulf %1506, %1505 : vector<2x256xf32>
    %1508 = arith.addf %1470, %1507 : vector<2x256xf32>
    %1509 = vector.extract_strided_slice %4 {offsets = [56, 0], sizes = [2, 1], strides = [1, 1]} : vector<128x1xf32> to vector<2x1xf32>
    %1510 = vector.broadcast %1509 : vector<2x1xf32> to vector<2x256xf32>
    %1511 = arith.addf %1508, %1510 : vector<2x256xf32>
    %c0_709 = arith.constant 0 : index
    %c0_710 = arith.constant 0 : index
    %1512 = vector.load %arg11[%c0_709, %c0_710] : memref<2x2xf32, #tpu.memory_space<vmem>>, vector<2x2xf32>
    %cst_711 = arith.constant dense<0.000000e+00> : vector<2x256xf32>
    %1513 = tpu.matmul %1512, %1511, %cst_711 {dimension_numbers = #tpu.dot_dimension_numbers<[1], [0], [0], [1], [0, 0, 1, 1], [], []>} : vector<2x2xf32>, vector<2x256xf32>, vector<2x256xf32> -> vector<2x256xf32>
    %1514 = vector.extract_strided_slice %4 {offsets = [64, 0], sizes = [2, 1], strides = [1, 1]} : vector<128x1xf32> to vector<2x1xf32>
    %1515 = vector.broadcast %1514 : vector<2x1xf32> to vector<2x256xf32>
    %1516 = arith.addf %1513, %1515 : vector<2x256xf32>
    %1517 = arith.mulf %1516, %1224 : vector<2x256xf32>
    %c2_i32_712 = arith.constant 2 : i32
    %1518 = tpu.dynamic_rotate %660 by %c2_i32_712 dim 1 : vector<2x256xf32>, i32 -> vector<2x256xf32>
    %1519 = vector.broadcast %352 : vector<1x256xf32> to vector<2x256xf32>
    %1520 = arith.mulf %1519, %1518 : vector<2x256xf32>
    %c1_i32_713 = arith.constant 1 : i32
    %1521 = tpu.dynamic_rotate %660 by %c1_i32_713 dim 1 : vector<2x256xf32>, i32 -> vector<2x256xf32>
    %1522 = vector.broadcast %364 : vector<1x256xf32> to vector<2x256xf32>
    %1523 = arith.mulf %1522, %1521 : vector<2x256xf32>
    %1524 = vector.broadcast %376 : vector<1x256xf32> to vector<2x256xf32>
    %1525 = arith.mulf %1524, %660 : vector<2x256xf32>
    %c255_i32_714 = arith.constant 255 : i32
    %1526 = tpu.dynamic_rotate %660 by %c255_i32_714 dim 1 : vector<2x256xf32>, i32 -> vector<2x256xf32>
    %1527 = vector.broadcast %388 : vector<1x256xf32> to vector<2x256xf32>
    %1528 = arith.mulf %1527, %1526 : vector<2x256xf32>
    %c254_i32_715 = arith.constant 254 : i32
    %1529 = tpu.dynamic_rotate %660 by %c254_i32_715 dim 1 : vector<2x256xf32>, i32 -> vector<2x256xf32>
    %1530 = vector.broadcast %400 : vector<1x256xf32> to vector<2x256xf32>
    %1531 = arith.mulf %1530, %1529 : vector<2x256xf32>
    %c0_716 = arith.constant 0 : index
    %c0_717 = arith.constant 0 : index
    %c0_718 = arith.constant 0 : index
    %1532 = vector.load %arg13[%c0_716, %c0_717, %c0_718] : memref<25x2x1xf32, #tpu.memory_space<vmem>>, vector<1x2x1xf32>
    %1533 = vector.shape_cast %1532 : vector<1x2x1xf32> to vector<2x1xf32>
    %1534 = vector.broadcast %1533 : vector<2x1xf32> to vector<2x256xf32>
    %1535 = arith.mulf %1520, %1534 : vector<2x256xf32>
    %c1_719 = arith.constant 1 : index
    %c0_720 = arith.constant 0 : index
    %c0_721 = arith.constant 0 : index
    %1536 = vector.load %arg13[%c1_719, %c0_720, %c0_721] : memref<25x2x1xf32, #tpu.memory_space<vmem>>, vector<1x2x1xf32>
    %1537 = vector.shape_cast %1536 : vector<1x2x1xf32> to vector<2x1xf32>
    %1538 = vector.broadcast %1537 : vector<2x1xf32> to vector<2x256xf32>
    %1539 = arith.mulf %1523, %1538 : vector<2x256xf32>
    %1540 = arith.addf %1535, %1539 : vector<2x256xf32>
    %c2_722 = arith.constant 2 : index
    %c0_723 = arith.constant 0 : index
    %c0_724 = arith.constant 0 : index
    %1541 = vector.load %arg13[%c2_722, %c0_723, %c0_724] : memref<25x2x1xf32, #tpu.memory_space<vmem>>, vector<1x2x1xf32>
    %1542 = vector.shape_cast %1541 : vector<1x2x1xf32> to vector<2x1xf32>
    %1543 = vector.broadcast %1542 : vector<2x1xf32> to vector<2x256xf32>
    %1544 = arith.mulf %1525, %1543 : vector<2x256xf32>
    %1545 = arith.addf %1540, %1544 : vector<2x256xf32>
    %c3_725 = arith.constant 3 : index
    %c0_726 = arith.constant 0 : index
    %c0_727 = arith.constant 0 : index
    %1546 = vector.load %arg13[%c3_725, %c0_726, %c0_727] : memref<25x2x1xf32, #tpu.memory_space<vmem>>, vector<1x2x1xf32>
    %1547 = vector.shape_cast %1546 : vector<1x2x1xf32> to vector<2x1xf32>
    %1548 = vector.broadcast %1547 : vector<2x1xf32> to vector<2x256xf32>
    %1549 = arith.mulf %1528, %1548 : vector<2x256xf32>
    %1550 = arith.addf %1545, %1549 : vector<2x256xf32>
    %c4_728 = arith.constant 4 : index
    %c0_729 = arith.constant 0 : index
    %c0_730 = arith.constant 0 : index
    %1551 = vector.load %arg13[%c4_728, %c0_729, %c0_730] : memref<25x2x1xf32, #tpu.memory_space<vmem>>, vector<1x2x1xf32>
    %1552 = vector.shape_cast %1551 : vector<1x2x1xf32> to vector<2x1xf32>
    %1553 = vector.broadcast %1552 : vector<2x1xf32> to vector<2x256xf32>
    %1554 = arith.mulf %1531, %1553 : vector<2x256xf32>
    %1555 = arith.addf %1550, %1554 : vector<2x256xf32>
    %c32_i32_731 = arith.constant 32 : i32
    %1556 = tpu.dynamic_rotate %1555 by %c32_i32_731 dim 1 : vector<2x256xf32>, i32 -> vector<2x256xf32>
    %1557 = vector.broadcast %412 : vector<1x256xf32> to vector<2x256xf32>
    %1558 = arith.mulf %1557, %1556 : vector<2x256xf32>
    %c5_732 = arith.constant 5 : index
    %c0_733 = arith.constant 0 : index
    %c0_734 = arith.constant 0 : index
    %1559 = vector.load %arg13[%c5_732, %c0_733, %c0_734] : memref<25x2x1xf32, #tpu.memory_space<vmem>>, vector<1x2x1xf32>
    %1560 = vector.shape_cast %1559 : vector<1x2x1xf32> to vector<2x1xf32>
    %1561 = vector.broadcast %1560 : vector<2x1xf32> to vector<2x256xf32>
    %1562 = arith.mulf %1520, %1561 : vector<2x256xf32>
    %c6_735 = arith.constant 6 : index
    %c0_736 = arith.constant 0 : index
    %c0_737 = arith.constant 0 : index
    %1563 = vector.load %arg13[%c6_735, %c0_736, %c0_737] : memref<25x2x1xf32, #tpu.memory_space<vmem>>, vector<1x2x1xf32>
    %1564 = vector.shape_cast %1563 : vector<1x2x1xf32> to vector<2x1xf32>
    %1565 = vector.broadcast %1564 : vector<2x1xf32> to vector<2x256xf32>
    %1566 = arith.mulf %1523, %1565 : vector<2x256xf32>
    %1567 = arith.addf %1562, %1566 : vector<2x256xf32>
    %c7_738 = arith.constant 7 : index
    %c0_739 = arith.constant 0 : index
    %c0_740 = arith.constant 0 : index
    %1568 = vector.load %arg13[%c7_738, %c0_739, %c0_740] : memref<25x2x1xf32, #tpu.memory_space<vmem>>, vector<1x2x1xf32>
    %1569 = vector.shape_cast %1568 : vector<1x2x1xf32> to vector<2x1xf32>
    %1570 = vector.broadcast %1569 : vector<2x1xf32> to vector<2x256xf32>
    %1571 = arith.mulf %1525, %1570 : vector<2x256xf32>
    %1572 = arith.addf %1567, %1571 : vector<2x256xf32>
    %c8_741 = arith.constant 8 : index
    %c0_742 = arith.constant 0 : index
    %c0_743 = arith.constant 0 : index
    %1573 = vector.load %arg13[%c8_741, %c0_742, %c0_743] : memref<25x2x1xf32, #tpu.memory_space<vmem>>, vector<1x2x1xf32>
    %1574 = vector.shape_cast %1573 : vector<1x2x1xf32> to vector<2x1xf32>
    %1575 = vector.broadcast %1574 : vector<2x1xf32> to vector<2x256xf32>
    %1576 = arith.mulf %1528, %1575 : vector<2x256xf32>
    %1577 = arith.addf %1572, %1576 : vector<2x256xf32>
    %c9_744 = arith.constant 9 : index
    %c0_745 = arith.constant 0 : index
    %c0_746 = arith.constant 0 : index
    %1578 = vector.load %arg13[%c9_744, %c0_745, %c0_746] : memref<25x2x1xf32, #tpu.memory_space<vmem>>, vector<1x2x1xf32>
    %1579 = vector.shape_cast %1578 : vector<1x2x1xf32> to vector<2x1xf32>
    %1580 = vector.broadcast %1579 : vector<2x1xf32> to vector<2x256xf32>
    %1581 = arith.mulf %1531, %1580 : vector<2x256xf32>
    %1582 = arith.addf %1577, %1581 : vector<2x256xf32>
    %c16_i32_747 = arith.constant 16 : i32
    %1583 = tpu.dynamic_rotate %1582 by %c16_i32_747 dim 1 : vector<2x256xf32>, i32 -> vector<2x256xf32>
    %1584 = vector.broadcast %424 : vector<1x256xf32> to vector<2x256xf32>
    %1585 = arith.mulf %1584, %1583 : vector<2x256xf32>
    %1586 = arith.addf %1558, %1585 : vector<2x256xf32>
    %c10_748 = arith.constant 10 : index
    %c0_749 = arith.constant 0 : index
    %c0_750 = arith.constant 0 : index
    %1587 = vector.load %arg13[%c10_748, %c0_749, %c0_750] : memref<25x2x1xf32, #tpu.memory_space<vmem>>, vector<1x2x1xf32>
    %1588 = vector.shape_cast %1587 : vector<1x2x1xf32> to vector<2x1xf32>
    %1589 = vector.broadcast %1588 : vector<2x1xf32> to vector<2x256xf32>
    %1590 = arith.mulf %1520, %1589 : vector<2x256xf32>
    %c11_751 = arith.constant 11 : index
    %c0_752 = arith.constant 0 : index
    %c0_753 = arith.constant 0 : index
    %1591 = vector.load %arg13[%c11_751, %c0_752, %c0_753] : memref<25x2x1xf32, #tpu.memory_space<vmem>>, vector<1x2x1xf32>
    %1592 = vector.shape_cast %1591 : vector<1x2x1xf32> to vector<2x1xf32>
    %1593 = vector.broadcast %1592 : vector<2x1xf32> to vector<2x256xf32>
    %1594 = arith.mulf %1523, %1593 : vector<2x256xf32>
    %1595 = arith.addf %1590, %1594 : vector<2x256xf32>
    %c12_754 = arith.constant 12 : index
    %c0_755 = arith.constant 0 : index
    %c0_756 = arith.constant 0 : index
    %1596 = vector.load %arg13[%c12_754, %c0_755, %c0_756] : memref<25x2x1xf32, #tpu.memory_space<vmem>>, vector<1x2x1xf32>
    %1597 = vector.shape_cast %1596 : vector<1x2x1xf32> to vector<2x1xf32>
    %1598 = vector.broadcast %1597 : vector<2x1xf32> to vector<2x256xf32>
    %1599 = arith.mulf %1525, %1598 : vector<2x256xf32>
    %1600 = arith.addf %1595, %1599 : vector<2x256xf32>
    %c13_757 = arith.constant 13 : index
    %c0_758 = arith.constant 0 : index
    %c0_759 = arith.constant 0 : index
    %1601 = vector.load %arg13[%c13_757, %c0_758, %c0_759] : memref<25x2x1xf32, #tpu.memory_space<vmem>>, vector<1x2x1xf32>
    %1602 = vector.shape_cast %1601 : vector<1x2x1xf32> to vector<2x1xf32>
    %1603 = vector.broadcast %1602 : vector<2x1xf32> to vector<2x256xf32>
    %1604 = arith.mulf %1528, %1603 : vector<2x256xf32>
    %1605 = arith.addf %1600, %1604 : vector<2x256xf32>
    %c14_760 = arith.constant 14 : index
    %c0_761 = arith.constant 0 : index
    %c0_762 = arith.constant 0 : index
    %1606 = vector.load %arg13[%c14_760, %c0_761, %c0_762] : memref<25x2x1xf32, #tpu.memory_space<vmem>>, vector<1x2x1xf32>
    %1607 = vector.shape_cast %1606 : vector<1x2x1xf32> to vector<2x1xf32>
    %1608 = vector.broadcast %1607 : vector<2x1xf32> to vector<2x256xf32>
    %1609 = arith.mulf %1531, %1608 : vector<2x256xf32>
    %1610 = arith.addf %1605, %1609 : vector<2x256xf32>
    %1611 = vector.broadcast %436 : vector<1x256xf32> to vector<2x256xf32>
    %1612 = arith.mulf %1611, %1610 : vector<2x256xf32>
    %1613 = arith.addf %1586, %1612 : vector<2x256xf32>
    %c15_763 = arith.constant 15 : index
    %c0_764 = arith.constant 0 : index
    %c0_765 = arith.constant 0 : index
    %1614 = vector.load %arg13[%c15_763, %c0_764, %c0_765] : memref<25x2x1xf32, #tpu.memory_space<vmem>>, vector<1x2x1xf32>
    %1615 = vector.shape_cast %1614 : vector<1x2x1xf32> to vector<2x1xf32>
    %1616 = vector.broadcast %1615 : vector<2x1xf32> to vector<2x256xf32>
    %1617 = arith.mulf %1520, %1616 : vector<2x256xf32>
    %c16_766 = arith.constant 16 : index
    %c0_767 = arith.constant 0 : index
    %c0_768 = arith.constant 0 : index
    %1618 = vector.load %arg13[%c16_766, %c0_767, %c0_768] : memref<25x2x1xf32, #tpu.memory_space<vmem>>, vector<1x2x1xf32>
    %1619 = vector.shape_cast %1618 : vector<1x2x1xf32> to vector<2x1xf32>
    %1620 = vector.broadcast %1619 : vector<2x1xf32> to vector<2x256xf32>
    %1621 = arith.mulf %1523, %1620 : vector<2x256xf32>
    %1622 = arith.addf %1617, %1621 : vector<2x256xf32>
    %c17_769 = arith.constant 17 : index
    %c0_770 = arith.constant 0 : index
    %c0_771 = arith.constant 0 : index
    %1623 = vector.load %arg13[%c17_769, %c0_770, %c0_771] : memref<25x2x1xf32, #tpu.memory_space<vmem>>, vector<1x2x1xf32>
    %1624 = vector.shape_cast %1623 : vector<1x2x1xf32> to vector<2x1xf32>
    %1625 = vector.broadcast %1624 : vector<2x1xf32> to vector<2x256xf32>
    %1626 = arith.mulf %1525, %1625 : vector<2x256xf32>
    %1627 = arith.addf %1622, %1626 : vector<2x256xf32>
    %c18_772 = arith.constant 18 : index
    %c0_773 = arith.constant 0 : index
    %c0_774 = arith.constant 0 : index
    %1628 = vector.load %arg13[%c18_772, %c0_773, %c0_774] : memref<25x2x1xf32, #tpu.memory_space<vmem>>, vector<1x2x1xf32>
    %1629 = vector.shape_cast %1628 : vector<1x2x1xf32> to vector<2x1xf32>
    %1630 = vector.broadcast %1629 : vector<2x1xf32> to vector<2x256xf32>
    %1631 = arith.mulf %1528, %1630 : vector<2x256xf32>
    %1632 = arith.addf %1627, %1631 : vector<2x256xf32>
    %c19_775 = arith.constant 19 : index
    %c0_776 = arith.constant 0 : index
    %c0_777 = arith.constant 0 : index
    %1633 = vector.load %arg13[%c19_775, %c0_776, %c0_777] : memref<25x2x1xf32, #tpu.memory_space<vmem>>, vector<1x2x1xf32>
    %1634 = vector.shape_cast %1633 : vector<1x2x1xf32> to vector<2x1xf32>
    %1635 = vector.broadcast %1634 : vector<2x1xf32> to vector<2x256xf32>
    %1636 = arith.mulf %1531, %1635 : vector<2x256xf32>
    %1637 = arith.addf %1632, %1636 : vector<2x256xf32>
    %c240_i32_778 = arith.constant 240 : i32
    %1638 = tpu.dynamic_rotate %1637 by %c240_i32_778 dim 1 : vector<2x256xf32>, i32 -> vector<2x256xf32>
    %1639 = vector.broadcast %448 : vector<1x256xf32> to vector<2x256xf32>
    %1640 = arith.mulf %1639, %1638 : vector<2x256xf32>
    %1641 = arith.addf %1613, %1640 : vector<2x256xf32>
    %c20_779 = arith.constant 20 : index
    %c0_780 = arith.constant 0 : index
    %c0_781 = arith.constant 0 : index
    %1642 = vector.load %arg13[%c20_779, %c0_780, %c0_781] : memref<25x2x1xf32, #tpu.memory_space<vmem>>, vector<1x2x1xf32>
    %1643 = vector.shape_cast %1642 : vector<1x2x1xf32> to vector<2x1xf32>
    %1644 = vector.broadcast %1643 : vector<2x1xf32> to vector<2x256xf32>
    %1645 = arith.mulf %1520, %1644 : vector<2x256xf32>
    %c21_782 = arith.constant 21 : index
    %c0_783 = arith.constant 0 : index
    %c0_784 = arith.constant 0 : index
    %1646 = vector.load %arg13[%c21_782, %c0_783, %c0_784] : memref<25x2x1xf32, #tpu.memory_space<vmem>>, vector<1x2x1xf32>
    %1647 = vector.shape_cast %1646 : vector<1x2x1xf32> to vector<2x1xf32>
    %1648 = vector.broadcast %1647 : vector<2x1xf32> to vector<2x256xf32>
    %1649 = arith.mulf %1523, %1648 : vector<2x256xf32>
    %1650 = arith.addf %1645, %1649 : vector<2x256xf32>
    %c22_785 = arith.constant 22 : index
    %c0_786 = arith.constant 0 : index
    %c0_787 = arith.constant 0 : index
    %1651 = vector.load %arg13[%c22_785, %c0_786, %c0_787] : memref<25x2x1xf32, #tpu.memory_space<vmem>>, vector<1x2x1xf32>
    %1652 = vector.shape_cast %1651 : vector<1x2x1xf32> to vector<2x1xf32>
    %1653 = vector.broadcast %1652 : vector<2x1xf32> to vector<2x256xf32>
    %1654 = arith.mulf %1525, %1653 : vector<2x256xf32>
    %1655 = arith.addf %1650, %1654 : vector<2x256xf32>
    %c23_788 = arith.constant 23 : index
    %c0_789 = arith.constant 0 : index
    %c0_790 = arith.constant 0 : index
    %1656 = vector.load %arg13[%c23_788, %c0_789, %c0_790] : memref<25x2x1xf32, #tpu.memory_space<vmem>>, vector<1x2x1xf32>
    %1657 = vector.shape_cast %1656 : vector<1x2x1xf32> to vector<2x1xf32>
    %1658 = vector.broadcast %1657 : vector<2x1xf32> to vector<2x256xf32>
    %1659 = arith.mulf %1528, %1658 : vector<2x256xf32>
    %1660 = arith.addf %1655, %1659 : vector<2x256xf32>
    %c24_791 = arith.constant 24 : index
    %c0_792 = arith.constant 0 : index
    %c0_793 = arith.constant 0 : index
    %1661 = vector.load %arg13[%c24_791, %c0_792, %c0_793] : memref<25x2x1xf32, #tpu.memory_space<vmem>>, vector<1x2x1xf32>
    %1662 = vector.shape_cast %1661 : vector<1x2x1xf32> to vector<2x1xf32>
    %1663 = vector.broadcast %1662 : vector<2x1xf32> to vector<2x256xf32>
    %1664 = arith.mulf %1531, %1663 : vector<2x256xf32>
    %1665 = arith.addf %1660, %1664 : vector<2x256xf32>
    %c224_i32_794 = arith.constant 224 : i32
    %1666 = tpu.dynamic_rotate %1665 by %c224_i32_794 dim 1 : vector<2x256xf32>, i32 -> vector<2x256xf32>
    %1667 = vector.broadcast %460 : vector<1x256xf32> to vector<2x256xf32>
    %1668 = arith.mulf %1667, %1666 : vector<2x256xf32>
    %1669 = arith.addf %1641, %1668 : vector<2x256xf32>
    %1670 = vector.extract_strided_slice %4 {offsets = [80, 0], sizes = [2, 1], strides = [1, 1]} : vector<128x1xf32> to vector<2x1xf32>
    %1671 = vector.broadcast %1670 : vector<2x1xf32> to vector<2x256xf32>
    %1672 = arith.addf %1669, %1671 : vector<2x256xf32>
    %c0_795 = arith.constant 0 : index
    %c0_796 = arith.constant 0 : index
    %c0_797 = arith.constant 0 : index
    %1673 = vector.load %arg16[%c0_795, %c0_796, %c0_797] : memref<25x2x1xf32, #tpu.memory_space<vmem>>, vector<1x2x1xf32>
    %1674 = vector.shape_cast %1673 : vector<1x2x1xf32> to vector<2x1xf32>
    %1675 = vector.broadcast %1674 : vector<2x1xf32> to vector<2x256xf32>
    %1676 = arith.mulf %1520, %1675 : vector<2x256xf32>
    %c1_798 = arith.constant 1 : index
    %c0_799 = arith.constant 0 : index
    %c0_800 = arith.constant 0 : index
    %1677 = vector.load %arg16[%c1_798, %c0_799, %c0_800] : memref<25x2x1xf32, #tpu.memory_space<vmem>>, vector<1x2x1xf32>
    %1678 = vector.shape_cast %1677 : vector<1x2x1xf32> to vector<2x1xf32>
    %1679 = vector.broadcast %1678 : vector<2x1xf32> to vector<2x256xf32>
    %1680 = arith.mulf %1523, %1679 : vector<2x256xf32>
    %1681 = arith.addf %1676, %1680 : vector<2x256xf32>
    %c2_801 = arith.constant 2 : index
    %c0_802 = arith.constant 0 : index
    %c0_803 = arith.constant 0 : index
    %1682 = vector.load %arg16[%c2_801, %c0_802, %c0_803] : memref<25x2x1xf32, #tpu.memory_space<vmem>>, vector<1x2x1xf32>
    %1683 = vector.shape_cast %1682 : vector<1x2x1xf32> to vector<2x1xf32>
    %1684 = vector.broadcast %1683 : vector<2x1xf32> to vector<2x256xf32>
    %1685 = arith.mulf %1525, %1684 : vector<2x256xf32>
    %1686 = arith.addf %1681, %1685 : vector<2x256xf32>
    %c3_804 = arith.constant 3 : index
    %c0_805 = arith.constant 0 : index
    %c0_806 = arith.constant 0 : index
    %1687 = vector.load %arg16[%c3_804, %c0_805, %c0_806] : memref<25x2x1xf32, #tpu.memory_space<vmem>>, vector<1x2x1xf32>
    %1688 = vector.shape_cast %1687 : vector<1x2x1xf32> to vector<2x1xf32>
    %1689 = vector.broadcast %1688 : vector<2x1xf32> to vector<2x256xf32>
    %1690 = arith.mulf %1528, %1689 : vector<2x256xf32>
    %1691 = arith.addf %1686, %1690 : vector<2x256xf32>
    %c4_807 = arith.constant 4 : index
    %c0_808 = arith.constant 0 : index
    %c0_809 = arith.constant 0 : index
    %1692 = vector.load %arg16[%c4_807, %c0_808, %c0_809] : memref<25x2x1xf32, #tpu.memory_space<vmem>>, vector<1x2x1xf32>
    %1693 = vector.shape_cast %1692 : vector<1x2x1xf32> to vector<2x1xf32>
    %1694 = vector.broadcast %1693 : vector<2x1xf32> to vector<2x256xf32>
    %1695 = arith.mulf %1531, %1694 : vector<2x256xf32>
    %1696 = arith.addf %1691, %1695 : vector<2x256xf32>
    %c32_i32_810 = arith.constant 32 : i32
    %1697 = tpu.dynamic_rotate %1696 by %c32_i32_810 dim 1 : vector<2x256xf32>, i32 -> vector<2x256xf32>
    %1698 = vector.broadcast %412 : vector<1x256xf32> to vector<2x256xf32>
    %1699 = arith.mulf %1698, %1697 : vector<2x256xf32>
    %c5_811 = arith.constant 5 : index
    %c0_812 = arith.constant 0 : index
    %c0_813 = arith.constant 0 : index
    %1700 = vector.load %arg16[%c5_811, %c0_812, %c0_813] : memref<25x2x1xf32, #tpu.memory_space<vmem>>, vector<1x2x1xf32>
    %1701 = vector.shape_cast %1700 : vector<1x2x1xf32> to vector<2x1xf32>
    %1702 = vector.broadcast %1701 : vector<2x1xf32> to vector<2x256xf32>
    %1703 = arith.mulf %1520, %1702 : vector<2x256xf32>
    %c6_814 = arith.constant 6 : index
    %c0_815 = arith.constant 0 : index
    %c0_816 = arith.constant 0 : index
    %1704 = vector.load %arg16[%c6_814, %c0_815, %c0_816] : memref<25x2x1xf32, #tpu.memory_space<vmem>>, vector<1x2x1xf32>
    %1705 = vector.shape_cast %1704 : vector<1x2x1xf32> to vector<2x1xf32>
    %1706 = vector.broadcast %1705 : vector<2x1xf32> to vector<2x256xf32>
    %1707 = arith.mulf %1523, %1706 : vector<2x256xf32>
    %1708 = arith.addf %1703, %1707 : vector<2x256xf32>
    %c7_817 = arith.constant 7 : index
    %c0_818 = arith.constant 0 : index
    %c0_819 = arith.constant 0 : index
    %1709 = vector.load %arg16[%c7_817, %c0_818, %c0_819] : memref<25x2x1xf32, #tpu.memory_space<vmem>>, vector<1x2x1xf32>
    %1710 = vector.shape_cast %1709 : vector<1x2x1xf32> to vector<2x1xf32>
    %1711 = vector.broadcast %1710 : vector<2x1xf32> to vector<2x256xf32>
    %1712 = arith.mulf %1525, %1711 : vector<2x256xf32>
    %1713 = arith.addf %1708, %1712 : vector<2x256xf32>
    %c8_820 = arith.constant 8 : index
    %c0_821 = arith.constant 0 : index
    %c0_822 = arith.constant 0 : index
    %1714 = vector.load %arg16[%c8_820, %c0_821, %c0_822] : memref<25x2x1xf32, #tpu.memory_space<vmem>>, vector<1x2x1xf32>
    %1715 = vector.shape_cast %1714 : vector<1x2x1xf32> to vector<2x1xf32>
    %1716 = vector.broadcast %1715 : vector<2x1xf32> to vector<2x256xf32>
    %1717 = arith.mulf %1528, %1716 : vector<2x256xf32>
    %1718 = arith.addf %1713, %1717 : vector<2x256xf32>
    %c9_823 = arith.constant 9 : index
    %c0_824 = arith.constant 0 : index
    %c0_825 = arith.constant 0 : index
    %1719 = vector.load %arg16[%c9_823, %c0_824, %c0_825] : memref<25x2x1xf32, #tpu.memory_space<vmem>>, vector<1x2x1xf32>
    %1720 = vector.shape_cast %1719 : vector<1x2x1xf32> to vector<2x1xf32>
    %1721 = vector.broadcast %1720 : vector<2x1xf32> to vector<2x256xf32>
    %1722 = arith.mulf %1531, %1721 : vector<2x256xf32>
    %1723 = arith.addf %1718, %1722 : vector<2x256xf32>
    %c16_i32_826 = arith.constant 16 : i32
    %1724 = tpu.dynamic_rotate %1723 by %c16_i32_826 dim 1 : vector<2x256xf32>, i32 -> vector<2x256xf32>
    %1725 = vector.broadcast %424 : vector<1x256xf32> to vector<2x256xf32>
    %1726 = arith.mulf %1725, %1724 : vector<2x256xf32>
    %1727 = arith.addf %1699, %1726 : vector<2x256xf32>
    %c10_827 = arith.constant 10 : index
    %c0_828 = arith.constant 0 : index
    %c0_829 = arith.constant 0 : index
    %1728 = vector.load %arg16[%c10_827, %c0_828, %c0_829] : memref<25x2x1xf32, #tpu.memory_space<vmem>>, vector<1x2x1xf32>
    %1729 = vector.shape_cast %1728 : vector<1x2x1xf32> to vector<2x1xf32>
    %1730 = vector.broadcast %1729 : vector<2x1xf32> to vector<2x256xf32>
    %1731 = arith.mulf %1520, %1730 : vector<2x256xf32>
    %c11_830 = arith.constant 11 : index
    %c0_831 = arith.constant 0 : index
    %c0_832 = arith.constant 0 : index
    %1732 = vector.load %arg16[%c11_830, %c0_831, %c0_832] : memref<25x2x1xf32, #tpu.memory_space<vmem>>, vector<1x2x1xf32>
    %1733 = vector.shape_cast %1732 : vector<1x2x1xf32> to vector<2x1xf32>
    %1734 = vector.broadcast %1733 : vector<2x1xf32> to vector<2x256xf32>
    %1735 = arith.mulf %1523, %1734 : vector<2x256xf32>
    %1736 = arith.addf %1731, %1735 : vector<2x256xf32>
    %c12_833 = arith.constant 12 : index
    %c0_834 = arith.constant 0 : index
    %c0_835 = arith.constant 0 : index
    %1737 = vector.load %arg16[%c12_833, %c0_834, %c0_835] : memref<25x2x1xf32, #tpu.memory_space<vmem>>, vector<1x2x1xf32>
    %1738 = vector.shape_cast %1737 : vector<1x2x1xf32> to vector<2x1xf32>
    %1739 = vector.broadcast %1738 : vector<2x1xf32> to vector<2x256xf32>
    %1740 = arith.mulf %1525, %1739 : vector<2x256xf32>
    %1741 = arith.addf %1736, %1740 : vector<2x256xf32>
    %c13_836 = arith.constant 13 : index
    %c0_837 = arith.constant 0 : index
    %c0_838 = arith.constant 0 : index
    %1742 = vector.load %arg16[%c13_836, %c0_837, %c0_838] : memref<25x2x1xf32, #tpu.memory_space<vmem>>, vector<1x2x1xf32>
    %1743 = vector.shape_cast %1742 : vector<1x2x1xf32> to vector<2x1xf32>
    %1744 = vector.broadcast %1743 : vector<2x1xf32> to vector<2x256xf32>
    %1745 = arith.mulf %1528, %1744 : vector<2x256xf32>
    %1746 = arith.addf %1741, %1745 : vector<2x256xf32>
    %c14_839 = arith.constant 14 : index
    %c0_840 = arith.constant 0 : index
    %c0_841 = arith.constant 0 : index
    %1747 = vector.load %arg16[%c14_839, %c0_840, %c0_841] : memref<25x2x1xf32, #tpu.memory_space<vmem>>, vector<1x2x1xf32>
    %1748 = vector.shape_cast %1747 : vector<1x2x1xf32> to vector<2x1xf32>
    %1749 = vector.broadcast %1748 : vector<2x1xf32> to vector<2x256xf32>
    %1750 = arith.mulf %1531, %1749 : vector<2x256xf32>
    %1751 = arith.addf %1746, %1750 : vector<2x256xf32>
    %1752 = vector.broadcast %436 : vector<1x256xf32> to vector<2x256xf32>
    %1753 = arith.mulf %1752, %1751 : vector<2x256xf32>
    %1754 = arith.addf %1727, %1753 : vector<2x256xf32>
    %c15_842 = arith.constant 15 : index
    %c0_843 = arith.constant 0 : index
    %c0_844 = arith.constant 0 : index
    %1755 = vector.load %arg16[%c15_842, %c0_843, %c0_844] : memref<25x2x1xf32, #tpu.memory_space<vmem>>, vector<1x2x1xf32>
    %1756 = vector.shape_cast %1755 : vector<1x2x1xf32> to vector<2x1xf32>
    %1757 = vector.broadcast %1756 : vector<2x1xf32> to vector<2x256xf32>
    %1758 = arith.mulf %1520, %1757 : vector<2x256xf32>
    %c16_845 = arith.constant 16 : index
    %c0_846 = arith.constant 0 : index
    %c0_847 = arith.constant 0 : index
    %1759 = vector.load %arg16[%c16_845, %c0_846, %c0_847] : memref<25x2x1xf32, #tpu.memory_space<vmem>>, vector<1x2x1xf32>
    %1760 = vector.shape_cast %1759 : vector<1x2x1xf32> to vector<2x1xf32>
    %1761 = vector.broadcast %1760 : vector<2x1xf32> to vector<2x256xf32>
    %1762 = arith.mulf %1523, %1761 : vector<2x256xf32>
    %1763 = arith.addf %1758, %1762 : vector<2x256xf32>
    %c17_848 = arith.constant 17 : index
    %c0_849 = arith.constant 0 : index
    %c0_850 = arith.constant 0 : index
    %1764 = vector.load %arg16[%c17_848, %c0_849, %c0_850] : memref<25x2x1xf32, #tpu.memory_space<vmem>>, vector<1x2x1xf32>
    %1765 = vector.shape_cast %1764 : vector<1x2x1xf32> to vector<2x1xf32>
    %1766 = vector.broadcast %1765 : vector<2x1xf32> to vector<2x256xf32>
    %1767 = arith.mulf %1525, %1766 : vector<2x256xf32>
    %1768 = arith.addf %1763, %1767 : vector<2x256xf32>
    %c18_851 = arith.constant 18 : index
    %c0_852 = arith.constant 0 : index
    %c0_853 = arith.constant 0 : index
    %1769 = vector.load %arg16[%c18_851, %c0_852, %c0_853] : memref<25x2x1xf32, #tpu.memory_space<vmem>>, vector<1x2x1xf32>
    %1770 = vector.shape_cast %1769 : vector<1x2x1xf32> to vector<2x1xf32>
    %1771 = vector.broadcast %1770 : vector<2x1xf32> to vector<2x256xf32>
    %1772 = arith.mulf %1528, %1771 : vector<2x256xf32>
    %1773 = arith.addf %1768, %1772 : vector<2x256xf32>
    %c19_854 = arith.constant 19 : index
    %c0_855 = arith.constant 0 : index
    %c0_856 = arith.constant 0 : index
    %1774 = vector.load %arg16[%c19_854, %c0_855, %c0_856] : memref<25x2x1xf32, #tpu.memory_space<vmem>>, vector<1x2x1xf32>
    %1775 = vector.shape_cast %1774 : vector<1x2x1xf32> to vector<2x1xf32>
    %1776 = vector.broadcast %1775 : vector<2x1xf32> to vector<2x256xf32>
    %1777 = arith.mulf %1531, %1776 : vector<2x256xf32>
    %1778 = arith.addf %1773, %1777 : vector<2x256xf32>
    %c240_i32_857 = arith.constant 240 : i32
    %1779 = tpu.dynamic_rotate %1778 by %c240_i32_857 dim 1 : vector<2x256xf32>, i32 -> vector<2x256xf32>
    %1780 = vector.broadcast %448 : vector<1x256xf32> to vector<2x256xf32>
    %1781 = arith.mulf %1780, %1779 : vector<2x256xf32>
    %1782 = arith.addf %1754, %1781 : vector<2x256xf32>
    %c20_858 = arith.constant 20 : index
    %c0_859 = arith.constant 0 : index
    %c0_860 = arith.constant 0 : index
    %1783 = vector.load %arg16[%c20_858, %c0_859, %c0_860] : memref<25x2x1xf32, #tpu.memory_space<vmem>>, vector<1x2x1xf32>
    %1784 = vector.shape_cast %1783 : vector<1x2x1xf32> to vector<2x1xf32>
    %1785 = vector.broadcast %1784 : vector<2x1xf32> to vector<2x256xf32>
    %1786 = arith.mulf %1520, %1785 : vector<2x256xf32>
    %c21_861 = arith.constant 21 : index
    %c0_862 = arith.constant 0 : index
    %c0_863 = arith.constant 0 : index
    %1787 = vector.load %arg16[%c21_861, %c0_862, %c0_863] : memref<25x2x1xf32, #tpu.memory_space<vmem>>, vector<1x2x1xf32>
    %1788 = vector.shape_cast %1787 : vector<1x2x1xf32> to vector<2x1xf32>
    %1789 = vector.broadcast %1788 : vector<2x1xf32> to vector<2x256xf32>
    %1790 = arith.mulf %1523, %1789 : vector<2x256xf32>
    %1791 = arith.addf %1786, %1790 : vector<2x256xf32>
    %c22_864 = arith.constant 22 : index
    %c0_865 = arith.constant 0 : index
    %c0_866 = arith.constant 0 : index
    %1792 = vector.load %arg16[%c22_864, %c0_865, %c0_866] : memref<25x2x1xf32, #tpu.memory_space<vmem>>, vector<1x2x1xf32>
    %1793 = vector.shape_cast %1792 : vector<1x2x1xf32> to vector<2x1xf32>
    %1794 = vector.broadcast %1793 : vector<2x1xf32> to vector<2x256xf32>
    %1795 = arith.mulf %1525, %1794 : vector<2x256xf32>
    %1796 = arith.addf %1791, %1795 : vector<2x256xf32>
    %c23_867 = arith.constant 23 : index
    %c0_868 = arith.constant 0 : index
    %c0_869 = arith.constant 0 : index
    %1797 = vector.load %arg16[%c23_867, %c0_868, %c0_869] : memref<25x2x1xf32, #tpu.memory_space<vmem>>, vector<1x2x1xf32>
    %1798 = vector.shape_cast %1797 : vector<1x2x1xf32> to vector<2x1xf32>
    %1799 = vector.broadcast %1798 : vector<2x1xf32> to vector<2x256xf32>
    %1800 = arith.mulf %1528, %1799 : vector<2x256xf32>
    %1801 = arith.addf %1796, %1800 : vector<2x256xf32>
    %c24_870 = arith.constant 24 : index
    %c0_871 = arith.constant 0 : index
    %c0_872 = arith.constant 0 : index
    %1802 = vector.load %arg16[%c24_870, %c0_871, %c0_872] : memref<25x2x1xf32, #tpu.memory_space<vmem>>, vector<1x2x1xf32>
    %1803 = vector.shape_cast %1802 : vector<1x2x1xf32> to vector<2x1xf32>
    %1804 = vector.broadcast %1803 : vector<2x1xf32> to vector<2x256xf32>
    %1805 = arith.mulf %1531, %1804 : vector<2x256xf32>
    %1806 = arith.addf %1801, %1805 : vector<2x256xf32>
    %c224_i32_873 = arith.constant 224 : i32
    %1807 = tpu.dynamic_rotate %1806 by %c224_i32_873 dim 1 : vector<2x256xf32>, i32 -> vector<2x256xf32>
    %1808 = vector.broadcast %460 : vector<1x256xf32> to vector<2x256xf32>
    %1809 = arith.mulf %1808, %1807 : vector<2x256xf32>
    %1810 = arith.addf %1782, %1809 : vector<2x256xf32>
    %1811 = vector.extract_strided_slice %4 {offsets = [104, 0], sizes = [2, 1], strides = [1, 1]} : vector<128x1xf32> to vector<2x1xf32>
    %1812 = vector.broadcast %1811 : vector<2x1xf32> to vector<2x256xf32>
    %1813 = arith.addf %1810, %1812 : vector<2x256xf32>
    %c9_i32_874 = arith.constant 9 : i32
    %1814 = tpu.dynamic_rotate %1672 by %c9_i32_874 dim 1 : vector<2x256xf32>, i32 -> vector<2x256xf32>
    %1815 = vector.broadcast %472 : vector<1x256xf32> to vector<2x256xf32>
    %1816 = arith.mulf %1815, %1814 : vector<2x256xf32>
    %c6_i32_875 = arith.constant 6 : i32
    %1817 = tpu.dynamic_rotate %1672 by %c6_i32_875 dim 1 : vector<2x256xf32>, i32 -> vector<2x256xf32>
    %1818 = vector.broadcast %484 : vector<1x256xf32> to vector<2x256xf32>
    %1819 = arith.mulf %1818, %1817 : vector<2x256xf32>
    %c3_i32_876 = arith.constant 3 : i32
    %1820 = tpu.dynamic_rotate %1672 by %c3_i32_876 dim 1 : vector<2x256xf32>, i32 -> vector<2x256xf32>
    %1821 = vector.broadcast %496 : vector<1x256xf32> to vector<2x256xf32>
    %1822 = arith.mulf %1821, %1820 : vector<2x256xf32>
    %1823 = vector.broadcast %508 : vector<1x256xf32> to vector<2x256xf32>
    %1824 = arith.mulf %1823, %1672 : vector<2x256xf32>
    %c253_i32_877 = arith.constant 253 : i32
    %1825 = tpu.dynamic_rotate %1672 by %c253_i32_877 dim 1 : vector<2x256xf32>, i32 -> vector<2x256xf32>
    %1826 = vector.broadcast %520 : vector<1x256xf32> to vector<2x256xf32>
    %1827 = arith.mulf %1826, %1825 : vector<2x256xf32>
    %c250_i32 = arith.constant 250 : i32
    %1828 = tpu.dynamic_rotate %1672 by %c250_i32 dim 1 : vector<2x256xf32>, i32 -> vector<2x256xf32>
    %1829 = vector.broadcast %532 : vector<1x256xf32> to vector<2x256xf32>
    %1830 = arith.mulf %1829, %1828 : vector<2x256xf32>
    %c247_i32 = arith.constant 247 : i32
    %1831 = tpu.dynamic_rotate %1672 by %c247_i32 dim 1 : vector<2x256xf32>, i32 -> vector<2x256xf32>
    %1832 = vector.broadcast %544 : vector<1x256xf32> to vector<2x256xf32>
    %1833 = arith.mulf %1832, %1831 : vector<2x256xf32>
    %c0_878 = arith.constant 0 : index
    %c0_879 = arith.constant 0 : index
    %c0_880 = arith.constant 0 : index
    %1834 = vector.load %arg14[%c0_878, %c0_879, %c0_880] : memref<49x2x1xf32, #tpu.memory_space<vmem>>, vector<1x2x1xf32>
    %1835 = vector.shape_cast %1834 : vector<1x2x1xf32> to vector<2x1xf32>
    %1836 = vector.broadcast %1835 : vector<2x1xf32> to vector<2x256xf32>
    %1837 = arith.mulf %1816, %1836 : vector<2x256xf32>
    %c1_881 = arith.constant 1 : index
    %c0_882 = arith.constant 0 : index
    %c0_883 = arith.constant 0 : index
    %1838 = vector.load %arg14[%c1_881, %c0_882, %c0_883] : memref<49x2x1xf32, #tpu.memory_space<vmem>>, vector<1x2x1xf32>
    %1839 = vector.shape_cast %1838 : vector<1x2x1xf32> to vector<2x1xf32>
    %1840 = vector.broadcast %1839 : vector<2x1xf32> to vector<2x256xf32>
    %1841 = arith.mulf %1819, %1840 : vector<2x256xf32>
    %1842 = arith.addf %1837, %1841 : vector<2x256xf32>
    %c2_884 = arith.constant 2 : index
    %c0_885 = arith.constant 0 : index
    %c0_886 = arith.constant 0 : index
    %1843 = vector.load %arg14[%c2_884, %c0_885, %c0_886] : memref<49x2x1xf32, #tpu.memory_space<vmem>>, vector<1x2x1xf32>
    %1844 = vector.shape_cast %1843 : vector<1x2x1xf32> to vector<2x1xf32>
    %1845 = vector.broadcast %1844 : vector<2x1xf32> to vector<2x256xf32>
    %1846 = arith.mulf %1822, %1845 : vector<2x256xf32>
    %1847 = arith.addf %1842, %1846 : vector<2x256xf32>
    %c3_887 = arith.constant 3 : index
    %c0_888 = arith.constant 0 : index
    %c0_889 = arith.constant 0 : index
    %1848 = vector.load %arg14[%c3_887, %c0_888, %c0_889] : memref<49x2x1xf32, #tpu.memory_space<vmem>>, vector<1x2x1xf32>
    %1849 = vector.shape_cast %1848 : vector<1x2x1xf32> to vector<2x1xf32>
    %1850 = vector.broadcast %1849 : vector<2x1xf32> to vector<2x256xf32>
    %1851 = arith.mulf %1824, %1850 : vector<2x256xf32>
    %1852 = arith.addf %1847, %1851 : vector<2x256xf32>
    %c4_890 = arith.constant 4 : index
    %c0_891 = arith.constant 0 : index
    %c0_892 = arith.constant 0 : index
    %1853 = vector.load %arg14[%c4_890, %c0_891, %c0_892] : memref<49x2x1xf32, #tpu.memory_space<vmem>>, vector<1x2x1xf32>
    %1854 = vector.shape_cast %1853 : vector<1x2x1xf32> to vector<2x1xf32>
    %1855 = vector.broadcast %1854 : vector<2x1xf32> to vector<2x256xf32>
    %1856 = arith.mulf %1827, %1855 : vector<2x256xf32>
    %1857 = arith.addf %1852, %1856 : vector<2x256xf32>
    %c5_893 = arith.constant 5 : index
    %c0_894 = arith.constant 0 : index
    %c0_895 = arith.constant 0 : index
    %1858 = vector.load %arg14[%c5_893, %c0_894, %c0_895] : memref<49x2x1xf32, #tpu.memory_space<vmem>>, vector<1x2x1xf32>
    %1859 = vector.shape_cast %1858 : vector<1x2x1xf32> to vector<2x1xf32>
    %1860 = vector.broadcast %1859 : vector<2x1xf32> to vector<2x256xf32>
    %1861 = arith.mulf %1830, %1860 : vector<2x256xf32>
    %1862 = arith.addf %1857, %1861 : vector<2x256xf32>
    %c6_896 = arith.constant 6 : index
    %c0_897 = arith.constant 0 : index
    %c0_898 = arith.constant 0 : index
    %1863 = vector.load %arg14[%c6_896, %c0_897, %c0_898] : memref<49x2x1xf32, #tpu.memory_space<vmem>>, vector<1x2x1xf32>
    %1864 = vector.shape_cast %1863 : vector<1x2x1xf32> to vector<2x1xf32>
    %1865 = vector.broadcast %1864 : vector<2x1xf32> to vector<2x256xf32>
    %1866 = arith.mulf %1833, %1865 : vector<2x256xf32>
    %1867 = arith.addf %1862, %1866 : vector<2x256xf32>
    %c144_i32 = arith.constant 144 : i32
    %1868 = tpu.dynamic_rotate %1867 by %c144_i32 dim 1 : vector<2x256xf32>, i32 -> vector<2x256xf32>
    %1869 = vector.broadcast %556 : vector<1x256xf32> to vector<2x256xf32>
    %1870 = arith.mulf %1869, %1868 : vector<2x256xf32>
    %c7_899 = arith.constant 7 : index
    %c0_900 = arith.constant 0 : index
    %c0_901 = arith.constant 0 : index
    %1871 = vector.load %arg14[%c7_899, %c0_900, %c0_901] : memref<49x2x1xf32, #tpu.memory_space<vmem>>, vector<1x2x1xf32>
    %1872 = vector.shape_cast %1871 : vector<1x2x1xf32> to vector<2x1xf32>
    %1873 = vector.broadcast %1872 : vector<2x1xf32> to vector<2x256xf32>
    %1874 = arith.mulf %1816, %1873 : vector<2x256xf32>
    %c8_902 = arith.constant 8 : index
    %c0_903 = arith.constant 0 : index
    %c0_904 = arith.constant 0 : index
    %1875 = vector.load %arg14[%c8_902, %c0_903, %c0_904] : memref<49x2x1xf32, #tpu.memory_space<vmem>>, vector<1x2x1xf32>
    %1876 = vector.shape_cast %1875 : vector<1x2x1xf32> to vector<2x1xf32>
    %1877 = vector.broadcast %1876 : vector<2x1xf32> to vector<2x256xf32>
    %1878 = arith.mulf %1819, %1877 : vector<2x256xf32>
    %1879 = arith.addf %1874, %1878 : vector<2x256xf32>
    %c9_905 = arith.constant 9 : index
    %c0_906 = arith.constant 0 : index
    %c0_907 = arith.constant 0 : index
    %1880 = vector.load %arg14[%c9_905, %c0_906, %c0_907] : memref<49x2x1xf32, #tpu.memory_space<vmem>>, vector<1x2x1xf32>
    %1881 = vector.shape_cast %1880 : vector<1x2x1xf32> to vector<2x1xf32>
    %1882 = vector.broadcast %1881 : vector<2x1xf32> to vector<2x256xf32>
    %1883 = arith.mulf %1822, %1882 : vector<2x256xf32>
    %1884 = arith.addf %1879, %1883 : vector<2x256xf32>
    %c10_908 = arith.constant 10 : index
    %c0_909 = arith.constant 0 : index
    %c0_910 = arith.constant 0 : index
    %1885 = vector.load %arg14[%c10_908, %c0_909, %c0_910] : memref<49x2x1xf32, #tpu.memory_space<vmem>>, vector<1x2x1xf32>
    %1886 = vector.shape_cast %1885 : vector<1x2x1xf32> to vector<2x1xf32>
    %1887 = vector.broadcast %1886 : vector<2x1xf32> to vector<2x256xf32>
    %1888 = arith.mulf %1824, %1887 : vector<2x256xf32>
    %1889 = arith.addf %1884, %1888 : vector<2x256xf32>
    %c11_911 = arith.constant 11 : index
    %c0_912 = arith.constant 0 : index
    %c0_913 = arith.constant 0 : index
    %1890 = vector.load %arg14[%c11_911, %c0_912, %c0_913] : memref<49x2x1xf32, #tpu.memory_space<vmem>>, vector<1x2x1xf32>
    %1891 = vector.shape_cast %1890 : vector<1x2x1xf32> to vector<2x1xf32>
    %1892 = vector.broadcast %1891 : vector<2x1xf32> to vector<2x256xf32>
    %1893 = arith.mulf %1827, %1892 : vector<2x256xf32>
    %1894 = arith.addf %1889, %1893 : vector<2x256xf32>
    %c12_914 = arith.constant 12 : index
    %c0_915 = arith.constant 0 : index
    %c0_916 = arith.constant 0 : index
    %1895 = vector.load %arg14[%c12_914, %c0_915, %c0_916] : memref<49x2x1xf32, #tpu.memory_space<vmem>>, vector<1x2x1xf32>
    %1896 = vector.shape_cast %1895 : vector<1x2x1xf32> to vector<2x1xf32>
    %1897 = vector.broadcast %1896 : vector<2x1xf32> to vector<2x256xf32>
    %1898 = arith.mulf %1830, %1897 : vector<2x256xf32>
    %1899 = arith.addf %1894, %1898 : vector<2x256xf32>
    %c13_917 = arith.constant 13 : index
    %c0_918 = arith.constant 0 : index
    %c0_919 = arith.constant 0 : index
    %1900 = vector.load %arg14[%c13_917, %c0_918, %c0_919] : memref<49x2x1xf32, #tpu.memory_space<vmem>>, vector<1x2x1xf32>
    %1901 = vector.shape_cast %1900 : vector<1x2x1xf32> to vector<2x1xf32>
    %1902 = vector.broadcast %1901 : vector<2x1xf32> to vector<2x256xf32>
    %1903 = arith.mulf %1833, %1902 : vector<2x256xf32>
    %1904 = arith.addf %1899, %1903 : vector<2x256xf32>
    %c96_i32 = arith.constant 96 : i32
    %1905 = tpu.dynamic_rotate %1904 by %c96_i32 dim 1 : vector<2x256xf32>, i32 -> vector<2x256xf32>
    %1906 = vector.broadcast %568 : vector<1x256xf32> to vector<2x256xf32>
    %1907 = arith.mulf %1906, %1905 : vector<2x256xf32>
    %1908 = arith.addf %1870, %1907 : vector<2x256xf32>
    %c14_920 = arith.constant 14 : index
    %c0_921 = arith.constant 0 : index
    %c0_922 = arith.constant 0 : index
    %1909 = vector.load %arg14[%c14_920, %c0_921, %c0_922] : memref<49x2x1xf32, #tpu.memory_space<vmem>>, vector<1x2x1xf32>
    %1910 = vector.shape_cast %1909 : vector<1x2x1xf32> to vector<2x1xf32>
    %1911 = vector.broadcast %1910 : vector<2x1xf32> to vector<2x256xf32>
    %1912 = arith.mulf %1816, %1911 : vector<2x256xf32>
    %c15_923 = arith.constant 15 : index
    %c0_924 = arith.constant 0 : index
    %c0_925 = arith.constant 0 : index
    %1913 = vector.load %arg14[%c15_923, %c0_924, %c0_925] : memref<49x2x1xf32, #tpu.memory_space<vmem>>, vector<1x2x1xf32>
    %1914 = vector.shape_cast %1913 : vector<1x2x1xf32> to vector<2x1xf32>
    %1915 = vector.broadcast %1914 : vector<2x1xf32> to vector<2x256xf32>
    %1916 = arith.mulf %1819, %1915 : vector<2x256xf32>
    %1917 = arith.addf %1912, %1916 : vector<2x256xf32>
    %c16_926 = arith.constant 16 : index
    %c0_927 = arith.constant 0 : index
    %c0_928 = arith.constant 0 : index
    %1918 = vector.load %arg14[%c16_926, %c0_927, %c0_928] : memref<49x2x1xf32, #tpu.memory_space<vmem>>, vector<1x2x1xf32>
    %1919 = vector.shape_cast %1918 : vector<1x2x1xf32> to vector<2x1xf32>
    %1920 = vector.broadcast %1919 : vector<2x1xf32> to vector<2x256xf32>
    %1921 = arith.mulf %1822, %1920 : vector<2x256xf32>
    %1922 = arith.addf %1917, %1921 : vector<2x256xf32>
    %c17_929 = arith.constant 17 : index
    %c0_930 = arith.constant 0 : index
    %c0_931 = arith.constant 0 : index
    %1923 = vector.load %arg14[%c17_929, %c0_930, %c0_931] : memref<49x2x1xf32, #tpu.memory_space<vmem>>, vector<1x2x1xf32>
    %1924 = vector.shape_cast %1923 : vector<1x2x1xf32> to vector<2x1xf32>
    %1925 = vector.broadcast %1924 : vector<2x1xf32> to vector<2x256xf32>
    %1926 = arith.mulf %1824, %1925 : vector<2x256xf32>
    %1927 = arith.addf %1922, %1926 : vector<2x256xf32>
    %c18_932 = arith.constant 18 : index
    %c0_933 = arith.constant 0 : index
    %c0_934 = arith.constant 0 : index
    %1928 = vector.load %arg14[%c18_932, %c0_933, %c0_934] : memref<49x2x1xf32, #tpu.memory_space<vmem>>, vector<1x2x1xf32>
    %1929 = vector.shape_cast %1928 : vector<1x2x1xf32> to vector<2x1xf32>
    %1930 = vector.broadcast %1929 : vector<2x1xf32> to vector<2x256xf32>
    %1931 = arith.mulf %1827, %1930 : vector<2x256xf32>
    %1932 = arith.addf %1927, %1931 : vector<2x256xf32>
    %c19_935 = arith.constant 19 : index
    %c0_936 = arith.constant 0 : index
    %c0_937 = arith.constant 0 : index
    %1933 = vector.load %arg14[%c19_935, %c0_936, %c0_937] : memref<49x2x1xf32, #tpu.memory_space<vmem>>, vector<1x2x1xf32>
    %1934 = vector.shape_cast %1933 : vector<1x2x1xf32> to vector<2x1xf32>
    %1935 = vector.broadcast %1934 : vector<2x1xf32> to vector<2x256xf32>
    %1936 = arith.mulf %1830, %1935 : vector<2x256xf32>
    %1937 = arith.addf %1932, %1936 : vector<2x256xf32>
    %c20_938 = arith.constant 20 : index
    %c0_939 = arith.constant 0 : index
    %c0_940 = arith.constant 0 : index
    %1938 = vector.load %arg14[%c20_938, %c0_939, %c0_940] : memref<49x2x1xf32, #tpu.memory_space<vmem>>, vector<1x2x1xf32>
    %1939 = vector.shape_cast %1938 : vector<1x2x1xf32> to vector<2x1xf32>
    %1940 = vector.broadcast %1939 : vector<2x1xf32> to vector<2x256xf32>
    %1941 = arith.mulf %1833, %1940 : vector<2x256xf32>
    %1942 = arith.addf %1937, %1941 : vector<2x256xf32>
    %c48_i32_941 = arith.constant 48 : i32
    %1943 = tpu.dynamic_rotate %1942 by %c48_i32_941 dim 1 : vector<2x256xf32>, i32 -> vector<2x256xf32>
    %1944 = vector.broadcast %580 : vector<1x256xf32> to vector<2x256xf32>
    %1945 = arith.mulf %1944, %1943 : vector<2x256xf32>
    %1946 = arith.addf %1908, %1945 : vector<2x256xf32>
    %c21_942 = arith.constant 21 : index
    %c0_943 = arith.constant 0 : index
    %c0_944 = arith.constant 0 : index
    %1947 = vector.load %arg14[%c21_942, %c0_943, %c0_944] : memref<49x2x1xf32, #tpu.memory_space<vmem>>, vector<1x2x1xf32>
    %1948 = vector.shape_cast %1947 : vector<1x2x1xf32> to vector<2x1xf32>
    %1949 = vector.broadcast %1948 : vector<2x1xf32> to vector<2x256xf32>
    %1950 = arith.mulf %1816, %1949 : vector<2x256xf32>
    %c22_945 = arith.constant 22 : index
    %c0_946 = arith.constant 0 : index
    %c0_947 = arith.constant 0 : index
    %1951 = vector.load %arg14[%c22_945, %c0_946, %c0_947] : memref<49x2x1xf32, #tpu.memory_space<vmem>>, vector<1x2x1xf32>
    %1952 = vector.shape_cast %1951 : vector<1x2x1xf32> to vector<2x1xf32>
    %1953 = vector.broadcast %1952 : vector<2x1xf32> to vector<2x256xf32>
    %1954 = arith.mulf %1819, %1953 : vector<2x256xf32>
    %1955 = arith.addf %1950, %1954 : vector<2x256xf32>
    %c23_948 = arith.constant 23 : index
    %c0_949 = arith.constant 0 : index
    %c0_950 = arith.constant 0 : index
    %1956 = vector.load %arg14[%c23_948, %c0_949, %c0_950] : memref<49x2x1xf32, #tpu.memory_space<vmem>>, vector<1x2x1xf32>
    %1957 = vector.shape_cast %1956 : vector<1x2x1xf32> to vector<2x1xf32>
    %1958 = vector.broadcast %1957 : vector<2x1xf32> to vector<2x256xf32>
    %1959 = arith.mulf %1822, %1958 : vector<2x256xf32>
    %1960 = arith.addf %1955, %1959 : vector<2x256xf32>
    %c24_951 = arith.constant 24 : index
    %c0_952 = arith.constant 0 : index
    %c0_953 = arith.constant 0 : index
    %1961 = vector.load %arg14[%c24_951, %c0_952, %c0_953] : memref<49x2x1xf32, #tpu.memory_space<vmem>>, vector<1x2x1xf32>
    %1962 = vector.shape_cast %1961 : vector<1x2x1xf32> to vector<2x1xf32>
    %1963 = vector.broadcast %1962 : vector<2x1xf32> to vector<2x256xf32>
    %1964 = arith.mulf %1824, %1963 : vector<2x256xf32>
    %1965 = arith.addf %1960, %1964 : vector<2x256xf32>
    %c25_954 = arith.constant 25 : index
    %c0_955 = arith.constant 0 : index
    %c0_956 = arith.constant 0 : index
    %1966 = vector.load %arg14[%c25_954, %c0_955, %c0_956] : memref<49x2x1xf32, #tpu.memory_space<vmem>>, vector<1x2x1xf32>
    %1967 = vector.shape_cast %1966 : vector<1x2x1xf32> to vector<2x1xf32>
    %1968 = vector.broadcast %1967 : vector<2x1xf32> to vector<2x256xf32>
    %1969 = arith.mulf %1827, %1968 : vector<2x256xf32>
    %1970 = arith.addf %1965, %1969 : vector<2x256xf32>
    %c26_957 = arith.constant 26 : index
    %c0_958 = arith.constant 0 : index
    %c0_959 = arith.constant 0 : index
    %1971 = vector.load %arg14[%c26_957, %c0_958, %c0_959] : memref<49x2x1xf32, #tpu.memory_space<vmem>>, vector<1x2x1xf32>
    %1972 = vector.shape_cast %1971 : vector<1x2x1xf32> to vector<2x1xf32>
    %1973 = vector.broadcast %1972 : vector<2x1xf32> to vector<2x256xf32>
    %1974 = arith.mulf %1830, %1973 : vector<2x256xf32>
    %1975 = arith.addf %1970, %1974 : vector<2x256xf32>
    %c27_960 = arith.constant 27 : index
    %c0_961 = arith.constant 0 : index
    %c0_962 = arith.constant 0 : index
    %1976 = vector.load %arg14[%c27_960, %c0_961, %c0_962] : memref<49x2x1xf32, #tpu.memory_space<vmem>>, vector<1x2x1xf32>
    %1977 = vector.shape_cast %1976 : vector<1x2x1xf32> to vector<2x1xf32>
    %1978 = vector.broadcast %1977 : vector<2x1xf32> to vector<2x256xf32>
    %1979 = arith.mulf %1833, %1978 : vector<2x256xf32>
    %1980 = arith.addf %1975, %1979 : vector<2x256xf32>
    %1981 = vector.broadcast %592 : vector<1x256xf32> to vector<2x256xf32>
    %1982 = arith.mulf %1981, %1980 : vector<2x256xf32>
    %1983 = arith.addf %1946, %1982 : vector<2x256xf32>
    %c28_963 = arith.constant 28 : index
    %c0_964 = arith.constant 0 : index
    %c0_965 = arith.constant 0 : index
    %1984 = vector.load %arg14[%c28_963, %c0_964, %c0_965] : memref<49x2x1xf32, #tpu.memory_space<vmem>>, vector<1x2x1xf32>
    %1985 = vector.shape_cast %1984 : vector<1x2x1xf32> to vector<2x1xf32>
    %1986 = vector.broadcast %1985 : vector<2x1xf32> to vector<2x256xf32>
    %1987 = arith.mulf %1816, %1986 : vector<2x256xf32>
    %c29_966 = arith.constant 29 : index
    %c0_967 = arith.constant 0 : index
    %c0_968 = arith.constant 0 : index
    %1988 = vector.load %arg14[%c29_966, %c0_967, %c0_968] : memref<49x2x1xf32, #tpu.memory_space<vmem>>, vector<1x2x1xf32>
    %1989 = vector.shape_cast %1988 : vector<1x2x1xf32> to vector<2x1xf32>
    %1990 = vector.broadcast %1989 : vector<2x1xf32> to vector<2x256xf32>
    %1991 = arith.mulf %1819, %1990 : vector<2x256xf32>
    %1992 = arith.addf %1987, %1991 : vector<2x256xf32>
    %c30_969 = arith.constant 30 : index
    %c0_970 = arith.constant 0 : index
    %c0_971 = arith.constant 0 : index
    %1993 = vector.load %arg14[%c30_969, %c0_970, %c0_971] : memref<49x2x1xf32, #tpu.memory_space<vmem>>, vector<1x2x1xf32>
    %1994 = vector.shape_cast %1993 : vector<1x2x1xf32> to vector<2x1xf32>
    %1995 = vector.broadcast %1994 : vector<2x1xf32> to vector<2x256xf32>
    %1996 = arith.mulf %1822, %1995 : vector<2x256xf32>
    %1997 = arith.addf %1992, %1996 : vector<2x256xf32>
    %c31_972 = arith.constant 31 : index
    %c0_973 = arith.constant 0 : index
    %c0_974 = arith.constant 0 : index
    %1998 = vector.load %arg14[%c31_972, %c0_973, %c0_974] : memref<49x2x1xf32, #tpu.memory_space<vmem>>, vector<1x2x1xf32>
    %1999 = vector.shape_cast %1998 : vector<1x2x1xf32> to vector<2x1xf32>
    %2000 = vector.broadcast %1999 : vector<2x1xf32> to vector<2x256xf32>
    %2001 = arith.mulf %1824, %2000 : vector<2x256xf32>
    %2002 = arith.addf %1997, %2001 : vector<2x256xf32>
    %c32_975 = arith.constant 32 : index
    %c0_976 = arith.constant 0 : index
    %c0_977 = arith.constant 0 : index
    %2003 = vector.load %arg14[%c32_975, %c0_976, %c0_977] : memref<49x2x1xf32, #tpu.memory_space<vmem>>, vector<1x2x1xf32>
    %2004 = vector.shape_cast %2003 : vector<1x2x1xf32> to vector<2x1xf32>
    %2005 = vector.broadcast %2004 : vector<2x1xf32> to vector<2x256xf32>
    %2006 = arith.mulf %1827, %2005 : vector<2x256xf32>
    %2007 = arith.addf %2002, %2006 : vector<2x256xf32>
    %c33_978 = arith.constant 33 : index
    %c0_979 = arith.constant 0 : index
    %c0_980 = arith.constant 0 : index
    %2008 = vector.load %arg14[%c33_978, %c0_979, %c0_980] : memref<49x2x1xf32, #tpu.memory_space<vmem>>, vector<1x2x1xf32>
    %2009 = vector.shape_cast %2008 : vector<1x2x1xf32> to vector<2x1xf32>
    %2010 = vector.broadcast %2009 : vector<2x1xf32> to vector<2x256xf32>
    %2011 = arith.mulf %1830, %2010 : vector<2x256xf32>
    %2012 = arith.addf %2007, %2011 : vector<2x256xf32>
    %c34_981 = arith.constant 34 : index
    %c0_982 = arith.constant 0 : index
    %c0_983 = arith.constant 0 : index
    %2013 = vector.load %arg14[%c34_981, %c0_982, %c0_983] : memref<49x2x1xf32, #tpu.memory_space<vmem>>, vector<1x2x1xf32>
    %2014 = vector.shape_cast %2013 : vector<1x2x1xf32> to vector<2x1xf32>
    %2015 = vector.broadcast %2014 : vector<2x1xf32> to vector<2x256xf32>
    %2016 = arith.mulf %1833, %2015 : vector<2x256xf32>
    %2017 = arith.addf %2012, %2016 : vector<2x256xf32>
    %c208_i32_984 = arith.constant 208 : i32
    %2018 = tpu.dynamic_rotate %2017 by %c208_i32_984 dim 1 : vector<2x256xf32>, i32 -> vector<2x256xf32>
    %2019 = vector.broadcast %604 : vector<1x256xf32> to vector<2x256xf32>
    %2020 = arith.mulf %2019, %2018 : vector<2x256xf32>
    %2021 = arith.addf %1983, %2020 : vector<2x256xf32>
    %c35_985 = arith.constant 35 : index
    %c0_986 = arith.constant 0 : index
    %c0_987 = arith.constant 0 : index
    %2022 = vector.load %arg14[%c35_985, %c0_986, %c0_987] : memref<49x2x1xf32, #tpu.memory_space<vmem>>, vector<1x2x1xf32>
    %2023 = vector.shape_cast %2022 : vector<1x2x1xf32> to vector<2x1xf32>
    %2024 = vector.broadcast %2023 : vector<2x1xf32> to vector<2x256xf32>
    %2025 = arith.mulf %1816, %2024 : vector<2x256xf32>
    %c36_988 = arith.constant 36 : index
    %c0_989 = arith.constant 0 : index
    %c0_990 = arith.constant 0 : index
    %2026 = vector.load %arg14[%c36_988, %c0_989, %c0_990] : memref<49x2x1xf32, #tpu.memory_space<vmem>>, vector<1x2x1xf32>
    %2027 = vector.shape_cast %2026 : vector<1x2x1xf32> to vector<2x1xf32>
    %2028 = vector.broadcast %2027 : vector<2x1xf32> to vector<2x256xf32>
    %2029 = arith.mulf %1819, %2028 : vector<2x256xf32>
    %2030 = arith.addf %2025, %2029 : vector<2x256xf32>
    %c37_991 = arith.constant 37 : index
    %c0_992 = arith.constant 0 : index
    %c0_993 = arith.constant 0 : index
    %2031 = vector.load %arg14[%c37_991, %c0_992, %c0_993] : memref<49x2x1xf32, #tpu.memory_space<vmem>>, vector<1x2x1xf32>
    %2032 = vector.shape_cast %2031 : vector<1x2x1xf32> to vector<2x1xf32>
    %2033 = vector.broadcast %2032 : vector<2x1xf32> to vector<2x256xf32>
    %2034 = arith.mulf %1822, %2033 : vector<2x256xf32>
    %2035 = arith.addf %2030, %2034 : vector<2x256xf32>
    %c38_994 = arith.constant 38 : index
    %c0_995 = arith.constant 0 : index
    %c0_996 = arith.constant 0 : index
    %2036 = vector.load %arg14[%c38_994, %c0_995, %c0_996] : memref<49x2x1xf32, #tpu.memory_space<vmem>>, vector<1x2x1xf32>
    %2037 = vector.shape_cast %2036 : vector<1x2x1xf32> to vector<2x1xf32>
    %2038 = vector.broadcast %2037 : vector<2x1xf32> to vector<2x256xf32>
    %2039 = arith.mulf %1824, %2038 : vector<2x256xf32>
    %2040 = arith.addf %2035, %2039 : vector<2x256xf32>
    %c39_997 = arith.constant 39 : index
    %c0_998 = arith.constant 0 : index
    %c0_999 = arith.constant 0 : index
    %2041 = vector.load %arg14[%c39_997, %c0_998, %c0_999] : memref<49x2x1xf32, #tpu.memory_space<vmem>>, vector<1x2x1xf32>
    %2042 = vector.shape_cast %2041 : vector<1x2x1xf32> to vector<2x1xf32>
    %2043 = vector.broadcast %2042 : vector<2x1xf32> to vector<2x256xf32>
    %2044 = arith.mulf %1827, %2043 : vector<2x256xf32>
    %2045 = arith.addf %2040, %2044 : vector<2x256xf32>
    %c40_1000 = arith.constant 40 : index
    %c0_1001 = arith.constant 0 : index
    %c0_1002 = arith.constant 0 : index
    %2046 = vector.load %arg14[%c40_1000, %c0_1001, %c0_1002] : memref<49x2x1xf32, #tpu.memory_space<vmem>>, vector<1x2x1xf32>
    %2047 = vector.shape_cast %2046 : vector<1x2x1xf32> to vector<2x1xf32>
    %2048 = vector.broadcast %2047 : vector<2x1xf32> to vector<2x256xf32>
    %2049 = arith.mulf %1830, %2048 : vector<2x256xf32>
    %2050 = arith.addf %2045, %2049 : vector<2x256xf32>
    %c41_1003 = arith.constant 41 : index
    %c0_1004 = arith.constant 0 : index
    %c0_1005 = arith.constant 0 : index
    %2051 = vector.load %arg14[%c41_1003, %c0_1004, %c0_1005] : memref<49x2x1xf32, #tpu.memory_space<vmem>>, vector<1x2x1xf32>
    %2052 = vector.shape_cast %2051 : vector<1x2x1xf32> to vector<2x1xf32>
    %2053 = vector.broadcast %2052 : vector<2x1xf32> to vector<2x256xf32>
    %2054 = arith.mulf %1833, %2053 : vector<2x256xf32>
    %2055 = arith.addf %2050, %2054 : vector<2x256xf32>
    %c160_i32 = arith.constant 160 : i32
    %2056 = tpu.dynamic_rotate %2055 by %c160_i32 dim 1 : vector<2x256xf32>, i32 -> vector<2x256xf32>
    %2057 = vector.broadcast %616 : vector<1x256xf32> to vector<2x256xf32>
    %2058 = arith.mulf %2057, %2056 : vector<2x256xf32>
    %2059 = arith.addf %2021, %2058 : vector<2x256xf32>
    %c42_1006 = arith.constant 42 : index
    %c0_1007 = arith.constant 0 : index
    %c0_1008 = arith.constant 0 : index
    %2060 = vector.load %arg14[%c42_1006, %c0_1007, %c0_1008] : memref<49x2x1xf32, #tpu.memory_space<vmem>>, vector<1x2x1xf32>
    %2061 = vector.shape_cast %2060 : vector<1x2x1xf32> to vector<2x1xf32>
    %2062 = vector.broadcast %2061 : vector<2x1xf32> to vector<2x256xf32>
    %2063 = arith.mulf %1816, %2062 : vector<2x256xf32>
    %c43_1009 = arith.constant 43 : index
    %c0_1010 = arith.constant 0 : index
    %c0_1011 = arith.constant 0 : index
    %2064 = vector.load %arg14[%c43_1009, %c0_1010, %c0_1011] : memref<49x2x1xf32, #tpu.memory_space<vmem>>, vector<1x2x1xf32>
    %2065 = vector.shape_cast %2064 : vector<1x2x1xf32> to vector<2x1xf32>
    %2066 = vector.broadcast %2065 : vector<2x1xf32> to vector<2x256xf32>
    %2067 = arith.mulf %1819, %2066 : vector<2x256xf32>
    %2068 = arith.addf %2063, %2067 : vector<2x256xf32>
    %c44_1012 = arith.constant 44 : index
    %c0_1013 = arith.constant 0 : index
    %c0_1014 = arith.constant 0 : index
    %2069 = vector.load %arg14[%c44_1012, %c0_1013, %c0_1014] : memref<49x2x1xf32, #tpu.memory_space<vmem>>, vector<1x2x1xf32>
    %2070 = vector.shape_cast %2069 : vector<1x2x1xf32> to vector<2x1xf32>
    %2071 = vector.broadcast %2070 : vector<2x1xf32> to vector<2x256xf32>
    %2072 = arith.mulf %1822, %2071 : vector<2x256xf32>
    %2073 = arith.addf %2068, %2072 : vector<2x256xf32>
    %c45_1015 = arith.constant 45 : index
    %c0_1016 = arith.constant 0 : index
    %c0_1017 = arith.constant 0 : index
    %2074 = vector.load %arg14[%c45_1015, %c0_1016, %c0_1017] : memref<49x2x1xf32, #tpu.memory_space<vmem>>, vector<1x2x1xf32>
    %2075 = vector.shape_cast %2074 : vector<1x2x1xf32> to vector<2x1xf32>
    %2076 = vector.broadcast %2075 : vector<2x1xf32> to vector<2x256xf32>
    %2077 = arith.mulf %1824, %2076 : vector<2x256xf32>
    %2078 = arith.addf %2073, %2077 : vector<2x256xf32>
    %c46_1018 = arith.constant 46 : index
    %c0_1019 = arith.constant 0 : index
    %c0_1020 = arith.constant 0 : index
    %2079 = vector.load %arg14[%c46_1018, %c0_1019, %c0_1020] : memref<49x2x1xf32, #tpu.memory_space<vmem>>, vector<1x2x1xf32>
    %2080 = vector.shape_cast %2079 : vector<1x2x1xf32> to vector<2x1xf32>
    %2081 = vector.broadcast %2080 : vector<2x1xf32> to vector<2x256xf32>
    %2082 = arith.mulf %1827, %2081 : vector<2x256xf32>
    %2083 = arith.addf %2078, %2082 : vector<2x256xf32>
    %c47_1021 = arith.constant 47 : index
    %c0_1022 = arith.constant 0 : index
    %c0_1023 = arith.constant 0 : index
    %2084 = vector.load %arg14[%c47_1021, %c0_1022, %c0_1023] : memref<49x2x1xf32, #tpu.memory_space<vmem>>, vector<1x2x1xf32>
    %2085 = vector.shape_cast %2084 : vector<1x2x1xf32> to vector<2x1xf32>
    %2086 = vector.broadcast %2085 : vector<2x1xf32> to vector<2x256xf32>
    %2087 = arith.mulf %1830, %2086 : vector<2x256xf32>
    %2088 = arith.addf %2083, %2087 : vector<2x256xf32>
    %c48_1024 = arith.constant 48 : index
    %c0_1025 = arith.constant 0 : index
    %c0_1026 = arith.constant 0 : index
    %2089 = vector.load %arg14[%c48_1024, %c0_1025, %c0_1026] : memref<49x2x1xf32, #tpu.memory_space<vmem>>, vector<1x2x1xf32>
    %2090 = vector.shape_cast %2089 : vector<1x2x1xf32> to vector<2x1xf32>
    %2091 = vector.broadcast %2090 : vector<2x1xf32> to vector<2x256xf32>
    %2092 = arith.mulf %1833, %2091 : vector<2x256xf32>
    %2093 = arith.addf %2088, %2092 : vector<2x256xf32>
    %c112_i32 = arith.constant 112 : i32
    %2094 = tpu.dynamic_rotate %2093 by %c112_i32 dim 1 : vector<2x256xf32>, i32 -> vector<2x256xf32>
    %2095 = vector.broadcast %628 : vector<1x256xf32> to vector<2x256xf32>
    %2096 = arith.mulf %2095, %2094 : vector<2x256xf32>
    %2097 = arith.addf %2059, %2096 : vector<2x256xf32>
    %2098 = vector.extract_strided_slice %4 {offsets = [88, 0], sizes = [2, 1], strides = [1, 1]} : vector<128x1xf32> to vector<2x1xf32>
    %2099 = vector.broadcast %2098 : vector<2x1xf32> to vector<2x256xf32>
    %2100 = arith.addf %2097, %2099 : vector<2x256xf32>
    %c0_1027 = arith.constant 0 : index
    %c0_1028 = arith.constant 0 : index
    %2101 = vector.load %arg15[%c0_1027, %c0_1028] : memref<2x2xf32, #tpu.memory_space<vmem>>, vector<2x2xf32>
    %cst_1029 = arith.constant dense<0.000000e+00> : vector<2x256xf32>
    %2102 = tpu.matmul %2101, %2100, %cst_1029 {dimension_numbers = #tpu.dot_dimension_numbers<[1], [0], [0], [1], [0, 0, 1, 1], [], []>} : vector<2x2xf32>, vector<2x256xf32>, vector<2x256xf32> -> vector<2x256xf32>
    %2103 = vector.extract_strided_slice %4 {offsets = [96, 0], sizes = [2, 1], strides = [1, 1]} : vector<128x1xf32> to vector<2x1xf32>
    %2104 = vector.broadcast %2103 : vector<2x1xf32> to vector<2x256xf32>
    %2105 = arith.addf %2102, %2104 : vector<2x256xf32>
    %2106 = arith.mulf %2105, %1813 : vector<2x256xf32>
    %2107 = arith.mulf %665, %1517 : vector<2x256xf32>
    %c0_1030 = arith.constant 0 : index
    %c0_1031 = arith.constant 0 : index
    %2108 = vector.load %arg17[%c0_1030, %c0_1031] : memref<4x2xf32, #tpu.memory_space<vmem>>, vector<4x2xf32>
    %cst_1032 = arith.constant dense<0.000000e+00> : vector<4x256xf32>
    %2109 = tpu.matmul %2108, %2107, %cst_1032 {dimension_numbers = #tpu.dot_dimension_numbers<[1], [0], [0], [1], [0, 0, 1, 1], [], []>} : vector<4x2xf32>, vector<2x256xf32>, vector<4x256xf32> -> vector<4x256xf32>
    %2110 = arith.mulf %670, %2106 : vector<2x256xf32>
    %c0_1033 = arith.constant 0 : index
    %c0_1034 = arith.constant 0 : index
    %2111 = vector.load %arg18[%c0_1033, %c0_1034] : memref<4x2xf32, #tpu.memory_space<vmem>>, vector<4x2xf32>
    %cst_1035 = arith.constant dense<0.000000e+00> : vector<4x256xf32>
    %2112 = tpu.matmul %2111, %2110, %cst_1035 {dimension_numbers = #tpu.dot_dimension_numbers<[1], [0], [0], [1], [0, 0, 1, 1], [], []>} : vector<4x2xf32>, vector<2x256xf32>, vector<4x256xf32> -> vector<4x256xf32>
    %2113 = arith.addf %2109, %2112 : vector<4x256xf32>
    %2114 = vector.extract_strided_slice %4 {offsets = [112, 0], sizes = [4, 1], strides = [1, 1]} : vector<128x1xf32> to vector<4x1xf32>
    %2115 = vector.broadcast %2114 : vector<4x1xf32> to vector<4x256xf32>
    %2116 = arith.addf %2113, %2115 : vector<4x256xf32>
    %2117 = vector.extract_strided_slice %4 {offsets = [120, 0], sizes = [4, 1], strides = [1, 1]} : vector<128x1xf32> to vector<4x1xf32>
    %2118 = vector.broadcast %2117 : vector<4x1xf32> to vector<4x256xf32>
    %2119 = arith.mulf %2116, %2118 : vector<4x256xf32>
    %2120 = arith.addf %2119, %1 : vector<4x256xf32>
    %c0_1036 = arith.constant 0 : index
    %c0_1037 = arith.constant 0 : index
    %c0_1038 = arith.constant 0 : index
    %2121 = vector.load %arg19[%c0_1036, %c0_1037, %c0_1038] : memref<1x4x256xf32, #tpu.memory_space<vmem>>, vector<1x4x256xf32>
    %2122 = vector.shape_cast %2121 : vector<1x4x256xf32> to vector<4x256xf32>
    %2123 = vector.shape_cast %2120 : vector<4x256xf32> to vector<1x4x256xf32>
    tpu.vector_store %arg19[%c0_1036, %c0_1037, %c0_1038], %2123 {strides = array<i32>} : memref<1x4x256xf32, #tpu.memory_space<vmem>>, vector<1x4x256xf32>,
    return
  }
  func.func @transform_0(%arg0: i32) -> (i32, i32, i32) {
    %c0_i32 = arith.constant 0 : i32
    %c0_i32_0 = arith.constant 0 : i32
    %c0_i32_1 = arith.constant 0 : i32
    return %arg0, %c0_i32, %c0_i32_0 : i32, i32, i32
  }
  func.func @transform_1(%arg0: i32) -> (i32, i32) {
    %c0_i32 = arith.constant 0 : i32
    %c0_i32_0 = arith.constant 0 : i32
    %c0_i32_1 = arith.constant 0 : i32
    return %c0_i32, %c0_i32_0 : i32, i32
  }
  func.func @transform_2(%arg0: i32) -> (i32, i32) {
    %c0_i32 = arith.constant 0 : i32
    %c0_i32_0 = arith.constant 0 : i32
    %c0_i32_1 = arith.constant 0 : i32
    return %c0_i32, %c0_i32_0 : i32, i32
  }
  func.func @transform_3(%arg0: i32) -> (i32, i32) {
    %c0_i32 = arith.constant 0 : i32
    %c0_i32_0 = arith.constant 0 : i32
    %c0_i32_1 = arith.constant 0 : i32
    return %c0_i32, %c0_i32_0 : i32, i32
  }
  func.func @transform_4(%arg0: i32) -> (i32, i32) {
    %c0_i32 = arith.constant 0 : i32
    %c0_i32_0 = arith.constant 0 : i32
    %c0_i32_1 = arith.constant 0 : i32
    return %c0_i32, %c0_i32_0 : i32, i32
  }
  func.func @transform_5(%arg0: i32) -> (i32, i32) {
    %c0_i32 = arith.constant 0 : i32
    %c0_i32_0 = arith.constant 0 : i32
    %c0_i32_1 = arith.constant 0 : i32
    return %c0_i32, %c0_i32_0 : i32, i32
  }
  func.func @transform_6(%arg0: i32) -> (i32, i32) {
    %c0_i32 = arith.constant 0 : i32
    %c0_i32_0 = arith.constant 0 : i32
    %c0_i32_1 = arith.constant 0 : i32
    return %c0_i32, %c0_i32_0 : i32, i32
  }
  func.func @transform_7(%arg0: i32) -> (i32, i32) {
    %c0_i32 = arith.constant 0 : i32
    %c0_i32_0 = arith.constant 0 : i32
    %c0_i32_1 = arith.constant 0 : i32
    return %c0_i32, %c0_i32_0 : i32, i32
  }
  func.func @transform_8(%arg0: i32) -> (i32, i32, i32) {
    %c0_i32 = arith.constant 0 : i32
    %c0_i32_0 = arith.constant 0 : i32
    %c0_i32_1 = arith.constant 0 : i32
    %c0_i32_2 = arith.constant 0 : i32
    return %c0_i32, %c0_i32_0, %c0_i32_1 : i32, i32, i32
  }
  func.func @transform_9(%arg0: i32) -> (i32, i32, i32) {
    %c0_i32 = arith.constant 0 : i32
    %c0_i32_0 = arith.constant 0 : i32
    %c0_i32_1 = arith.constant 0 : i32
    %c0_i32_2 = arith.constant 0 : i32
    return %c0_i32, %c0_i32_0, %c0_i32_1 : i32, i32, i32
  }
  func.func @transform_10(%arg0: i32) -> (i32, i32) {
    %c0_i32 = arith.constant 0 : i32
    %c0_i32_0 = arith.constant 0 : i32
    %c0_i32_1 = arith.constant 0 : i32
    return %c0_i32, %c0_i32_0 : i32, i32
  }
  func.func @transform_11(%arg0: i32) -> (i32, i32, i32) {
    %c0_i32 = arith.constant 0 : i32
    %c0_i32_0 = arith.constant 0 : i32
    %c0_i32_1 = arith.constant 0 : i32
    %c0_i32_2 = arith.constant 0 : i32
    return %c0_i32, %c0_i32_0, %c0_i32_1 : i32, i32, i32
  }
  func.func @transform_12(%arg0: i32) -> (i32, i32, i32) {
    %c0_i32 = arith.constant 0 : i32
    %c0_i32_0 = arith.constant 0 : i32
    %c0_i32_1 = arith.constant 0 : i32
    %c0_i32_2 = arith.constant 0 : i32
    return %c0_i32, %c0_i32_0, %c0_i32_1 : i32, i32, i32
  }
  func.func @transform_13(%arg0: i32) -> (i32, i32, i32) {
    %c0_i32 = arith.constant 0 : i32
    %c0_i32_0 = arith.constant 0 : i32
    %c0_i32_1 = arith.constant 0 : i32
    %c0_i32_2 = arith.constant 0 : i32
    return %c0_i32, %c0_i32_0, %c0_i32_1 : i32, i32, i32
  }
  func.func @transform_14(%arg0: i32) -> (i32, i32) {
    %c0_i32 = arith.constant 0 : i32
    %c0_i32_0 = arith.constant 0 : i32
    %c0_i32_1 = arith.constant 0 : i32
    return %c0_i32, %c0_i32_0 : i32, i32
  }
  func.func @transform_15(%arg0: i32) -> (i32, i32, i32) {
    %c0_i32 = arith.constant 0 : i32
    %c0_i32_0 = arith.constant 0 : i32
    %c0_i32_1 = arith.constant 0 : i32
    %c0_i32_2 = arith.constant 0 : i32
    return %c0_i32, %c0_i32_0, %c0_i32_1 : i32, i32, i32
  }
  func.func @transform_16(%arg0: i32) -> (i32, i32) {
    %c0_i32 = arith.constant 0 : i32
    %c0_i32_0 = arith.constant 0 : i32
    %c0_i32_1 = arith.constant 0 : i32
    return %c0_i32, %c0_i32_0 : i32, i32
  }
  func.func @transform_17(%arg0: i32) -> (i32, i32) {
    %c0_i32 = arith.constant 0 : i32
    %c0_i32_0 = arith.constant 0 : i32
    %c0_i32_1 = arith.constant 0 : i32
    return %c0_i32, %c0_i32_0 : i32, i32
  }
  func.func @transform_18(%arg0: i32) -> (i32, i32, i32) {
    %c0_i32 = arith.constant 0 : i32
    %c0_i32_0 = arith.constant 0 : i32
    %c0_i32_1 = arith.constant 0 : i32
    return %arg0, %c0_i32, %c0_i32_0 : i32, i32, i32
  }
}

</mosaic_0001>

<llo_original>
// kernel: tpu_custom_call.1
$region0: #{tpu_custom_call.1}
  #allocation0 [shape = 'u32[]', space=smem, size = 0x4, offset = 0x4, fixed_abs, tag = 'smem constant byte address 0x4 - core index']
  #allocation1 [shape = 'u32[144,128]{1,0:T(1,128)}', space=vmem, size = 0x12000, scoped, tag = 'internal scratch']
  %s0 = inlined_call_operand.vmem [shape: f32[2,4,256], index: 0, kind: input, shape index: {}]
  %s1 = inlined_call_operand.vmem [shape: s32[1,256], index: 1, kind: input, shape index: {}]
  %s2 = inlined_call_operand.vmem [shape: s32[1,256], index: 2, kind: input, shape index: {}]
  %s3 = inlined_call_operand.vmem [shape: f32[128,1], index: 3, kind: input, shape index: {}]
  %s4 = inlined_call_operand.vmem [shape: f32[2,4], index: 4, kind: input, shape index: {}]
  %s5 = inlined_call_operand.vmem [shape: f32[2,4], index: 5, kind: input, shape index: {}]
  %s6 = inlined_call_operand.vmem [shape: f32[2,4], index: 6, kind: input, shape index: {}]
  %s7 = inlined_call_operand.vmem [shape: f32[2,4], index: 7, kind: input, shape index: {}]
  %s8 = inlined_call_operand.vmem [shape: f32[49,2,1], index: 8, kind: input, shape index: {}]
  %s9 = inlined_call_operand.vmem [shape: f32[81,2,1], index: 9, kind: input, shape index: {}]
  %s10 = inlined_call_operand.vmem [shape: f32[2,2], index: 10, kind: input, shape index: {}]
  %s11 = inlined_call_operand.vmem [shape: f32[49,2,1], index: 11, kind: input, shape index: {}]
  %s12 = inlined_call_operand.vmem [shape: f32[25,2,1], index: 12, kind: input, shape index: {}]
  %s13 = inlined_call_operand.vmem [shape: f32[49,2,1], index: 13, kind: input, shape index: {}]
  %s14 = inlined_call_operand.vmem [shape: f32[2,2], index: 14, kind: input, shape index: {}]
  %s15 = inlined_call_operand.vmem [shape: f32[25,2,1], index: 15, kind: input, shape index: {}]
  %s16 = inlined_call_operand.vmem [shape: f32[4,2], index: 16, kind: input, shape index: {}]
  %s17 = inlined_call_operand.vmem [shape: f32[4,2], index: 17, kind: input, shape index: {}]
  %s18 = inlined_call_operand.hbm [shape: f32[2,4,256], index: 18, kind: output, shape index: {}]
  %s19 = sld [smem:[#allocation0]]
  $region105: #{tpu_custom_call.1} parent=0
    _
  %s21 = ssub.s32 1, %s19
  %s22 = scalar_select 0, %s21, %s19
  $region1: #{tpu_custom_call.1} parent=0
    #allocation2 [shape = 'u8[8192]{0}', space=vmem, size = 0x2000, scoped, tag = 'output window, operand 0']
    #allocation3 [shape = 's32[2]{0}', space=sflag, size = 0x8, scoped, tag = 'scoped memory for tpu_custom_call.1']
    %23 = vsyncpa [#allocation3], 0
    %s24 = scalar_lea.sflag [#allocation3], 1
    %25 = vsyncpa %s24, 0
    loop: start=0, step=1, limit=4
    $region2: #{tpu_custom_call.1} parent=1 // loop_pre_header
      _
    $region3: #{tpu_custom_call.1} parent=1 // loop_header
      %s27 = sphi 0, %s31
      %p28 = scmp.ge.s32.totalorder %s27, 4
      %s37 = sphi 0, %s39
      %s40 = sphi 0, %s37
      %s41 = sphi 0, %s40
      %s57 = sphi 0, %s41
      %s61 = sphi 0, %s61
      %s63 = sphi 0, %s61
      %s64 = sphi 0, %s63
      %s78 = sphi 0, %s64
      %s82 = sphi 0, %s82
      %s84 = sphi 0, %s82
      %s85 = sphi 0, %s84
      %s99 = sphi 0, %s85
      %s103 = sphi 0, %s103
      %s105 = sphi 0, %s103
      %s106 = sphi 0, %s105
      %s120 = sphi 0, %s106
      %s124 = sphi 0, %s124
      %s126 = sphi 0, %s124
      %s127 = sphi 0, %s126
      %s141 = sphi 0, %s127
      %s145 = sphi 0, %s145
      %s147 = sphi 0, %s145
      %s148 = sphi 0, %s147
      %s162 = sphi 0, %s148
      %s166 = sphi 0, %s166
      %s168 = sphi 0, %s166
      %s169 = sphi 0, %s168
      %s183 = sphi 0, %s169
      %s187 = sphi 0, %s187
      %s189 = sphi 0, %s187
      %s190 = sphi 0, %s189
      %s204 = sphi 0, %s190
      %s208 = sphi 0, %s208
      %s210 = sphi 0, %s208
      %s211 = sphi 0, %s210
      %s225 = sphi 0, %s211
      %s229 = sphi 0, %s229
      %s231 = sphi 0, %s229
      %s232 = sphi 0, %s231
      %s246 = sphi 0, %s232
      %s250 = sphi 0, %s250
      %s252 = sphi 0, %s250
      %s253 = sphi 0, %s252
      %s267 = sphi 0, %s253
      %s271 = sphi 0, %s271
      %s273 = sphi 0, %s271
      %s274 = sphi 0, %s273
      %s288 = sphi 0, %s274
      %s292 = sphi 0, %s292
      %s294 = sphi 0, %s292
      %s295 = sphi 0, %s294
      %s309 = sphi 0, %s295
      %s313 = sphi 0, %s313
      %s315 = sphi 0, %s313
      %s316 = sphi 0, %s315
      %s330 = sphi 0, %s316
      %s334 = sphi 0, %s334
      %s336 = sphi 0, %s334
      %s337 = sphi 0, %s336
      %s351 = sphi 0, %s337
      %s355 = sphi 0, %s355
      %s357 = sphi 0, %s355
      %s358 = sphi 0, %s357
      %s372 = sphi 0, %s358
      %s376 = sphi 0, %s376
      %s378 = sphi 0, %s376
      %s379 = sphi 0, %s378
      %s393 = sphi 0, %s379
      %s397 = sphi 0, %s397
      %s399 = sphi 0, %s397
      %s400 = sphi 0, %s399
      %s414 = sphi 0, %s400
      %s420 = sphi 0, %s422
      %s423 = sphi 0, %s420
      %s424 = sphi 0, %s423
      %s440 = sphi 0, %s424
    $region4: #{tpu_custom_call.1} parent=1 // loop_header_branch
      %30 = sbr.rel (%p28) target = $region8
    $region5: #{tpu_custom_call.1} parent=1 // loop_body
      %s32 = ssub.s32 %s27, 1
      %s33 = ssub.s32 %s27, 2
      %s34 = sadd.s32 %s27, 1
      %s35 = ssub.s32 %s27, %s34
      %p36 = scmp.eq.s32.totalorder %s35, 0
      %s38 = sadd.s32 %s37, 1
      %s39 = scalar_select %p36, %s37, %s38
      %p42 = pneg %p36
      %p43 = scmp.eq.s32.totalorder %s27, 1
      %p44 = por %p42, %p43
      %p45 = scmp.ne.s32.totalorder %s37, %s40
      %p46 = scmp.eq.s32.totalorder %s27, 0
      %p47 = por %p45, %p46
      %p48 = scmp.ne.s32.totalorder %s37, %s40
      %p49 = scmp.eq.s32.totalorder %s32, 1
      %p50 = por %p48, %p49
      %p51 = scmp.ne.s32.totalorder %s40, %s41
      %p52 = scmp.eq.s32.totalorder %s32, 0
      %p53 = por %p51, %p52
      %p54 = scmp.ne.s32.totalorder %s40, %s41
      %p55 = scmp.eq.s32.totalorder %s33, 1
      %p56 = por %p54, %p55
      %p58 = scmp.ne.s32.totalorder %s41, %s57
      %p59 = scmp.eq.s32.totalorder %s33, 0
      %p60 = por %p58, %p59
      %s62 = sadd.s32 %s61, 1
      %p65 = scmp.eq.s32.totalorder %s27, 1
      %p66 = scmp.ne.s32.totalorder %s61, %s63
      %p67 = scmp.eq.s32.totalorder %s27, 0
      %p68 = por %p66, %p67
      %p69 = scmp.ne.s32.totalorder %s61, %s63
      %p70 = scmp.eq.s32.totalorder %s32, 1
      %p71 = por %p69, %p70
      %p72 = scmp.ne.s32.totalorder %s63, %s64
      %p73 = scmp.eq.s32.totalorder %s32, 0
      %p74 = por %p72, %p73
      %p75 = scmp.ne.s32.totalorder %s63, %s64
      %p76 = scmp.eq.s32.totalorder %s33, 1
      %p77 = por %p75, %p76
      %p79 = scmp.ne.s32.totalorder %s64, %s78
      %p80 = scmp.eq.s32.totalorder %s33, 0
      %p81 = por %p79, %p80
      %s83 = sadd.s32 %s82, 1
      %p86 = scmp.eq.s32.totalorder %s27, 1
      %p87 = scmp.ne.s32.totalorder %s82, %s84
      %p88 = scmp.eq.s32.totalorder %s27, 0
      %p89 = por %p87, %p88
      %p90 = scmp.ne.s32.totalorder %s82, %s84
      %p91 = scmp.eq.s32.totalorder %s32, 1
      %p92 = por %p90, %p91
      %p93 = scmp.ne.s32.totalorder %s84, %s85
      %p94 = scmp.eq.s32.totalorder %s32, 0
      %p95 = por %p93, %p94
      %p96 = scmp.ne.s32.totalorder %s84, %s85
      %p97 = scmp.eq.s32.totalorder %s33, 1
      %p98 = por %p96, %p97
      %p100 = scmp.ne.s32.totalorder %s85, %s99
      %p101 = scmp.eq.s32.totalorder %s33, 0
      %p102 = por %p100, %p101
      %s104 = sadd.s32 %s103, 1
      %p107 = scmp.eq.s32.totalorder %s27, 1
      %p108 = scmp.ne.s32.totalorder %s103, %s105
      %p109 = scmp.eq.s32.totalorder %s27, 0
      %p110 = por %p108, %p109
      %p111 = scmp.ne.s32.totalorder %s103, %s105
      %p112 = scmp.eq.s32.totalorder %s32, 1
      %p113 = por %p111, %p112
      %p114 = scmp.ne.s32.totalorder %s105, %s106
      %p115 = scmp.eq.s32.totalorder %s32, 0
      %p116 = por %p114, %p115
      %p117 = scmp.ne.s32.totalorder %s105, %s106
      %p118 = scmp.eq.s32.totalorder %s33, 1
      %p119 = por %p117, %p118
      %p121 = scmp.ne.s32.totalorder %s106, %s120
      %p122 = scmp.eq.s32.totalorder %s33, 0
      %p123 = por %p121, %p122
      %s125 = sadd.s32 %s124, 1
      %p128 = scmp.eq.s32.totalorder %s27, 1
      %p129 = scmp.ne.s32.totalorder %s124, %s126
      %p130 = scmp.eq.s32.totalorder %s27, 0
      %p131 = por %p129, %p130
      %p132 = scmp.ne.s32.totalorder %s124, %s126
      %p133 = scmp.eq.s32.totalorder %s32, 1
      %p134 = por %p132, %p133
      %p135 = scmp.ne.s32.totalorder %s126, %s127
      %p136 = scmp.eq.s32.totalorder %s32, 0
      %p137 = por %p135, %p136
      %p138 = scmp.ne.s32.totalorder %s126, %s127
      %p139 = scmp.eq.s32.totalorder %s33, 1
      %p140 = por %p138, %p139
      %p142 = scmp.ne.s32.totalorder %s127, %s141
      %p143 = scmp.eq.s32.totalorder %s33, 0
      %p144 = por %p142, %p143
      %s146 = sadd.s32 %s145, 1
      %p149 = scmp.eq.s32.totalorder %s27, 1
      %p150 = scmp.ne.s32.totalorder %s145, %s147
      %p151 = scmp.eq.s32.totalorder %s27, 0
      %p152 = por %p150, %p151
      %p153 = scmp.ne.s32.totalorder %s145, %s147
      %p154 = scmp.eq.s32.totalorder %s32, 1
      %p155 = por %p153, %p154
      %p156 = scmp.ne.s32.totalorder %s147, %s148
      %p157 = scmp.eq.s32.totalorder %s32, 0
      %p158 = por %p156, %p157
      %p159 = scmp.ne.s32.totalorder %s147, %s148
      %p160 = scmp.eq.s32.totalorder %s33, 1
      %p161 = por %p159, %p160
      %p163 = scmp.ne.s32.totalorder %s148, %s162
      %p164 = scmp.eq.s32.totalorder %s33, 0
      %p165 = por %p163, %p164
      %s167 = sadd.s32 %s166, 1
      %p170 = scmp.eq.s32.totalorder %s27, 1
      %p171 = scmp.ne.s32.totalorder %s166, %s168
      %p172 = scmp.eq.s32.totalorder %s27, 0
      %p173 = por %p171, %p172
      %p174 = scmp.ne.s32.totalorder %s166, %s168
      %p175 = scmp.eq.s32.totalorder %s32, 1
      %p176 = por %p174, %p175
      %p177 = scmp.ne.s32.totalorder %s168, %s169
      %p178 = scmp.eq.s32.totalorder %s32, 0
      %p179 = por %p177, %p178
      %p180 = scmp.ne.s32.totalorder %s168, %s169
      %p181 = scmp.eq.s32.totalorder %s33, 1
      %p182 = por %p180, %p181
      %p184 = scmp.ne.s32.totalorder %s169, %s183
      %p185 = scmp.eq.s32.totalorder %s33, 0
      %p186 = por %p184, %p185
      %s188 = sadd.s32 %s187, 1
      %p191 = scmp.eq.s32.totalorder %s27, 1
      %p192 = scmp.ne.s32.totalorder %s187, %s189
      %p193 = scmp.eq.s32.totalorder %s27, 0
      %p194 = por %p192, %p193
      %p195 = scmp.ne.s32.totalorder %s187, %s189
      %p196 = scmp.eq.s32.totalorder %s32, 1
      %p197 = por %p195, %p196
      %p198 = scmp.ne.s32.totalorder %s189, %s190
      %p199 = scmp.eq.s32.totalorder %s32, 0
      %p200 = por %p198, %p199
      %p201 = scmp.ne.s32.totalorder %s189, %s190
      %p202 = scmp.eq.s32.totalorder %s33, 1
      %p203 = por %p201, %p202
      %p205 = scmp.ne.s32.totalorder %s190, %s204
      %p206 = scmp.eq.s32.totalorder %s33, 0
      %p207 = por %p205, %p206
      %s209 = sadd.s32 %s208, 1
      %p212 = scmp.eq.s32.totalorder %s27, 1
      %p213 = scmp.ne.s32.totalorder %s208, %s210
      %p214 = scmp.eq.s32.totalorder %s27, 0
      %p215 = por %p213, %p214
      %p216 = scmp.ne.s32.totalorder %s208, %s210
      %p217 = scmp.eq.s32.totalorder %s32, 1
      %p218 = por %p216, %p217
      %p219 = scmp.ne.s32.totalorder %s210, %s211
      %p220 = scmp.eq.s32.totalorder %s32, 0
      %p221 = por %p219, %p220
      %p222 = scmp.ne.s32.totalorder %s210, %s211
      %p223 = scmp.eq.s32.totalorder %s33, 1
      %p224 = por %p222, %p223
      %p226 = scmp.ne.s32.totalorder %s211, %s225
      %p227 = scmp.eq.s32.totalorder %s33, 0
      %p228 = por %p226, %p227
      %s230 = sadd.s32 %s229, 1
      %p233 = scmp.eq.s32.totalorder %s27, 1
      %p234 = scmp.ne.s32.totalorder %s229, %s231
      %p235 = scmp.eq.s32.totalorder %s27, 0
      %p236 = por %p234, %p235
      %p237 = scmp.ne.s32.totalorder %s229, %s231
      %p238 = scmp.eq.s32.totalorder %s32, 1
      %p239 = por %p237, %p238
      %p240 = scmp.ne.s32.totalorder %s231, %s232
      %p241 = scmp.eq.s32.totalorder %s32, 0
      %p242 = por %p240, %p241
      %p243 = scmp.ne.s32.totalorder %s231, %s232
      %p244 = scmp.eq.s32.totalorder %s33, 1
      %p245 = por %p243, %p244
      %p247 = scmp.ne.s32.totalorder %s232, %s246
      %p248 = scmp.eq.s32.totalorder %s33, 0
      %p249 = por %p247, %p248
      %s251 = sadd.s32 %s250, 1
      %p254 = scmp.eq.s32.totalorder %s27, 1
      %p255 = scmp.ne.s32.totalorder %s250, %s252
      %p256 = scmp.eq.s32.totalorder %s27, 0
      %p257 = por %p255, %p256
      %p258 = scmp.ne.s32.totalorder %s250, %s252
      %p259 = scmp.eq.s32.totalorder %s32, 1
      %p260 = por %p258, %p259
      %p261 = scmp.ne.s32.totalorder %s252, %s253
      %p262 = scmp.eq.s32.totalorder %s32, 0
      %p263 = por %p261, %p262
      %p264 = scmp.ne.s32.totalorder %s252, %s253
      %p265 = scmp.eq.s32.totalorder %s33, 1
      %p266 = por %p264, %p265
      %p268 = scmp.ne.s32.totalorder %s253, %s267
      %p269 = scmp.eq.s32.totalorder %s33, 0
      %p270 = por %p268, %p269
      %s272 = sadd.s32 %s271, 1
      %p275 = scmp.eq.s32.totalorder %s27, 1
      %p276 = scmp.ne.s32.totalorder %s271, %s273
      %p277 = scmp.eq.s32.totalorder %s27, 0
      %p278 = por %p276, %p277
      %p279 = scmp.ne.s32.totalorder %s271, %s273
      %p280 = scmp.eq.s32.totalorder %s32, 1
      %p281 = por %p279, %p280
      %p282 = scmp.ne.s32.totalorder %s273, %s274
      %p283 = scmp.eq.s32.totalorder %s32, 0
      %p284 = por %p282, %p283
      %p285 = scmp.ne.s32.totalorder %s273, %s274
      %p286 = scmp.eq.s32.totalorder %s33, 1
      %p287 = por %p285, %p286
      %p289 = scmp.ne.s32.totalorder %s274, %s288
      %p290 = scmp.eq.s32.totalorder %s33, 0
      %p291 = por %p289, %p290
      %s293 = sadd.s32 %s292, 1
      %p296 = scmp.eq.s32.totalorder %s27, 1
      %p297 = scmp.ne.s32.totalorder %s292, %s294
      %p298 = scmp.eq.s32.totalorder %s27, 0
      %p299 = por %p297, %p298
      %p300 = scmp.ne.s32.totalorder %s292, %s294
      %p301 = scmp.eq.s32.totalorder %s32, 1
      %p302 = por %p300, %p301
      %p303 = scmp.ne.s32.totalorder %s294, %s295
      %p304 = scmp.eq.s32.totalorder %s32, 0
      %p305 = por %p303, %p304
      %p306 = scmp.ne.s32.totalorder %s294, %s295
      %p307 = scmp.eq.s32.totalorder %s33, 1
      %p308 = por %p306, %p307
      %p310 = scmp.ne.s32.totalorder %s295, %s309
      %p311 = scmp.eq.s32.totalorder %s33, 0
      %p312 = por %p310, %p311
      %s314 = sadd.s32 %s313, 1
      %p317 = scmp.eq.s32.totalorder %s27, 1
      %p318 = scmp.ne.s32.totalorder %s313, %s315
      %p319 = scmp.eq.s32.totalorder %s27, 0
      %p320 = por %p318, %p319
      %p321 = scmp.ne.s32.totalorder %s313, %s315
      %p322 = scmp.eq.s32.totalorder %s32, 1
      %p323 = por %p321, %p322
      %p324 = scmp.ne.s32.totalorder %s315, %s316
      %p325 = scmp.eq.s32.totalorder %s32, 0
      %p326 = por %p324, %p325
      %p327 = scmp.ne.s32.totalorder %s315, %s316
      %p328 = scmp.eq.s32.totalorder %s33, 1
      %p329 = por %p327, %p328
      %p331 = scmp.ne.s32.totalorder %s316, %s330
      %p332 = scmp.eq.s32.totalorder %s33, 0
      %p333 = por %p331, %p332
      %s335 = sadd.s32 %s334, 1
      %p338 = scmp.eq.s32.totalorder %s27, 1
      %p339 = scmp.ne.s32.totalorder %s334, %s336
      %p340 = scmp.eq.s32.totalorder %s27, 0
      %p341 = por %p339, %p340
      %p342 = scmp.ne.s32.totalorder %s334, %s336
      %p343 = scmp.eq.s32.totalorder %s32, 1
      %p344 = por %p342, %p343
      %p345 = scmp.ne.s32.totalorder %s336, %s337
      %p346 = scmp.eq.s32.totalorder %s32, 0
      %p347 = por %p345, %p346
      %p348 = scmp.ne.s32.totalorder %s336, %s337
      %p349 = scmp.eq.s32.totalorder %s33, 1
      %p350 = por %p348, %p349
      %p352 = scmp.ne.s32.totalorder %s337, %s351
      %p353 = scmp.eq.s32.totalorder %s33, 0
      %p354 = por %p352, %p353
      %s356 = sadd.s32 %s355, 1
      %p359 = scmp.eq.s32.totalorder %s27, 1
      %p360 = scmp.ne.s32.totalorder %s355, %s357
      %p361 = scmp.eq.s32.totalorder %s27, 0
      %p362 = por %p360, %p361
      %p363 = scmp.ne.s32.totalorder %s355, %s357
      %p364 = scmp.eq.s32.totalorder %s32, 1
      %p365 = por %p363, %p364
      %p366 = scmp.ne.s32.totalorder %s357, %s358
      %p367 = scmp.eq.s32.totalorder %s32, 0
      %p368 = por %p366, %p367
      %p369 = scmp.ne.s32.totalorder %s357, %s358
      %p370 = scmp.eq.s32.totalorder %s33, 1
      %p371 = por %p369, %p370
      %p373 = scmp.ne.s32.totalorder %s358, %s372
      %p374 = scmp.eq.s32.totalorder %s33, 0
      %p375 = por %p373, %p374
      %s377 = sadd.s32 %s376, 1
      %p380 = scmp.eq.s32.totalorder %s27, 1
      %p381 = scmp.ne.s32.totalorder %s376, %s378
      %p382 = scmp.eq.s32.totalorder %s27, 0
      %p383 = por %p381, %p382
      %p384 = scmp.ne.s32.totalorder %s376, %s378
      %p385 = scmp.eq.s32.totalorder %s32, 1
      %p386 = por %p384, %p385
      %p387 = scmp.ne.s32.totalorder %s378, %s379
      %p388 = scmp.eq.s32.totalorder %s32, 0
      %p389 = por %p387, %p388
      %p390 = scmp.ne.s32.totalorder %s378, %s379
      %p391 = scmp.eq.s32.totalorder %s33, 1
      %p392 = por %p390, %p391
      %p394 = scmp.ne.s32.totalorder %s379, %s393
      %p395 = scmp.eq.s32.totalorder %s33, 0
      %p396 = por %p394, %p395
      %s398 = sadd.s32 %s397, 1
      %p401 = scmp.eq.s32.totalorder %s27, 1
      %p402 = scmp.ne.s32.totalorder %s397, %s399
      %p403 = scmp.eq.s32.totalorder %s27, 0
      %p404 = por %p402, %p403
      %p405 = scmp.ne.s32.totalorder %s397, %s399
      %p406 = scmp.eq.s32.totalorder %s32, 1
      %p407 = por %p405, %p406
      %p408 = scmp.ne.s32.totalorder %s399, %s400
      %p409 = scmp.eq.s32.totalorder %s32, 0
      %p410 = por %p408, %p409
      %p411 = scmp.ne.s32.totalorder %s399, %s400
      %p412 = scmp.eq.s32.totalorder %s33, 1
      %p413 = por %p411, %p412
      %p415 = scmp.ne.s32.totalorder %s400, %s414
      %p416 = scmp.eq.s32.totalorder %s33, 0
      %p417 = por %p415, %p416
      %s418 = ssub.s32 %s27, %s34
      %p419 = scmp.eq.s32.totalorder %s418, 0
      %s421 = sadd.s32 %s420, 1
      %s422 = scalar_select %p419, %s420, %s421
      %p425 = pneg %p419
      %p426 = scmp.eq.s32.totalorder %s27, 1
      %p427 = por %p425, %p426
      %p428 = scmp.ne.s32.totalorder %s420, %s423
      %p429 = scmp.eq.s32.totalorder %s27, 0
      %p430 = por %p428, %p429
      %p431 = scmp.ne.s32.totalorder %s420, %s423
      %p432 = scmp.eq.s32.totalorder %s32, 1
      %p433 = por %p431, %p432
      %p434 = scmp.ne.s32.totalorder %s423, %s424
      %p435 = scmp.eq.s32.totalorder %s32, 0
      %p436 = por %p434, %p435
      %p437 = scmp.ne.s32.totalorder %s423, %s424
      %p438 = scmp.eq.s32.totalorder %s33, 1
      %p439 = por %p437, %p438
      %p441 = scmp.ne.s32.totalorder %s424, %s440
      %p442 = scmp.eq.s32.totalorder %s33, 0
      %p443 = por %p441, %p442
      %p444 = scmp.le.s32.totalorder 1, %s27
      %p445 = scmp.lt.s32.totalorder %s27, 3
      %p446 = pnand %p444, %p445
      %p447 = pneg %p446
      // Predicated region
      $region9: #{tpu_custom_call.1} parent=5 // pred_check
        _
      $region10: #{tpu_custom_call.1} parent=5 // pred_check_branch
        %449 = sbr.rel (%p446) target = $region12
      $region11: #{tpu_custom_call.1} parent=5 // pred_region
        %s450 = ssub.s32 %s27, 1
        // Predicated region
        $region13: #{tpu_custom_call.1} parent=11 // pred_check
          %p451 = pneg %p74
        $region14: #{tpu_custom_call.1} parent=11 // pred_check_branch
          %453 = sbr.rel (%p451) target = $region16
        $region15: #{tpu_custom_call.1} parent=11 // pred_region
          _
        $region16: #{tpu_custom_call.1} parent=11 // pred_fallthru
          _
        // Predicated region
        $region17: #{tpu_custom_call.1} parent=11 // pred_check
          %p454 = pneg %p95
        $region18: #{tpu_custom_call.1} parent=11 // pred_check_branch
          %456 = sbr.rel (%p454) target = $region20
        $region19: #{tpu_custom_call.1} parent=11 // pred_region
          _
        $region20: #{tpu_custom_call.1} parent=11 // pred_fallthru
          _
        // Predicated region
        $region21: #{tpu_custom_call.1} parent=11 // pred_check
          %p457 = pneg %p116
        $region22: #{tpu_custom_call.1} parent=11 // pred_check_branch
          %459 = sbr.rel (%p457) target = $region24
        $region23: #{tpu_custom_call.1} parent=11 // pred_region
          _
        $region24: #{tpu_custom_call.1} parent=11 // pred_fallthru
          _
        // Predicated region
        $region25: #{tpu_custom_call.1} parent=11 // pred_check
          %p460 = pneg %p137
        $region26: #{tpu_custom_call.1} parent=11 // pred_check_branch
          %462 = sbr.rel (%p460) target = $region28
        $region27: #{tpu_custom_call.1} parent=11 // pred_region
          _
        $region28: #{tpu_custom_call.1} parent=11 // pred_fallthru
          _
        // Predicated region
        $region29: #{tpu_custom_call.1} parent=11 // pred_check
          %p463 = pneg %p158
        $region30: #{tpu_custom_call.1} parent=11 // pred_check_branch
          %465 = sbr.rel (%p463) target = $region32
        $region31: #{tpu_custom_call.1} parent=11 // pred_region
          _
        $region32: #{tpu_custom_call.1} parent=11 // pred_fallthru
          _
        // Predicated region
        $region33: #{tpu_custom_call.1} parent=11 // pred_check
          %p466 = pneg %p179
        $region34: #{tpu_custom_call.1} parent=11 // pred_check_branch
          %468 = sbr.rel (%p466) target = $region36
        $region35: #{tpu_custom_call.1} parent=11 // pred_region
          _
        $region36: #{tpu_custom_call.1} parent=11 // pred_fallthru
          _
        // Predicated region
        $region37: #{tpu_custom_call.1} parent=11 // pred_check
          %p469 = pneg %p200
        $region38: #{tpu_custom_call.1} parent=11 // pred_check_branch
          %471 = sbr.rel (%p469) target = $region40
        $region39: #{tpu_custom_call.1} parent=11 // pred_region
          _
        $region40: #{tpu_custom_call.1} parent=11 // pred_fallthru
          _
        // Predicated region
        $region41: #{tpu_custom_call.1} parent=11 // pred_check
          %p472 = pneg %p221
        $region42: #{tpu_custom_call.1} parent=11 // pred_check_branch
          %474 = sbr.rel (%p472) target = $region44
        $region43: #{tpu_custom_call.1} parent=11 // pred_region
          _
        $region44: #{tpu_custom_call.1} parent=11 // pred_fallthru
          _
        // Predicated region
        $region45: #{tpu_custom_call.1} parent=11 // pred_check
          %p475 = pneg %p242
        $region46: #{tpu_custom_call.1} parent=11 // pred_check_branch
          %477 = sbr.rel (%p475) target = $region48
        $region47: #{tpu_custom_call.1} parent=11 // pred_region
          _
        $region48: #{tpu_custom_call.1} parent=11 // pred_fallthru
          _
        // Predicated region
        $region49: #{tpu_custom_call.1} parent=11 // pred_check
          %p478 = pneg %p263
        $region50: #{tpu_custom_call.1} parent=11 // pred_check_branch
          %480 = sbr.rel (%p478) target = $region52
        $region51: #{tpu_custom_call.1} parent=11 // pred_region
          _
        $region52: #{tpu_custom_call.1} parent=11 // pred_fallthru
          _
        // Predicated region
        $region53: #{tpu_custom_call.1} parent=11 // pred_check
          %p481 = pneg %p284
        $region54: #{tpu_custom_call.1} parent=11 // pred_check_branch
          %483 = sbr.rel (%p481) target = $region56
        $region55: #{tpu_custom_call.1} parent=11 // pred_region
          _
        $region56: #{tpu_custom_call.1} parent=11 // pred_fallthru
          _
        // Predicated region
        $region57: #{tpu_custom_call.1} parent=11 // pred_check
          %p484 = pneg %p305
        $region58: #{tpu_custom_call.1} parent=11 // pred_check_branch
          %486 = sbr.rel (%p484) target = $region60
        $region59: #{tpu_custom_call.1} parent=11 // pred_region
          _
        $region60: #{tpu_custom_call.1} parent=11 // pred_fallthru
          _
        // Predicated region
        $region61: #{tpu_custom_call.1} parent=11 // pred_check
          %p487 = pneg %p326
        $region62: #{tpu_custom_call.1} parent=11 // pred_check_branch
          %489 = sbr.rel (%p487) target = $region64
        $region63: #{tpu_custom_call.1} parent=11 // pred_region
          _
        $region64: #{tpu_custom_call.1} parent=11 // pred_fallthru
          _
        // Predicated region
        $region65: #{tpu_custom_call.1} parent=11 // pred_check
          %p490 = pneg %p347
        $region66: #{tpu_custom_call.1} parent=11 // pred_check_branch
          %492 = sbr.rel (%p490) target = $region68
        $region67: #{tpu_custom_call.1} parent=11 // pred_region
          _
        $region68: #{tpu_custom_call.1} parent=11 // pred_fallthru
          _
        // Predicated region
        $region69: #{tpu_custom_call.1} parent=11 // pred_check
          %p493 = pneg %p368
        $region70: #{tpu_custom_call.1} parent=11 // pred_check_branch
          %495 = sbr.rel (%p493) target = $region72
        $region71: #{tpu_custom_call.1} parent=11 // pred_region
          _
        $region72: #{tpu_custom_call.1} parent=11 // pred_fallthru
          _
        // Predicated region
        $region73: #{tpu_custom_call.1} parent=11 // pred_check
          %p496 = pneg %p389
        $region74: #{tpu_custom_call.1} parent=11 // pred_check_branch
          %498 = sbr.rel (%p496) target = $region76
        $region75: #{tpu_custom_call.1} parent=11 // pred_region
          _
        $region76: #{tpu_custom_call.1} parent=11 // pred_fallthru
          _
        // Predicated region
        $region77: #{tpu_custom_call.1} parent=11 // pred_check
          %p499 = pneg %p410
        $region78: #{tpu_custom_call.1} parent=11 // pred_check_branch
          %501 = sbr.rel (%p499) target = $region80
        $region79: #{tpu_custom_call.1} parent=11 // pred_region
          _
        $region80: #{tpu_custom_call.1} parent=11 // pred_fallthru
          _
      $region12: #{tpu_custom_call.1} parent=5 // pred_fallthru
        _
      %p502 = scmp.lt.s32.totalorder %s27, 2
      // Predicated region
      $region81: #{tpu_custom_call.1} parent=5 // pred_check
        %p503 = pneg %p502
      $region82: #{tpu_custom_call.1} parent=5 // pred_check_branch
        %505 = sbr.rel (%p503) target = $region84
      $region83: #{tpu_custom_call.1} parent=5 // pred_region
        // Predicated region
        $region85: #{tpu_custom_call.1} parent=83 // pred_check
          %p506 = pneg %p47
        $region86: #{tpu_custom_call.1} parent=83 // pred_check_branch
          %508 = sbr.rel (%p506) target = $region88
        $region87: #{tpu_custom_call.1} parent=83 // pred_region
          %p509 = scmp.lt.s32.totalorder %s27, 1
          %s510 = scalar_select %p509, %s27, 1
          %s511 = smul.addr %s510, 2
          %s512 = smul.addr %s511, 4
          %s513 = scalar_lea.vmem %s0, %s512
        $region88: #{tpu_custom_call.1} parent=83 // pred_fallthru
          _
      $region84: #{tpu_custom_call.1} parent=5 // pred_fallthru
        _
      %p514 = scmp.le.s32.totalorder 1, %s27
      %p515 = scmp.lt.s32.totalorder %s27, 3
      %p516 = pnand %p514, %p515
      %p517 = pneg %p516
      // Predicated region
      $region89: #{tpu_custom_call.1} parent=5 // pred_check
        _
      $region90: #{tpu_custom_call.1} parent=5 // pred_check_branch
        %519 = sbr.rel (%p516) target = $region92
      $region91: #{tpu_custom_call.1} parent=5 // pred_region
        %s520 = ssub.s32 %s27, 1
        %p521 = scmp.lt.s32.totalorder %s32, 1
        %s522 = scalar_select %p521, %s32, 1
        %s523 = smul.addr %s522, 2
        %s524 = smul.addr %s523, 4
        %s525 = scalar_lea.vmem %s0, %s524
        %p526 = pneg %p53
        %p527 = pneg %p50
        %p528 = pneg %p74
        %p529 = pneg %p71
        %p530 = pneg %p95
        %p531 = pneg %p92
        %p532 = pneg %p116
        %p533 = pneg %p113
        %p534 = pneg %p137
        %p535 = pneg %p134
        %p536 = pneg %p158
        %p537 = pneg %p155
        %p538 = pneg %p179
        %p539 = pneg %p176
        %p540 = pneg %p200
        %p541 = pneg %p197
        %p542 = pneg %p221
        %p543 = pneg %p218
        %p544 = pneg %p242
        %p545 = pneg %p239
        %p546 = pneg %p263
        %p547 = pneg %p260
        %p548 = pneg %p284
        %p549 = pneg %p281
        %p550 = pneg %p305
        %p551 = pneg %p302
        %p552 = pneg %p326
        %p553 = pneg %p323
        %p554 = pneg %p347
        %p555 = pneg %p344
        %p556 = pneg %p368
        %p557 = pneg %p365
        %p558 = pneg %p389
        %p559 = pneg %p386
        %p560 = pneg %p410
        %p561 = pneg %p407
        %p562 = pneg %p436
        %p563 = pneg %p433
        %s564 = sand.u32 %s423, 1
        %s565 = scalar_lea.sflag [#allocation3], %s564
        %s566 = sand.u32 %s423, 1
        %s567 = smul.addr %s566, 8
        %s568 = scalar_lea.vmem [#allocation2], %s567
        %p569 = scmp.lt.s32.totalorder %s32, 1
        %s570 = scalar_select %p569, %s32, 1
        %s571 = smul.addr %s570, 2
        %s572 = smul.addr %s571, 4
        %s573 = scalar_lea.vmem %s0, %s572
        %v574 = vld [vmem:[%s573] sm:$0xff]
        %v575 = vld [vmem:[%s1] sm:$0x3]
        %v576 = vld [vmem:[%s2] sm:$0x3]
        %v577 = vld [vmem:[%s3] sm:$0xff]
        %v578 = vld [vmem:[%s3 + $0x8] sm:$0xff]
        %v579 = vld [vmem:[%s3 + $0x10] sm:$0xff]
        %v580 = vld [vmem:[%s3 + $0x18] sm:$0xff]
        %v581 = vld [vmem:[%s3 + $0x20] sm:$0xff]
        %v582 = vld [vmem:[%s3 + $0x28] sm:$0xff]
        %v583 = vld [vmem:[%s3 + $0x30] sm:$0xff]
        %v584 = vld [vmem:[%s3 + $0x38] sm:$0xff]
        %v585 = vld [vmem:[%s3 + $0x40] sm:$0xff]
        %v586 = vld [vmem:[%s3 + $0x48] sm:$0xff]
        %v587 = vld [vmem:[%s3 + $0x50] sm:$0xff]
        %v588 = vld [vmem:[%s3 + $0x58] sm:$0xff]
        %v589 = vld [vmem:[%s3 + $0x60] sm:$0xff]
        %v590 = vld [vmem:[%s3 + $0x68] sm:$0xff]
        %v591 = vld [vmem:[%s3 + $0x70] sm:$0xff]
        %v592 = vld [vmem:[%s3 + $0x78] sm:$0xff]
        %v593 = vadd.s32 %v576, 4294967293
        %vm594 = vcmp.ge.s32.totalorder %v593, 0
        %vm595 = vcmp.lt.s32.totalorder %v593, 16
        %vm596 = vmand %vm594, %vm595
        %v597 = vsel %vm596, 1.0, 0.0
        %v598 = vadd.s32 %v576, 4294967294
        %vm599 = vcmp.ge.s32.totalorder %v598, 0
        %vm600 = vcmp.lt.s32.totalorder %v598, 16
        %vm601 = vmand %vm599, %vm600
        %v602 = vsel %vm601, 1.0, 0.0
        %v603 = vadd.s32 %v576, 4294967295
        %vm604 = vcmp.ge.s32.totalorder %v603, 0
        %vm605 = vcmp.lt.s32.totalorder %v603, 16
        %vm606 = vmand %vm604, %vm605
        %v607 = vsel %vm606, 1.0, 0.0
        %vm608 = vcmp.ge.s32.totalorder %v576, 0
        %vm609 = vcmp.lt.s32.totalorder %v576, 16
        %vm610 = vmand %vm608, %vm609
        %v611 = vsel %vm610, 1.0, 0.0
        %v612 = vadd.s32 %v576, 1
        %vm613 = vcmp.ge.s32.totalorder %v612, 0
        %vm614 = vcmp.lt.s32.totalorder %v612, 16
        %vm615 = vmand %vm613, %vm614
        %v616 = vsel %vm615, 1.0, 0.0
        %v617 = vadd.s32 %v576, 2
        %vm618 = vcmp.ge.s32.totalorder %v617, 0
        %vm619 = vcmp.lt.s32.totalorder %v617, 16
        %vm620 = vmand %vm618, %vm619
        %v621 = vsel %vm620, 1.0, 0.0
        %v622 = vadd.s32 %v576, 3
        %vm623 = vcmp.ge.s32.totalorder %v622, 0
        %vm624 = vcmp.lt.s32.totalorder %v622, 16
        %vm625 = vmand %vm623, %vm624
        %v626 = vsel %vm625, 1.0, 0.0
        %v627 = vadd.s32 %v575, 4294967293
        %vm628 = vcmp.ge.s32.totalorder %v627, 0
        %vm629 = vcmp.lt.s32.totalorder %v627, 16
        %vm630 = vmand %vm628, %vm629
        %v631 = vsel %vm630, 1.0, 0.0
        %v632 = vadd.s32 %v575, 4294967294
        %vm633 = vcmp.ge.s32.totalorder %v632, 0
        %vm634 = vcmp.lt.s32.totalorder %v632, 16
        %vm635 = vmand %vm633, %vm634
        %v636 = vsel %vm635, 1.0, 0.0
        %v637 = vadd.s32 %v575, 4294967295
        %vm638 = vcmp.ge.s32.totalorder %v637, 0
        %vm639 = vcmp.lt.s32.totalorder %v637, 16
        %vm640 = vmand %vm638, %vm639
        %v641 = vsel %vm640, 1.0, 0.0
        %vm642 = vcmp.ge.s32.totalorder %v575, 0
        %vm643 = vcmp.lt.s32.totalorder %v575, 16
        %vm644 = vmand %vm642, %vm643
        %v645 = vsel %vm644, 1.0, 0.0
        %v646 = vadd.s32 %v575, 1
        %vm647 = vcmp.ge.s32.totalorder %v646, 0
        %vm648 = vcmp.lt.s32.totalorder %v646, 16
        %vm649 = vmand %vm647, %vm648
        %v650 = vsel %vm649, 1.0, 0.0
        %v651 = vadd.s32 %v575, 2
        %vm652 = vcmp.ge.s32.totalorder %v651, 0
        %vm653 = vcmp.lt.s32.totalorder %v651, 16
        %vm654 = vmand %vm652, %vm653
        %v655 = vsel %vm654, 1.0, 0.0
        %v656 = vadd.s32 %v575, 3
        %vm657 = vcmp.ge.s32.totalorder %v656, 0
        %vm658 = vcmp.lt.s32.totalorder %v656, 16
        %vm659 = vmand %vm657, %vm658
        %v660 = vsel %vm659, 1.0, 0.0
        %v661 = vadd.s32 %v576, 4294967284
        %vm662 = vcmp.ge.s32.totalorder %v661, 0
        %vm663 = vcmp.lt.s32.totalorder %v661, 16
        %vm664 = vmand %vm662, %vm663
        %v665 = vsel %vm664, 1.0, 0.0
        %v666 = vadd.s32 %v576, 4294967288
        %vm667 = vcmp.ge.s32.totalorder %v666, 0
        %vm668 = vcmp.lt.s32.totalorder %v666, 16
        %vm669 = vmand %vm667, %vm668
        %v670 = vsel %vm669, 1.0, 0.0
        %v671 = vadd.s32 %v576, 4294967292
        %vm672 = vcmp.ge.s32.totalorder %v671, 0
        %vm673 = vcmp.lt.s32.totalorder %v671, 16
        %vm674 = vmand %vm672, %vm673
        %v675 = vsel %vm674, 1.0, 0.0
        %v676 = vadd.s32 %v576, 4
        %vm677 = vcmp.ge.s32.totalorder %v676, 0
        %vm678 = vcmp.lt.s32.totalorder %v676, 16
        %vm679 = vmand %vm677, %vm678
        %v680 = vsel %vm679, 1.0, 0.0
        %v681 = vadd.s32 %v576, 8
        %vm682 = vcmp.ge.s32.totalorder %v681, 0
        %vm683 = vcmp.lt.s32.totalorder %v681, 16
        %vm684 = vmand %vm682, %vm683
        %v685 = vsel %vm684, 1.0, 0.0
        %v686 = vadd.s32 %v576, 12
        %vm687 = vcmp.ge.s32.totalorder %v686, 0
        %vm688 = vcmp.lt.s32.totalorder %v686, 16
        %vm689 = vmand %vm687, %vm688
        %v690 = vsel %vm689, 1.0, 0.0
        %v691 = vadd.s32 %v575, 4294967284
        %vm692 = vcmp.ge.s32.totalorder %v691, 0
        %vm693 = vcmp.lt.s32.totalorder %v691, 16
        %vm694 = vmand %vm692, %vm693
        %v695 = vsel %vm694, 1.0, 0.0
        %v696 = vadd.s32 %v575, 4294967288
        %vm697 = vcmp.ge.s32.totalorder %v696, 0
        %vm698 = vcmp.lt.s32.totalorder %v696, 16
        %vm699 = vmand %vm697, %vm698
        %v700 = vsel %vm699, 1.0, 0.0
        %v701 = vadd.s32 %v575, 4294967292
        %vm702 = vcmp.ge.s32.totalorder %v701, 0
        %vm703 = vcmp.lt.s32.totalorder %v701, 16
        %vm704 = vmand %vm702, %vm703
        %v705 = vsel %vm704, 1.0, 0.0
        %v706 = vadd.s32 %v575, 4
        %vm707 = vcmp.ge.s32.totalorder %v706, 0
        %vm708 = vcmp.lt.s32.totalorder %v706, 16
        %vm709 = vmand %vm707, %vm708
        %v710 = vsel %vm709, 1.0, 0.0
        %v711 = vadd.s32 %v575, 8
        %vm712 = vcmp.ge.s32.totalorder %v711, 0
        %vm713 = vcmp.lt.s32.totalorder %v711, 16
        %vm714 = vmand %vm712, %vm713
        %v715 = vsel %vm714, 1.0, 0.0
        %v716 = vadd.s32 %v575, 12
        %vm717 = vcmp.ge.s32.totalorder %v716, 0
        %vm718 = vcmp.lt.s32.totalorder %v716, 16
        %vm719 = vmand %vm717, %vm718
        %v720 = vsel %vm719, 1.0, 0.0
        %v721 = vadd.s32 %v576, 4294967287
        %vm722 = vcmp.ge.s32.totalorder %v721, 0
        %vm723 = vcmp.lt.s32.totalorder %v721, 16
        %vm724 = vmand %vm722, %vm723
        %v725 = vsel %vm724, 1.0, 0.0
        %v726 = vadd.s32 %v576, 4294967290
        %vm727 = vcmp.ge.s32.totalorder %v726, 0
        %vm728 = vcmp.lt.s32.totalorder %v726, 16
        %vm729 = vmand %vm727, %vm728
        %v730 = vsel %vm729, 1.0, 0.0
        %v731 = vadd.s32 %v576, 6
        %vm732 = vcmp.ge.s32.totalorder %v731, 0
        %vm733 = vcmp.lt.s32.totalorder %v731, 16
        %vm734 = vmand %vm732, %vm733
        %v735 = vsel %vm734, 1.0, 0.0
        %v736 = vadd.s32 %v576, 9
        %vm737 = vcmp.ge.s32.totalorder %v736, 0
        %vm738 = vcmp.lt.s32.totalorder %v736, 16
        %vm739 = vmand %vm737, %vm738
        %v740 = vsel %vm739, 1.0, 0.0
        %v741 = vadd.s32 %v575, 4294967287
        %vm742 = vcmp.ge.s32.totalorder %v741, 0
        %vm743 = vcmp.lt.s32.totalorder %v741, 16
        %vm744 = vmand %vm742, %vm743
        %v745 = vsel %vm744, 1.0, 0.0
        %v746 = vadd.s32 %v575, 4294967290
        %vm747 = vcmp.ge.s32.totalorder %v746, 0
        %vm748 = vcmp.lt.s32.totalorder %v746, 16
        %vm749 = vmand %vm747, %vm748
        %v750 = vsel %vm749, 1.0, 0.0
        %v751 = vadd.s32 %v575, 6
        %vm752 = vcmp.ge.s32.totalorder %v751, 0
        %vm753 = vcmp.lt.s32.totalorder %v751, 16
        %vm754 = vmand %vm752, %vm753
        %v755 = vsel %vm754, 1.0, 0.0
        %v756 = vadd.s32 %v575, 9
        %vm757 = vcmp.ge.s32.totalorder %v756, 0
        %vm758 = vcmp.lt.s32.totalorder %v756, 16
        %vm759 = vmand %vm757, %vm758
        %v760 = vsel %vm759, 1.0, 0.0
        %v762 = vcombine.high %v574, %v574
        %vm764 = vcmask 1043456
        %v765 = vsel %vm764, %v574, 0.0
        %v766 = vrot.slane %v765, 4
        %v767 = vadd.f32 %v765, %v766
        %v768 = vrot.slane %v767, 2
        %v769 = vadd.f32 %v767, %v768
        %v770 = vrot.slane %v769, 1
        %v771 = vadd.f32 %v769, %v770
        %v772 = vsel %vm764, %v762, 0.0
        %v773 = vrot.slane %v772, 4
        %v774 = vadd.f32 %v772, %v773
        %v775 = vrot.slane %v774, 2
        %v776 = vadd.f32 %v774, %v775
        %v777 = vrot.slane %v776, 1
        %v778 = vadd.f32 %v776, %v777
        %v779 = vrcp.pop 4.0
        %v780 = vmul.f32 %v771, %v779
        %v781 = vmul.f32 %v778, %v779
        %v784 = vcombine.low %v780, %v781
        %v786 = vsub.f32 %v574, %v784
        %v787 = vmul.f32 %v786, %v786
        %v789 = vcombine.high %v787, %v787
        %v791 = vsel %vm764, %v787, 0.0
        %v792 = vrot.slane %v791, 4
        %v793 = vadd.f32 %v791, %v792
        %v794 = vrot.slane %v793, 2
        %v795 = vadd.f32 %v793, %v794
        %v796 = vrot.slane %v795, 1
        %v797 = vadd.f32 %v795, %v796
        %v798 = vsel %vm764, %v789, 0.0
        %v799 = vrot.slane %v798, 4
        %v800 = vadd.f32 %v798, %v799
        %v801 = vrot.slane %v800, 2
        %v802 = vadd.f32 %v800, %v801
        %v803 = vrot.slane %v802, 1
        %v804 = vadd.f32 %v802, %v803
        %v805 = vmul.f32 %v797, %v779
        %v806 = vmul.f32 %v804, %v779
        %v807 = vadd.f32 %v805, 1e-06
        %v808 = vadd.f32 %v806, 1e-06
        %v809 = vrsqrt.pop %v807
        %v810 = vrsqrt.pop %v808
        %v813 = vcombine.low %v809, %v810
        %v815 = vmul.f32 %v786, %v813
        %817 = vset.pattern.permute.xlu0 0
        %818 = vperm.xlu0 %817, %v577
        %v819 = vpop.permute.xlu0 %818
        %v821 = vunpack.c.l.s4 839922192
        %v822 = vunpack.c.0.s8 %v821
        %v823 = vlaneseq
        %v824 = vshrl.u32 %v823, 7
        %v825 = vsub.s32 %v822, %v824
        %v826 = vrot.slane %v819, %v825
        %v828 = vmul.f32 %v815, %v826
        %830 = vset.pattern.permute.xlu0 0
        %831 = vperm.xlu0 %830, %v578
        %v832 = vpop.permute.xlu0 %831
        %v834 = vunpack.c.l.s4 839922192
        %v835 = vunpack.c.0.s8 %v834
        %v836 = vlaneseq
        %v837 = vshrl.u32 %v836, 7
        %v838 = vsub.s32 %v835, %v837
        %v839 = vrot.slane %v832, %v838
        %v841 = vadd.f32 %v828, %v839
        %v842 = vld [vmem:[%s4] sm:$0x3]
        %844 = vset.pattern.permute.xlu0 0
        %845 = vperm.xlu0 %844, %v579
        %v846 = vpop.permute.xlu0 %845
        %v849 = vcombine.high %v841, %v841
        %vm850 = vcmask 31744
        %v852 = vsel %vm850, %v842, 0
        %v854 = vsel %vm764, %v841, 0
        %v856 = vsel %vm764, %v849, 0
        %858 = vmatprep.subr.mxu0 %v856
        %859 = vmatpush1.msra.mxu0 %v854
        %860 = vmatprep.subr.mxu0 0.0
        %861 = vmatpush1.msra.mxu0 0.0
        %862 = vmatprep.subr.mxu0 0.0
        %863 = vmatpush1.msra.mxu0 0.0
        %864 = vmatprep.subr.mxu0 0.0
        %865 = vmatpush1.msra.mxu0 0.0
        %866 = vmatprep.subr.mxu0 0.0
        %867 = vmatpush1.msra.mxu0 0.0
        %868 = vmatprep.subr.mxu0 0.0
        %869 = vmatpush1.msra.mxu0 0.0
        %870 = vmatprep.subr.mxu0 0.0
        %871 = vmatpush1.msra.mxu0 0.0
        %872 = vmatprep.subr.mxu0 0.0
        %873 = vmatpush1.msra.mxu0 0.0
        %874 = vmatprep.subr.mxu0 0.0
        %875 = vmatpush1.msra.mxu0 0.0
        %876 = vmatprep.subr.mxu0 0.0
        %877 = vmatpush1.msra.mxu0 0.0
        %878 = vmatprep.subr.mxu0 0.0
        %879 = vmatpush1.msra.mxu0 0.0
        %880 = vmatprep.subr.mxu0 0.0
        %881 = vmatpush1.msra.mxu0 0.0
        %882 = vmatprep.subr.mxu0 0.0
        %883 = vmatpush1.msra.mxu0 0.0
        %884 = vmatprep.subr.mxu0 0.0
        %885 = vmatpush1.msra.mxu0 0.0
        %886 = vmatprep.subr.mxu0 0.0
        %887 = vmatpush1.msra.mxu0 0.0
        %888 = vmatprep.subr.mxu0 0.0
        %889 = vmatpush1.msra.mxu0 0.0
        %890 = vmatprep.subr.mxu0 0.0
        %891 = vmatpush1.msra.mxu0 0.0
        %892 = vmatprep.subr.mxu0 0.0
        %893 = vmatpush1.msra.mxu0 0.0
        %894 = vmatprep.subr.mxu0 0.0
        %895 = vmatpush1.msra.mxu0 0.0
        %896 = vmatprep.subr.mxu0 0.0
        %897 = vmatpush1.msra.mxu0 0.0
        %898 = vmatprep.subr.mxu0 0.0
        %899 = vmatpush1.msra.mxu0 0.0
        %900 = vmatprep.subr.mxu0 0.0
        %901 = vmatpush1.msra.mxu0 0.0
        %902 = vmatprep.subr.mxu0 0.0
        %903 = vmatpush1.msra.mxu0 0.0
        %904 = vmatprep.subr.mxu0 0.0
        %905 = vmatpush1.msra.mxu0 0.0
        %906 = vmatprep.subr.mxu0 0.0
        %907 = vmatpush1.msra.mxu0 0.0
        %908 = vmatprep.subr.mxu0 0.0
        %909 = vmatpush1.msra.mxu0 0.0
        %910 = vmatprep.subr.mxu0 0.0
        %911 = vmatpush1.msra.mxu0 0.0
        %912 = vmatprep.subr.mxu0 0.0
        %913 = vmatpush1.msra.mxu0 0.0
        %914 = vmatprep.subr.mxu0 0.0
        %915 = vmatpush1.msra.mxu0 0.0
        %916 = vmatprep.subr.mxu0 0.0
        %917 = vmatpush1.msra.mxu0 0.0
        %918 = vmatprep.subr.mxu0 0.0
        %919 = vmatpush1.msra.mxu0 0.0
        %920 = vmatprep.subr.mxu0 0.0
        %921 = vmatpush1.msra.mxu0 0.0
        %922 = vmatprep.mubr.f32.mxu0 0.0
        %923 = vmatmul.mubr.f32.gmra.mrb[0].mxu0 %v852
        %v924 = vpop.f32.mrb[0].mxu0
        %v925 = vadd.f32 %v846, %v924
        %v926 = vpop.f32.mrb[0].mxu0
        %v927 = vadd.f32 %v846, %v926
        %928 = vdwg.mxu0
        %v929 = vld [vmem:[%s5] sm:$0x3]
        %931 = vset.pattern.permute.xlu0 0
        %932 = vperm.xlu0 %931, %v580
        %v933 = vpop.permute.xlu0 %932
        %v936 = vsel %vm850, %v929, 0
        %938 = vmatprep.subr.mxu0 %v856
        %939 = vmatpush1.msra.mxu0 %v854
        %940 = vmatprep.subr.mxu0 0.0
        %941 = vmatpush1.msra.mxu0 0.0
        %942 = vmatprep.subr.mxu0 0.0
        %943 = vmatpush1.msra.mxu0 0.0
        %944 = vmatprep.subr.mxu0 0.0
        %945 = vmatpush1.msra.mxu0 0.0
        %946 = vmatprep.subr.mxu0 0.0
        %947 = vmatpush1.msra.mxu0 0.0
        %948 = vmatprep.subr.mxu0 0.0
        %949 = vmatpush1.msra.mxu0 0.0
        %950 = vmatprep.subr.mxu0 0.0
        %951 = vmatpush1.msra.mxu0 0.0
        %952 = vmatprep.subr.mxu0 0.0
        %953 = vmatpush1.msra.mxu0 0.0
        %954 = vmatprep.subr.mxu0 0.0
        %955 = vmatpush1.msra.mxu0 0.0
        %956 = vmatprep.subr.mxu0 0.0
        %957 = vmatpush1.msra.mxu0 0.0
        %958 = vmatprep.subr.mxu0 0.0
        %959 = vmatpush1.msra.mxu0 0.0
        %960 = vmatprep.subr.mxu0 0.0
        %961 = vmatpush1.msra.mxu0 0.0
        %962 = vmatprep.subr.mxu0 0.0
        %963 = vmatpush1.msra.mxu0 0.0
        %964 = vmatprep.subr.mxu0 0.0
        %965 = vmatpush1.msra.mxu0 0.0
        %966 = vmatprep.subr.mxu0 0.0
        %967 = vmatpush1.msra.mxu0 0.0
        %968 = vmatprep.subr.mxu0 0.0
        %969 = vmatpush1.msra.mxu0 0.0
        %970 = vmatprep.subr.mxu0 0.0
        %971 = vmatpush1.msra.mxu0 0.0
        %972 = vmatprep.subr.mxu0 0.0
        %973 = vmatpush1.msra.mxu0 0.0
        %974 = vmatprep.subr.mxu0 0.0
        %975 = vmatpush1.msra.mxu0 0.0
        %976 = vmatprep.subr.mxu0 0.0
        %977 = vmatpush1.msra.mxu0 0.0
        %978 = vmatprep.subr.mxu0 0.0
        %979 = vmatpush1.msra.mxu0 0.0
        %980 = vmatprep.subr.mxu0 0.0
        %981 = vmatpush1.msra.mxu0 0.0
        %982 = vmatprep.subr.mxu0 0.0
        %983 = vmatpush1.msra.mxu0 0.0
        %984 = vmatprep.subr.mxu0 0.0
        %985 = vmatpush1.msra.mxu0 0.0
        %986 = vmatprep.subr.mxu0 0.0
        %987 = vmatpush1.msra.mxu0 0.0
        %988 = vmatprep.subr.mxu0 0.0
        %989 = vmatpush1.msra.mxu0 0.0
        %990 = vmatprep.subr.mxu0 0.0
        %991 = vmatpush1.msra.mxu0 0.0
        %992 = vmatprep.subr.mxu0 0.0
        %993 = vmatpush1.msra.mxu0 0.0
        %994 = vmatprep.subr.mxu0 0.0
        %995 = vmatpush1.msra.mxu0 0.0
        %996 = vmatprep.subr.mxu0 0.0
        %997 = vmatpush1.msra.mxu0 0.0
        %998 = vmatprep.subr.mxu0 0.0
        %999 = vmatpush1.msra.mxu0 0.0
        %1000 = vmatprep.subr.mxu0 0.0
        %1001 = vmatpush1.msra.mxu0 0.0
        %1002 = vmatprep.mubr.f32.mxu0 0.0
        %1003 = vmatmul.mubr.f32.gmra.mrb[0].mxu0 %v936
        %v1004 = vpop.f32.mrb[0].mxu0
        %v1005 = vadd.f32 %v933, %v1004
        %v1006 = vpop.f32.mrb[0].mxu0
        %v1007 = vadd.f32 %v933, %v1006
        %1008 = vdwg.mxu0
        %v1009 = vld [vmem:[%s6] sm:$0x3]
        %1011 = vset.pattern.permute.xlu0 0
        %1012 = vperm.xlu0 %1011, %v581
        %v1013 = vpop.permute.xlu0 %1012
        %v1016 = vsel %vm850, %v1009, 0
        %1018 = vmatprep.subr.mxu0 %v856
        %1019 = vmatpush1.msra.mxu0 %v854
        %1020 = vmatprep.subr.mxu0 0.0
        %1021 = vmatpush1.msra.mxu0 0.0
        %1022 = vmatprep.subr.mxu0 0.0
        %1023 = vmatpush1.msra.mxu0 0.0
        %1024 = vmatprep.subr.mxu0 0.0
        %1025 = vmatpush1.msra.mxu0 0.0
        %1026 = vmatprep.subr.mxu0 0.0
        %1027 = vmatpush1.msra.mxu0 0.0
        %1028 = vmatprep.subr.mxu0 0.0
        %1029 = vmatpush1.msra.mxu0 0.0
        %1030 = vmatprep.subr.mxu0 0.0
        %1031 = vmatpush1.msra.mxu0 0.0
        %1032 = vmatprep.subr.mxu0 0.0
        %1033 = vmatpush1.msra.mxu0 0.0
        %1034 = vmatprep.subr.mxu0 0.0
        %1035 = vmatpush1.msra.mxu0 0.0
        %1036 = vmatprep.subr.mxu0 0.0
        %1037 = vmatpush1.msra.mxu0 0.0
        %1038 = vmatprep.subr.mxu0 0.0
        %1039 = vmatpush1.msra.mxu0 0.0
        %1040 = vmatprep.subr.mxu0 0.0
        %1041 = vmatpush1.msra.mxu0 0.0
        %1042 = vmatprep.subr.mxu0 0.0
        %1043 = vmatpush1.msra.mxu0 0.0
        %1044 = vmatprep.subr.mxu0 0.0
        %1045 = vmatpush1.msra.mxu0 0.0
        %1046 = vmatprep.subr.mxu0 0.0
        %1047 = vmatpush1.msra.mxu0 0.0
        %1048 = vmatprep.subr.mxu0 0.0
        %1049 = vmatpush1.msra.mxu0 0.0
        %1050 = vmatprep.subr.mxu0 0.0
        %1051 = vmatpush1.msra.mxu0 0.0
        %1052 = vmatprep.subr.mxu0 0.0
        %1053 = vmatpush1.msra.mxu0 0.0
        %1054 = vmatprep.subr.mxu0 0.0
        %1055 = vmatpush1.msra.mxu0 0.0
        %1056 = vmatprep.subr.mxu0 0.0
        %1057 = vmatpush1.msra.mxu0 0.0
        %1058 = vmatprep.subr.mxu0 0.0
        %1059 = vmatpush1.msra.mxu0 0.0
        %1060 = vmatprep.subr.mxu0 0.0
        %1061 = vmatpush1.msra.mxu0 0.0
        %1062 = vmatprep.subr.mxu0 0.0
        %1063 = vmatpush1.msra.mxu0 0.0
        %1064 = vmatprep.subr.mxu0 0.0
        %1065 = vmatpush1.msra.mxu0 0.0
        %1066 = vmatprep.subr.mxu0 0.0
        %1067 = vmatpush1.msra.mxu0 0.0
        %1068 = vmatprep.subr.mxu0 0.0
        %1069 = vmatpush1.msra.mxu0 0.0
        %1070 = vmatprep.subr.mxu0 0.0
        %1071 = vmatpush1.msra.mxu0 0.0
        %1072 = vmatprep.subr.mxu0 0.0
        %1073 = vmatpush1.msra.mxu0 0.0
        %1074 = vmatprep.subr.mxu0 0.0
        %1075 = vmatpush1.msra.mxu0 0.0
        %1076 = vmatprep.subr.mxu0 0.0
        %1077 = vmatpush1.msra.mxu0 0.0
        %1078 = vmatprep.subr.mxu0 0.0
        %1079 = vmatpush1.msra.mxu0 0.0
        %1080 = vmatprep.subr.mxu0 0.0
        %1081 = vmatpush1.msra.mxu0 0.0
        %1082 = vmatprep.mubr.f32.mxu0 0.0
        %1083 = vmatmul.mubr.f32.gmra.mrb[0].mxu0 %v1016
        %v1084 = vpop.f32.mrb[0].mxu0
        %v1085 = vadd.f32 %v1013, %v1084
        %v1086 = vpop.f32.mrb[0].mxu0
        %v1087 = vadd.f32 %v1013, %v1086
        %1088 = vdwg.mxu0
        %v1089 = vld [vmem:[%s7] sm:$0x3]
        %1091 = vset.pattern.permute.xlu0 0
        %1092 = vperm.xlu0 %1091, %v582
        %v1093 = vpop.permute.xlu0 %1092
        %v1096 = vsel %vm850, %v1089, 0
        %1098 = vmatprep.subr.mxu0 %v856
        %1099 = vmatpush1.msra.mxu0 %v854
        %1100 = vmatprep.subr.mxu0 0.0
        %1101 = vmatpush1.msra.mxu0 0.0
        %1102 = vmatprep.subr.mxu0 0.0
        %1103 = vmatpush1.msra.mxu0 0.0
        %1104 = vmatprep.subr.mxu0 0.0
        %1105 = vmatpush1.msra.mxu0 0.0
        %1106 = vmatprep.subr.mxu0 0.0
        %1107 = vmatpush1.msra.mxu0 0.0
        %1108 = vmatprep.subr.mxu0 0.0
        %1109 = vmatpush1.msra.mxu0 0.0
        %1110 = vmatprep.subr.mxu0 0.0
        %1111 = vmatpush1.msra.mxu0 0.0
        %1112 = vmatprep.subr.mxu0 0.0
        %1113 = vmatpush1.msra.mxu0 0.0
        %1114 = vmatprep.subr.mxu0 0.0
        %1115 = vmatpush1.msra.mxu0 0.0
        %1116 = vmatprep.subr.mxu0 0.0
        %1117 = vmatpush1.msra.mxu0 0.0
        %1118 = vmatprep.subr.mxu0 0.0
        %1119 = vmatpush1.msra.mxu0 0.0
        %1120 = vmatprep.subr.mxu0 0.0
        %1121 = vmatpush1.msra.mxu0 0.0
        %1122 = vmatprep.subr.mxu0 0.0
        %1123 = vmatpush1.msra.mxu0 0.0
        %1124 = vmatprep.subr.mxu0 0.0
        %1125 = vmatpush1.msra.mxu0 0.0
        %1126 = vmatprep.subr.mxu0 0.0
        %1127 = vmatpush1.msra.mxu0 0.0
        %1128 = vmatprep.subr.mxu0 0.0
        %1129 = vmatpush1.msra.mxu0 0.0
        %1130 = vmatprep.subr.mxu0 0.0
        %1131 = vmatpush1.msra.mxu0 0.0
        %1132 = vmatprep.subr.mxu0 0.0
        %1133 = vmatpush1.msra.mxu0 0.0
        %1134 = vmatprep.subr.mxu0 0.0
        %1135 = vmatpush1.msra.mxu0 0.0
        %1136 = vmatprep.subr.mxu0 0.0
        %1137 = vmatpush1.msra.mxu0 0.0
        %1138 = vmatprep.subr.mxu0 0.0
        %1139 = vmatpush1.msra.mxu0 0.0
        %1140 = vmatprep.subr.mxu0 0.0
        %1141 = vmatpush1.msra.mxu0 0.0
        %1142 = vmatprep.subr.mxu0 0.0
        %1143 = vmatpush1.msra.mxu0 0.0
        %1144 = vmatprep.subr.mxu0 0.0
        %1145 = vmatpush1.msra.mxu0 0.0
        %1146 = vmatprep.subr.mxu0 0.0
        %1147 = vmatpush1.msra.mxu0 0.0
        %1148 = vmatprep.subr.mxu0 0.0
        %1149 = vmatpush1.msra.mxu0 0.0
        %1150 = vmatprep.subr.mxu0 0.0
        %1151 = vmatpush1.msra.mxu0 0.0
        %1152 = vmatprep.subr.mxu0 0.0
        %1153 = vmatpush1.msra.mxu0 0.0
        %1154 = vmatprep.subr.mxu0 0.0
        %1155 = vmatpush1.msra.mxu0 0.0
        %1156 = vmatprep.subr.mxu0 0.0
        %1157 = vmatpush1.msra.mxu0 0.0
        %1158 = vmatprep.subr.mxu0 0.0
        %1159 = vmatpush1.msra.mxu0 0.0
        %1160 = vmatprep.subr.mxu0 0.0
        %1161 = vmatpush1.msra.mxu0 0.0
        %1162 = vmatprep.mubr.f32.mxu0 0.0
        %1163 = vmatmul.mubr.f32.gmra.mrb[0].mxu0 %v1096
        %v1164 = vpop.f32.mrb[0].mxu0
        %v1165 = vadd.f32 %v1093, %v1164
        %v1166 = vpop.f32.mrb[0].mxu0
        %v1167 = vadd.f32 %v1093, %v1166
        %1168 = vdwg.mxu0
        %1169 = vrot.lane.b32.xlu0 %v925, 3
        %v1170 = vpop.permute.xlu0 %1169
        %1171 = vrot.lane.b32.xlu0 %v927, 3
        %v1172 = vpop.permute.xlu0 %1171
        %v1173 = vlaneseq
        %v1174 = vand.u32 %v1173, 127
        %vm1175 = vcmp.lt.s32.totalorder %v1174, 3
        %v1176 = vsel %vm1175, %v1170, %v1172
        %v1177 = vsel %vm1175, %v1172, %v1170
        %v1179 = vlaneseq
        %v1180 = vshrl.u32 %v1179, 7
        %v1181 = vsub.s32 0, %v1180
        %v1182 = vrot.slane %v597, %v1181
        %v1183 = vlaneseq
        %v1184 = vshrl.u32 %v1183, 7
        %v1185 = vsub.s32 1, %v1184
        %v1186 = vrot.slane %v597, %v1185
        %v1189 = vmul.f32 %v1182, %v1177
        %v1190 = vmul.f32 %v1186, %v1176
        %1191 = vrot.lane.b32.xlu0 %v925, 2
        %v1192 = vpop.permute.xlu0 %1191
        %1193 = vrot.lane.b32.xlu0 %v927, 2
        %v1194 = vpop.permute.xlu0 %1193
        %vm1195 = vcmp.lt.s32.totalorder %v1174, 2
        %v1196 = vsel %vm1195, %v1192, %v1194
        %v1197 = vsel %vm1195, %v1194, %v1192
        %v1199 = vlaneseq
        %v1200 = vshrl.u32 %v1199, 7
        %v1201 = vsub.s32 0, %v1200
        %v1202 = vrot.slane %v602, %v1201
        %v1203 = vlaneseq
        %v1204 = vshrl.u32 %v1203, 7
        %v1205 = vsub.s32 1, %v1204
        %v1206 = vrot.slane %v602, %v1205
        %v1209 = vmul.f32 %v1202, %v1197
        %v1210 = vmul.f32 %v1206, %v1196
        %1211 = vrot.lane.b32.xlu0 %v925, 1
        %v1212 = vpop.permute.xlu0 %1211
        %1213 = vrot.lane.b32.xlu0 %v927, 1
        %v1214 = vpop.permute.xlu0 %1213
        %vm1215 = vcmp.lt.s32.totalorder %v1174, 1
        %v1216 = vsel %vm1215, %v1212, %v1214
        %v1217 = vsel %vm1215, %v1214, %v1212
        %v1219 = vlaneseq
        %v1220 = vshrl.u32 %v1219, 7
        %v1221 = vsub.s32 0, %v1220
        %v1222 = vrot.slane %v607, %v1221
        %v1223 = vlaneseq
        %v1224 = vshrl.u32 %v1223, 7
        %v1225 = vsub.s32 1, %v1224
        %v1226 = vrot.slane %v607, %v1225
        %v1229 = vmul.f32 %v1222, %v1217
        %v1230 = vmul.f32 %v1226, %v1216
        %v1232 = vlaneseq
        %v1233 = vshrl.u32 %v1232, 7
        %v1234 = vsub.s32 0, %v1233
        %v1235 = vrot.slane %v611, %v1234
        %v1236 = vlaneseq
        %v1237 = vshrl.u32 %v1236, 7
        %v1238 = vsub.s32 1, %v1237
        %v1239 = vrot.slane %v611, %v1238
        %v1242 = vmul.f32 %v1235, %v925
        %v1243 = vmul.f32 %v1239, %v927
        %1244 = vrot.lane.b32.xlu0 %v925, 127
        %v1245 = vpop.permute.xlu0 %1244
        %1246 = vrot.lane.b32.xlu0 %v927, 127
        %v1247 = vpop.permute.xlu0 %1246
        %vm1248 = vcmp.lt.s32.totalorder %v1174, 127
        %v1249 = vsel %vm1248, %v1245, %v1247
        %v1250 = vsel %vm1248, %v1247, %v1245
        %v1252 = vlaneseq
        %v1253 = vshrl.u32 %v1252, 7
        %v1254 = vsub.s32 0, %v1253
        %v1255 = vrot.slane %v616, %v1254
        %v1256 = vlaneseq
        %v1257 = vshrl.u32 %v1256, 7
        %v1258 = vsub.s32 1, %v1257
        %v1259 = vrot.slane %v616, %v1258
        %v1262 = vmul.f32 %v1255, %v1249
        %v1263 = vmul.f32 %v1259, %v1250
        %1264 = vrot.lane.b32.xlu0 %v925, 126
        %v1265 = vpop.permute.xlu0 %1264
        %1266 = vrot.lane.b32.xlu0 %v927, 126
        %v1267 = vpop.permute.xlu0 %1266
        %vm1268 = vcmp.lt.s32.totalorder %v1174, 126
        %v1269 = vsel %vm1268, %v1265, %v1267
        %v1270 = vsel %vm1268, %v1267, %v1265
        %v1272 = vlaneseq
        %v1273 = vshrl.u32 %v1272, 7
        %v1274 = vsub.s32 0, %v1273
        %v1275 = vrot.slane %v621, %v1274
        %v1276 = vlaneseq
        %v1277 = vshrl.u32 %v1276, 7
        %v1278 = vsub.s32 1, %v1277
        %v1279 = vrot.slane %v621, %v1278
        %v1282 = vmul.f32 %v1275, %v1269
        %v1283 = vmul.f32 %v1279, %v1270
        %1284 = vrot.lane.b32.xlu0 %v925, 125
        %v1285 = vpop.permute.xlu0 %1284
        %1286 = vrot.lane.b32.xlu0 %v927, 125
        %v1287 = vpop.permute.xlu0 %1286
        %vm1288 = vcmp.lt.s32.totalorder %v1174, 125
        %v1289 = vsel %vm1288, %v1285, %v1287
        %v1290 = vsel %vm1288, %v1287, %v1285
        %v1292 = vlaneseq
        %v1293 = vshrl.u32 %v1292, 7
        %v1294 = vsub.s32 0, %v1293
        %v1295 = vrot.slane %v626, %v1294
        %v1296 = vlaneseq
        %v1297 = vshrl.u32 %v1296, 7
        %v1298 = vsub.s32 1, %v1297
        %v1299 = vrot.slane %v626, %v1298
        %v1302 = vmul.f32 %v1295, %v1289
        %v1303 = vmul.f32 %v1299, %v1290
        %v1304 = vld [vmem:[%s8] sm:$0x3]
        %1306 = vset.pattern.permute.xlu0 0
        %1307 = vperm.xlu0 %1306, %v1304
        %v1308 = vpop.permute.xlu0 %1307
        %v1310 = vmul.f32 %v1189, %v1308
        %v1311 = vmul.f32 %v1190, %v1308
        %s1312 = scalar_lea.vmem %s8, 2
        %v1313 = vld [vmem:[%s1312] sm:$0x3]
        %1315 = vset.pattern.permute.xlu0 0
        %1316 = vperm.xlu0 %1315, %v1313
        %v1317 = vpop.permute.xlu0 %1316
        %v1319 = vmul.f32 %v1209, %v1317
        %v1320 = vmul.f32 %v1210, %v1317
        %v1321 = vadd.f32 %v1310, %v1319
        %v1322 = vadd.f32 %v1311, %v1320
        %s1323 = scalar_lea.vmem %s8, 4
        %v1324 = vld [vmem:[%s1323] sm:$0x3]
        %1326 = vset.pattern.permute.xlu0 0
        %1327 = vperm.xlu0 %1326, %v1324
        %v1328 = vpop.permute.xlu0 %1327
        %v1330 = vmul.f32 %v1229, %v1328
        %v1331 = vmul.f32 %v1230, %v1328
        %v1332 = vadd.f32 %v1321, %v1330
        %v1333 = vadd.f32 %v1322, %v1331
        %s1334 = scalar_lea.vmem %s8, 6
        %v1335 = vld [vmem:[%s1334] sm:$0x3]
        %1337 = vset.pattern.permute.xlu0 0
        %1338 = vperm.xlu0 %1337, %v1335
        %v1339 = vpop.permute.xlu0 %1338
        %v1341 = vmul.f32 %v1242, %v1339
        %v1342 = vmul.f32 %v1243, %v1339
        %v1343 = vadd.f32 %v1332, %v1341
        %v1344 = vadd.f32 %v1333, %v1342
        %s1345 = scalar_lea.vmem %s8, 8
        %v1346 = vld [vmem:[%s1345] sm:$0x3]
        %1348 = vset.pattern.permute.xlu0 0
        %1349 = vperm.xlu0 %1348, %v1346
        %v1350 = vpop.permute.xlu0 %1349
        %v1352 = vmul.f32 %v1262, %v1350
        %v1353 = vmul.f32 %v1263, %v1350
        %v1354 = vadd.f32 %v1343, %v1352
        %v1355 = vadd.f32 %v1344, %v1353
        %s1356 = scalar_lea.vmem %s8, 10
        %v1357 = vld [vmem:[%s1356] sm:$0x3]
        %1359 = vset.pattern.permute.xlu0 0
        %1360 = vperm.xlu0 %1359, %v1357
        %v1361 = vpop.permute.xlu0 %1360
        %v1363 = vmul.f32 %v1282, %v1361
        %v1364 = vmul.f32 %v1283, %v1361
        %v1365 = vadd.f32 %v1354, %v1363
        %v1366 = vadd.f32 %v1355, %v1364
        %s1367 = scalar_lea.vmem %s8, 12
        %v1368 = vld [vmem:[%s1367] sm:$0x3]
        %1370 = vset.pattern.permute.xlu0 0
        %1371 = vperm.xlu0 %1370, %v1368
        %v1372 = vpop.permute.xlu0 %1371
        %v1374 = vmul.f32 %v1302, %v1372
        %v1375 = vmul.f32 %v1303, %v1372
        %v1376 = vadd.f32 %v1365, %v1374
        %v1377 = vadd.f32 %v1366, %v1375
        %1378 = vrot.lane.b32.xlu0 %v1376, 48
        %v1379 = vpop.permute.xlu0 %1378
        %1380 = vrot.lane.b32.xlu0 %v1377, 48
        %v1381 = vpop.permute.xlu0 %1380
        %vm1382 = vcmp.lt.s32.totalorder %v1174, 48
        %v1383 = vsel %vm1382, %v1379, %v1381
        %v1384 = vsel %vm1382, %v1381, %v1379
        %v1386 = vlaneseq
        %v1387 = vshrl.u32 %v1386, 7
        %v1388 = vsub.s32 0, %v1387
        %v1389 = vrot.slane %v631, %v1388
        %v1390 = vlaneseq
        %v1391 = vshrl.u32 %v1390, 7
        %v1392 = vsub.s32 1, %v1391
        %v1393 = vrot.slane %v631, %v1392
        %v1396 = vmul.f32 %v1389, %v1384
        %v1397 = vmul.f32 %v1393, %v1383
        %s1398 = scalar_lea.vmem %s8, 14
        %v1399 = vld [vmem:[%s1398] sm:$0x3]
        %1401 = vset.pattern.permute.xlu0 0
        %1402 = vperm.xlu0 %1401, %v1399
        %v1403 = vpop.permute.xlu0 %1402
        %v1405 = vmul.f32 %v1189, %v1403
        %v1406 = vmul.f32 %v1190, %v1403
        %s1407 = scalar_lea.vmem %s8, 16
        %v1408 = vld [vmem:[%s1407] sm:$0x3]
        %1410 = vset.pattern.permute.xlu0 0
        %1411 = vperm.xlu0 %1410, %v1408
        %v1412 = vpop.permute.xlu0 %1411
        %v1414 = vmul.f32 %v1209, %v1412
        %v1415 = vmul.f32 %v1210, %v1412
        %v1416 = vadd.f32 %v1405, %v1414
        %v1417 = vadd.f32 %v1406, %v1415
        %s1418 = scalar_lea.vmem %s8, 18
        %v1419 = vld [vmem:[%s1418] sm:$0x3]
        %1421 = vset.pattern.permute.xlu0 0
        %1422 = vperm.xlu0 %1421, %v1419
        %v1423 = vpop.permute.xlu0 %1422
        %v1425 = vmul.f32 %v1229, %v1423
        %v1426 = vmul.f32 %v1230, %v1423
        %v1427 = vadd.f32 %v1416, %v1425
        %v1428 = vadd.f32 %v1417, %v1426
        %s1429 = scalar_lea.vmem %s8, 20
        %v1430 = vld [vmem:[%s1429] sm:$0x3]
        %1432 = vset.pattern.permute.xlu0 0
        %1433 = vperm.xlu0 %1432, %v1430
        %v1434 = vpop.permute.xlu0 %1433
        %v1436 = vmul.f32 %v1242, %v1434
        %v1437 = vmul.f32 %v1243, %v1434
        %v1438 = vadd.f32 %v1427, %v1436
        %v1439 = vadd.f32 %v1428, %v1437
        %s1440 = scalar_lea.vmem %s8, 22
        %v1441 = vld [vmem:[%s1440] sm:$0x3]
        %1443 = vset.pattern.permute.xlu0 0
        %1444 = vperm.xlu0 %1443, %v1441
        %v1445 = vpop.permute.xlu0 %1444
        %v1447 = vmul.f32 %v1262, %v1445
        %v1448 = vmul.f32 %v1263, %v1445
        %v1449 = vadd.f32 %v1438, %v1447
        %v1450 = vadd.f32 %v1439, %v1448
        %s1451 = scalar_lea.vmem %s8, 24
        %v1452 = vld [vmem:[%s1451] sm:$0x3]
        %1454 = vset.pattern.permute.xlu0 0
        %1455 = vperm.xlu0 %1454, %v1452
        %v1456 = vpop.permute.xlu0 %1455
        %v1458 = vmul.f32 %v1282, %v1456
        %v1459 = vmul.f32 %v1283, %v1456
        %v1460 = vadd.f32 %v1449, %v1458
        %v1461 = vadd.f32 %v1450, %v1459
        %s1462 = scalar_lea.vmem %s8, 26
        %v1463 = vld [vmem:[%s1462] sm:$0x3]
        %1465 = vset.pattern.permute.xlu0 0
        %1466 = vperm.xlu0 %1465, %v1463
        %v1467 = vpop.permute.xlu0 %1466
        %v1469 = vmul.f32 %v1302, %v1467
        %v1470 = vmul.f32 %v1303, %v1467
        %v1471 = vadd.f32 %v1460, %v1469
        %v1472 = vadd.f32 %v1461, %v1470
        %1473 = vrot.lane.b32.xlu0 %v1471, 32
        %v1474 = vpop.permute.xlu0 %1473
        %1475 = vrot.lane.b32.xlu0 %v1472, 32
        %v1476 = vpop.permute.xlu0 %1475
        %vm1477 = vcmp.lt.s32.totalorder %v1174, 32
        %v1478 = vsel %vm1477, %v1474, %v1476
        %v1479 = vsel %vm1477, %v1476, %v1474
        %v1481 = vlaneseq
        %v1482 = vshrl.u32 %v1481, 7
        %v1483 = vsub.s32 0, %v1482
        %v1484 = vrot.slane %v636, %v1483
        %v1485 = vlaneseq
        %v1486 = vshrl.u32 %v1485, 7
        %v1487 = vsub.s32 1, %v1486
        %v1488 = vrot.slane %v636, %v1487
        %v1491 = vmul.f32 %v1484, %v1479
        %v1492 = vmul.f32 %v1488, %v1478
        %v1493 = vadd.f32 %v1396, %v1491
        %v1494 = vadd.f32 %v1397, %v1492
        %s1495 = scalar_lea.vmem %s8, 28
        %v1496 = vld [vmem:[%s1495] sm:$0x3]
        %1498 = vset.pattern.permute.xlu0 0
        %1499 = vperm.xlu0 %1498, %v1496
        %v1500 = vpop.permute.xlu0 %1499
        %v1502 = vmul.f32 %v1189, %v1500
        %v1503 = vmul.f32 %v1190, %v1500
        %s1504 = scalar_lea.vmem %s8, 30
        %v1505 = vld [vmem:[%s1504] sm:$0x3]
        %1507 = vset.pattern.permute.xlu0 0
        %1508 = vperm.xlu0 %1507, %v1505
        %v1509 = vpop.permute.xlu0 %1508
        %v1511 = vmul.f32 %v1209, %v1509
        %v1512 = vmul.f32 %v1210, %v1509
        %v1513 = vadd.f32 %v1502, %v1511
        %v1514 = vadd.f32 %v1503, %v1512
        %s1515 = scalar_lea.vmem %s8, 32
        %v1516 = vld [vmem:[%s1515] sm:$0x3]
        %1518 = vset.pattern.permute.xlu0 0
        %1519 = vperm.xlu0 %1518, %v1516
        %v1520 = vpop.permute.xlu0 %1519
        %v1522 = vmul.f32 %v1229, %v1520
        %v1523 = vmul.f32 %v1230, %v1520
        %v1524 = vadd.f32 %v1513, %v1522
        %v1525 = vadd.f32 %v1514, %v1523
        %s1526 = scalar_lea.vmem %s8, 34
        %v1527 = vld [vmem:[%s1526] sm:$0x3]
        %1529 = vset.pattern.permute.xlu0 0
        %1530 = vperm.xlu0 %1529, %v1527
        %v1531 = vpop.permute.xlu0 %1530
        %v1533 = vmul.f32 %v1242, %v1531
        %v1534 = vmul.f32 %v1243, %v1531
        %v1535 = vadd.f32 %v1524, %v1533
        %v1536 = vadd.f32 %v1525, %v1534
        %s1537 = scalar_lea.vmem %s8, 36
        %v1538 = vld [vmem:[%s1537] sm:$0x3]
        %1540 = vset.pattern.permute.xlu0 0
        %1541 = vperm.xlu0 %1540, %v1538
        %v1542 = vpop.permute.xlu0 %1541
        %v1544 = vmul.f32 %v1262, %v1542
        %v1545 = vmul.f32 %v1263, %v1542
        %v1546 = vadd.f32 %v1535, %v1544
        %v1547 = vadd.f32 %v1536, %v1545
        %s1548 = scalar_lea.vmem %s8, 38
        %v1549 = vld [vmem:[%s1548] sm:$0x3]
        %1551 = vset.pattern.permute.xlu0 0
        %1552 = vperm.xlu0 %1551, %v1549
        %v1553 = vpop.permute.xlu0 %1552
        %v1555 = vmul.f32 %v1282, %v1553
        %v1556 = vmul.f32 %v1283, %v1553
        %v1557 = vadd.f32 %v1546, %v1555
        %v1558 = vadd.f32 %v1547, %v1556
        %s1559 = scalar_lea.vmem %s8, 40
        %v1560 = vld [vmem:[%s1559] sm:$0x3]
        %1562 = vset.pattern.permute.xlu0 0
        %1563 = vperm.xlu0 %1562, %v1560
        %v1564 = vpop.permute.xlu0 %1563
        %v1566 = vmul.f32 %v1302, %v1564
        %v1567 = vmul.f32 %v1303, %v1564
        %v1568 = vadd.f32 %v1557, %v1566
        %v1569 = vadd.f32 %v1558, %v1567
        %1570 = vrot.lane.b32.xlu0 %v1568, 16
        %v1571 = vpop.permute.xlu0 %1570
        %1572 = vrot.lane.b32.xlu0 %v1569, 16
        %v1573 = vpop.permute.xlu0 %1572
        %vm1574 = vcmp.lt.s32.totalorder %v1174, 16
        %v1575 = vsel %vm1574, %v1571, %v1573
        %v1576 = vsel %vm1574, %v1573, %v1571
        %v1578 = vlaneseq
        %v1579 = vshrl.u32 %v1578, 7
        %v1580 = vsub.s32 0, %v1579
        %v1581 = vrot.slane %v641, %v1580
        %v1582 = vlaneseq
        %v1583 = vshrl.u32 %v1582, 7
        %v1584 = vsub.s32 1, %v1583
        %v1585 = vrot.slane %v641, %v1584
        %v1588 = vmul.f32 %v1581, %v1576
        %v1589 = vmul.f32 %v1585, %v1575
        %v1590 = vadd.f32 %v1493, %v1588
        %v1591 = vadd.f32 %v1494, %v1589
        %s1592 = scalar_lea.vmem %s8, 42
        %v1593 = vld [vmem:[%s1592] sm:$0x3]
        %1595 = vset.pattern.permute.xlu0 0
        %1596 = vperm.xlu0 %1595, %v1593
        %v1597 = vpop.permute.xlu0 %1596
        %v1599 = vmul.f32 %v1189, %v1597
        %v1600 = vmul.f32 %v1190, %v1597
        %s1601 = scalar_lea.vmem %s8, 44
        %v1602 = vld [vmem:[%s1601] sm:$0x3]
        %1604 = vset.pattern.permute.xlu0 0
        %1605 = vperm.xlu0 %1604, %v1602
        %v1606 = vpop.permute.xlu0 %1605
        %v1608 = vmul.f32 %v1209, %v1606
        %v1609 = vmul.f32 %v1210, %v1606
        %v1610 = vadd.f32 %v1599, %v1608
        %v1611 = vadd.f32 %v1600, %v1609
        %s1612 = scalar_lea.vmem %s8, 46
        %v1613 = vld [vmem:[%s1612] sm:$0x3]
        %1615 = vset.pattern.permute.xlu0 0
        %1616 = vperm.xlu0 %1615, %v1613
        %v1617 = vpop.permute.xlu0 %1616
        %v1619 = vmul.f32 %v1229, %v1617
        %v1620 = vmul.f32 %v1230, %v1617
        %v1621 = vadd.f32 %v1610, %v1619
        %v1622 = vadd.f32 %v1611, %v1620
        %s1623 = scalar_lea.vmem %s8, 48
        %v1624 = vld [vmem:[%s1623] sm:$0x3]
        %1626 = vset.pattern.permute.xlu0 0
        %1627 = vperm.xlu0 %1626, %v1624
        %v1628 = vpop.permute.xlu0 %1627
        %v1630 = vmul.f32 %v1242, %v1628
        %v1631 = vmul.f32 %v1243, %v1628
        %v1632 = vadd.f32 %v1621, %v1630
        %v1633 = vadd.f32 %v1622, %v1631
        %s1634 = scalar_lea.vmem %s8, 50
        %v1635 = vld [vmem:[%s1634] sm:$0x3]
        %1637 = vset.pattern.permute.xlu0 0
        %1638 = vperm.xlu0 %1637, %v1635
        %v1639 = vpop.permute.xlu0 %1638
        %v1641 = vmul.f32 %v1262, %v1639
        %v1642 = vmul.f32 %v1263, %v1639
        %v1643 = vadd.f32 %v1632, %v1641
        %v1644 = vadd.f32 %v1633, %v1642
        %s1645 = scalar_lea.vmem %s8, 52
        %v1646 = vld [vmem:[%s1645] sm:$0x3]
        %1648 = vset.pattern.permute.xlu0 0
        %1649 = vperm.xlu0 %1648, %v1646
        %v1650 = vpop.permute.xlu0 %1649
        %v1652 = vmul.f32 %v1282, %v1650
        %v1653 = vmul.f32 %v1283, %v1650
        %v1654 = vadd.f32 %v1643, %v1652
        %v1655 = vadd.f32 %v1644, %v1653
        %s1656 = scalar_lea.vmem %s8, 54
        %v1657 = vld [vmem:[%s1656] sm:$0x3]
        %1659 = vset.pattern.permute.xlu0 0
        %1660 = vperm.xlu0 %1659, %v1657
        %v1661 = vpop.permute.xlu0 %1660
        %v1663 = vmul.f32 %v1302, %v1661
        %v1664 = vmul.f32 %v1303, %v1661
        %v1665 = vadd.f32 %v1654, %v1663
        %v1666 = vadd.f32 %v1655, %v1664
        %v1668 = vlaneseq
        %v1669 = vshrl.u32 %v1668, 7
        %v1670 = vsub.s32 0, %v1669
        %v1671 = vrot.slane %v645, %v1670
        %v1672 = vlaneseq
        %v1673 = vshrl.u32 %v1672, 7
        %v1674 = vsub.s32 1, %v1673
        %v1675 = vrot.slane %v645, %v1674
        %v1678 = vmul.f32 %v1671, %v1665
        %v1679 = vmul.f32 %v1675, %v1666
        %v1680 = vadd.f32 %v1590, %v1678
        %v1681 = vadd.f32 %v1591, %v1679
        %s1682 = scalar_lea.vmem %s8, 56
        %v1683 = vld [vmem:[%s1682] sm:$0x3]
        %1685 = vset.pattern.permute.xlu0 0
        %1686 = vperm.xlu0 %1685, %v1683
        %v1687 = vpop.permute.xlu0 %1686
        %v1689 = vmul.f32 %v1189, %v1687
        %v1690 = vmul.f32 %v1190, %v1687
        %s1691 = scalar_lea.vmem %s8, 58
        %v1692 = vld [vmem:[%s1691] sm:$0x3]
        %1694 = vset.pattern.permute.xlu0 0
        %1695 = vperm.xlu0 %1694, %v1692
        %v1696 = vpop.permute.xlu0 %1695
        %v1698 = vmul.f32 %v1209, %v1696
        %v1699 = vmul.f32 %v1210, %v1696
        %v1700 = vadd.f32 %v1689, %v1698
        %v1701 = vadd.f32 %v1690, %v1699
        %s1702 = scalar_lea.vmem %s8, 60
        %v1703 = vld [vmem:[%s1702] sm:$0x3]
        %1705 = vset.pattern.permute.xlu0 0
        %1706 = vperm.xlu0 %1705, %v1703
        %v1707 = vpop.permute.xlu0 %1706
        %v1709 = vmul.f32 %v1229, %v1707
        %v1710 = vmul.f32 %v1230, %v1707
        %v1711 = vadd.f32 %v1700, %v1709
        %v1712 = vadd.f32 %v1701, %v1710
        %s1713 = scalar_lea.vmem %s8, 62
        %v1714 = vld [vmem:[%s1713] sm:$0x3]
        %1716 = vset.pattern.permute.xlu0 0
        %1717 = vperm.xlu0 %1716, %v1714
        %v1718 = vpop.permute.xlu0 %1717
        %v1720 = vmul.f32 %v1242, %v1718
        %v1721 = vmul.f32 %v1243, %v1718
        %v1722 = vadd.f32 %v1711, %v1720
        %v1723 = vadd.f32 %v1712, %v1721
        %s1724 = scalar_lea.vmem %s8, 64
        %v1725 = vld [vmem:[%s1724] sm:$0x3]
        %1727 = vset.pattern.permute.xlu0 0
        %1728 = vperm.xlu0 %1727, %v1725
        %v1729 = vpop.permute.xlu0 %1728
        %v1731 = vmul.f32 %v1262, %v1729
        %v1732 = vmul.f32 %v1263, %v1729
        %v1733 = vadd.f32 %v1722, %v1731
        %v1734 = vadd.f32 %v1723, %v1732
        %s1735 = scalar_lea.vmem %s8, 66
        %v1736 = vld [vmem:[%s1735] sm:$0x3]
        %1738 = vset.pattern.permute.xlu0 0
        %1739 = vperm.xlu0 %1738, %v1736
        %v1740 = vpop.permute.xlu0 %1739
        %v1742 = vmul.f32 %v1282, %v1740
        %v1743 = vmul.f32 %v1283, %v1740
        %v1744 = vadd.f32 %v1733, %v1742
        %v1745 = vadd.f32 %v1734, %v1743
        %s1746 = scalar_lea.vmem %s8, 68
        %v1747 = vld [vmem:[%s1746] sm:$0x3]
        %1749 = vset.pattern.permute.xlu0 0
        %1750 = vperm.xlu0 %1749, %v1747
        %v1751 = vpop.permute.xlu0 %1750
        %v1753 = vmul.f32 %v1302, %v1751
        %v1754 = vmul.f32 %v1303, %v1751
        %v1755 = vadd.f32 %v1744, %v1753
        %v1756 = vadd.f32 %v1745, %v1754
        %1757 = vrot.lane.b32.xlu0 %v1755, 112
        %v1758 = vpop.permute.xlu0 %1757
        %1759 = vrot.lane.b32.xlu0 %v1756, 112
        %v1760 = vpop.permute.xlu0 %1759
        %vm1761 = vcmp.lt.s32.totalorder %v1174, 112
        %v1762 = vsel %vm1761, %v1758, %v1760
        %v1763 = vsel %vm1761, %v1760, %v1758
        %v1765 = vlaneseq
        %v1766 = vshrl.u32 %v1765, 7
        %v1767 = vsub.s32 0, %v1766
        %v1768 = vrot.slane %v650, %v1767
        %v1769 = vlaneseq
        %v1770 = vshrl.u32 %v1769, 7
        %v1771 = vsub.s32 1, %v1770
        %v1772 = vrot.slane %v650, %v1771
        %v1775 = vmul.f32 %v1768, %v1762
        %v1776 = vmul.f32 %v1772, %v1763
        %v1777 = vadd.f32 %v1680, %v1775
        %v1778 = vadd.f32 %v1681, %v1776
        %s1779 = scalar_lea.vmem %s8, 70
        %v1780 = vld [vmem:[%s1779] sm:$0x3]
        %1782 = vset.pattern.permute.xlu0 0
        %1783 = vperm.xlu0 %1782, %v1780
        %v1784 = vpop.permute.xlu0 %1783
        %v1786 = vmul.f32 %v1189, %v1784
        %v1787 = vmul.f32 %v1190, %v1784
        %s1788 = scalar_lea.vmem %s8, 72
        %v1789 = vld [vmem:[%s1788] sm:$0x3]
        %1791 = vset.pattern.permute.xlu0 0
        %1792 = vperm.xlu0 %1791, %v1789
        %v1793 = vpop.permute.xlu0 %1792
        %v1795 = vmul.f32 %v1209, %v1793
        %v1796 = vmul.f32 %v1210, %v1793
        %v1797 = vadd.f32 %v1786, %v1795
        %v1798 = vadd.f32 %v1787, %v1796
        %s1799 = scalar_lea.vmem %s8, 74
        %v1800 = vld [vmem:[%s1799] sm:$0x3]
        %1802 = vset.pattern.permute.xlu0 0
        %1803 = vperm.xlu0 %1802, %v1800
        %v1804 = vpop.permute.xlu0 %1803
        %v1806 = vmul.f32 %v1229, %v1804
        %v1807 = vmul.f32 %v1230, %v1804
        %v1808 = vadd.f32 %v1797, %v1806
        %v1809 = vadd.f32 %v1798, %v1807
        %s1810 = scalar_lea.vmem %s8, 76
        %v1811 = vld [vmem:[%s1810] sm:$0x3]
        %1813 = vset.pattern.permute.xlu0 0
        %1814 = vperm.xlu0 %1813, %v1811
        %v1815 = vpop.permute.xlu0 %1814
        %v1817 = vmul.f32 %v1242, %v1815
        %v1818 = vmul.f32 %v1243, %v1815
        %v1819 = vadd.f32 %v1808, %v1817
        %v1820 = vadd.f32 %v1809, %v1818
        %s1821 = scalar_lea.vmem %s8, 78
        %v1822 = vld [vmem:[%s1821] sm:$0x3]
        %1824 = vset.pattern.permute.xlu0 0
        %1825 = vperm.xlu0 %1824, %v1822
        %v1826 = vpop.permute.xlu0 %1825
        %v1828 = vmul.f32 %v1262, %v1826
        %v1829 = vmul.f32 %v1263, %v1826
        %v1830 = vadd.f32 %v1819, %v1828
        %v1831 = vadd.f32 %v1820, %v1829
        %s1832 = scalar_lea.vmem %s8, 80
        %v1833 = vld [vmem:[%s1832] sm:$0x3]
        %1835 = vset.pattern.permute.xlu0 0
        %1836 = vperm.xlu0 %1835, %v1833
        %v1837 = vpop.permute.xlu0 %1836
        %v1839 = vmul.f32 %v1282, %v1837
        %v1840 = vmul.f32 %v1283, %v1837
        %v1841 = vadd.f32 %v1830, %v1839
        %v1842 = vadd.f32 %v1831, %v1840
        %s1843 = scalar_lea.vmem %s8, 82
        %v1844 = vld [vmem:[%s1843] sm:$0x3]
        %1846 = vset.pattern.permute.xlu0 0
        %1847 = vperm.xlu0 %1846, %v1844
        %v1848 = vpop.permute.xlu0 %1847
        %v1850 = vmul.f32 %v1302, %v1848
        %v1851 = vmul.f32 %v1303, %v1848
        %v1852 = vadd.f32 %v1841, %v1850
        %v1853 = vadd.f32 %v1842, %v1851
        %1854 = vrot.lane.b32.xlu0 %v1852, 96
        %v1855 = vpop.permute.xlu0 %1854
        %1856 = vrot.lane.b32.xlu0 %v1853, 96
        %v1857 = vpop.permute.xlu0 %1856
        %vm1858 = vcmp.lt.s32.totalorder %v1174, 96
        %v1859 = vsel %vm1858, %v1855, %v1857
        %v1860 = vsel %vm1858, %v1857, %v1855
        %v1862 = vlaneseq
        %v1863 = vshrl.u32 %v1862, 7
        %v1864 = vsub.s32 0, %v1863
        %v1865 = vrot.slane %v655, %v1864
        %v1866 = vlaneseq
        %v1867 = vshrl.u32 %v1866, 7
        %v1868 = vsub.s32 1, %v1867
        %v1869 = vrot.slane %v655, %v1868
        %v1872 = vmul.f32 %v1865, %v1859
        %v1873 = vmul.f32 %v1869, %v1860
        %v1874 = vadd.f32 %v1777, %v1872
        %v1875 = vadd.f32 %v1778, %v1873
        %s1876 = scalar_lea.vmem %s8, 84
        %v1877 = vld [vmem:[%s1876] sm:$0x3]
        %1879 = vset.pattern.permute.xlu0 0
        %1880 = vperm.xlu0 %1879, %v1877
        %v1881 = vpop.permute.xlu0 %1880
        %v1883 = vmul.f32 %v1189, %v1881
        %v1884 = vmul.f32 %v1190, %v1881
        %s1885 = scalar_lea.vmem %s8, 86
        %v1886 = vld [vmem:[%s1885] sm:$0x3]
        %1888 = vset.pattern.permute.xlu0 0
        %1889 = vperm.xlu0 %1888, %v1886
        %v1890 = vpop.permute.xlu0 %1889
        %v1892 = vmul.f32 %v1209, %v1890
        %v1893 = vmul.f32 %v1210, %v1890
        %v1894 = vadd.f32 %v1883, %v1892
        %v1895 = vadd.f32 %v1884, %v1893
        %s1896 = scalar_lea.vmem %s8, 88
        %v1897 = vld [vmem:[%s1896] sm:$0x3]
        %1899 = vset.pattern.permute.xlu0 0
        %1900 = vperm.xlu0 %1899, %v1897
        %v1901 = vpop.permute.xlu0 %1900
        %v1903 = vmul.f32 %v1229, %v1901
        %v1904 = vmul.f32 %v1230, %v1901
        %v1905 = vadd.f32 %v1894, %v1903
        %v1906 = vadd.f32 %v1895, %v1904
        %s1907 = scalar_lea.vmem %s8, 90
        %v1908 = vld [vmem:[%s1907] sm:$0x3]
        %1910 = vset.pattern.permute.xlu0 0
        %1911 = vperm.xlu0 %1910, %v1908
        %v1912 = vpop.permute.xlu0 %1911
        %v1914 = vmul.f32 %v1242, %v1912
        %v1915 = vmul.f32 %v1243, %v1912
        %v1916 = vadd.f32 %v1905, %v1914
        %v1917 = vadd.f32 %v1906, %v1915
        %s1918 = scalar_lea.vmem %s8, 92
        %v1919 = vld [vmem:[%s1918] sm:$0x3]
        %1921 = vset.pattern.permute.xlu0 0
        %1922 = vperm.xlu0 %1921, %v1919
        %v1923 = vpop.permute.xlu0 %1922
        %v1925 = vmul.f32 %v1262, %v1923
        %v1926 = vmul.f32 %v1263, %v1923
        %v1927 = vadd.f32 %v1916, %v1925
        %v1928 = vadd.f32 %v1917, %v1926
        %s1929 = scalar_lea.vmem %s8, 94
        %v1930 = vld [vmem:[%s1929] sm:$0x3]
        %1932 = vset.pattern.permute.xlu0 0
        %1933 = vperm.xlu0 %1932, %v1930
        %v1934 = vpop.permute.xlu0 %1933
        %v1936 = vmul.f32 %v1282, %v1934
        %v1937 = vmul.f32 %v1283, %v1934
        %v1938 = vadd.f32 %v1927, %v1936
        %v1939 = vadd.f32 %v1928, %v1937
        %s1940 = scalar_lea.vmem %s8, 96
        %v1941 = vld [vmem:[%s1940] sm:$0x3]
        %1943 = vset.pattern.permute.xlu0 0
        %1944 = vperm.xlu0 %1943, %v1941
        %v1945 = vpop.permute.xlu0 %1944
        %v1947 = vmul.f32 %v1302, %v1945
        %v1948 = vmul.f32 %v1303, %v1945
        %v1949 = vadd.f32 %v1938, %v1947
        %v1950 = vadd.f32 %v1939, %v1948
        %1951 = vrot.lane.b32.xlu0 %v1949, 80
        %v1952 = vpop.permute.xlu0 %1951
        %1953 = vrot.lane.b32.xlu0 %v1950, 80
        %v1954 = vpop.permute.xlu0 %1953
        %vm1955 = vcmp.lt.s32.totalorder %v1174, 80
        %v1956 = vsel %vm1955, %v1952, %v1954
        %v1957 = vsel %vm1955, %v1954, %v1952
        %v1959 = vlaneseq
        %v1960 = vshrl.u32 %v1959, 7
        %v1961 = vsub.s32 0, %v1960
        %v1962 = vrot.slane %v660, %v1961
        %v1963 = vlaneseq
        %v1964 = vshrl.u32 %v1963, 7
        %v1965 = vsub.s32 1, %v1964
        %v1966 = vrot.slane %v660, %v1965
        %v1969 = vmul.f32 %v1962, %v1956
        %v1970 = vmul.f32 %v1966, %v1957
        %v1971 = vadd.f32 %v1874, %v1969
        %v1972 = vadd.f32 %v1875, %v1970
        %1974 = vset.pattern.permute.xlu0 0
        %1975 = vperm.xlu0 %1974, %v583
        %v1976 = vpop.permute.xlu0 %1975
        %v1978 = vadd.f32 %v1971, %v1976
        %v1979 = vadd.f32 %v1972, %v1976
        %v1980 = vld [vmem:[%s11] sm:$0x3]
        %1982 = vset.pattern.permute.xlu0 0
        %1983 = vperm.xlu0 %1982, %v1980
        %v1984 = vpop.permute.xlu0 %1983
        %v1986 = vmul.f32 %v1189, %v1984
        %v1987 = vmul.f32 %v1190, %v1984
        %s1988 = scalar_lea.vmem %s11, 2
        %v1989 = vld [vmem:[%s1988] sm:$0x3]
        %1991 = vset.pattern.permute.xlu0 0
        %1992 = vperm.xlu0 %1991, %v1989
        %v1993 = vpop.permute.xlu0 %1992
        %v1995 = vmul.f32 %v1209, %v1993
        %v1996 = vmul.f32 %v1210, %v1993
        %v1997 = vadd.f32 %v1986, %v1995
        %v1998 = vadd.f32 %v1987, %v1996
        %s1999 = scalar_lea.vmem %s11, 4
        %v2000 = vld [vmem:[%s1999] sm:$0x3]
        %2002 = vset.pattern.permute.xlu0 0
        %2003 = vperm.xlu0 %2002, %v2000
        %v2004 = vpop.permute.xlu0 %2003
        %v2006 = vmul.f32 %v1229, %v2004
        %v2007 = vmul.f32 %v1230, %v2004
        %v2008 = vadd.f32 %v1997, %v2006
        %v2009 = vadd.f32 %v1998, %v2007
        %s2010 = scalar_lea.vmem %s11, 6
        %v2011 = vld [vmem:[%s2010] sm:$0x3]
        %2013 = vset.pattern.permute.xlu0 0
        %2014 = vperm.xlu0 %2013, %v2011
        %v2015 = vpop.permute.xlu0 %2014
        %v2017 = vmul.f32 %v1242, %v2015
        %v2018 = vmul.f32 %v1243, %v2015
        %v2019 = vadd.f32 %v2008, %v2017
        %v2020 = vadd.f32 %v2009, %v2018
        %s2021 = scalar_lea.vmem %s11, 8
        %v2022 = vld [vmem:[%s2021] sm:$0x3]
        %2024 = vset.pattern.permute.xlu0 0
        %2025 = vperm.xlu0 %2024, %v2022
        %v2026 = vpop.permute.xlu0 %2025
        %v2028 = vmul.f32 %v1262, %v2026
        %v2029 = vmul.f32 %v1263, %v2026
        %v2030 = vadd.f32 %v2019, %v2028
        %v2031 = vadd.f32 %v2020, %v2029
        %s2032 = scalar_lea.vmem %s11, 10
        %v2033 = vld [vmem:[%s2032] sm:$0x3]
        %2035 = vset.pattern.permute.xlu0 0
        %2036 = vperm.xlu0 %2035, %v2033
        %v2037 = vpop.permute.xlu0 %2036
        %v2039 = vmul.f32 %v1282, %v2037
        %v2040 = vmul.f32 %v1283, %v2037
        %v2041 = vadd.f32 %v2030, %v2039
        %v2042 = vadd.f32 %v2031, %v2040
        %s2043 = scalar_lea.vmem %s11, 12
        %v2044 = vld [vmem:[%s2043] sm:$0x3]
        %2046 = vset.pattern.permute.xlu0 0
        %2047 = vperm.xlu0 %2046, %v2044
        %v2048 = vpop.permute.xlu0 %2047
        %v2050 = vmul.f32 %v1302, %v2048
        %v2051 = vmul.f32 %v1303, %v2048
        %v2052 = vadd.f32 %v2041, %v2050
        %v2053 = vadd.f32 %v2042, %v2051
        %2054 = vrot.lane.b32.xlu0 %v2052, 48
        %v2055 = vpop.permute.xlu0 %2054
        %2056 = vrot.lane.b32.xlu0 %v2053, 48
        %v2057 = vpop.permute.xlu0 %2056
        %v2058 = vsel %vm1382, %v2055, %v2057
        %v2059 = vsel %vm1382, %v2057, %v2055
        %v2060 = vmul.f32 %v1389, %v2059
        %v2061 = vmul.f32 %v1393, %v2058
        %s2062 = scalar_lea.vmem %s11, 14
        %v2063 = vld [vmem:[%s2062] sm:$0x3]
        %2065 = vset.pattern.permute.xlu0 0
        %2066 = vperm.xlu0 %2065, %v2063
        %v2067 = vpop.permute.xlu0 %2066
        %v2069 = vmul.f32 %v1189, %v2067
        %v2070 = vmul.f32 %v1190, %v2067
        %s2071 = scalar_lea.vmem %s11, 16
        %v2072 = vld [vmem:[%s2071] sm:$0x3]
        %2074 = vset.pattern.permute.xlu0 0
        %2075 = vperm.xlu0 %2074, %v2072
        %v2076 = vpop.permute.xlu0 %2075
        %v2078 = vmul.f32 %v1209, %v2076
        %v2079 = vmul.f32 %v1210, %v2076
        %v2080 = vadd.f32 %v2069, %v2078
        %v2081 = vadd.f32 %v2070, %v2079
        %s2082 = scalar_lea.vmem %s11, 18
        %v2083 = vld [vmem:[%s2082] sm:$0x3]
        %2085 = vset.pattern.permute.xlu0 0
        %2086 = vperm.xlu0 %2085, %v2083
        %v2087 = vpop.permute.xlu0 %2086
        %v2089 = vmul.f32 %v1229, %v2087
        %v2090 = vmul.f32 %v1230, %v2087
        %v2091 = vadd.f32 %v2080, %v2089
        %v2092 = vadd.f32 %v2081, %v2090
        %s2093 = scalar_lea.vmem %s11, 20
        %v2094 = vld [vmem:[%s2093] sm:$0x3]
        %2096 = vset.pattern.permute.xlu0 0
        %2097 = vperm.xlu0 %2096, %v2094
        %v2098 = vpop.permute.xlu0 %2097
        %v2100 = vmul.f32 %v1242, %v2098
        %v2101 = vmul.f32 %v1243, %v2098
        %v2102 = vadd.f32 %v2091, %v2100
        %v2103 = vadd.f32 %v2092, %v2101
        %s2104 = scalar_lea.vmem %s11, 22
        %v2105 = vld [vmem:[%s2104] sm:$0x3]
        %2107 = vset.pattern.permute.xlu0 0
        %2108 = vperm.xlu0 %2107, %v2105
        %v2109 = vpop.permute.xlu0 %2108
        %v2111 = vmul.f32 %v1262, %v2109
        %v2112 = vmul.f32 %v1263, %v2109
        %v2113 = vadd.f32 %v2102, %v2111
        %v2114 = vadd.f32 %v2103, %v2112
        %s2115 = scalar_lea.vmem %s11, 24
        %v2116 = vld [vmem:[%s2115] sm:$0x3]
        %2118 = vset.pattern.permute.xlu0 0
        %2119 = vperm.xlu0 %2118, %v2116
        %v2120 = vpop.permute.xlu0 %2119
        %v2122 = vmul.f32 %v1282, %v2120
        %v2123 = vmul.f32 %v1283, %v2120
        %v2124 = vadd.f32 %v2113, %v2122
        %v2125 = vadd.f32 %v2114, %v2123
        %s2126 = scalar_lea.vmem %s11, 26
        %v2127 = vld [vmem:[%s2126] sm:$0x3]
        %2129 = vset.pattern.permute.xlu0 0
        %2130 = vperm.xlu0 %2129, %v2127
        %v2131 = vpop.permute.xlu0 %2130
        %v2133 = vmul.f32 %v1302, %v2131
        %v2134 = vmul.f32 %v1303, %v2131
        %v2135 = vadd.f32 %v2124, %v2133
        %v2136 = vadd.f32 %v2125, %v2134
        %2137 = vrot.lane.b32.xlu0 %v2135, 32
        %v2138 = vpop.permute.xlu0 %2137
        %2139 = vrot.lane.b32.xlu0 %v2136, 32
        %v2140 = vpop.permute.xlu0 %2139
        %v2141 = vsel %vm1477, %v2138, %v2140
        %v2142 = vsel %vm1477, %v2140, %v2138
        %v2143 = vmul.f32 %v1484, %v2142
        %v2144 = vmul.f32 %v1488, %v2141
        %v2145 = vadd.f32 %v2060, %v2143
        %v2146 = vadd.f32 %v2061, %v2144
        %s2147 = scalar_lea.vmem %s11, 28
        %v2148 = vld [vmem:[%s2147] sm:$0x3]
        %2150 = vset.pattern.permute.xlu0 0
        %2151 = vperm.xlu0 %2150, %v2148
        %v2152 = vpop.permute.xlu0 %2151
        %v2154 = vmul.f32 %v1189, %v2152
        %v2155 = vmul.f32 %v1190, %v2152
        %s2156 = scalar_lea.vmem %s11, 30
        %v2157 = vld [vmem:[%s2156] sm:$0x3]
        %2159 = vset.pattern.permute.xlu0 0
        %2160 = vperm.xlu0 %2159, %v2157
        %v2161 = vpop.permute.xlu0 %2160
        %v2163 = vmul.f32 %v1209, %v2161
        %v2164 = vmul.f32 %v1210, %v2161
        %v2165 = vadd.f32 %v2154, %v2163
        %v2166 = vadd.f32 %v2155, %v2164
        %s2167 = scalar_lea.vmem %s11, 32
        %v2168 = vld [vmem:[%s2167] sm:$0x3]
        %2170 = vset.pattern.permute.xlu0 0
        %2171 = vperm.xlu0 %2170, %v2168
        %v2172 = vpop.permute.xlu0 %2171
        %v2174 = vmul.f32 %v1229, %v2172
        %v2175 = vmul.f32 %v1230, %v2172
        %v2176 = vadd.f32 %v2165, %v2174
        %v2177 = vadd.f32 %v2166, %v2175
        %s2178 = scalar_lea.vmem %s11, 34
        %v2179 = vld [vmem:[%s2178] sm:$0x3]
        %2181 = vset.pattern.permute.xlu0 0
        %2182 = vperm.xlu0 %2181, %v2179
        %v2183 = vpop.permute.xlu0 %2182
        %v2185 = vmul.f32 %v1242, %v2183
        %v2186 = vmul.f32 %v1243, %v2183
        %v2187 = vadd.f32 %v2176, %v2185
        %v2188 = vadd.f32 %v2177, %v2186
        %s2189 = scalar_lea.vmem %s11, 36
        %v2190 = vld [vmem:[%s2189] sm:$0x3]
        %2192 = vset.pattern.permute.xlu0 0
        %2193 = vperm.xlu0 %2192, %v2190
        %v2194 = vpop.permute.xlu0 %2193
        %v2196 = vmul.f32 %v1262, %v2194
        %v2197 = vmul.f32 %v1263, %v2194
        %v2198 = vadd.f32 %v2187, %v2196
        %v2199 = vadd.f32 %v2188, %v2197
        %s2200 = scalar_lea.vmem %s11, 38
        %v2201 = vld [vmem:[%s2200] sm:$0x3]
        %2203 = vset.pattern.permute.xlu0 0
        %2204 = vperm.xlu0 %2203, %v2201
        %v2205 = vpop.permute.xlu0 %2204
        %v2207 = vmul.f32 %v1282, %v2205
        %v2208 = vmul.f32 %v1283, %v2205
        %v2209 = vadd.f32 %v2198, %v2207
        %v2210 = vadd.f32 %v2199, %v2208
        %s2211 = scalar_lea.vmem %s11, 40
        %v2212 = vld [vmem:[%s2211] sm:$0x3]
        %2214 = vset.pattern.permute.xlu0 0
        %2215 = vperm.xlu0 %2214, %v2212
        %v2216 = vpop.permute.xlu0 %2215
        %v2218 = vmul.f32 %v1302, %v2216
        %v2219 = vmul.f32 %v1303, %v2216
        %v2220 = vadd.f32 %v2209, %v2218
        %v2221 = vadd.f32 %v2210, %v2219
        %2222 = vrot.lane.b32.xlu0 %v2220, 16
        %v2223 = vpop.permute.xlu0 %2222
        %2224 = vrot.lane.b32.xlu0 %v2221, 16
        %v2225 = vpop.permute.xlu0 %2224
        %v2226 = vsel %vm1574, %v2223, %v2225
        %v2227 = vsel %vm1574, %v2225, %v2223
        %v2228 = vmul.f32 %v1581, %v2227
        %v2229 = vmul.f32 %v1585, %v2226
        %v2230 = vadd.f32 %v2145, %v2228
        %v2231 = vadd.f32 %v2146, %v2229
        %s2232 = scalar_lea.vmem %s11, 42
        %v2233 = vld [vmem:[%s2232] sm:$0x3]
        %2235 = vset.pattern.permute.xlu0 0
        %2236 = vperm.xlu0 %2235, %v2233
        %v2237 = vpop.permute.xlu0 %2236
        %v2239 = vmul.f32 %v1189, %v2237
        %v2240 = vmul.f32 %v1190, %v2237
        %s2241 = scalar_lea.vmem %s11, 44
        %v2242 = vld [vmem:[%s2241] sm:$0x3]
        %2244 = vset.pattern.permute.xlu0 0
        %2245 = vperm.xlu0 %2244, %v2242
        %v2246 = vpop.permute.xlu0 %2245
        %v2248 = vmul.f32 %v1209, %v2246
        %v2249 = vmul.f32 %v1210, %v2246
        %v2250 = vadd.f32 %v2239, %v2248
        %v2251 = vadd.f32 %v2240, %v2249
        %s2252 = scalar_lea.vmem %s11, 46
        %v2253 = vld [vmem:[%s2252] sm:$0x3]
        %2255 = vset.pattern.permute.xlu0 0
        %2256 = vperm.xlu0 %2255, %v2253
        %v2257 = vpop.permute.xlu0 %2256
        %v2259 = vmul.f32 %v1229, %v2257
        %v2260 = vmul.f32 %v1230, %v2257
        %v2261 = vadd.f32 %v2250, %v2259
        %v2262 = vadd.f32 %v2251, %v2260
        %s2263 = scalar_lea.vmem %s11, 48
        %v2264 = vld [vmem:[%s2263] sm:$0x3]
        %2266 = vset.pattern.permute.xlu0 0
        %2267 = vperm.xlu0 %2266, %v2264
        %v2268 = vpop.permute.xlu0 %2267
        %v2270 = vmul.f32 %v1242, %v2268
        %v2271 = vmul.f32 %v1243, %v2268
        %v2272 = vadd.f32 %v2261, %v2270
        %v2273 = vadd.f32 %v2262, %v2271
        %s2274 = scalar_lea.vmem %s11, 50
        %v2275 = vld [vmem:[%s2274] sm:$0x3]
        %2277 = vset.pattern.permute.xlu0 0
        %2278 = vperm.xlu0 %2277, %v2275
        %v2279 = vpop.permute.xlu0 %2278
        %v2281 = vmul.f32 %v1262, %v2279
        %v2282 = vmul.f32 %v1263, %v2279
        %v2283 = vadd.f32 %v2272, %v2281
        %v2284 = vadd.f32 %v2273, %v2282
        %s2285 = scalar_lea.vmem %s11, 52
        %v2286 = vld [vmem:[%s2285] sm:$0x3]
        %2288 = vset.pattern.permute.xlu0 0
        %2289 = vperm.xlu0 %2288, %v2286
        %v2290 = vpop.permute.xlu0 %2289
        %v2292 = vmul.f32 %v1282, %v2290
        %v2293 = vmul.f32 %v1283, %v2290
        %v2294 = vadd.f32 %v2283, %v2292
        %v2295 = vadd.f32 %v2284, %v2293
        %s2296 = scalar_lea.vmem %s11, 54
        %v2297 = vld [vmem:[%s2296] sm:$0x3]
        %2299 = vset.pattern.permute.xlu0 0
        %2300 = vperm.xlu0 %2299, %v2297
        %v2301 = vpop.permute.xlu0 %2300
        %v2303 = vmul.f32 %v1302, %v2301
        %v2304 = vmul.f32 %v1303, %v2301
        %v2305 = vadd.f32 %v2294, %v2303
        %v2306 = vadd.f32 %v2295, %v2304
        %v2307 = vmul.f32 %v1671, %v2305
        %v2308 = vmul.f32 %v1675, %v2306
        %v2309 = vadd.f32 %v2230, %v2307
        %v2310 = vadd.f32 %v2231, %v2308
        %s2311 = scalar_lea.vmem %s11, 56
        %v2312 = vld [vmem:[%s2311] sm:$0x3]
        %2314 = vset.pattern.permute.xlu0 0
        %2315 = vperm.xlu0 %2314, %v2312
        %v2316 = vpop.permute.xlu0 %2315
        %v2318 = vmul.f32 %v1189, %v2316
        %v2319 = vmul.f32 %v1190, %v2316
        %s2320 = scalar_lea.vmem %s11, 58
        %v2321 = vld [vmem:[%s2320] sm:$0x3]
        %2323 = vset.pattern.permute.xlu0 0
        %2324 = vperm.xlu0 %2323, %v2321
        %v2325 = vpop.permute.xlu0 %2324
        %v2327 = vmul.f32 %v1209, %v2325
        %v2328 = vmul.f32 %v1210, %v2325
        %v2329 = vadd.f32 %v2318, %v2327
        %v2330 = vadd.f32 %v2319, %v2328
        %s2331 = scalar_lea.vmem %s11, 60
        %v2332 = vld [vmem:[%s2331] sm:$0x3]
        %2334 = vset.pattern.permute.xlu0 0
        %2335 = vperm.xlu0 %2334, %v2332
        %v2336 = vpop.permute.xlu0 %2335
        %v2338 = vmul.f32 %v1229, %v2336
        %v2339 = vmul.f32 %v1230, %v2336
        %v2340 = vadd.f32 %v2329, %v2338
        %v2341 = vadd.f32 %v2330, %v2339
        %s2342 = scalar_lea.vmem %s11, 62
        %v2343 = vld [vmem:[%s2342] sm:$0x3]
        %2345 = vset.pattern.permute.xlu0 0
        %2346 = vperm.xlu0 %2345, %v2343
        %v2347 = vpop.permute.xlu0 %2346
        %v2349 = vmul.f32 %v1242, %v2347
        %v2350 = vmul.f32 %v1243, %v2347
        %v2351 = vadd.f32 %v2340, %v2349
        %v2352 = vadd.f32 %v2341, %v2350
        %s2353 = scalar_lea.vmem %s11, 64
        %v2354 = vld [vmem:[%s2353] sm:$0x3]
        %2356 = vset.pattern.permute.xlu0 0
        %2357 = vperm.xlu0 %2356, %v2354
        %v2358 = vpop.permute.xlu0 %2357
        %v2360 = vmul.f32 %v1262, %v2358
        %v2361 = vmul.f32 %v1263, %v2358
        %v2362 = vadd.f32 %v2351, %v2360
        %v2363 = vadd.f32 %v2352, %v2361
        %s2364 = scalar_lea.vmem %s11, 66
        %v2365 = vld [vmem:[%s2364] sm:$0x3]
        %2367 = vset.pattern.permute.xlu0 0
        %2368 = vperm.xlu0 %2367, %v2365
        %v2369 = vpop.permute.xlu0 %2368
        %v2371 = vmul.f32 %v1282, %v2369
        %v2372 = vmul.f32 %v1283, %v2369
        %v2373 = vadd.f32 %v2362, %v2371
        %v2374 = vadd.f32 %v2363, %v2372
        %s2375 = scalar_lea.vmem %s11, 68
        %v2376 = vld [vmem:[%s2375] sm:$0x3]
        %2378 = vset.pattern.permute.xlu0 0
        %2379 = vperm.xlu0 %2378, %v2376
        %v2380 = vpop.permute.xlu0 %2379
        %v2382 = vmul.f32 %v1302, %v2380
        %v2383 = vmul.f32 %v1303, %v2380
        %v2384 = vadd.f32 %v2373, %v2382
        %v2385 = vadd.f32 %v2374, %v2383
        %2386 = vrot.lane.b32.xlu0 %v2384, 112
        %v2387 = vpop.permute.xlu0 %2386
        %2388 = vrot.lane.b32.xlu0 %v2385, 112
        %v2389 = vpop.permute.xlu0 %2388
        %v2390 = vsel %vm1761, %v2387, %v2389
        %v2391 = vsel %vm1761, %v2389, %v2387
        %v2392 = vmul.f32 %v1768, %v2390
        %v2393 = vmul.f32 %v1772, %v2391
        %v2394 = vadd.f32 %v2309, %v2392
        %v2395 = vadd.f32 %v2310, %v2393
        %s2396 = scalar_lea.vmem %s11, 70
        %v2397 = vld [vmem:[%s2396] sm:$0x3]
        %2399 = vset.pattern.permute.xlu0 0
        %2400 = vperm.xlu0 %2399, %v2397
        %v2401 = vpop.permute.xlu0 %2400
        %v2403 = vmul.f32 %v1189, %v2401
        %v2404 = vmul.f32 %v1190, %v2401
        %s2405 = scalar_lea.vmem %s11, 72
        %v2406 = vld [vmem:[%s2405] sm:$0x3]
        %2408 = vset.pattern.permute.xlu0 0
        %2409 = vperm.xlu0 %2408, %v2406
        %v2410 = vpop.permute.xlu0 %2409
        %v2412 = vmul.f32 %v1209, %v2410
        %v2413 = vmul.f32 %v1210, %v2410
        %v2414 = vadd.f32 %v2403, %v2412
        %v2415 = vadd.f32 %v2404, %v2413
        %s2416 = scalar_lea.vmem %s11, 74
        %v2417 = vld [vmem:[%s2416] sm:$0x3]
        %2419 = vset.pattern.permute.xlu0 0
        %2420 = vperm.xlu0 %2419, %v2417
        %v2421 = vpop.permute.xlu0 %2420
        %v2423 = vmul.f32 %v1229, %v2421
        %v2424 = vmul.f32 %v1230, %v2421
        %v2425 = vadd.f32 %v2414, %v2423
        %v2426 = vadd.f32 %v2415, %v2424
        %s2427 = scalar_lea.vmem %s11, 76
        %v2428 = vld [vmem:[%s2427] sm:$0x3]
        %2430 = vset.pattern.permute.xlu0 0
        %2431 = vperm.xlu0 %2430, %v2428
        %v2432 = vpop.permute.xlu0 %2431
        %v2434 = vmul.f32 %v1242, %v2432
        %v2435 = vmul.f32 %v1243, %v2432
        %v2436 = vadd.f32 %v2425, %v2434
        %v2437 = vadd.f32 %v2426, %v2435
        %s2438 = scalar_lea.vmem %s11, 78
        %v2439 = vld [vmem:[%s2438] sm:$0x3]
        %2441 = vset.pattern.permute.xlu0 0
        %2442 = vperm.xlu0 %2441, %v2439
        %v2443 = vpop.permute.xlu0 %2442
        %v2445 = vmul.f32 %v1262, %v2443
        %v2446 = vmul.f32 %v1263, %v2443
        %v2447 = vadd.f32 %v2436, %v2445
        %v2448 = vadd.f32 %v2437, %v2446
        %s2449 = scalar_lea.vmem %s11, 80
        %v2450 = vld [vmem:[%s2449] sm:$0x3]
        %2452 = vset.pattern.permute.xlu0 0
        %2453 = vperm.xlu0 %2452, %v2450
        %v2454 = vpop.permute.xlu0 %2453
        %v2456 = vmul.f32 %v1282, %v2454
        %v2457 = vmul.f32 %v1283, %v2454
        %v2458 = vadd.f32 %v2447, %v2456
        %v2459 = vadd.f32 %v2448, %v2457
        %s2460 = scalar_lea.vmem %s11, 82
        %v2461 = vld [vmem:[%s2460] sm:$0x3]
        %2463 = vset.pattern.permute.xlu0 0
        %2464 = vperm.xlu0 %2463, %v2461
        %v2465 = vpop.permute.xlu0 %2464
        %v2467 = vmul.f32 %v1302, %v2465
        %v2468 = vmul.f32 %v1303, %v2465
        %v2469 = vadd.f32 %v2458, %v2467
        %v2470 = vadd.f32 %v2459, %v2468
        %2471 = vrot.lane.b32.xlu0 %v2469, 96
        %v2472 = vpop.permute.xlu0 %2471
        %2473 = vrot.lane.b32.xlu0 %v2470, 96
        %v2474 = vpop.permute.xlu0 %2473
        %v2475 = vsel %vm1858, %v2472, %v2474
        %v2476 = vsel %vm1858, %v2474, %v2472
        %v2477 = vmul.f32 %v1865, %v2475
        %v2478 = vmul.f32 %v1869, %v2476
        %v2479 = vadd.f32 %v2394, %v2477
        %v2480 = vadd.f32 %v2395, %v2478
        %s2481 = scalar_lea.vmem %s11, 84
        %v2482 = vld [vmem:[%s2481] sm:$0x3]
        %2484 = vset.pattern.permute.xlu0 0
        %2485 = vperm.xlu0 %2484, %v2482
        %v2486 = vpop.permute.xlu0 %2485
        %v2488 = vmul.f32 %v1189, %v2486
        %v2489 = vmul.f32 %v1190, %v2486
        %s2490 = scalar_lea.vmem %s11, 86
        %v2491 = vld [vmem:[%s2490] sm:$0x3]
        %2493 = vset.pattern.permute.xlu0 0
        %2494 = vperm.xlu0 %2493, %v2491
        %v2495 = vpop.permute.xlu0 %2494
        %v2497 = vmul.f32 %v1209, %v2495
        %v2498 = vmul.f32 %v1210, %v2495
        %v2499 = vadd.f32 %v2488, %v2497
        %v2500 = vadd.f32 %v2489, %v2498
        %s2501 = scalar_lea.vmem %s11, 88
        %v2502 = vld [vmem:[%s2501] sm:$0x3]
        %2504 = vset.pattern.permute.xlu0 0
        %2505 = vperm.xlu0 %2504, %v2502
        %v2506 = vpop.permute.xlu0 %2505
        %v2508 = vmul.f32 %v1229, %v2506
        %v2509 = vmul.f32 %v1230, %v2506
        %v2510 = vadd.f32 %v2499, %v2508
        %v2511 = vadd.f32 %v2500, %v2509
        %s2512 = scalar_lea.vmem %s11, 90
        %v2513 = vld [vmem:[%s2512] sm:$0x3]
        %2515 = vset.pattern.permute.xlu0 0
        %2516 = vperm.xlu0 %2515, %v2513
        %v2517 = vpop.permute.xlu0 %2516
        %v2519 = vmul.f32 %v1242, %v2517
        %v2520 = vmul.f32 %v1243, %v2517
        %v2521 = vadd.f32 %v2510, %v2519
        %v2522 = vadd.f32 %v2511, %v2520
        %s2523 = scalar_lea.vmem %s11, 92
        %v2524 = vld [vmem:[%s2523] sm:$0x3]
        %2526 = vset.pattern.permute.xlu0 0
        %2527 = vperm.xlu0 %2526, %v2524
        %v2528 = vpop.permute.xlu0 %2527
        %v2530 = vmul.f32 %v1262, %v2528
        %v2531 = vmul.f32 %v1263, %v2528
        %v2532 = vadd.f32 %v2521, %v2530
        %v2533 = vadd.f32 %v2522, %v2531
        %s2534 = scalar_lea.vmem %s11, 94
        %v2535 = vld [vmem:[%s2534] sm:$0x3]
        %2537 = vset.pattern.permute.xlu0 0
        %2538 = vperm.xlu0 %2537, %v2535
        %v2539 = vpop.permute.xlu0 %2538
        %v2541 = vmul.f32 %v1282, %v2539
        %v2542 = vmul.f32 %v1283, %v2539
        %v2543 = vadd.f32 %v2532, %v2541
        %v2544 = vadd.f32 %v2533, %v2542
        %s2545 = scalar_lea.vmem %s11, 96
        %v2546 = vld [vmem:[%s2545] sm:$0x3]
        %2548 = vset.pattern.permute.xlu0 0
        %2549 = vperm.xlu0 %2548, %v2546
        %v2550 = vpop.permute.xlu0 %2549
        %v2552 = vmul.f32 %v1302, %v2550
        %v2553 = vmul.f32 %v1303, %v2550
        %v2554 = vadd.f32 %v2543, %v2552
        %v2555 = vadd.f32 %v2544, %v2553
        %2556 = vrot.lane.b32.xlu0 %v2554, 80
        %v2557 = vpop.permute.xlu0 %2556
        %2558 = vrot.lane.b32.xlu0 %v2555, 80
        %v2559 = vpop.permute.xlu0 %2558
        %v2560 = vsel %vm1955, %v2557, %v2559
        %v2561 = vsel %vm1955, %v2559, %v2557
        %v2562 = vmul.f32 %v1962, %v2560
        %v2563 = vmul.f32 %v1966, %v2561
        %v2564 = vadd.f32 %v2479, %v2562
        %v2565 = vadd.f32 %v2480, %v2563
        %2567 = vset.pattern.permute.xlu0 0
        %2568 = vperm.xlu0 %2567, %v586
        %v2569 = vpop.permute.xlu0 %2568
        %v2571 = vadd.f32 %v2564, %v2569
        %v2572 = vadd.f32 %v2565, %v2569
        %2573 = vrot.lane.b32.xlu0 %v1978, 12
        %v2574 = vpop.permute.xlu0 %2573
        %2575 = vrot.lane.b32.xlu0 %v1979, 12
        %v2576 = vpop.permute.xlu0 %2575
        %vm2577 = vcmp.lt.s32.totalorder %v1174, 12
        %v2578 = vsel %vm2577, %v2574, %v2576
        %v2579 = vsel %vm2577, %v2576, %v2574
        %v2581 = vlaneseq
        %v2582 = vshrl.u32 %v2581, 7
        %v2583 = vsub.s32 0, %v2582
        %v2584 = vrot.slane %v665, %v2583
        %v2585 = vlaneseq
        %v2586 = vshrl.u32 %v2585, 7
        %v2587 = vsub.s32 1, %v2586
        %v2588 = vrot.slane %v665, %v2587
        %v2591 = vmul.f32 %v2584, %v2579
        %v2592 = vmul.f32 %v2588, %v2578
        %2593 = vrot.lane.b32.xlu0 %v1978, 8
        %v2594 = vpop.permute.xlu0 %2593
        %2595 = vrot.lane.b32.xlu0 %v1979, 8
        %v2596 = vpop.permute.xlu0 %2595
        %vm2597 = vcmp.lt.s32.totalorder %v1174, 8
        %v2598 = vsel %vm2597, %v2594, %v2596
        %v2599 = vsel %vm2597, %v2596, %v2594
        %v2601 = vlaneseq
        %v2602 = vshrl.u32 %v2601, 7
        %v2603 = vsub.s32 0, %v2602
        %v2604 = vrot.slane %v670, %v2603
        %v2605 = vlaneseq
        %v2606 = vshrl.u32 %v2605, 7
        %v2607 = vsub.s32 1, %v2606
        %v2608 = vrot.slane %v670, %v2607
        %v2611 = vmul.f32 %v2604, %v2599
        %v2612 = vmul.f32 %v2608, %v2598
        %2613 = vrot.lane.b32.xlu0 %v1978, 4
        %v2614 = vpop.permute.xlu0 %2613
        %2615 = vrot.lane.b32.xlu0 %v1979, 4
        %v2616 = vpop.permute.xlu0 %2615
        %vm2617 = vcmp.lt.s32.totalorder %v1174, 4
        %v2618 = vsel %vm2617, %v2614, %v2616
        %v2619 = vsel %vm2617, %v2616, %v2614
        %v2621 = vlaneseq
        %v2622 = vshrl.u32 %v2621, 7
        %v2623 = vsub.s32 0, %v2622
        %v2624 = vrot.slane %v675, %v2623
        %v2625 = vlaneseq
        %v2626 = vshrl.u32 %v2625, 7
        %v2627 = vsub.s32 1, %v2626
        %v2628 = vrot.slane %v675, %v2627
        %v2631 = vmul.f32 %v2624, %v2619
        %v2632 = vmul.f32 %v2628, %v2618
        %v2633 = vmul.f32 %v1235, %v1978
        %v2634 = vmul.f32 %v1239, %v1979
        %2635 = vrot.lane.b32.xlu0 %v1978, 124
        %v2636 = vpop.permute.xlu0 %2635
        %2637 = vrot.lane.b32.xlu0 %v1979, 124
        %v2638 = vpop.permute.xlu0 %2637
        %vm2639 = vcmp.lt.s32.totalorder %v1174, 124
        %v2640 = vsel %vm2639, %v2636, %v2638
        %v2641 = vsel %vm2639, %v2638, %v2636
        %v2643 = vlaneseq
        %v2644 = vshrl.u32 %v2643, 7
        %v2645 = vsub.s32 0, %v2644
        %v2646 = vrot.slane %v680, %v2645
        %v2647 = vlaneseq
        %v2648 = vshrl.u32 %v2647, 7
        %v2649 = vsub.s32 1, %v2648
        %v2650 = vrot.slane %v680, %v2649
        %v2653 = vmul.f32 %v2646, %v2640
        %v2654 = vmul.f32 %v2650, %v2641
        %2655 = vrot.lane.b32.xlu0 %v1978, 120
        %v2656 = vpop.permute.xlu0 %2655
        %2657 = vrot.lane.b32.xlu0 %v1979, 120
        %v2658 = vpop.permute.xlu0 %2657
        %vm2659 = vcmp.lt.s32.totalorder %v1174, 120
        %v2660 = vsel %vm2659, %v2656, %v2658
        %v2661 = vsel %vm2659, %v2658, %v2656
        %v2663 = vlaneseq
        %v2664 = vshrl.u32 %v2663, 7
        %v2665 = vsub.s32 0, %v2664
        %v2666 = vrot.slane %v685, %v2665
        %v2667 = vlaneseq
        %v2668 = vshrl.u32 %v2667, 7
        %v2669 = vsub.s32 1, %v2668
        %v2670 = vrot.slane %v685, %v2669
        %v2673 = vmul.f32 %v2666, %v2660
        %v2674 = vmul.f32 %v2670, %v2661
        %2675 = vrot.lane.b32.xlu0 %v1978, 116
        %v2676 = vpop.permute.xlu0 %2675
        %2677 = vrot.lane.b32.xlu0 %v1979, 116
        %v2678 = vpop.permute.xlu0 %2677
        %vm2679 = vcmp.lt.s32.totalorder %v1174, 116
        %v2680 = vsel %vm2679, %v2676, %v2678
        %v2681 = vsel %vm2679, %v2678, %v2676
        %v2683 = vlaneseq
        %v2684 = vshrl.u32 %v2683, 7
        %v2685 = vsub.s32 0, %v2684
        %v2686 = vrot.slane %v690, %v2685
        %v2687 = vlaneseq
        %v2688 = vshrl.u32 %v2687, 7
        %v2689 = vsub.s32 1, %v2688
        %v2690 = vrot.slane %v690, %v2689
        %v2693 = vmul.f32 %v2686, %v2680
        %v2694 = vmul.f32 %v2690, %v2681
        %s2695 = scalar_lea.vmem %s9, 20
        %v2696 = vld [vmem:[%s2695] sm:$0x3]
        %2698 = vset.pattern.permute.xlu0 0
        %2699 = vperm.xlu0 %2698, %v2696
        %v2700 = vpop.permute.xlu0 %2699
        %v2702 = vmul.f32 %v2591, %v2700
        %v2703 = vmul.f32 %v2592, %v2700
        %s2704 = scalar_lea.vmem %s9, 22
        %v2705 = vld [vmem:[%s2704] sm:$0x3]
        %2707 = vset.pattern.permute.xlu0 0
        %2708 = vperm.xlu0 %2707, %v2705
        %v2709 = vpop.permute.xlu0 %2708
        %v2711 = vmul.f32 %v2611, %v2709
        %v2712 = vmul.f32 %v2612, %v2709
        %v2713 = vadd.f32 %v2702, %v2711
        %v2714 = vadd.f32 %v2703, %v2712
        %s2715 = scalar_lea.vmem %s9, 24
        %v2716 = vld [vmem:[%s2715] sm:$0x3]
        %2718 = vset.pattern.permute.xlu0 0
        %2719 = vperm.xlu0 %2718, %v2716
        %v2720 = vpop.permute.xlu0 %2719
        %v2722 = vmul.f32 %v2631, %v2720
        %v2723 = vmul.f32 %v2632, %v2720
        %v2724 = vadd.f32 %v2713, %v2722
        %v2725 = vadd.f32 %v2714, %v2723
        %s2726 = scalar_lea.vmem %s9, 26
        %v2727 = vld [vmem:[%s2726] sm:$0x3]
        %2729 = vset.pattern.permute.xlu0 0
        %2730 = vperm.xlu0 %2729, %v2727
        %v2731 = vpop.permute.xlu0 %2730
        %v2733 = vmul.f32 %v2633, %v2731
        %v2734 = vmul.f32 %v2634, %v2731
        %v2735 = vadd.f32 %v2724, %v2733
        %v2736 = vadd.f32 %v2725, %v2734
        %s2737 = scalar_lea.vmem %s9, 28
        %v2738 = vld [vmem:[%s2737] sm:$0x3]
        %2740 = vset.pattern.permute.xlu0 0
        %2741 = vperm.xlu0 %2740, %v2738
        %v2742 = vpop.permute.xlu0 %2741
        %v2744 = vmul.f32 %v2653, %v2742
        %v2745 = vmul.f32 %v2654, %v2742
        %v2746 = vadd.f32 %v2735, %v2744
        %v2747 = vadd.f32 %v2736, %v2745
        %s2748 = scalar_lea.vmem %s9, 30
        %v2749 = vld [vmem:[%s2748] sm:$0x3]
        %2751 = vset.pattern.permute.xlu0 0
        %2752 = vperm.xlu0 %2751, %v2749
        %v2753 = vpop.permute.xlu0 %2752
        %v2755 = vmul.f32 %v2673, %v2753
        %v2756 = vmul.f32 %v2674, %v2753
        %v2757 = vadd.f32 %v2746, %v2755
        %v2758 = vadd.f32 %v2747, %v2756
        %s2759 = scalar_lea.vmem %s9, 32
        %v2760 = vld [vmem:[%s2759] sm:$0x3]
        %2762 = vset.pattern.permute.xlu0 0
        %2763 = vperm.xlu0 %2762, %v2760
        %v2764 = vpop.permute.xlu0 %2763
        %v2766 = vmul.f32 %v2693, %v2764
        %v2767 = vmul.f32 %v2694, %v2764
        %v2768 = vadd.f32 %v2757, %v2766
        %v2769 = vadd.f32 %v2758, %v2767
        %2770 = vrot.lane.b32.xlu0 %v2768, 64
        %v2771 = vpop.permute.xlu0 %2770
        %2772 = vrot.lane.b32.xlu0 %v2769, 64
        %v2773 = vpop.permute.xlu0 %2772
        %vm2774 = vcmp.lt.s32.totalorder %v1174, 64
        %v2775 = vsel %vm2774, %v2771, %v2773
        %v2776 = vsel %vm2774, %v2773, %v2771
        %v2778 = vlaneseq
        %v2779 = vshrl.u32 %v2778, 7
        %v2780 = vsub.s32 0, %v2779
        %v2781 = vrot.slane %v695, %v2780
        %v2782 = vlaneseq
        %v2783 = vshrl.u32 %v2782, 7
        %v2784 = vsub.s32 1, %v2783
        %v2785 = vrot.slane %v695, %v2784
        %v2788 = vmul.f32 %v2781, %v2775
        %v2789 = vmul.f32 %v2785, %v2776
        %s2790 = scalar_lea.vmem %s9, 38
        %v2791 = vld [vmem:[%s2790] sm:$0x3]
        %2793 = vset.pattern.permute.xlu0 0
        %2794 = vperm.xlu0 %2793, %v2791
        %v2795 = vpop.permute.xlu0 %2794
        %v2797 = vmul.f32 %v2591, %v2795
        %v2798 = vmul.f32 %v2592, %v2795
        %s2799 = scalar_lea.vmem %s9, 40
        %v2800 = vld [vmem:[%s2799] sm:$0x3]
        %2802 = vset.pattern.permute.xlu0 0
        %2803 = vperm.xlu0 %2802, %v2800
        %v2804 = vpop.permute.xlu0 %2803
        %v2806 = vmul.f32 %v2611, %v2804
        %v2807 = vmul.f32 %v2612, %v2804
        %v2808 = vadd.f32 %v2797, %v2806
        %v2809 = vadd.f32 %v2798, %v2807
        %s2810 = scalar_lea.vmem %s9, 42
        %v2811 = vld [vmem:[%s2810] sm:$0x3]
        %2813 = vset.pattern.permute.xlu0 0
        %2814 = vperm.xlu0 %2813, %v2811
        %v2815 = vpop.permute.xlu0 %2814
        %v2817 = vmul.f32 %v2631, %v2815
        %v2818 = vmul.f32 %v2632, %v2815
        %v2819 = vadd.f32 %v2808, %v2817
        %v2820 = vadd.f32 %v2809, %v2818
        %s2821 = scalar_lea.vmem %s9, 44
        %v2822 = vld [vmem:[%s2821] sm:$0x3]
        %2824 = vset.pattern.permute.xlu0 0
        %2825 = vperm.xlu0 %2824, %v2822
        %v2826 = vpop.permute.xlu0 %2825
        %v2828 = vmul.f32 %v2633, %v2826
        %v2829 = vmul.f32 %v2634, %v2826
        %v2830 = vadd.f32 %v2819, %v2828
        %v2831 = vadd.f32 %v2820, %v2829
        %s2832 = scalar_lea.vmem %s9, 46
        %v2833 = vld [vmem:[%s2832] sm:$0x3]
        %2835 = vset.pattern.permute.xlu0 0
        %2836 = vperm.xlu0 %2835, %v2833
        %v2837 = vpop.permute.xlu0 %2836
        %v2839 = vmul.f32 %v2653, %v2837
        %v2840 = vmul.f32 %v2654, %v2837
        %v2841 = vadd.f32 %v2830, %v2839
        %v2842 = vadd.f32 %v2831, %v2840
        %s2843 = scalar_lea.vmem %s9, 48
        %v2844 = vld [vmem:[%s2843] sm:$0x3]
        %2846 = vset.pattern.permute.xlu0 0
        %2847 = vperm.xlu0 %2846, %v2844
        %v2848 = vpop.permute.xlu0 %2847
        %v2850 = vmul.f32 %v2673, %v2848
        %v2851 = vmul.f32 %v2674, %v2848
        %v2852 = vadd.f32 %v2841, %v2850
        %v2853 = vadd.f32 %v2842, %v2851
        %s2854 = scalar_lea.vmem %s9, 50
        %v2855 = vld [vmem:[%s2854] sm:$0x3]
        %2857 = vset.pattern.permute.xlu0 0
        %2858 = vperm.xlu0 %2857, %v2855
        %v2859 = vpop.permute.xlu0 %2858
        %v2861 = vmul.f32 %v2693, %v2859
        %v2862 = vmul.f32 %v2694, %v2859
        %v2863 = vadd.f32 %v2852, %v2861
        %v2864 = vadd.f32 %v2853, %v2862
        %v2866 = vlaneseq
        %v2867 = vshrl.u32 %v2866, 7
        %v2868 = vsub.s32 0, %v2867
        %v2869 = vrot.slane %v700, %v2868
        %v2870 = vlaneseq
        %v2871 = vshrl.u32 %v2870, 7
        %v2872 = vsub.s32 1, %v2871
        %v2873 = vrot.slane %v700, %v2872
        %v2876 = vmul.f32 %v2869, %v2864
        %v2877 = vmul.f32 %v2873, %v2863
        %v2878 = vadd.f32 %v2788, %v2876
        %v2879 = vadd.f32 %v2789, %v2877
        %s2880 = scalar_lea.vmem %s9, 56
        %v2881 = vld [vmem:[%s2880] sm:$0x3]
        %2883 = vset.pattern.permute.xlu0 0
        %2884 = vperm.xlu0 %2883, %v2881
        %v2885 = vpop.permute.xlu0 %2884
        %v2887 = vmul.f32 %v2591, %v2885
        %v2888 = vmul.f32 %v2592, %v2885
        %s2889 = scalar_lea.vmem %s9, 58
        %v2890 = vld [vmem:[%s2889] sm:$0x3]
        %2892 = vset.pattern.permute.xlu0 0
        %2893 = vperm.xlu0 %2892, %v2890
        %v2894 = vpop.permute.xlu0 %2893
        %v2896 = vmul.f32 %v2611, %v2894
        %v2897 = vmul.f32 %v2612, %v2894
        %v2898 = vadd.f32 %v2887, %v2896
        %v2899 = vadd.f32 %v2888, %v2897
        %s2900 = scalar_lea.vmem %s9, 60
        %v2901 = vld [vmem:[%s2900] sm:$0x3]
        %2903 = vset.pattern.permute.xlu0 0
        %2904 = vperm.xlu0 %2903, %v2901
        %v2905 = vpop.permute.xlu0 %2904
        %v2907 = vmul.f32 %v2631, %v2905
        %v2908 = vmul.f32 %v2632, %v2905
        %v2909 = vadd.f32 %v2898, %v2907
        %v2910 = vadd.f32 %v2899, %v2908
        %s2911 = scalar_lea.vmem %s9, 62
        %v2912 = vld [vmem:[%s2911] sm:$0x3]
        %2914 = vset.pattern.permute.xlu0 0
        %2915 = vperm.xlu0 %2914, %v2912
        %v2916 = vpop.permute.xlu0 %2915
        %v2918 = vmul.f32 %v2633, %v2916
        %v2919 = vmul.f32 %v2634, %v2916
        %v2920 = vadd.f32 %v2909, %v2918
        %v2921 = vadd.f32 %v2910, %v2919
        %s2922 = scalar_lea.vmem %s9, 64
        %v2923 = vld [vmem:[%s2922] sm:$0x3]
        %2925 = vset.pattern.permute.xlu0 0
        %2926 = vperm.xlu0 %2925, %v2923
        %v2927 = vpop.permute.xlu0 %2926
        %v2929 = vmul.f32 %v2653, %v2927
        %v2930 = vmul.f32 %v2654, %v2927
        %v2931 = vadd.f32 %v2920, %v2929
        %v2932 = vadd.f32 %v2921, %v2930
        %s2933 = scalar_lea.vmem %s9, 66
        %v2934 = vld [vmem:[%s2933] sm:$0x3]
        %2936 = vset.pattern.permute.xlu0 0
        %2937 = vperm.xlu0 %2936, %v2934
        %v2938 = vpop.permute.xlu0 %2937
        %v2940 = vmul.f32 %v2673, %v2938
        %v2941 = vmul.f32 %v2674, %v2938
        %v2942 = vadd.f32 %v2931, %v2940
        %v2943 = vadd.f32 %v2932, %v2941
        %s2944 = scalar_lea.vmem %s9, 68
        %v2945 = vld [vmem:[%s2944] sm:$0x3]
        %2947 = vset.pattern.permute.xlu0 0
        %2948 = vperm.xlu0 %2947, %v2945
        %v2949 = vpop.permute.xlu0 %2948
        %v2951 = vmul.f32 %v2693, %v2949
        %v2952 = vmul.f32 %v2694, %v2949
        %v2953 = vadd.f32 %v2942, %v2951
        %v2954 = vadd.f32 %v2943, %v2952
        %2955 = vrot.lane.b32.xlu0 %v2953, 64
        %v2956 = vpop.permute.xlu0 %2955
        %2957 = vrot.lane.b32.xlu0 %v2954, 64
        %v2958 = vpop.permute.xlu0 %2957
        %v2959 = vsel %vm2774, %v2956, %v2958
        %v2960 = vsel %vm2774, %v2958, %v2956
        %v2962 = vlaneseq
        %v2963 = vshrl.u32 %v2962, 7
        %v2964 = vsub.s32 0, %v2963
        %v2965 = vrot.slane %v705, %v2964
        %v2966 = vlaneseq
        %v2967 = vshrl.u32 %v2966, 7
        %v2968 = vsub.s32 1, %v2967
        %v2969 = vrot.slane %v705, %v2968
        %v2972 = vmul.f32 %v2965, %v2960
        %v2973 = vmul.f32 %v2969, %v2959
        %v2974 = vadd.f32 %v2878, %v2972
        %v2975 = vadd.f32 %v2879, %v2973
        %s2976 = scalar_lea.vmem %s9, 74
        %v2977 = vld [vmem:[%s2976] sm:$0x3]
        %2979 = vset.pattern.permute.xlu0 0
        %2980 = vperm.xlu0 %2979, %v2977
        %v2981 = vpop.permute.xlu0 %2980
        %v2983 = vmul.f32 %v2591, %v2981
        %v2984 = vmul.f32 %v2592, %v2981
        %s2985 = scalar_lea.vmem %s9, 76
        %v2986 = vld [vmem:[%s2985] sm:$0x3]
        %2988 = vset.pattern.permute.xlu0 0
        %2989 = vperm.xlu0 %2988, %v2986
        %v2990 = vpop.permute.xlu0 %2989
        %v2992 = vmul.f32 %v2611, %v2990
        %v2993 = vmul.f32 %v2612, %v2990
        %v2994 = vadd.f32 %v2983, %v2992
        %v2995 = vadd.f32 %v2984, %v2993
        %s2996 = scalar_lea.vmem %s9, 78
        %v2997 = vld [vmem:[%s2996] sm:$0x3]
        %2999 = vset.pattern.permute.xlu0 0
        %3000 = vperm.xlu0 %2999, %v2997
        %v3001 = vpop.permute.xlu0 %3000
        %v3003 = vmul.f32 %v2631, %v3001
        %v3004 = vmul.f32 %v2632, %v3001
        %v3005 = vadd.f32 %v2994, %v3003
        %v3006 = vadd.f32 %v2995, %v3004
        %s3007 = scalar_lea.vmem %s9, 80
        %v3008 = vld [vmem:[%s3007] sm:$0x3]
        %3010 = vset.pattern.permute.xlu0 0
        %3011 = vperm.xlu0 %3010, %v3008
        %v3012 = vpop.permute.xlu0 %3011
        %v3014 = vmul.f32 %v2633, %v3012
        %v3015 = vmul.f32 %v2634, %v3012
        %v3016 = vadd.f32 %v3005, %v3014
        %v3017 = vadd.f32 %v3006, %v3015
        %s3018 = scalar_lea.vmem %s9, 82
        %v3019 = vld [vmem:[%s3018] sm:$0x3]
        %3021 = vset.pattern.permute.xlu0 0
        %3022 = vperm.xlu0 %3021, %v3019
        %v3023 = vpop.permute.xlu0 %3022
        %v3025 = vmul.f32 %v2653, %v3023
        %v3026 = vmul.f32 %v2654, %v3023
        %v3027 = vadd.f32 %v3016, %v3025
        %v3028 = vadd.f32 %v3017, %v3026
        %s3029 = scalar_lea.vmem %s9, 84
        %v3030 = vld [vmem:[%s3029] sm:$0x3]
        %3032 = vset.pattern.permute.xlu0 0
        %3033 = vperm.xlu0 %3032, %v3030
        %v3034 = vpop.permute.xlu0 %3033
        %v3036 = vmul.f32 %v2673, %v3034
        %v3037 = vmul.f32 %v2674, %v3034
        %v3038 = vadd.f32 %v3027, %v3036
        %v3039 = vadd.f32 %v3028, %v3037
        %s3040 = scalar_lea.vmem %s9, 86
        %v3041 = vld [vmem:[%s3040] sm:$0x3]
        %3043 = vset.pattern.permute.xlu0 0
        %3044 = vperm.xlu0 %3043, %v3041
        %v3045 = vpop.permute.xlu0 %3044
        %v3047 = vmul.f32 %v2693, %v3045
        %v3048 = vmul.f32 %v2694, %v3045
        %v3049 = vadd.f32 %v3038, %v3047
        %v3050 = vadd.f32 %v3039, %v3048
        %v3051 = vmul.f32 %v1671, %v3049
        %v3052 = vmul.f32 %v1675, %v3050
        %v3053 = vadd.f32 %v2974, %v3051
        %v3054 = vadd.f32 %v2975, %v3052
        %s3055 = scalar_lea.vmem %s9, 92
        %v3056 = vld [vmem:[%s3055] sm:$0x3]
        %3058 = vset.pattern.permute.xlu0 0
        %3059 = vperm.xlu0 %3058, %v3056
        %v3060 = vpop.permute.xlu0 %3059
        %v3062 = vmul.f32 %v2591, %v3060
        %v3063 = vmul.f32 %v2592, %v3060
        %s3064 = scalar_lea.vmem %s9, 94
        %v3065 = vld [vmem:[%s3064] sm:$0x3]
        %3067 = vset.pattern.permute.xlu0 0
        %3068 = vperm.xlu0 %3067, %v3065
        %v3069 = vpop.permute.xlu0 %3068
        %v3071 = vmul.f32 %v2611, %v3069
        %v3072 = vmul.f32 %v2612, %v3069
        %v3073 = vadd.f32 %v3062, %v3071
        %v3074 = vadd.f32 %v3063, %v3072
        %s3075 = scalar_lea.vmem %s9, 96
        %v3076 = vld [vmem:[%s3075] sm:$0x3]
        %3078 = vset.pattern.permute.xlu0 0
        %3079 = vperm.xlu0 %3078, %v3076
        %v3080 = vpop.permute.xlu0 %3079
        %v3082 = vmul.f32 %v2631, %v3080
        %v3083 = vmul.f32 %v2632, %v3080
        %v3084 = vadd.f32 %v3073, %v3082
        %v3085 = vadd.f32 %v3074, %v3083
        %s3086 = scalar_lea.vmem %s9, 98
        %v3087 = vld [vmem:[%s3086] sm:$0x3]
        %3089 = vset.pattern.permute.xlu0 0
        %3090 = vperm.xlu0 %3089, %v3087
        %v3091 = vpop.permute.xlu0 %3090
        %v3093 = vmul.f32 %v2633, %v3091
        %v3094 = vmul.f32 %v2634, %v3091
        %v3095 = vadd.f32 %v3084, %v3093
        %v3096 = vadd.f32 %v3085, %v3094
        %s3097 = scalar_lea.vmem %s9, 100
        %v3098 = vld [vmem:[%s3097] sm:$0x3]
        %3100 = vset.pattern.permute.xlu0 0
        %3101 = vperm.xlu0 %3100, %v3098
        %v3102 = vpop.permute.xlu0 %3101
        %v3104 = vmul.f32 %v2653, %v3102
        %v3105 = vmul.f32 %v2654, %v3102
        %v3106 = vadd.f32 %v3095, %v3104
        %v3107 = vadd.f32 %v3096, %v3105
        %s3108 = scalar_lea.vmem %s9, 102
        %v3109 = vld [vmem:[%s3108] sm:$0x3]
        %3111 = vset.pattern.permute.xlu0 0
        %3112 = vperm.xlu0 %3111, %v3109
        %v3113 = vpop.permute.xlu0 %3112
        %v3115 = vmul.f32 %v2673, %v3113
        %v3116 = vmul.f32 %v2674, %v3113
        %v3117 = vadd.f32 %v3106, %v3115
        %v3118 = vadd.f32 %v3107, %v3116
        %s3119 = scalar_lea.vmem %s9, 104
        %v3120 = vld [vmem:[%s3119] sm:$0x3]
        %3122 = vset.pattern.permute.xlu0 0
        %3123 = vperm.xlu0 %3122, %v3120
        %v3124 = vpop.permute.xlu0 %3123
        %v3126 = vmul.f32 %v2693, %v3124
        %v3127 = vmul.f32 %v2694, %v3124
        %v3128 = vadd.f32 %v3117, %v3126
        %v3129 = vadd.f32 %v3118, %v3127
        %3130 = vrot.lane.b32.xlu0 %v3128, 64
        %v3131 = vpop.permute.xlu0 %3130
        %3132 = vrot.lane.b32.xlu0 %v3129, 64
        %v3133 = vpop.permute.xlu0 %3132
        %v3134 = vsel %vm2774, %v3131, %v3133
        %v3135 = vsel %vm2774, %v3133, %v3131
        %v3137 = vlaneseq
        %v3138 = vshrl.u32 %v3137, 7
        %v3139 = vsub.s32 0, %v3138
        %v3140 = vrot.slane %v710, %v3139
        %v3141 = vlaneseq
        %v3142 = vshrl.u32 %v3141, 7
        %v3143 = vsub.s32 1, %v3142
        %v3144 = vrot.slane %v710, %v3143
        %v3147 = vmul.f32 %v3140, %v3134
        %v3148 = vmul.f32 %v3144, %v3135
        %v3149 = vadd.f32 %v3053, %v3147
        %v3150 = vadd.f32 %v3054, %v3148
        %s3151 = scalar_lea.vmem %s9, 110
        %v3152 = vld [vmem:[%s3151] sm:$0x3]
        %3154 = vset.pattern.permute.xlu0 0
        %3155 = vperm.xlu0 %3154, %v3152
        %v3156 = vpop.permute.xlu0 %3155
        %v3158 = vmul.f32 %v2591, %v3156
        %v3159 = vmul.f32 %v2592, %v3156
        %s3160 = scalar_lea.vmem %s9, 112
        %v3161 = vld [vmem:[%s3160] sm:$0x3]
        %3163 = vset.pattern.permute.xlu0 0
        %3164 = vperm.xlu0 %3163, %v3161
        %v3165 = vpop.permute.xlu0 %3164
        %v3167 = vmul.f32 %v2611, %v3165
        %v3168 = vmul.f32 %v2612, %v3165
        %v3169 = vadd.f32 %v3158, %v3167
        %v3170 = vadd.f32 %v3159, %v3168
        %s3171 = scalar_lea.vmem %s9, 114
        %v3172 = vld [vmem:[%s3171] sm:$0x3]
        %3174 = vset.pattern.permute.xlu0 0
        %3175 = vperm.xlu0 %3174, %v3172
        %v3176 = vpop.permute.xlu0 %3175
        %v3178 = vmul.f32 %v2631, %v3176
        %v3179 = vmul.f32 %v2632, %v3176
        %v3180 = vadd.f32 %v3169, %v3178
        %v3181 = vadd.f32 %v3170, %v3179
        %s3182 = scalar_lea.vmem %s9, 116
        %v3183 = vld [vmem:[%s3182] sm:$0x3]
        %3185 = vset.pattern.permute.xlu0 0
        %3186 = vperm.xlu0 %3185, %v3183
        %v3187 = vpop.permute.xlu0 %3186
        %v3189 = vmul.f32 %v2633, %v3187
        %v3190 = vmul.f32 %v2634, %v3187
        %v3191 = vadd.f32 %v3180, %v3189
        %v3192 = vadd.f32 %v3181, %v3190
        %s3193 = scalar_lea.vmem %s9, 118
        %v3194 = vld [vmem:[%s3193] sm:$0x3]
        %3196 = vset.pattern.permute.xlu0 0
        %3197 = vperm.xlu0 %3196, %v3194
        %v3198 = vpop.permute.xlu0 %3197
        %v3200 = vmul.f32 %v2653, %v3198
        %v3201 = vmul.f32 %v2654, %v3198
        %v3202 = vadd.f32 %v3191, %v3200
        %v3203 = vadd.f32 %v3192, %v3201
        %s3204 = scalar_lea.vmem %s9, 120
        %v3205 = vld [vmem:[%s3204] sm:$0x3]
        %3207 = vset.pattern.permute.xlu0 0
        %3208 = vperm.xlu0 %3207, %v3205
        %v3209 = vpop.permute.xlu0 %3208
        %v3211 = vmul.f32 %v2673, %v3209
        %v3212 = vmul.f32 %v2674, %v3209
        %v3213 = vadd.f32 %v3202, %v3211
        %v3214 = vadd.f32 %v3203, %v3212
        %s3215 = scalar_lea.vmem %s9, 122
        %v3216 = vld [vmem:[%s3215] sm:$0x3]
        %3218 = vset.pattern.permute.xlu0 0
        %3219 = vperm.xlu0 %3218, %v3216
        %v3220 = vpop.permute.xlu0 %3219
        %v3222 = vmul.f32 %v2693, %v3220
        %v3223 = vmul.f32 %v2694, %v3220
        %v3224 = vadd.f32 %v3213, %v3222
        %v3225 = vadd.f32 %v3214, %v3223
        %v3227 = vlaneseq
        %v3228 = vshrl.u32 %v3227, 7
        %v3229 = vsub.s32 0, %v3228
        %v3230 = vrot.slane %v715, %v3229
        %v3231 = vlaneseq
        %v3232 = vshrl.u32 %v3231, 7
        %v3233 = vsub.s32 1, %v3232
        %v3234 = vrot.slane %v715, %v3233
        %v3237 = vmul.f32 %v3230, %v3225
        %v3238 = vmul.f32 %v3234, %v3224
        %v3239 = vadd.f32 %v3149, %v3237
        %v3240 = vadd.f32 %v3150, %v3238
        %s3241 = scalar_lea.vmem %s9, 128
        %v3242 = vld [vmem:[%s3241] sm:$0x3]
        %3244 = vset.pattern.permute.xlu0 0
        %3245 = vperm.xlu0 %3244, %v3242
        %v3246 = vpop.permute.xlu0 %3245
        %v3248 = vmul.f32 %v2591, %v3246
        %v3249 = vmul.f32 %v2592, %v3246
        %s3250 = scalar_lea.vmem %s9, 130
        %v3251 = vld [vmem:[%s3250] sm:$0x3]
        %3253 = vset.pattern.permute.xlu0 0
        %3254 = vperm.xlu0 %3253, %v3251
        %v3255 = vpop.permute.xlu0 %3254
        %v3257 = vmul.f32 %v2611, %v3255
        %v3258 = vmul.f32 %v2612, %v3255
        %v3259 = vadd.f32 %v3248, %v3257
        %v3260 = vadd.f32 %v3249, %v3258
        %s3261 = scalar_lea.vmem %s9, 132
        %v3262 = vld [vmem:[%s3261] sm:$0x3]
        %3264 = vset.pattern.permute.xlu0 0
        %3265 = vperm.xlu0 %3264, %v3262
        %v3266 = vpop.permute.xlu0 %3265
        %v3268 = vmul.f32 %v2631, %v3266
        %v3269 = vmul.f32 %v2632, %v3266
        %v3270 = vadd.f32 %v3259, %v3268
        %v3271 = vadd.f32 %v3260, %v3269
        %s3272 = scalar_lea.vmem %s9, 134
        %v3273 = vld [vmem:[%s3272] sm:$0x3]
        %3275 = vset.pattern.permute.xlu0 0
        %3276 = vperm.xlu0 %3275, %v3273
        %v3277 = vpop.permute.xlu0 %3276
        %v3279 = vmul.f32 %v2633, %v3277
        %v3280 = vmul.f32 %v2634, %v3277
        %v3281 = vadd.f32 %v3270, %v3279
        %v3282 = vadd.f32 %v3271, %v3280
        %s3283 = scalar_lea.vmem %s9, 136
        %v3284 = vld [vmem:[%s3283] sm:$0x3]
        %3286 = vset.pattern.permute.xlu0 0
        %3287 = vperm.xlu0 %3286, %v3284
        %v3288 = vpop.permute.xlu0 %3287
        %v3290 = vmul.f32 %v2653, %v3288
        %v3291 = vmul.f32 %v2654, %v3288
        %v3292 = vadd.f32 %v3281, %v3290
        %v3293 = vadd.f32 %v3282, %v3291
        %s3294 = scalar_lea.vmem %s9, 138
        %v3295 = vld [vmem:[%s3294] sm:$0x3]
        %3297 = vset.pattern.permute.xlu0 0
        %3298 = vperm.xlu0 %3297, %v3295
        %v3299 = vpop.permute.xlu0 %3298
        %v3301 = vmul.f32 %v2673, %v3299
        %v3302 = vmul.f32 %v2674, %v3299
        %v3303 = vadd.f32 %v3292, %v3301
        %v3304 = vadd.f32 %v3293, %v3302
        %s3305 = scalar_lea.vmem %s9, 140
        %v3306 = vld [vmem:[%s3305] sm:$0x3]
        %3308 = vset.pattern.permute.xlu0 0
        %3309 = vperm.xlu0 %3308, %v3306
        %v3310 = vpop.permute.xlu0 %3309
        %v3312 = vmul.f32 %v2693, %v3310
        %v3313 = vmul.f32 %v2694, %v3310
        %v3314 = vadd.f32 %v3303, %v3312
        %v3315 = vadd.f32 %v3304, %v3313
        %3316 = vrot.lane.b32.xlu0 %v3314, 64
        %v3317 = vpop.permute.xlu0 %3316
        %3318 = vrot.lane.b32.xlu0 %v3315, 64
        %v3319 = vpop.permute.xlu0 %3318
        %v3320 = vsel %vm2774, %v3317, %v3319
        %v3321 = vsel %vm2774, %v3319, %v3317
        %v3323 = vlaneseq
        %v3324 = vshrl.u32 %v3323, 7
        %v3325 = vsub.s32 0, %v3324
        %v3326 = vrot.slane %v720, %v3325
        %v3327 = vlaneseq
        %v3328 = vshrl.u32 %v3327, 7
        %v3329 = vsub.s32 1, %v3328
        %v3330 = vrot.slane %v720, %v3329
        %v3333 = vmul.f32 %v3326, %v3321
        %v3334 = vmul.f32 %v3330, %v3320
        %v3335 = vadd.f32 %v3239, %v3333
        %v3336 = vadd.f32 %v3240, %v3334
        %3338 = vset.pattern.permute.xlu0 0
        %3339 = vperm.xlu0 %3338, %v584
        %v3340 = vpop.permute.xlu0 %3339
        %v3342 = vadd.f32 %v3335, %v3340
        %v3343 = vadd.f32 %v3336, %v3340
        %v3344 = vld [vmem:[%s10] sm:$0x3]
        %3346 = vset.pattern.permute.xlu0 0
        %3347 = vperm.xlu0 %3346, %v585
        %v3348 = vpop.permute.xlu0 %3347
        %vm3350 = vcmask 15360
        %v3352 = vsel %vm3350, %v3344, 0
        %vm3354 = vcmask 1041408
        %v3356 = vsel %vm3354, %v3342, 0
        %v3359 = vsel %vm3354, %v3343, 0
        %3361 = vmatprep.subr.mxu0 %v3359
        %3362 = vmatpush1.msra.mxu0 %v3356
        %3363 = vmatprep.subr.mxu0 0.0
        %3364 = vmatpush1.msra.mxu0 0.0
        %3365 = vmatprep.subr.mxu0 0.0
        %3366 = vmatpush1.msra.mxu0 0.0
        %3367 = vmatprep.subr.mxu0 0.0
        %3368 = vmatpush1.msra.mxu0 0.0
        %3369 = vmatprep.subr.mxu0 0.0
        %3370 = vmatpush1.msra.mxu0 0.0
        %3371 = vmatprep.subr.mxu0 0.0
        %3372 = vmatpush1.msra.mxu0 0.0
        %3373 = vmatprep.subr.mxu0 0.0
        %3374 = vmatpush1.msra.mxu0 0.0
        %3375 = vmatprep.subr.mxu0 0.0
        %3376 = vmatpush1.msra.mxu0 0.0
        %3377 = vmatprep.subr.mxu0 0.0
        %3378 = vmatpush1.msra.mxu0 0.0
        %3379 = vmatprep.subr.mxu0 0.0
        %3380 = vmatpush1.msra.mxu0 0.0
        %3381 = vmatprep.subr.mxu0 0.0
        %3382 = vmatpush1.msra.mxu0 0.0
        %3383 = vmatprep.subr.mxu0 0.0
        %3384 = vmatpush1.msra.mxu0 0.0
        %3385 = vmatprep.subr.mxu0 0.0
        %3386 = vmatpush1.msra.mxu0 0.0
        %3387 = vmatprep.subr.mxu0 0.0
        %3388 = vmatpush1.msra.mxu0 0.0
        %3389 = vmatprep.subr.mxu0 0.0
        %3390 = vmatpush1.msra.mxu0 0.0
        %3391 = vmatprep.subr.mxu0 0.0
        %3392 = vmatpush1.msra.mxu0 0.0
        %3393 = vmatprep.subr.mxu0 0.0
        %3394 = vmatpush1.msra.mxu0 0.0
        %3395 = vmatprep.subr.mxu0 0.0
        %3396 = vmatpush1.msra.mxu0 0.0
        %3397 = vmatprep.subr.mxu0 0.0
        %3398 = vmatpush1.msra.mxu0 0.0
        %3399 = vmatprep.subr.mxu0 0.0
        %3400 = vmatpush1.msra.mxu0 0.0
        %3401 = vmatprep.subr.mxu0 0.0
        %3402 = vmatpush1.msra.mxu0 0.0
        %3403 = vmatprep.subr.mxu0 0.0
        %3404 = vmatpush1.msra.mxu0 0.0
        %3405 = vmatprep.subr.mxu0 0.0
        %3406 = vmatpush1.msra.mxu0 0.0
        %3407 = vmatprep.subr.mxu0 0.0
        %3408 = vmatpush1.msra.mxu0 0.0
        %3409 = vmatprep.subr.mxu0 0.0
        %3410 = vmatpush1.msra.mxu0 0.0
        %3411 = vmatprep.subr.mxu0 0.0
        %3412 = vmatpush1.msra.mxu0 0.0
        %3413 = vmatprep.subr.mxu0 0.0
        %3414 = vmatpush1.msra.mxu0 0.0
        %3415 = vmatprep.subr.mxu0 0.0
        %3416 = vmatpush1.msra.mxu0 0.0
        %3417 = vmatprep.subr.mxu0 0.0
        %3418 = vmatpush1.msra.mxu0 0.0
        %3419 = vmatprep.subr.mxu0 0.0
        %3420 = vmatpush1.msra.mxu0 0.0
        %3421 = vmatprep.subr.mxu0 0.0
        %3422 = vmatpush1.msra.mxu0 0.0
        %3423 = vmatprep.subr.mxu0 0.0
        %3424 = vmatpush1.msra.mxu0 0.0
        %3425 = vmatprep.mubr.f32.mxu0 0.0
        %3426 = vmatmul.mubr.f32.gmra.mrb[0].mxu0 %v3352
        %v3427 = vpop.f32.mrb[0].mxu0
        %v3428 = vadd.f32 %v3348, %v3427
        %v3429 = vpop.f32.mrb[0].mxu0
        %v3430 = vadd.f32 %v3348, %v3429
        %3431 = vdwg.mxu0
        %v3432 = vmul.f32 %v3428, %v2571
        %v3433 = vmul.f32 %v3430, %v2572
        %3434 = vrot.lane.b32.xlu0 %v1005, 2
        %v3435 = vpop.permute.xlu0 %3434
        %3436 = vrot.lane.b32.xlu0 %v1007, 2
        %v3437 = vpop.permute.xlu0 %3436
        %v3438 = vsel %vm1195, %v3435, %v3437
        %v3439 = vsel %vm1195, %v3437, %v3435
        %v3440 = vmul.f32 %v1202, %v3439
        %v3441 = vmul.f32 %v1206, %v3438
        %3442 = vrot.lane.b32.xlu0 %v1005, 1
        %v3443 = vpop.permute.xlu0 %3442
        %3444 = vrot.lane.b32.xlu0 %v1007, 1
        %v3445 = vpop.permute.xlu0 %3444
        %v3446 = vsel %vm1215, %v3443, %v3445
        %v3447 = vsel %vm1215, %v3445, %v3443
        %v3448 = vmul.f32 %v1222, %v3447
        %v3449 = vmul.f32 %v1226, %v3446
        %v3450 = vmul.f32 %v1235, %v1005
        %v3451 = vmul.f32 %v1239, %v1007
        %3452 = vrot.lane.b32.xlu0 %v1005, 127
        %v3453 = vpop.permute.xlu0 %3452
        %3454 = vrot.lane.b32.xlu0 %v1007, 127
        %v3455 = vpop.permute.xlu0 %3454
        %v3456 = vsel %vm1248, %v3453, %v3455
        %v3457 = vsel %vm1248, %v3455, %v3453
        %v3458 = vmul.f32 %v1255, %v3456
        %v3459 = vmul.f32 %v1259, %v3457
        %3460 = vrot.lane.b32.xlu0 %v1005, 126
        %v3461 = vpop.permute.xlu0 %3460
        %3462 = vrot.lane.b32.xlu0 %v1007, 126
        %v3463 = vpop.permute.xlu0 %3462
        %v3464 = vsel %vm1268, %v3461, %v3463
        %v3465 = vsel %vm1268, %v3463, %v3461
        %v3466 = vmul.f32 %v1275, %v3464
        %v3467 = vmul.f32 %v1279, %v3465
        %v3468 = vld [vmem:[%s12] sm:$0x3]
        %3470 = vset.pattern.permute.xlu0 0
        %3471 = vperm.xlu0 %3470, %v3468
        %v3472 = vpop.permute.xlu0 %3471
        %v3474 = vmul.f32 %v3440, %v3472
        %v3475 = vmul.f32 %v3441, %v3472
        %s3476 = scalar_lea.vmem %s12, 2
        %v3477 = vld [vmem:[%s3476] sm:$0x3]
        %3479 = vset.pattern.permute.xlu0 0
        %3480 = vperm.xlu0 %3479, %v3477
        %v3481 = vpop.permute.xlu0 %3480
        %v3483 = vmul.f32 %v3448, %v3481
        %v3484 = vmul.f32 %v3449, %v3481
        %v3485 = vadd.f32 %v3474, %v3483
        %v3486 = vadd.f32 %v3475, %v3484
        %s3487 = scalar_lea.vmem %s12, 4
        %v3488 = vld [vmem:[%s3487] sm:$0x3]
        %3490 = vset.pattern.permute.xlu0 0
        %3491 = vperm.xlu0 %3490, %v3488
        %v3492 = vpop.permute.xlu0 %3491
        %v3494 = vmul.f32 %v3450, %v3492
        %v3495 = vmul.f32 %v3451, %v3492
        %v3496 = vadd.f32 %v3485, %v3494
        %v3497 = vadd.f32 %v3486, %v3495
        %s3498 = scalar_lea.vmem %s12, 6
        %v3499 = vld [vmem:[%s3498] sm:$0x3]
        %3501 = vset.pattern.permute.xlu0 0
        %3502 = vperm.xlu0 %3501, %v3499
        %v3503 = vpop.permute.xlu0 %3502
        %v3505 = vmul.f32 %v3458, %v3503
        %v3506 = vmul.f32 %v3459, %v3503
        %v3507 = vadd.f32 %v3496, %v3505
        %v3508 = vadd.f32 %v3497, %v3506
        %s3509 = scalar_lea.vmem %s12, 8
        %v3510 = vld [vmem:[%s3509] sm:$0x3]
        %3512 = vset.pattern.permute.xlu0 0
        %3513 = vperm.xlu0 %3512, %v3510
        %v3514 = vpop.permute.xlu0 %3513
        %v3516 = vmul.f32 %v3466, %v3514
        %v3517 = vmul.f32 %v3467, %v3514
        %v3518 = vadd.f32 %v3507, %v3516
        %v3519 = vadd.f32 %v3508, %v3517
        %3520 = vrot.lane.b32.xlu0 %v3518, 32
        %v3521 = vpop.permute.xlu0 %3520
        %3522 = vrot.lane.b32.xlu0 %v3519, 32
        %v3523 = vpop.permute.xlu0 %3522
        %v3524 = vsel %vm1477, %v3521, %v3523
        %v3525 = vsel %vm1477, %v3523, %v3521
        %v3526 = vmul.f32 %v1484, %v3525
        %v3527 = vmul.f32 %v1488, %v3524
        %s3528 = scalar_lea.vmem %s12, 10
        %v3529 = vld [vmem:[%s3528] sm:$0x3]
        %3531 = vset.pattern.permute.xlu0 0
        %3532 = vperm.xlu0 %3531, %v3529
        %v3533 = vpop.permute.xlu0 %3532
        %v3535 = vmul.f32 %v3440, %v3533
        %v3536 = vmul.f32 %v3441, %v3533
        %s3537 = scalar_lea.vmem %s12, 12
        %v3538 = vld [vmem:[%s3537] sm:$0x3]
        %3540 = vset.pattern.permute.xlu0 0
        %3541 = vperm.xlu0 %3540, %v3538
        %v3542 = vpop.permute.xlu0 %3541
        %v3544 = vmul.f32 %v3448, %v3542
        %v3545 = vmul.f32 %v3449, %v3542
        %v3546 = vadd.f32 %v3535, %v3544
        %v3547 = vadd.f32 %v3536, %v3545
        %s3548 = scalar_lea.vmem %s12, 14
        %v3549 = vld [vmem:[%s3548] sm:$0x3]
        %3551 = vset.pattern.permute.xlu0 0
        %3552 = vperm.xlu0 %3551, %v3549
        %v3553 = vpop.permute.xlu0 %3552
        %v3555 = vmul.f32 %v3450, %v3553
        %v3556 = vmul.f32 %v3451, %v3553
        %v3557 = vadd.f32 %v3546, %v3555
        %v3558 = vadd.f32 %v3547, %v3556
        %s3559 = scalar_lea.vmem %s12, 16
        %v3560 = vld [vmem:[%s3559] sm:$0x3]
        %3562 = vset.pattern.permute.xlu0 0
        %3563 = vperm.xlu0 %3562, %v3560
        %v3564 = vpop.permute.xlu0 %3563
        %v3566 = vmul.f32 %v3458, %v3564
        %v3567 = vmul.f32 %v3459, %v3564
        %v3568 = vadd.f32 %v3557, %v3566
        %v3569 = vadd.f32 %v3558, %v3567
        %s3570 = scalar_lea.vmem %s12, 18
        %v3571 = vld [vmem:[%s3570] sm:$0x3]
        %3573 = vset.pattern.permute.xlu0 0
        %3574 = vperm.xlu0 %3573, %v3571
        %v3575 = vpop.permute.xlu0 %3574
        %v3577 = vmul.f32 %v3466, %v3575
        %v3578 = vmul.f32 %v3467, %v3575
        %v3579 = vadd.f32 %v3568, %v3577
        %v3580 = vadd.f32 %v3569, %v3578
        %3581 = vrot.lane.b32.xlu0 %v3579, 16
        %v3582 = vpop.permute.xlu0 %3581
        %3583 = vrot.lane.b32.xlu0 %v3580, 16
        %v3584 = vpop.permute.xlu0 %3583
        %v3585 = vsel %vm1574, %v3582, %v3584
        %v3586 = vsel %vm1574, %v3584, %v3582
        %v3587 = vmul.f32 %v1581, %v3586
        %v3588 = vmul.f32 %v1585, %v3585
        %v3589 = vadd.f32 %v3526, %v3587
        %v3590 = vadd.f32 %v3527, %v3588
        %s3591 = scalar_lea.vmem %s12, 20
        %v3592 = vld [vmem:[%s3591] sm:$0x3]
        %3594 = vset.pattern.permute.xlu0 0
        %3595 = vperm.xlu0 %3594, %v3592
        %v3596 = vpop.permute.xlu0 %3595
        %v3598 = vmul.f32 %v3440, %v3596
        %v3599 = vmul.f32 %v3441, %v3596
        %s3600 = scalar_lea.vmem %s12, 22
        %v3601 = vld [vmem:[%s3600] sm:$0x3]
        %3603 = vset.pattern.permute.xlu0 0
        %3604 = vperm.xlu0 %3603, %v3601
        %v3605 = vpop.permute.xlu0 %3604
        %v3607 = vmul.f32 %v3448, %v3605
        %v3608 = vmul.f32 %v3449, %v3605
        %v3609 = vadd.f32 %v3598, %v3607
        %v3610 = vadd.f32 %v3599, %v3608
        %s3611 = scalar_lea.vmem %s12, 24
        %v3612 = vld [vmem:[%s3611] sm:$0x3]
        %3614 = vset.pattern.permute.xlu0 0
        %3615 = vperm.xlu0 %3614, %v3612
        %v3616 = vpop.permute.xlu0 %3615
        %v3618 = vmul.f32 %v3450, %v3616
        %v3619 = vmul.f32 %v3451, %v3616
        %v3620 = vadd.f32 %v3609, %v3618
        %v3621 = vadd.f32 %v3610, %v3619
        %s3622 = scalar_lea.vmem %s12, 26
        %v3623 = vld [vmem:[%s3622] sm:$0x3]
        %3625 = vset.pattern.permute.xlu0 0
        %3626 = vperm.xlu0 %3625, %v3623
        %v3627 = vpop.permute.xlu0 %3626
        %v3629 = vmul.f32 %v3458, %v3627
        %v3630 = vmul.f32 %v3459, %v3627
        %v3631 = vadd.f32 %v3620, %v3629
        %v3632 = vadd.f32 %v3621, %v3630
        %s3633 = scalar_lea.vmem %s12, 28
        %v3634 = vld [vmem:[%s3633] sm:$0x3]
        %3636 = vset.pattern.permute.xlu0 0
        %3637 = vperm.xlu0 %3636, %v3634
        %v3638 = vpop.permute.xlu0 %3637
        %v3640 = vmul.f32 %v3466, %v3638
        %v3641 = vmul.f32 %v3467, %v3638
        %v3642 = vadd.f32 %v3631, %v3640
        %v3643 = vadd.f32 %v3632, %v3641
        %v3644 = vmul.f32 %v1671, %v3642
        %v3645 = vmul.f32 %v1675, %v3643
        %v3646 = vadd.f32 %v3589, %v3644
        %v3647 = vadd.f32 %v3590, %v3645
        %s3648 = scalar_lea.vmem %s12, 30
        %v3649 = vld [vmem:[%s3648] sm:$0x3]
        %3651 = vset.pattern.permute.xlu0 0
        %3652 = vperm.xlu0 %3651, %v3649
        %v3653 = vpop.permute.xlu0 %3652
        %v3655 = vmul.f32 %v3440, %v3653
        %v3656 = vmul.f32 %v3441, %v3653
        %s3657 = scalar_lea.vmem %s12, 32
        %v3658 = vld [vmem:[%s3657] sm:$0x3]
        %3660 = vset.pattern.permute.xlu0 0
        %3661 = vperm.xlu0 %3660, %v3658
        %v3662 = vpop.permute.xlu0 %3661
        %v3664 = vmul.f32 %v3448, %v3662
        %v3665 = vmul.f32 %v3449, %v3662
        %v3666 = vadd.f32 %v3655, %v3664
        %v3667 = vadd.f32 %v3656, %v3665
        %s3668 = scalar_lea.vmem %s12, 34
        %v3669 = vld [vmem:[%s3668] sm:$0x3]
        %3671 = vset.pattern.permute.xlu0 0
        %3672 = vperm.xlu0 %3671, %v3669
        %v3673 = vpop.permute.xlu0 %3672
        %v3675 = vmul.f32 %v3450, %v3673
        %v3676 = vmul.f32 %v3451, %v3673
        %v3677 = vadd.f32 %v3666, %v3675
        %v3678 = vadd.f32 %v3667, %v3676
        %s3679 = scalar_lea.vmem %s12, 36
        %v3680 = vld [vmem:[%s3679] sm:$0x3]
        %3682 = vset.pattern.permute.xlu0 0
        %3683 = vperm.xlu0 %3682, %v3680
        %v3684 = vpop.permute.xlu0 %3683
        %v3686 = vmul.f32 %v3458, %v3684
        %v3687 = vmul.f32 %v3459, %v3684
        %v3688 = vadd.f32 %v3677, %v3686
        %v3689 = vadd.f32 %v3678, %v3687
        %s3690 = scalar_lea.vmem %s12, 38
        %v3691 = vld [vmem:[%s3690] sm:$0x3]
        %3693 = vset.pattern.permute.xlu0 0
        %3694 = vperm.xlu0 %3693, %v3691
        %v3695 = vpop.permute.xlu0 %3694
        %v3697 = vmul.f32 %v3466, %v3695
        %v3698 = vmul.f32 %v3467, %v3695
        %v3699 = vadd.f32 %v3688, %v3697
        %v3700 = vadd.f32 %v3689, %v3698
        %3701 = vrot.lane.b32.xlu0 %v3699, 112
        %v3702 = vpop.permute.xlu0 %3701
        %3703 = vrot.lane.b32.xlu0 %v3700, 112
        %v3704 = vpop.permute.xlu0 %3703
        %v3705 = vsel %vm1761, %v3702, %v3704
        %v3706 = vsel %vm1761, %v3704, %v3702
        %v3707 = vmul.f32 %v1768, %v3705
        %v3708 = vmul.f32 %v1772, %v3706
        %v3709 = vadd.f32 %v3646, %v3707
        %v3710 = vadd.f32 %v3647, %v3708
        %s3711 = scalar_lea.vmem %s12, 40
        %v3712 = vld [vmem:[%s3711] sm:$0x3]
        %3714 = vset.pattern.permute.xlu0 0
        %3715 = vperm.xlu0 %3714, %v3712
        %v3716 = vpop.permute.xlu0 %3715
        %v3718 = vmul.f32 %v3440, %v3716
        %v3719 = vmul.f32 %v3441, %v3716
        %s3720 = scalar_lea.vmem %s12, 42
        %v3721 = vld [vmem:[%s3720] sm:$0x3]
        %3723 = vset.pattern.permute.xlu0 0
        %3724 = vperm.xlu0 %3723, %v3721
        %v3725 = vpop.permute.xlu0 %3724
        %v3727 = vmul.f32 %v3448, %v3725
        %v3728 = vmul.f32 %v3449, %v3725
        %v3729 = vadd.f32 %v3718, %v3727
        %v3730 = vadd.f32 %v3719, %v3728
        %s3731 = scalar_lea.vmem %s12, 44
        %v3732 = vld [vmem:[%s3731] sm:$0x3]
        %3734 = vset.pattern.permute.xlu0 0
        %3735 = vperm.xlu0 %3734, %v3732
        %v3736 = vpop.permute.xlu0 %3735
        %v3738 = vmul.f32 %v3450, %v3736
        %v3739 = vmul.f32 %v3451, %v3736
        %v3740 = vadd.f32 %v3729, %v3738
        %v3741 = vadd.f32 %v3730, %v3739
        %s3742 = scalar_lea.vmem %s12, 46
        %v3743 = vld [vmem:[%s3742] sm:$0x3]
        %3745 = vset.pattern.permute.xlu0 0
        %3746 = vperm.xlu0 %3745, %v3743
        %v3747 = vpop.permute.xlu0 %3746
        %v3749 = vmul.f32 %v3458, %v3747
        %v3750 = vmul.f32 %v3459, %v3747
        %v3751 = vadd.f32 %v3740, %v3749
        %v3752 = vadd.f32 %v3741, %v3750
        %s3753 = scalar_lea.vmem %s12, 48
        %v3754 = vld [vmem:[%s3753] sm:$0x3]
        %3756 = vset.pattern.permute.xlu0 0
        %3757 = vperm.xlu0 %3756, %v3754
        %v3758 = vpop.permute.xlu0 %3757
        %v3760 = vmul.f32 %v3466, %v3758
        %v3761 = vmul.f32 %v3467, %v3758
        %v3762 = vadd.f32 %v3751, %v3760
        %v3763 = vadd.f32 %v3752, %v3761
        %3764 = vrot.lane.b32.xlu0 %v3762, 96
        %v3765 = vpop.permute.xlu0 %3764
        %3766 = vrot.lane.b32.xlu0 %v3763, 96
        %v3767 = vpop.permute.xlu0 %3766
        %v3768 = vsel %vm1858, %v3765, %v3767
        %v3769 = vsel %vm1858, %v3767, %v3765
        %v3770 = vmul.f32 %v1865, %v3768
        %v3771 = vmul.f32 %v1869, %v3769
        %v3772 = vadd.f32 %v3709, %v3770
        %v3773 = vadd.f32 %v3710, %v3771
        %3775 = vset.pattern.permute.xlu0 0
        %3776 = vperm.xlu0 %3775, %v587
        %v3777 = vpop.permute.xlu0 %3776
        %v3779 = vadd.f32 %v3772, %v3777
        %v3780 = vadd.f32 %v3773, %v3777
        %v3781 = vld [vmem:[%s15] sm:$0x3]
        %3783 = vset.pattern.permute.xlu0 0
        %3784 = vperm.xlu0 %3783, %v3781
        %v3785 = vpop.permute.xlu0 %3784
        %v3787 = vmul.f32 %v3440, %v3785
        %v3788 = vmul.f32 %v3441, %v3785
        %s3789 = scalar_lea.vmem %s15, 2
        %v3790 = vld [vmem:[%s3789] sm:$0x3]
        %3792 = vset.pattern.permute.xlu0 0
        %3793 = vperm.xlu0 %3792, %v3790
        %v3794 = vpop.permute.xlu0 %3793
        %v3796 = vmul.f32 %v3448, %v3794
        %v3797 = vmul.f32 %v3449, %v3794
        %v3798 = vadd.f32 %v3787, %v3796
        %v3799 = vadd.f32 %v3788, %v3797
        %s3800 = scalar_lea.vmem %s15, 4
        %v3801 = vld [vmem:[%s3800] sm:$0x3]
        %3803 = vset.pattern.permute.xlu0 0
        %3804 = vperm.xlu0 %3803, %v3801
        %v3805 = vpop.permute.xlu0 %3804
        %v3807 = vmul.f32 %v3450, %v3805
        %v3808 = vmul.f32 %v3451, %v3805
        %v3809 = vadd.f32 %v3798, %v3807
        %v3810 = vadd.f32 %v3799, %v3808
        %s3811 = scalar_lea.vmem %s15, 6
        %v3812 = vld [vmem:[%s3811] sm:$0x3]
        %3814 = vset.pattern.permute.xlu0 0
        %3815 = vperm.xlu0 %3814, %v3812
        %v3816 = vpop.permute.xlu0 %3815
        %v3818 = vmul.f32 %v3458, %v3816
        %v3819 = vmul.f32 %v3459, %v3816
        %v3820 = vadd.f32 %v3809, %v3818
        %v3821 = vadd.f32 %v3810, %v3819
        %s3822 = scalar_lea.vmem %s15, 8
        %v3823 = vld [vmem:[%s3822] sm:$0x3]
        %3825 = vset.pattern.permute.xlu0 0
        %3826 = vperm.xlu0 %3825, %v3823
        %v3827 = vpop.permute.xlu0 %3826
        %v3829 = vmul.f32 %v3466, %v3827
        %v3830 = vmul.f32 %v3467, %v3827
        %v3831 = vadd.f32 %v3820, %v3829
        %v3832 = vadd.f32 %v3821, %v3830
        %3833 = vrot.lane.b32.xlu0 %v3831, 32
        %v3834 = vpop.permute.xlu0 %3833
        %3835 = vrot.lane.b32.xlu0 %v3832, 32
        %v3836 = vpop.permute.xlu0 %3835
        %v3837 = vsel %vm1477, %v3834, %v3836
        %v3838 = vsel %vm1477, %v3836, %v3834
        %v3839 = vmul.f32 %v1484, %v3838
        %v3840 = vmul.f32 %v1488, %v3837
        %s3841 = scalar_lea.vmem %s15, 10
        %v3842 = vld [vmem:[%s3841] sm:$0x3]
        %3844 = vset.pattern.permute.xlu0 0
        %3845 = vperm.xlu0 %3844, %v3842
        %v3846 = vpop.permute.xlu0 %3845
        %v3848 = vmul.f32 %v3440, %v3846
        %v3849 = vmul.f32 %v3441, %v3846
        %s3850 = scalar_lea.vmem %s15, 12
        %v3851 = vld [vmem:[%s3850] sm:$0x3]
        %3853 = vset.pattern.permute.xlu0 0
        %3854 = vperm.xlu0 %3853, %v3851
        %v3855 = vpop.permute.xlu0 %3854
        %v3857 = vmul.f32 %v3448, %v3855
        %v3858 = vmul.f32 %v3449, %v3855
        %v3859 = vadd.f32 %v3848, %v3857
        %v3860 = vadd.f32 %v3849, %v3858
        %s3861 = scalar_lea.vmem %s15, 14
        %v3862 = vld [vmem:[%s3861] sm:$0x3]
        %3864 = vset.pattern.permute.xlu0 0
        %3865 = vperm.xlu0 %3864, %v3862
        %v3866 = vpop.permute.xlu0 %3865
        %v3868 = vmul.f32 %v3450, %v3866
        %v3869 = vmul.f32 %v3451, %v3866
        %v3870 = vadd.f32 %v3859, %v3868
        %v3871 = vadd.f32 %v3860, %v3869
        %s3872 = scalar_lea.vmem %s15, 16
        %v3873 = vld [vmem:[%s3872] sm:$0x3]
        %3875 = vset.pattern.permute.xlu0 0
        %3876 = vperm.xlu0 %3875, %v3873
        %v3877 = vpop.permute.xlu0 %3876
        %v3879 = vmul.f32 %v3458, %v3877
        %v3880 = vmul.f32 %v3459, %v3877
        %v3881 = vadd.f32 %v3870, %v3879
        %v3882 = vadd.f32 %v3871, %v3880
        %s3883 = scalar_lea.vmem %s15, 18
        %v3884 = vld [vmem:[%s3883] sm:$0x3]
        %3886 = vset.pattern.permute.xlu0 0
        %3887 = vperm.xlu0 %3886, %v3884
        %v3888 = vpop.permute.xlu0 %3887
        %v3890 = vmul.f32 %v3466, %v3888
        %v3891 = vmul.f32 %v3467, %v3888
        %v3892 = vadd.f32 %v3881, %v3890
        %v3893 = vadd.f32 %v3882, %v3891
        %3894 = vrot.lane.b32.xlu0 %v3892, 16
        %v3895 = vpop.permute.xlu0 %3894
        %3896 = vrot.lane.b32.xlu0 %v3893, 16
        %v3897 = vpop.permute.xlu0 %3896
        %v3898 = vsel %vm1574, %v3895, %v3897
        %v3899 = vsel %vm1574, %v3897, %v3895
        %v3900 = vmul.f32 %v1581, %v3899
        %v3901 = vmul.f32 %v1585, %v3898
        %v3902 = vadd.f32 %v3839, %v3900
        %v3903 = vadd.f32 %v3840, %v3901
        %s3904 = scalar_lea.vmem %s15, 20
        %v3905 = vld [vmem:[%s3904] sm:$0x3]
        %3907 = vset.pattern.permute.xlu0 0
        %3908 = vperm.xlu0 %3907, %v3905
        %v3909 = vpop.permute.xlu0 %3908
        %v3911 = vmul.f32 %v3440, %v3909
        %v3912 = vmul.f32 %v3441, %v3909
        %s3913 = scalar_lea.vmem %s15, 22
        %v3914 = vld [vmem:[%s3913] sm:$0x3]
        %3916 = vset.pattern.permute.xlu0 0
        %3917 = vperm.xlu0 %3916, %v3914
        %v3918 = vpop.permute.xlu0 %3917
        %v3920 = vmul.f32 %v3448, %v3918
        %v3921 = vmul.f32 %v3449, %v3918
        %v3922 = vadd.f32 %v3911, %v3920
        %v3923 = vadd.f32 %v3912, %v3921
        %s3924 = scalar_lea.vmem %s15, 24
        %v3925 = vld [vmem:[%s3924] sm:$0x3]
        %3927 = vset.pattern.permute.xlu0 0
        %3928 = vperm.xlu0 %3927, %v3925
        %v3929 = vpop.permute.xlu0 %3928
        %v3931 = vmul.f32 %v3450, %v3929
        %v3932 = vmul.f32 %v3451, %v3929
        %v3933 = vadd.f32 %v3922, %v3931
        %v3934 = vadd.f32 %v3923, %v3932
        %s3935 = scalar_lea.vmem %s15, 26
        %v3936 = vld [vmem:[%s3935] sm:$0x3]
        %3938 = vset.pattern.permute.xlu0 0
        %3939 = vperm.xlu0 %3938, %v3936
        %v3940 = vpop.permute.xlu0 %3939
        %v3942 = vmul.f32 %v3458, %v3940
        %v3943 = vmul.f32 %v3459, %v3940
        %v3944 = vadd.f32 %v3933, %v3942
        %v3945 = vadd.f32 %v3934, %v3943
        %s3946 = scalar_lea.vmem %s15, 28
        %v3947 = vld [vmem:[%s3946] sm:$0x3]
        %3949 = vset.pattern.permute.xlu0 0
        %3950 = vperm.xlu0 %3949, %v3947
        %v3951 = vpop.permute.xlu0 %3950
        %v3953 = vmul.f32 %v3466, %v3951
        %v3954 = vmul.f32 %v3467, %v3951
        %v3955 = vadd.f32 %v3944, %v3953
        %v3956 = vadd.f32 %v3945, %v3954
        %v3957 = vmul.f32 %v1671, %v3955
        %v3958 = vmul.f32 %v1675, %v3956
        %v3959 = vadd.f32 %v3902, %v3957
        %v3960 = vadd.f32 %v3903, %v3958
        %s3961 = scalar_lea.vmem %s15, 30
        %v3962 = vld [vmem:[%s3961] sm:$0x3]
        %3964 = vset.pattern.permute.xlu0 0
        %3965 = vperm.xlu0 %3964, %v3962
        %v3966 = vpop.permute.xlu0 %3965
        %v3968 = vmul.f32 %v3440, %v3966
        %v3969 = vmul.f32 %v3441, %v3966
        %s3970 = scalar_lea.vmem %s15, 32
        %v3971 = vld [vmem:[%s3970] sm:$0x3]
        %3973 = vset.pattern.permute.xlu0 0
        %3974 = vperm.xlu0 %3973, %v3971
        %v3975 = vpop.permute.xlu0 %3974
        %v3977 = vmul.f32 %v3448, %v3975
        %v3978 = vmul.f32 %v3449, %v3975
        %v3979 = vadd.f32 %v3968, %v3977
        %v3980 = vadd.f32 %v3969, %v3978
        %s3981 = scalar_lea.vmem %s15, 34
        %v3982 = vld [vmem:[%s3981] sm:$0x3]
        %3984 = vset.pattern.permute.xlu0 0
        %3985 = vperm.xlu0 %3984, %v3982
        %v3986 = vpop.permute.xlu0 %3985
        %v3988 = vmul.f32 %v3450, %v3986
        %v3989 = vmul.f32 %v3451, %v3986
        %v3990 = vadd.f32 %v3979, %v3988
        %v3991 = vadd.f32 %v3980, %v3989
        %s3992 = scalar_lea.vmem %s15, 36
        %v3993 = vld [vmem:[%s3992] sm:$0x3]
        %3995 = vset.pattern.permute.xlu0 0
        %3996 = vperm.xlu0 %3995, %v3993
        %v3997 = vpop.permute.xlu0 %3996
        %v3999 = vmul.f32 %v3458, %v3997
        %v4000 = vmul.f32 %v3459, %v3997
        %v4001 = vadd.f32 %v3990, %v3999
        %v4002 = vadd.f32 %v3991, %v4000
        %s4003 = scalar_lea.vmem %s15, 38
        %v4004 = vld [vmem:[%s4003] sm:$0x3]
        %4006 = vset.pattern.permute.xlu0 0
        %4007 = vperm.xlu0 %4006, %v4004
        %v4008 = vpop.permute.xlu0 %4007
        %v4010 = vmul.f32 %v3466, %v4008
        %v4011 = vmul.f32 %v3467, %v4008
        %v4012 = vadd.f32 %v4001, %v4010
        %v4013 = vadd.f32 %v4002, %v4011
        %4014 = vrot.lane.b32.xlu0 %v4012, 112
        %v4015 = vpop.permute.xlu0 %4014
        %4016 = vrot.lane.b32.xlu0 %v4013, 112
        %v4017 = vpop.permute.xlu0 %4016
        %v4018 = vsel %vm1761, %v4015, %v4017
        %v4019 = vsel %vm1761, %v4017, %v4015
        %v4020 = vmul.f32 %v1768, %v4018
        %v4021 = vmul.f32 %v1772, %v4019
        %v4022 = vadd.f32 %v3959, %v4020
        %v4023 = vadd.f32 %v3960, %v4021
        %s4024 = scalar_lea.vmem %s15, 40
        %v4025 = vld [vmem:[%s4024] sm:$0x3]
        %4027 = vset.pattern.permute.xlu0 0
        %4028 = vperm.xlu0 %4027, %v4025
        %v4029 = vpop.permute.xlu0 %4028
        %v4031 = vmul.f32 %v3440, %v4029
        %v4032 = vmul.f32 %v3441, %v4029
        %s4033 = scalar_lea.vmem %s15, 42
        %v4034 = vld [vmem:[%s4033] sm:$0x3]
        %4036 = vset.pattern.permute.xlu0 0
        %4037 = vperm.xlu0 %4036, %v4034
        %v4038 = vpop.permute.xlu0 %4037
        %v4040 = vmul.f32 %v3448, %v4038
        %v4041 = vmul.f32 %v3449, %v4038
        %v4042 = vadd.f32 %v4031, %v4040
        %v4043 = vadd.f32 %v4032, %v4041
        %s4044 = scalar_lea.vmem %s15, 44
        %v4045 = vld [vmem:[%s4044] sm:$0x3]
        %4047 = vset.pattern.permute.xlu0 0
        %4048 = vperm.xlu0 %4047, %v4045
        %v4049 = vpop.permute.xlu0 %4048
        %v4051 = vmul.f32 %v3450, %v4049
        %v4052 = vmul.f32 %v3451, %v4049
        %v4053 = vadd.f32 %v4042, %v4051
        %v4054 = vadd.f32 %v4043, %v4052
        %s4055 = scalar_lea.vmem %s15, 46
        %v4056 = vld [vmem:[%s4055] sm:$0x3]
        %4058 = vset.pattern.permute.xlu0 0
        %4059 = vperm.xlu0 %4058, %v4056
        %v4060 = vpop.permute.xlu0 %4059
        %v4062 = vmul.f32 %v3458, %v4060
        %v4063 = vmul.f32 %v3459, %v4060
        %v4064 = vadd.f32 %v4053, %v4062
        %v4065 = vadd.f32 %v4054, %v4063
        %s4066 = scalar_lea.vmem %s15, 48
        %v4067 = vld [vmem:[%s4066] sm:$0x3]
        %4069 = vset.pattern.permute.xlu0 0
        %4070 = vperm.xlu0 %4069, %v4067
        %v4071 = vpop.permute.xlu0 %4070
        %v4073 = vmul.f32 %v3466, %v4071
        %v4074 = vmul.f32 %v3467, %v4071
        %v4075 = vadd.f32 %v4064, %v4073
        %v4076 = vadd.f32 %v4065, %v4074
        %4077 = vrot.lane.b32.xlu0 %v4075, 96
        %v4078 = vpop.permute.xlu0 %4077
        %4079 = vrot.lane.b32.xlu0 %v4076, 96
        %v4080 = vpop.permute.xlu0 %4079
        %v4081 = vsel %vm1858, %v4078, %v4080
        %v4082 = vsel %vm1858, %v4080, %v4078
        %v4083 = vmul.f32 %v1865, %v4081
        %v4084 = vmul.f32 %v1869, %v4082
        %v4085 = vadd.f32 %v4022, %v4083
        %v4086 = vadd.f32 %v4023, %v4084
        %4088 = vset.pattern.permute.xlu0 0
        %4089 = vperm.xlu0 %4088, %v590
        %v4090 = vpop.permute.xlu0 %4089
        %v4092 = vadd.f32 %v4085, %v4090
        %v4093 = vadd.f32 %v4086, %v4090
        %4094 = vrot.lane.b32.xlu0 %v3779, 9
        %v4095 = vpop.permute.xlu0 %4094
        %4096 = vrot.lane.b32.xlu0 %v3780, 9
        %v4097 = vpop.permute.xlu0 %4096
        %vm4098 = vcmp.lt.s32.totalorder %v1174, 9
        %v4099 = vsel %vm4098, %v4095, %v4097
        %v4100 = vsel %vm4098, %v4097, %v4095
        %v4102 = vlaneseq
        %v4103 = vshrl.u32 %v4102, 7
        %v4104 = vsub.s32 0, %v4103
        %v4105 = vrot.slane %v725, %v4104
        %v4106 = vlaneseq
        %v4107 = vshrl.u32 %v4106, 7
        %v4108 = vsub.s32 1, %v4107
        %v4109 = vrot.slane %v725, %v4108
        %v4112 = vmul.f32 %v4105, %v4100
        %v4113 = vmul.f32 %v4109, %v4099
        %4114 = vrot.lane.b32.xlu0 %v3779, 6
        %v4115 = vpop.permute.xlu0 %4114
        %4116 = vrot.lane.b32.xlu0 %v3780, 6
        %v4117 = vpop.permute.xlu0 %4116
        %vm4118 = vcmp.lt.s32.totalorder %v1174, 6
        %v4119 = vsel %vm4118, %v4115, %v4117
        %v4120 = vsel %vm4118, %v4117, %v4115
        %v4122 = vlaneseq
        %v4123 = vshrl.u32 %v4122, 7
        %v4124 = vsub.s32 0, %v4123
        %v4125 = vrot.slane %v730, %v4124
        %v4126 = vlaneseq
        %v4127 = vshrl.u32 %v4126, 7
        %v4128 = vsub.s32 1, %v4127
        %v4129 = vrot.slane %v730, %v4128
        %v4132 = vmul.f32 %v4125, %v4120
        %v4133 = vmul.f32 %v4129, %v4119
        %4134 = vrot.lane.b32.xlu0 %v3779, 3
        %v4135 = vpop.permute.xlu0 %4134
        %4136 = vrot.lane.b32.xlu0 %v3780, 3
        %v4137 = vpop.permute.xlu0 %4136
        %v4138 = vsel %vm1175, %v4135, %v4137
        %v4139 = vsel %vm1175, %v4137, %v4135
        %v4140 = vmul.f32 %v1182, %v4139
        %v4141 = vmul.f32 %v1186, %v4138
        %v4142 = vmul.f32 %v1235, %v3779
        %v4143 = vmul.f32 %v1239, %v3780
        %4144 = vrot.lane.b32.xlu0 %v3779, 125
        %v4145 = vpop.permute.xlu0 %4144
        %4146 = vrot.lane.b32.xlu0 %v3780, 125
        %v4147 = vpop.permute.xlu0 %4146
        %v4148 = vsel %vm1288, %v4145, %v4147
        %v4149 = vsel %vm1288, %v4147, %v4145
        %v4150 = vmul.f32 %v1295, %v4148
        %v4151 = vmul.f32 %v1299, %v4149
        %4152 = vrot.lane.b32.xlu0 %v3779, 122
        %v4153 = vpop.permute.xlu0 %4152
        %4154 = vrot.lane.b32.xlu0 %v3780, 122
        %v4155 = vpop.permute.xlu0 %4154
        %vm4156 = vcmp.lt.s32.totalorder %v1174, 122
        %v4157 = vsel %vm4156, %v4153, %v4155
        %v4158 = vsel %vm4156, %v4155, %v4153
        %v4160 = vlaneseq
        %v4161 = vshrl.u32 %v4160, 7
        %v4162 = vsub.s32 0, %v4161
        %v4163 = vrot.slane %v735, %v4162
        %v4164 = vlaneseq
        %v4165 = vshrl.u32 %v4164, 7
        %v4166 = vsub.s32 1, %v4165
        %v4167 = vrot.slane %v735, %v4166
        %v4170 = vmul.f32 %v4163, %v4157
        %v4171 = vmul.f32 %v4167, %v4158
        %4172 = vrot.lane.b32.xlu0 %v3779, 119
        %v4173 = vpop.permute.xlu0 %4172
        %4174 = vrot.lane.b32.xlu0 %v3780, 119
        %v4175 = vpop.permute.xlu0 %4174
        %vm4176 = vcmp.lt.s32.totalorder %v1174, 119
        %v4177 = vsel %vm4176, %v4173, %v4175
        %v4178 = vsel %vm4176, %v4175, %v4173
        %v4180 = vlaneseq
        %v4181 = vshrl.u32 %v4180, 7
        %v4182 = vsub.s32 0, %v4181
        %v4183 = vrot.slane %v740, %v4182
        %v4184 = vlaneseq
        %v4185 = vshrl.u32 %v4184, 7
        %v4186 = vsub.s32 1, %v4185
        %v4187 = vrot.slane %v740, %v4186
        %v4190 = vmul.f32 %v4183, %v4177
        %v4191 = vmul.f32 %v4187, %v4178
        %v4192 = vld [vmem:[%s13] sm:$0x3]
        %4194 = vset.pattern.permute.xlu0 0
        %4195 = vperm.xlu0 %4194, %v4192
        %v4196 = vpop.permute.xlu0 %4195
        %v4198 = vmul.f32 %v4112, %v4196
        %v4199 = vmul.f32 %v4113, %v4196
        %s4200 = scalar_lea.vmem %s13, 2
        %v4201 = vld [vmem:[%s4200] sm:$0x3]
        %4203 = vset.pattern.permute.xlu0 0
        %4204 = vperm.xlu0 %4203, %v4201
        %v4205 = vpop.permute.xlu0 %4204
        %v4207 = vmul.f32 %v4132, %v4205
        %v4208 = vmul.f32 %v4133, %v4205
        %v4209 = vadd.f32 %v4198, %v4207
        %v4210 = vadd.f32 %v4199, %v4208
        %s4211 = scalar_lea.vmem %s13, 4
        %v4212 = vld [vmem:[%s4211] sm:$0x3]
        %4214 = vset.pattern.permute.xlu0 0
        %4215 = vperm.xlu0 %4214, %v4212
        %v4216 = vpop.permute.xlu0 %4215
        %v4218 = vmul.f32 %v4140, %v4216
        %v4219 = vmul.f32 %v4141, %v4216
        %v4220 = vadd.f32 %v4209, %v4218
        %v4221 = vadd.f32 %v4210, %v4219
        %s4222 = scalar_lea.vmem %s13, 6
        %v4223 = vld [vmem:[%s4222] sm:$0x3]
        %4225 = vset.pattern.permute.xlu0 0
        %4226 = vperm.xlu0 %4225, %v4223
        %v4227 = vpop.permute.xlu0 %4226
        %v4229 = vmul.f32 %v4142, %v4227
        %v4230 = vmul.f32 %v4143, %v4227
        %v4231 = vadd.f32 %v4220, %v4229
        %v4232 = vadd.f32 %v4221, %v4230
        %s4233 = scalar_lea.vmem %s13, 8
        %v4234 = vld [vmem:[%s4233] sm:$0x3]
        %4236 = vset.pattern.permute.xlu0 0
        %4237 = vperm.xlu0 %4236, %v4234
        %v4238 = vpop.permute.xlu0 %4237
        %v4240 = vmul.f32 %v4150, %v4238
        %v4241 = vmul.f32 %v4151, %v4238
        %v4242 = vadd.f32 %v4231, %v4240
        %v4243 = vadd.f32 %v4232, %v4241
        %s4244 = scalar_lea.vmem %s13, 10
        %v4245 = vld [vmem:[%s4244] sm:$0x3]
        %4247 = vset.pattern.permute.xlu0 0
        %4248 = vperm.xlu0 %4247, %v4245
        %v4249 = vpop.permute.xlu0 %4248
        %v4251 = vmul.f32 %v4170, %v4249
        %v4252 = vmul.f32 %v4171, %v4249
        %v4253 = vadd.f32 %v4242, %v4251
        %v4254 = vadd.f32 %v4243, %v4252
        %s4255 = scalar_lea.vmem %s13, 12
        %v4256 = vld [vmem:[%s4255] sm:$0x3]
        %4258 = vset.pattern.permute.xlu0 0
        %4259 = vperm.xlu0 %4258, %v4256
        %v4260 = vpop.permute.xlu0 %4259
        %v4262 = vmul.f32 %v4190, %v4260
        %v4263 = vmul.f32 %v4191, %v4260
        %v4264 = vadd.f32 %v4253, %v4262
        %v4265 = vadd.f32 %v4254, %v4263
        %4266 = vrot.lane.b32.xlu0 %v4264, 16
        %v4267 = vpop.permute.xlu0 %4266
        %4268 = vrot.lane.b32.xlu0 %v4265, 16
        %v4269 = vpop.permute.xlu0 %4268
        %v4270 = vsel %vm1574, %v4267, %v4269
        %v4271 = vsel %vm1574, %v4269, %v4267
        %v4273 = vlaneseq
        %v4274 = vshrl.u32 %v4273, 7
        %v4275 = vsub.s32 0, %v4274
        %v4276 = vrot.slane %v745, %v4275
        %v4277 = vlaneseq
        %v4278 = vshrl.u32 %v4277, 7
        %v4279 = vsub.s32 1, %v4278
        %v4280 = vrot.slane %v745, %v4279
        %v4283 = vmul.f32 %v4276, %v4270
        %v4284 = vmul.f32 %v4280, %v4271
        %s4285 = scalar_lea.vmem %s13, 14
        %v4286 = vld [vmem:[%s4285] sm:$0x3]
        %4288 = vset.pattern.permute.xlu0 0
        %4289 = vperm.xlu0 %4288, %v4286
        %v4290 = vpop.permute.xlu0 %4289
        %v4292 = vmul.f32 %v4112, %v4290
        %v4293 = vmul.f32 %v4113, %v4290
        %s4294 = scalar_lea.vmem %s13, 16
        %v4295 = vld [vmem:[%s4294] sm:$0x3]
        %4297 = vset.pattern.permute.xlu0 0
        %4298 = vperm.xlu0 %4297, %v4295
        %v4299 = vpop.permute.xlu0 %4298
        %v4301 = vmul.f32 %v4132, %v4299
        %v4302 = vmul.f32 %v4133, %v4299
        %v4303 = vadd.f32 %v4292, %v4301
        %v4304 = vadd.f32 %v4293, %v4302
        %s4305 = scalar_lea.vmem %s13, 18
        %v4306 = vld [vmem:[%s4305] sm:$0x3]
        %4308 = vset.pattern.permute.xlu0 0
        %4309 = vperm.xlu0 %4308, %v4306
        %v4310 = vpop.permute.xlu0 %4309
        %v4312 = vmul.f32 %v4140, %v4310
        %v4313 = vmul.f32 %v4141, %v4310
        %v4314 = vadd.f32 %v4303, %v4312
        %v4315 = vadd.f32 %v4304, %v4313
        %s4316 = scalar_lea.vmem %s13, 20
        %v4317 = vld [vmem:[%s4316] sm:$0x3]
        %4319 = vset.pattern.permute.xlu0 0
        %4320 = vperm.xlu0 %4319, %v4317
        %v4321 = vpop.permute.xlu0 %4320
        %v4323 = vmul.f32 %v4142, %v4321
        %v4324 = vmul.f32 %v4143, %v4321
        %v4325 = vadd.f32 %v4314, %v4323
        %v4326 = vadd.f32 %v4315, %v4324
        %s4327 = scalar_lea.vmem %s13, 22
        %v4328 = vld [vmem:[%s4327] sm:$0x3]
        %4330 = vset.pattern.permute.xlu0 0
        %4331 = vperm.xlu0 %4330, %v4328
        %v4332 = vpop.permute.xlu0 %4331
        %v4334 = vmul.f32 %v4150, %v4332
        %v4335 = vmul.f32 %v4151, %v4332
        %v4336 = vadd.f32 %v4325, %v4334
        %v4337 = vadd.f32 %v4326, %v4335
        %s4338 = scalar_lea.vmem %s13, 24
        %v4339 = vld [vmem:[%s4338] sm:$0x3]
        %4341 = vset.pattern.permute.xlu0 0
        %4342 = vperm.xlu0 %4341, %v4339
        %v4343 = vpop.permute.xlu0 %4342
        %v4345 = vmul.f32 %v4170, %v4343
        %v4346 = vmul.f32 %v4171, %v4343
        %v4347 = vadd.f32 %v4336, %v4345
        %v4348 = vadd.f32 %v4337, %v4346
        %s4349 = scalar_lea.vmem %s13, 26
        %v4350 = vld [vmem:[%s4349] sm:$0x3]
        %4352 = vset.pattern.permute.xlu0 0
        %4353 = vperm.xlu0 %4352, %v4350
        %v4354 = vpop.permute.xlu0 %4353
        %v4356 = vmul.f32 %v4190, %v4354
        %v4357 = vmul.f32 %v4191, %v4354
        %v4358 = vadd.f32 %v4347, %v4356
        %v4359 = vadd.f32 %v4348, %v4357
        %4360 = vrot.lane.b32.xlu0 %v4358, 96
        %v4361 = vpop.permute.xlu0 %4360
        %4362 = vrot.lane.b32.xlu0 %v4359, 96
        %v4363 = vpop.permute.xlu0 %4362
        %v4364 = vsel %vm1858, %v4361, %v4363
        %v4365 = vsel %vm1858, %v4363, %v4361
        %v4367 = vlaneseq
        %v4368 = vshrl.u32 %v4367, 7
        %v4369 = vsub.s32 0, %v4368
        %v4370 = vrot.slane %v750, %v4369
        %v4371 = vlaneseq
        %v4372 = vshrl.u32 %v4371, 7
        %v4373 = vsub.s32 1, %v4372
        %v4374 = vrot.slane %v750, %v4373
        %v4377 = vmul.f32 %v4370, %v4365
        %v4378 = vmul.f32 %v4374, %v4364
        %v4379 = vadd.f32 %v4283, %v4377
        %v4380 = vadd.f32 %v4284, %v4378
        %s4381 = scalar_lea.vmem %s13, 28
        %v4382 = vld [vmem:[%s4381] sm:$0x3]
        %4384 = vset.pattern.permute.xlu0 0
        %4385 = vperm.xlu0 %4384, %v4382
        %v4386 = vpop.permute.xlu0 %4385
        %v4388 = vmul.f32 %v4112, %v4386
        %v4389 = vmul.f32 %v4113, %v4386
        %s4390 = scalar_lea.vmem %s13, 30
        %v4391 = vld [vmem:[%s4390] sm:$0x3]
        %4393 = vset.pattern.permute.xlu0 0
        %4394 = vperm.xlu0 %4393, %v4391
        %v4395 = vpop.permute.xlu0 %4394
        %v4397 = vmul.f32 %v4132, %v4395
        %v4398 = vmul.f32 %v4133, %v4395
        %v4399 = vadd.f32 %v4388, %v4397
        %v4400 = vadd.f32 %v4389, %v4398
        %s4401 = scalar_lea.vmem %s13, 32
        %v4402 = vld [vmem:[%s4401] sm:$0x3]
        %4404 = vset.pattern.permute.xlu0 0
        %4405 = vperm.xlu0 %4404, %v4402
        %v4406 = vpop.permute.xlu0 %4405
        %v4408 = vmul.f32 %v4140, %v4406
        %v4409 = vmul.f32 %v4141, %v4406
        %v4410 = vadd.f32 %v4399, %v4408
        %v4411 = vadd.f32 %v4400, %v4409
        %s4412 = scalar_lea.vmem %s13, 34
        %v4413 = vld [vmem:[%s4412] sm:$0x3]
        %4415 = vset.pattern.permute.xlu0 0
        %4416 = vperm.xlu0 %4415, %v4413
        %v4417 = vpop.permute.xlu0 %4416
        %v4419 = vmul.f32 %v4142, %v4417
        %v4420 = vmul.f32 %v4143, %v4417
        %v4421 = vadd.f32 %v4410, %v4419
        %v4422 = vadd.f32 %v4411, %v4420
        %s4423 = scalar_lea.vmem %s13, 36
        %v4424 = vld [vmem:[%s4423] sm:$0x3]
        %4426 = vset.pattern.permute.xlu0 0
        %4427 = vperm.xlu0 %4426, %v4424
        %v4428 = vpop.permute.xlu0 %4427
        %v4430 = vmul.f32 %v4150, %v4428
        %v4431 = vmul.f32 %v4151, %v4428
        %v4432 = vadd.f32 %v4421, %v4430
        %v4433 = vadd.f32 %v4422, %v4431
        %s4434 = scalar_lea.vmem %s13, 38
        %v4435 = vld [vmem:[%s4434] sm:$0x3]
        %4437 = vset.pattern.permute.xlu0 0
        %4438 = vperm.xlu0 %4437, %v4435
        %v4439 = vpop.permute.xlu0 %4438
        %v4441 = vmul.f32 %v4170, %v4439
        %v4442 = vmul.f32 %v4171, %v4439
        %v4443 = vadd.f32 %v4432, %v4441
        %v4444 = vadd.f32 %v4433, %v4442
        %s4445 = scalar_lea.vmem %s13, 40
        %v4446 = vld [vmem:[%s4445] sm:$0x3]
        %4448 = vset.pattern.permute.xlu0 0
        %4449 = vperm.xlu0 %4448, %v4446
        %v4450 = vpop.permute.xlu0 %4449
        %v4452 = vmul.f32 %v4190, %v4450
        %v4453 = vmul.f32 %v4191, %v4450
        %v4454 = vadd.f32 %v4443, %v4452
        %v4455 = vadd.f32 %v4444, %v4453
        %4456 = vrot.lane.b32.xlu0 %v4454, 48
        %v4457 = vpop.permute.xlu0 %4456
        %4458 = vrot.lane.b32.xlu0 %v4455, 48
        %v4459 = vpop.permute.xlu0 %4458
        %v4460 = vsel %vm1382, %v4457, %v4459
        %v4461 = vsel %vm1382, %v4459, %v4457
        %v4462 = vmul.f32 %v1389, %v4461
        %v4463 = vmul.f32 %v1393, %v4460
        %v4464 = vadd.f32 %v4379, %v4462
        %v4465 = vadd.f32 %v4380, %v4463
        %s4466 = scalar_lea.vmem %s13, 42
        %v4467 = vld [vmem:[%s4466] sm:$0x3]
        %4469 = vset.pattern.permute.xlu0 0
        %4470 = vperm.xlu0 %4469, %v4467
        %v4471 = vpop.permute.xlu0 %4470
        %v4473 = vmul.f32 %v4112, %v4471
        %v4474 = vmul.f32 %v4113, %v4471
        %s4475 = scalar_lea.vmem %s13, 44
        %v4476 = vld [vmem:[%s4475] sm:$0x3]
        %4478 = vset.pattern.permute.xlu0 0
        %4479 = vperm.xlu0 %4478, %v4476
        %v4480 = vpop.permute.xlu0 %4479
        %v4482 = vmul.f32 %v4132, %v4480
        %v4483 = vmul.f32 %v4133, %v4480
        %v4484 = vadd.f32 %v4473, %v4482
        %v4485 = vadd.f32 %v4474, %v4483
        %s4486 = scalar_lea.vmem %s13, 46
        %v4487 = vld [vmem:[%s4486] sm:$0x3]
        %4489 = vset.pattern.permute.xlu0 0
        %4490 = vperm.xlu0 %4489, %v4487
        %v4491 = vpop.permute.xlu0 %4490
        %v4493 = vmul.f32 %v4140, %v4491
        %v4494 = vmul.f32 %v4141, %v4491
        %v4495 = vadd.f32 %v4484, %v4493
        %v4496 = vadd.f32 %v4485, %v4494
        %s4497 = scalar_lea.vmem %s13, 48
        %v4498 = vld [vmem:[%s4497] sm:$0x3]
        %4500 = vset.pattern.permute.xlu0 0
        %4501 = vperm.xlu0 %4500, %v4498
        %v4502 = vpop.permute.xlu0 %4501
        %v4504 = vmul.f32 %v4142, %v4502
        %v4505 = vmul.f32 %v4143, %v4502
        %v4506 = vadd.f32 %v4495, %v4504
        %v4507 = vadd.f32 %v4496, %v4505
        %s4508 = scalar_lea.vmem %s13, 50
        %v4509 = vld [vmem:[%s4508] sm:$0x3]
        %4511 = vset.pattern.permute.xlu0 0
        %4512 = vperm.xlu0 %4511, %v4509
        %v4513 = vpop.permute.xlu0 %4512
        %v4515 = vmul.f32 %v4150, %v4513
        %v4516 = vmul.f32 %v4151, %v4513
        %v4517 = vadd.f32 %v4506, %v4515
        %v4518 = vadd.f32 %v4507, %v4516
        %s4519 = scalar_lea.vmem %s13, 52
        %v4520 = vld [vmem:[%s4519] sm:$0x3]
        %4522 = vset.pattern.permute.xlu0 0
        %4523 = vperm.xlu0 %4522, %v4520
        %v4524 = vpop.permute.xlu0 %4523
        %v4526 = vmul.f32 %v4170, %v4524
        %v4527 = vmul.f32 %v4171, %v4524
        %v4528 = vadd.f32 %v4517, %v4526
        %v4529 = vadd.f32 %v4518, %v4527
        %s4530 = scalar_lea.vmem %s13, 54
        %v4531 = vld [vmem:[%s4530] sm:$0x3]
        %4533 = vset.pattern.permute.xlu0 0
        %4534 = vperm.xlu0 %4533, %v4531
        %v4535 = vpop.permute.xlu0 %4534
        %v4537 = vmul.f32 %v4190, %v4535
        %v4538 = vmul.f32 %v4191, %v4535
        %v4539 = vadd.f32 %v4528, %v4537
        %v4540 = vadd.f32 %v4529, %v4538
        %v4541 = vmul.f32 %v1671, %v4539
        %v4542 = vmul.f32 %v1675, %v4540
        %v4543 = vadd.f32 %v4464, %v4541
        %v4544 = vadd.f32 %v4465, %v4542
        %s4545 = scalar_lea.vmem %s13, 56
        %v4546 = vld [vmem:[%s4545] sm:$0x3]
        %4548 = vset.pattern.permute.xlu0 0
        %4549 = vperm.xlu0 %4548, %v4546
        %v4550 = vpop.permute.xlu0 %4549
        %v4552 = vmul.f32 %v4112, %v4550
        %v4553 = vmul.f32 %v4113, %v4550
        %s4554 = scalar_lea.vmem %s13, 58
        %v4555 = vld [vmem:[%s4554] sm:$0x3]
        %4557 = vset.pattern.permute.xlu0 0
        %4558 = vperm.xlu0 %4557, %v4555
        %v4559 = vpop.permute.xlu0 %4558
        %v4561 = vmul.f32 %v4132, %v4559
        %v4562 = vmul.f32 %v4133, %v4559
        %v4563 = vadd.f32 %v4552, %v4561
        %v4564 = vadd.f32 %v4553, %v4562
        %s4565 = scalar_lea.vmem %s13, 60
        %v4566 = vld [vmem:[%s4565] sm:$0x3]
        %4568 = vset.pattern.permute.xlu0 0
        %4569 = vperm.xlu0 %4568, %v4566
        %v4570 = vpop.permute.xlu0 %4569
        %v4572 = vmul.f32 %v4140, %v4570
        %v4573 = vmul.f32 %v4141, %v4570
        %v4574 = vadd.f32 %v4563, %v4572
        %v4575 = vadd.f32 %v4564, %v4573
        %s4576 = scalar_lea.vmem %s13, 62
        %v4577 = vld [vmem:[%s4576] sm:$0x3]
        %4579 = vset.pattern.permute.xlu0 0
        %4580 = vperm.xlu0 %4579, %v4577
        %v4581 = vpop.permute.xlu0 %4580
        %v4583 = vmul.f32 %v4142, %v4581
        %v4584 = vmul.f32 %v4143, %v4581
        %v4585 = vadd.f32 %v4574, %v4583
        %v4586 = vadd.f32 %v4575, %v4584
        %s4587 = scalar_lea.vmem %s13, 64
        %v4588 = vld [vmem:[%s4587] sm:$0x3]
        %4590 = vset.pattern.permute.xlu0 0
        %4591 = vperm.xlu0 %4590, %v4588
        %v4592 = vpop.permute.xlu0 %4591
        %v4594 = vmul.f32 %v4150, %v4592
        %v4595 = vmul.f32 %v4151, %v4592
        %v4596 = vadd.f32 %v4585, %v4594
        %v4597 = vadd.f32 %v4586, %v4595
        %s4598 = scalar_lea.vmem %s13, 66
        %v4599 = vld [vmem:[%s4598] sm:$0x3]
        %4601 = vset.pattern.permute.xlu0 0
        %4602 = vperm.xlu0 %4601, %v4599
        %v4603 = vpop.permute.xlu0 %4602
        %v4605 = vmul.f32 %v4170, %v4603
        %v4606 = vmul.f32 %v4171, %v4603
        %v4607 = vadd.f32 %v4596, %v4605
        %v4608 = vadd.f32 %v4597, %v4606
        %s4609 = scalar_lea.vmem %s13, 68
        %v4610 = vld [vmem:[%s4609] sm:$0x3]
        %4612 = vset.pattern.permute.xlu0 0
        %4613 = vperm.xlu0 %4612, %v4610
        %v4614 = vpop.permute.xlu0 %4613
        %v4616 = vmul.f32 %v4190, %v4614
        %v4617 = vmul.f32 %v4191, %v4614
        %v4618 = vadd.f32 %v4607, %v4616
        %v4619 = vadd.f32 %v4608, %v4617
        %4620 = vrot.lane.b32.xlu0 %v4618, 80
        %v4621 = vpop.permute.xlu0 %4620
        %4622 = vrot.lane.b32.xlu0 %v4619, 80
        %v4623 = vpop.permute.xlu0 %4622
        %v4624 = vsel %vm1955, %v4621, %v4623
        %v4625 = vsel %vm1955, %v4623, %v4621
        %v4626 = vmul.f32 %v1962, %v4624
        %v4627 = vmul.f32 %v1966, %v4625
        %v4628 = vadd.f32 %v4543, %v4626
        %v4629 = vadd.f32 %v4544, %v4627
        %s4630 = scalar_lea.vmem %s13, 70
        %v4631 = vld [vmem:[%s4630] sm:$0x3]
        %4633 = vset.pattern.permute.xlu0 0
        %4634 = vperm.xlu0 %4633, %v4631
        %v4635 = vpop.permute.xlu0 %4634
        %v4637 = vmul.f32 %v4112, %v4635
        %v4638 = vmul.f32 %v4113, %v4635
        %s4639 = scalar_lea.vmem %s13, 72
        %v4640 = vld [vmem:[%s4639] sm:$0x3]
        %4642 = vset.pattern.permute.xlu0 0
        %4643 = vperm.xlu0 %4642, %v4640
        %v4644 = vpop.permute.xlu0 %4643
        %v4646 = vmul.f32 %v4132, %v4644
        %v4647 = vmul.f32 %v4133, %v4644
        %v4648 = vadd.f32 %v4637, %v4646
        %v4649 = vadd.f32 %v4638, %v4647
        %s4650 = scalar_lea.vmem %s13, 74
        %v4651 = vld [vmem:[%s4650] sm:$0x3]
        %4653 = vset.pattern.permute.xlu0 0
        %4654 = vperm.xlu0 %4653, %v4651
        %v4655 = vpop.permute.xlu0 %4654
        %v4657 = vmul.f32 %v4140, %v4655
        %v4658 = vmul.f32 %v4141, %v4655
        %v4659 = vadd.f32 %v4648, %v4657
        %v4660 = vadd.f32 %v4649, %v4658
        %s4661 = scalar_lea.vmem %s13, 76
        %v4662 = vld [vmem:[%s4661] sm:$0x3]
        %4664 = vset.pattern.permute.xlu0 0
        %4665 = vperm.xlu0 %4664, %v4662
        %v4666 = vpop.permute.xlu0 %4665
        %v4668 = vmul.f32 %v4142, %v4666
        %v4669 = vmul.f32 %v4143, %v4666
        %v4670 = vadd.f32 %v4659, %v4668
        %v4671 = vadd.f32 %v4660, %v4669
        %s4672 = scalar_lea.vmem %s13, 78
        %v4673 = vld [vmem:[%s4672] sm:$0x3]
        %4675 = vset.pattern.permute.xlu0 0
        %4676 = vperm.xlu0 %4675, %v4673
        %v4677 = vpop.permute.xlu0 %4676
        %v4679 = vmul.f32 %v4150, %v4677
        %v4680 = vmul.f32 %v4151, %v4677
        %v4681 = vadd.f32 %v4670, %v4679
        %v4682 = vadd.f32 %v4671, %v4680
        %s4683 = scalar_lea.vmem %s13, 80
        %v4684 = vld [vmem:[%s4683] sm:$0x3]
        %4686 = vset.pattern.permute.xlu0 0
        %4687 = vperm.xlu0 %4686, %v4684
        %v4688 = vpop.permute.xlu0 %4687
        %v4690 = vmul.f32 %v4170, %v4688
        %v4691 = vmul.f32 %v4171, %v4688
        %v4692 = vadd.f32 %v4681, %v4690
        %v4693 = vadd.f32 %v4682, %v4691
        %s4694 = scalar_lea.vmem %s13, 82
        %v4695 = vld [vmem:[%s4694] sm:$0x3]
        %4697 = vset.pattern.permute.xlu0 0
        %4698 = vperm.xlu0 %4697, %v4695
        %v4699 = vpop.permute.xlu0 %4698
        %v4701 = vmul.f32 %v4190, %v4699
        %v4702 = vmul.f32 %v4191, %v4699
        %v4703 = vadd.f32 %v4692, %v4701
        %v4704 = vadd.f32 %v4693, %v4702
        %4705 = vrot.lane.b32.xlu0 %v4703, 32
        %v4706 = vpop.permute.xlu0 %4705
        %4707 = vrot.lane.b32.xlu0 %v4704, 32
        %v4708 = vpop.permute.xlu0 %4707
        %v4709 = vsel %vm1477, %v4706, %v4708
        %v4710 = vsel %vm1477, %v4708, %v4706
        %v4712 = vlaneseq
        %v4713 = vshrl.u32 %v4712, 7
        %v4714 = vsub.s32 0, %v4713
        %v4715 = vrot.slane %v755, %v4714
        %v4716 = vlaneseq
        %v4717 = vshrl.u32 %v4716, 7
        %v4718 = vsub.s32 1, %v4717
        %v4719 = vrot.slane %v755, %v4718
        %v4722 = vmul.f32 %v4715, %v4709
        %v4723 = vmul.f32 %v4719, %v4710
        %v4724 = vadd.f32 %v4628, %v4722
        %v4725 = vadd.f32 %v4629, %v4723
        %s4726 = scalar_lea.vmem %s13, 84
        %v4727 = vld [vmem:[%s4726] sm:$0x3]
        %4729 = vset.pattern.permute.xlu0 0
        %4730 = vperm.xlu0 %4729, %v4727
        %v4731 = vpop.permute.xlu0 %4730
        %v4733 = vmul.f32 %v4112, %v4731
        %v4734 = vmul.f32 %v4113, %v4731
        %s4735 = scalar_lea.vmem %s13, 86
        %v4736 = vld [vmem:[%s4735] sm:$0x3]
        %4738 = vset.pattern.permute.xlu0 0
        %4739 = vperm.xlu0 %4738, %v4736
        %v4740 = vpop.permute.xlu0 %4739
        %v4742 = vmul.f32 %v4132, %v4740
        %v4743 = vmul.f32 %v4133, %v4740
        %v4744 = vadd.f32 %v4733, %v4742
        %v4745 = vadd.f32 %v4734, %v4743
        %s4746 = scalar_lea.vmem %s13, 88
        %v4747 = vld [vmem:[%s4746] sm:$0x3]
        %4749 = vset.pattern.permute.xlu0 0
        %4750 = vperm.xlu0 %4749, %v4747
        %v4751 = vpop.permute.xlu0 %4750
        %v4753 = vmul.f32 %v4140, %v4751
        %v4754 = vmul.f32 %v4141, %v4751
        %v4755 = vadd.f32 %v4744, %v4753
        %v4756 = vadd.f32 %v4745, %v4754
        %s4757 = scalar_lea.vmem %s13, 90
        %v4758 = vld [vmem:[%s4757] sm:$0x3]
        %4760 = vset.pattern.permute.xlu0 0
        %4761 = vperm.xlu0 %4760, %v4758
        %v4762 = vpop.permute.xlu0 %4761
        %v4764 = vmul.f32 %v4142, %v4762
        %v4765 = vmul.f32 %v4143, %v4762
        %v4766 = vadd.f32 %v4755, %v4764
        %v4767 = vadd.f32 %v4756, %v4765
        %s4768 = scalar_lea.vmem %s13, 92
        %v4769 = vld [vmem:[%s4768] sm:$0x3]
        %4771 = vset.pattern.permute.xlu0 0
        %4772 = vperm.xlu0 %4771, %v4769
        %v4773 = vpop.permute.xlu0 %4772
        %v4775 = vmul.f32 %v4150, %v4773
        %v4776 = vmul.f32 %v4151, %v4773
        %v4777 = vadd.f32 %v4766, %v4775
        %v4778 = vadd.f32 %v4767, %v4776
        %s4779 = scalar_lea.vmem %s13, 94
        %v4780 = vld [vmem:[%s4779] sm:$0x3]
        %4782 = vset.pattern.permute.xlu0 0
        %4783 = vperm.xlu0 %4782, %v4780
        %v4784 = vpop.permute.xlu0 %4783
        %v4786 = vmul.f32 %v4170, %v4784
        %v4787 = vmul.f32 %v4171, %v4784
        %v4788 = vadd.f32 %v4777, %v4786
        %v4789 = vadd.f32 %v4778, %v4787
        %s4790 = scalar_lea.vmem %s13, 96
        %v4791 = vld [vmem:[%s4790] sm:$0x3]
        %4793 = vset.pattern.permute.xlu0 0
        %4794 = vperm.xlu0 %4793, %v4791
        %v4795 = vpop.permute.xlu0 %4794
        %v4797 = vmul.f32 %v4190, %v4795
        %v4798 = vmul.f32 %v4191, %v4795
        %v4799 = vadd.f32 %v4788, %v4797
        %v4800 = vadd.f32 %v4789, %v4798
        %4801 = vrot.lane.b32.xlu0 %v4799, 112
        %v4802 = vpop.permute.xlu0 %4801
        %4803 = vrot.lane.b32.xlu0 %v4800, 112
        %v4804 = vpop.permute.xlu0 %4803
        %v4805 = vsel %vm1761, %v4802, %v4804
        %v4806 = vsel %vm1761, %v4804, %v4802
        %v4808 = vlaneseq
        %v4809 = vshrl.u32 %v4808, 7
        %v4810 = vsub.s32 0, %v4809
        %v4811 = vrot.slane %v760, %v4810
        %v4812 = vlaneseq
        %v4813 = vshrl.u32 %v4812, 7
        %v4814 = vsub.s32 1, %v4813
        %v4815 = vrot.slane %v760, %v4814
        %v4818 = vmul.f32 %v4811, %v4806
        %v4819 = vmul.f32 %v4815, %v4805
        %v4820 = vadd.f32 %v4724, %v4818
        %v4821 = vadd.f32 %v4725, %v4819
        %4823 = vset.pattern.permute.xlu0 0
        %4824 = vperm.xlu0 %4823, %v588
        %v4825 = vpop.permute.xlu0 %4824
        %v4827 = vadd.f32 %v4820, %v4825
        %v4828 = vadd.f32 %v4821, %v4825
        %v4829 = vld [vmem:[%s14] sm:$0x3]
        %4831 = vset.pattern.permute.xlu0 0
        %4832 = vperm.xlu0 %4831, %v589
        %v4833 = vpop.permute.xlu0 %4832
        %v4836 = vsel %vm3350, %v4829, 0
        %v4839 = vsel %vm3354, %v4827, 0
        %v4842 = vsel %vm3354, %v4828, 0
        %4844 = vmatprep.subr.mxu0 %v4842
        %4845 = vmatpush1.msra.mxu0 %v4839
        %4846 = vmatprep.subr.mxu0 0.0
        %4847 = vmatpush1.msra.mxu0 0.0
        %4848 = vmatprep.subr.mxu0 0.0
        %4849 = vmatpush1.msra.mxu0 0.0
        %4850 = vmatprep.subr.mxu0 0.0
        %4851 = vmatpush1.msra.mxu0 0.0
        %4852 = vmatprep.subr.mxu0 0.0
        %4853 = vmatpush1.msra.mxu0 0.0
        %4854 = vmatprep.subr.mxu0 0.0
        %4855 = vmatpush1.msra.mxu0 0.0
        %4856 = vmatprep.subr.mxu0 0.0
        %4857 = vmatpush1.msra.mxu0 0.0
        %4858 = vmatprep.subr.mxu0 0.0
        %4859 = vmatpush1.msra.mxu0 0.0
        %4860 = vmatprep.subr.mxu0 0.0
        %4861 = vmatpush1.msra.mxu0 0.0
        %4862 = vmatprep.subr.mxu0 0.0
        %4863 = vmatpush1.msra.mxu0 0.0
        %4864 = vmatprep.subr.mxu0 0.0
        %4865 = vmatpush1.msra.mxu0 0.0
        %4866 = vmatprep.subr.mxu0 0.0
        %4867 = vmatpush1.msra.mxu0 0.0
        %4868 = vmatprep.subr.mxu0 0.0
        %4869 = vmatpush1.msra.mxu0 0.0
        %4870 = vmatprep.subr.mxu0 0.0
        %4871 = vmatpush1.msra.mxu0 0.0
        %4872 = vmatprep.subr.mxu0 0.0
        %4873 = vmatpush1.msra.mxu0 0.0
        %4874 = vmatprep.subr.mxu0 0.0
        %4875 = vmatpush1.msra.mxu0 0.0
        %4876 = vmatprep.subr.mxu0 0.0
        %4877 = vmatpush1.msra.mxu0 0.0
        %4878 = vmatprep.subr.mxu0 0.0
        %4879 = vmatpush1.msra.mxu0 0.0
        %4880 = vmatprep.subr.mxu0 0.0
        %4881 = vmatpush1.msra.mxu0 0.0
        %4882 = vmatprep.subr.mxu0 0.0
        %4883 = vmatpush1.msra.mxu0 0.0
        %4884 = vmatprep.subr.mxu0 0.0
        %4885 = vmatpush1.msra.mxu0 0.0
        %4886 = vmatprep.subr.mxu0 0.0
        %4887 = vmatpush1.msra.mxu0 0.0
        %4888 = vmatprep.subr.mxu0 0.0
        %4889 = vmatpush1.msra.mxu0 0.0
        %4890 = vmatprep.subr.mxu0 0.0
        %4891 = vmatpush1.msra.mxu0 0.0
        %4892 = vmatprep.subr.mxu0 0.0
        %4893 = vmatpush1.msra.mxu0 0.0
        %4894 = vmatprep.subr.mxu0 0.0
        %4895 = vmatpush1.msra.mxu0 0.0
        %4896 = vmatprep.subr.mxu0 0.0
        %4897 = vmatpush1.msra.mxu0 0.0
        %4898 = vmatprep.subr.mxu0 0.0
        %4899 = vmatpush1.msra.mxu0 0.0
        %4900 = vmatprep.subr.mxu0 0.0
        %4901 = vmatpush1.msra.mxu0 0.0
        %4902 = vmatprep.subr.mxu0 0.0
        %4903 = vmatpush1.msra.mxu0 0.0
        %4904 = vmatprep.subr.mxu0 0.0
        %4905 = vmatpush1.msra.mxu0 0.0
        %4906 = vmatprep.subr.mxu0 0.0
        %4907 = vmatpush1.msra.mxu0 0.0
        %4908 = vmatprep.mubr.f32.mxu0 0.0
        %4909 = vmatmul.mubr.f32.gmra.mrb[0].mxu0 %v4836
        %v4910 = vpop.f32.mrb[0].mxu0
        %v4911 = vadd.f32 %v4833, %v4910
        %v4912 = vpop.f32.mrb[0].mxu0
        %v4913 = vadd.f32 %v4833, %v4912
        %4914 = vdwg.mxu0
        %v4915 = vmul.f32 %v4911, %v4092
        %v4916 = vmul.f32 %v4913, %v4093
        %v4917 = vmul.f32 %v1085, %v3432
        %v4918 = vmul.f32 %v1087, %v3433
        %v4919 = vld [vmem:[%s16] sm:$0xf]
        %v4920 = vmul.f32 %v1165, %v4915
        %v4921 = vmul.f32 %v1167, %v4916
        %v4922 = vld [vmem:[%s17] sm:$0xf]
        %v4924 = vsel %vm3350, %v4922, 0
        %v4927 = vsel %vm3354, %v4920, 0
        %v4930 = vsel %vm3354, %v4921, 0
        %4932 = vmatprep.subr.mxu0 %v4930
        %4933 = vmatpush1.msra.mxu0 %v4927
        %4934 = vmatprep.subr.mxu0 0.0
        %4935 = vmatpush1.msra.mxu0 0.0
        %4936 = vmatprep.subr.mxu0 0.0
        %4937 = vmatpush1.msra.mxu0 0.0
        %4938 = vmatprep.subr.mxu0 0.0
        %4939 = vmatpush1.msra.mxu0 0.0
        %4940 = vmatprep.subr.mxu0 0.0
        %4941 = vmatpush1.msra.mxu0 0.0
        %4942 = vmatprep.subr.mxu0 0.0
        %4943 = vmatpush1.msra.mxu0 0.0
        %4944 = vmatprep.subr.mxu0 0.0
        %4945 = vmatpush1.msra.mxu0 0.0
        %4946 = vmatprep.subr.mxu0 0.0
        %4947 = vmatpush1.msra.mxu0 0.0
        %4948 = vmatprep.subr.mxu0 0.0
        %4949 = vmatpush1.msra.mxu0 0.0
        %4950 = vmatprep.subr.mxu0 0.0
        %4951 = vmatpush1.msra.mxu0 0.0
        %4952 = vmatprep.subr.mxu0 0.0
        %4953 = vmatpush1.msra.mxu0 0.0
        %4954 = vmatprep.subr.mxu0 0.0
        %4955 = vmatpush1.msra.mxu0 0.0
        %4956 = vmatprep.subr.mxu0 0.0
        %4957 = vmatpush1.msra.mxu0 0.0
        %4958 = vmatprep.subr.mxu0 0.0
        %4959 = vmatpush1.msra.mxu0 0.0
        %4960 = vmatprep.subr.mxu0 0.0
        %4961 = vmatpush1.msra.mxu0 0.0
        %4962 = vmatprep.subr.mxu0 0.0
        %4963 = vmatpush1.msra.mxu0 0.0
        %4964 = vmatprep.subr.mxu0 0.0
        %4965 = vmatpush1.msra.mxu0 0.0
        %4966 = vmatprep.subr.mxu0 0.0
        %4967 = vmatpush1.msra.mxu0 0.0
        %4968 = vmatprep.subr.mxu0 0.0
        %4969 = vmatpush1.msra.mxu0 0.0
        %4970 = vmatprep.subr.mxu0 0.0
        %4971 = vmatpush1.msra.mxu0 0.0
        %4972 = vmatprep.subr.mxu0 0.0
        %4973 = vmatpush1.msra.mxu0 0.0
        %4974 = vmatprep.subr.mxu0 0.0
        %4975 = vmatpush1.msra.mxu0 0.0
        %4976 = vmatprep.subr.mxu0 0.0
        %4977 = vmatpush1.msra.mxu0 0.0
        %4978 = vmatprep.subr.mxu0 0.0
        %4979 = vmatpush1.msra.mxu0 0.0
        %4980 = vmatprep.subr.mxu0 0.0
        %4981 = vmatpush1.msra.mxu0 0.0
        %4982 = vmatprep.subr.mxu0 0.0
        %4983 = vmatpush1.msra.mxu0 0.0
        %4984 = vmatprep.subr.mxu0 0.0
        %4985 = vmatpush1.msra.mxu0 0.0
        %4986 = vmatprep.subr.mxu0 0.0
        %4987 = vmatpush1.msra.mxu0 0.0
        %4988 = vmatprep.subr.mxu0 0.0
        %4989 = vmatpush1.msra.mxu0 0.0
        %4990 = vmatprep.subr.mxu0 0.0
        %4991 = vmatpush1.msra.mxu0 0.0
        %4992 = vmatprep.subr.mxu0 0.0
        %4993 = vmatpush1.msra.mxu0 0.0
        %4994 = vmatprep.subr.mxu0 0.0
        %4995 = vmatpush1.msra.mxu0 0.0
        %4996 = vmatprep.mubr.f32.mxu0 0.0
        %4997 = vmatmul.mubr.f32.gmra.mrb[0].mxu0 %v4924
        %v4998 = vpop.f32.mrb[0].mxu0
        %v4999 = vadd.f32 0.0, %v4998
        %v5000 = vpop.f32.mrb[0].mxu0
        %v5001 = vadd.f32 0.0, %v5000
        %5002 = vdwg.mxu0
        %v5004 = vsel %vm3350, %v4919, 0
        %v5007 = vsel %vm3354, %v4917, 0
        %v5010 = vsel %vm3354, %v4918, 0
        %5012 = vmatprep.subr.mxu0 %v5010
        %5013 = vmatpush1.msra.mxu0 %v5007
        %5014 = vmatprep.subr.mxu0 0.0
        %5015 = vmatpush1.msra.mxu0 0.0
        %5016 = vmatprep.subr.mxu0 0.0
        %5017 = vmatpush1.msra.mxu0 0.0
        %5018 = vmatprep.subr.mxu0 0.0
        %5019 = vmatpush1.msra.mxu0 0.0
        %5020 = vmatprep.subr.mxu0 0.0
        %5021 = vmatpush1.msra.mxu0 0.0
        %5022 = vmatprep.subr.mxu0 0.0
        %5023 = vmatpush1.msra.mxu0 0.0
        %5024 = vmatprep.subr.mxu0 0.0
        %5025 = vmatpush1.msra.mxu0 0.0
        %5026 = vmatprep.subr.mxu0 0.0
        %5027 = vmatpush1.msra.mxu0 0.0
        %5028 = vmatprep.subr.mxu0 0.0
        %5029 = vmatpush1.msra.mxu0 0.0
        %5030 = vmatprep.subr.mxu0 0.0
        %5031 = vmatpush1.msra.mxu0 0.0
        %5032 = vmatprep.subr.mxu0 0.0
        %5033 = vmatpush1.msra.mxu0 0.0
        %5034 = vmatprep.subr.mxu0 0.0
        %5035 = vmatpush1.msra.mxu0 0.0
        %5036 = vmatprep.subr.mxu0 0.0
        %5037 = vmatpush1.msra.mxu0 0.0
        %5038 = vmatprep.subr.mxu0 0.0
        %5039 = vmatpush1.msra.mxu0 0.0
        %5040 = vmatprep.subr.mxu0 0.0
        %5041 = vmatpush1.msra.mxu0 0.0
        %5042 = vmatprep.subr.mxu0 0.0
        %5043 = vmatpush1.msra.mxu0 0.0
        %5044 = vmatprep.subr.mxu0 0.0
        %5045 = vmatpush1.msra.mxu0 0.0
        %5046 = vmatprep.subr.mxu0 0.0
        %5047 = vmatpush1.msra.mxu0 0.0
        %5048 = vmatprep.subr.mxu0 0.0
        %5049 = vmatpush1.msra.mxu0 0.0
        %5050 = vmatprep.subr.mxu0 0.0
        %5051 = vmatpush1.msra.mxu0 0.0
        %5052 = vmatprep.subr.mxu0 0.0
        %5053 = vmatpush1.msra.mxu0 0.0
        %5054 = vmatprep.subr.mxu0 0.0
        %5055 = vmatpush1.msra.mxu0 0.0
        %5056 = vmatprep.subr.mxu0 0.0
        %5057 = vmatpush1.msra.mxu0 0.0
        %5058 = vmatprep.subr.mxu0 0.0
        %5059 = vmatpush1.msra.mxu0 0.0
        %5060 = vmatprep.subr.mxu0 0.0
        %5061 = vmatpush1.msra.mxu0 0.0
        %5062 = vmatprep.subr.mxu0 0.0
        %5063 = vmatpush1.msra.mxu0 0.0
        %5064 = vmatprep.subr.mxu0 0.0
        %5065 = vmatpush1.msra.mxu0 0.0
        %5066 = vmatprep.subr.mxu0 0.0
        %5067 = vmatpush1.msra.mxu0 0.0
        %5068 = vmatprep.subr.mxu0 0.0
        %5069 = vmatpush1.msra.mxu0 0.0
        %5070 = vmatprep.subr.mxu0 0.0
        %5071 = vmatpush1.msra.mxu0 0.0
        %5072 = vmatprep.subr.mxu0 0.0
        %5073 = vmatpush1.msra.mxu0 0.0
        %5074 = vmatprep.subr.mxu0 0.0
        %5075 = vmatpush1.msra.mxu0 0.0
        %5076 = vmatprep.mubr.f32.mxu0 0.0
        %5077 = vmatmul.mubr.f32.gmra.mrb[0].mxu0 %v5004
        %v5078 = vpop.f32.mrb[0].mxu0
        %v5079 = vadd.f32 %v4999, %v5078
        %v5080 = vpop.f32.mrb[0].mxu0
        %v5081 = vadd.f32 %v5001, %v5080
        %5082 = vdwg.mxu0
        %5084 = vset.pattern.permute.xlu0 0
        %5085 = vperm.xlu0 %5084, %v591
        %v5086 = vpop.permute.xlu0 %5085
        %v5088 = vadd.f32 %v5079, %v5086
        %v5089 = vadd.f32 %v5081, %v5086
        %5091 = vset.pattern.permute.xlu0 0
        %5092 = vperm.xlu0 %5091, %v592
        %v5093 = vpop.permute.xlu0 %5092
        %v5095 = vmul.f32 %v5088, %v5093
        %v5096 = vmul.f32 %v5089, %v5093
        %v5097 = vadd.f32 %v5095, %v574
        %v5098 = vadd.f32 %v5096, %v762
        %v5101 = vcombine.low %v5097, %v5098
        %5103 = vst [vmem:[%s568] sm:$0xff] %v5101
        %s5104 = sand.u32 %s423, 1
        %s5105 = scalar_lea.sflag [#allocation3], %s5104
        %s5106 = sand.u32 %s423, 1
        %s5107 = smul.addr %s5106, 8
        %s5108 = scalar_lea.vmem [#allocation2], %s5107
        // Predicated region
        $region93: #{tpu_custom_call.1} parent=91 // pred_check
          %p5109 = pneg %p433
        $region94: #{tpu_custom_call.1} parent=91 // pred_check_branch
          %5111 = sbr.rel (%p5109) target = $region96
        $region95: #{tpu_custom_call.1} parent=91 // pred_region
          %s5113 = ssub.s32 128, 128
          %5114 = vsyncadd %s5105, %s5113
          %s5115 = smul.addr %s32, 2
          %s5116 = smul.addr %s5115, 64
          %s5117 = scalar_lea.hbm %s18, %s5116
          %s5119 = sshll.u32 %s5108, 4
          %s5120 = int_to_ptr.vmem [resolvable:$true] %s5119
          %5122 = dma.vmem_to_hbm [thread:$0]  %s5120, 128, %s5117, %s5105
        $region96: #{tpu_custom_call.1} parent=91 // pred_fallthru
          _
      $region92: #{tpu_custom_call.1} parent=5 // pred_fallthru
        _
      %p5123 = scmp.le.s32.totalorder 2, %s27
      // Predicated region
      $region97: #{tpu_custom_call.1} parent=5 // pred_check
        %p5124 = pneg %p5123
      $region98: #{tpu_custom_call.1} parent=5 // pred_check_branch
        %5126 = sbr.rel (%p5124) target = $region100
      $region99: #{tpu_custom_call.1} parent=5 // pred_region
        %s5127 = ssub.s32 %s27, 2
        // Predicated region
        $region101: #{tpu_custom_call.1} parent=99 // pred_check
          %p5128 = pneg %p439
        $region102: #{tpu_custom_call.1} parent=99 // pred_check_branch
          %5130 = sbr.rel (%p5128) target = $region104
        $region103: #{tpu_custom_call.1} parent=99 // pred_region
          %s5131 = sand.u32 %s424, 1
          %s5132 = scalar_lea.sflag [#allocation3], %s5131
          %s5133 = sand.u32 %s424, 1
          %s5134 = smul.addr %s5133, 8
          %s5135 = scalar_lea.vmem [#allocation2], %s5134
          %5136 = dma.done %s5132, 128
        $region104: #{tpu_custom_call.1} parent=99 // pred_fallthru
          _
      $region100: #{tpu_custom_call.1} parent=5 // pred_fallthru
        _
    $region6: #{tpu_custom_call.1} parent=1 // loop_footer
      %s31 = sadd.s32 1, %s27
    $region7: #{tpu_custom_call.1} parent=1 // loop_footer_branch
      %26 = sbr.rel target = $region3
    $region8: #{tpu_custom_call.1} parent=1 // loop_exit
      _
    %5137 = vsyncpa [#allocation3], 1
    %s5138 = scalar_lea.sflag [#allocation3], 1
    %5139 = vsyncpa %s5138, 1

</llo_original>
